<compile_context>
chip_gen: v6e
topology: v6e:2x2x1
jax: 0.10.0
libtpu: 0.0.40
codegen_flags: <defaults>
</compile_context>

<pallas_src>
import functools

import jax
import jax.numpy as jnp
import numpy as np
from jax.experimental import pallas as pl
from jax.experimental.pallas import tpu as pltpu

_BN_EPS = 1e-5


def _silu(v):
    return v * jax.nn.sigmoid(v)


def _padded_layout(h, w):
    """Flat zero-padded layout used for the 3x3 (pad=1) convolution.

    Padded position (a, b), a in [0, h+2), b in [0, w+2), lives at flat index
    a*stride + b + base, with stride >= w+2 (8-aligned) and base = 7.  Image
    position (r, c) (== padded (r+1, c+1)) is therefore at flat
    (r+1)*stride + c + 8, i.e. every image row starts at an 8-aligned sublane
    offset, and the tap-(dh, dw) window of the 3x3 conv is the CONTIGUOUS
    range [base + dh*stride + dw, ... + h*stride).
    """
    stride = ((w + 15) // 8) * 8
    base = 7
    rows = (h + 3) * stride          # interior + halo + window-read guard
    return stride, base, rows


def csp_layer_kernel(
    x_ref,                                   # (1, H*stride, Cin)  bf16 (width padded)
    mask_ref,                                # (H*stride, 1)       f32, 1.0 where col < W
    w1_ref, b1_ref,                          # (Cin, Chid) bf16, (1, Chid) f32
    w2_ref, b2_ref,                          # (Cin, Chid) bf16, (1, Chid) f32
    wb1_ref, bb1_ref,                        # (nb, Chid, Chid) bf16, (nb, 1, Chid) f32
    wb2_ref, bb2_ref,                        # (nb, 9, Chid, Chid) bf16, (nb, 1, Chid) f32
    w3a_ref, w3b_ref, b3_ref,                # (Chid, Cout) bf16 x2, (1, Cout) f32
    o_ref,                                   # (1, H*W, Cout) f32
    pad_ref,                                 # VMEM scratch ((H+3)*stride, Chid) f32
    *, h, w, nb, shortcut, tile_rows,
):
    stride, base, rows = _padded_layout(h, w)
    hp = h * stride                          # rows of the carried padded layout
    chid = wb1_ref.shape[-1]
    write_off = stride + base + 1            # == stride + 8, 8-aligned

    xb = x_ref[0]                            # (hp, Cin) bf16
    mask = mask_ref[...]                     # (hp, 1)   f32

    # ---- CSP conv1 / conv2 : 1x1 (+ folded-BN bias) + SiLU -----------------
    # BN scale is already folded into the bf16 weights; only the bias add here.
    x1 = _silu(jnp.dot(xb, w1_ref[...], preferred_element_type=jnp.float32)
               + b1_ref[...])                                   # (hp, Chid) f32
    x2b = _silu(jnp.dot(xb, w2_ref[...], preferred_element_type=jnp.float32)
                + b2_ref[...]).astype(jnp.bfloat16)             # kept bf16 (MXU operand only)

    if nb > 0:
        # Zero ONLY the halo/guard rows never covered by the masked interior
        # store below (3*stride rows).  The interior [write_off, write_off+hp)
        # is fully rewritten by that store every bottleneck iteration, so it
        # needs no pre-zeroing; doing this per grid step keeps the scratch
        # correct even when the batch axis is split across TensorCores.
        head = write_off                                 # rows [0, stride + 8)
        tail = rows - (write_off + hp)                   # rows [(h+1)*stride + 8, rows)
        pad_ref[pl.ds(0, head), :] = jnp.zeros((head, chid), jnp.float32)
        pad_ref[pl.ds(write_off + hp, tail), :] = jnp.zeros((tail, chid), jnp.float32)

    cur = x1                                 # (hp, Chid) f32, padded layout
    for i in range(nb):                      # static unroll over bottlenecks
        # Bottleneck conv1 : 1x1 + bias + SiLU.  Columns c >= w hold junk but
        # never leak into valid positions (all ops are position-wise except
        # the 3x3 window reads, which only see the masked scratch).
        curb = cur.astype(jnp.bfloat16)
        bh = _silu(jnp.dot(curb, wb1_ref[i], preferred_element_type=jnp.float32)
                   + bb1_ref[i])

        # ONE contiguous 8-aligned store of the whole slab; the interior mask
        # writes explicit zeros into the halo columns (c >= w).
        pad_ref[pl.ds(write_off, hp), :] = bh * mask

        # Bottleneck conv2 : 3x3 / pad=1 as 9 matmuls over CONTIGUOUS flat
        # windows, row-tiled so the f32 accumulator stays small (single
        # accumulator chain per tile); epilogue (bias + SiLU + residual) per
        # tile as well.
        # TODO(synk): switch pad_ref to bfloat16 (halves scratch + window
        # traffic, drops the per-tap casts) once the packed-dtype window reads
        # at the odd tap offsets (base + dw in {7, 9}) are verified to lower
        # on all target chips; with the f32 scratch the casts are VPU filler
        # under the MXU.
        bias2 = bb2_ref[i]
        tiles = []
        off = 0
        while off < hp:
            tm = min(tile_rows, hp - off)
            acc = None
            for t in range(9):
                dh, dw = t // 3, t % 3
                win = pad_ref[pl.ds(base + dh * stride + dw + off, tm), :]
                d = jnp.dot(win.astype(jnp.bfloat16), wb2_ref[i, t],
                            preferred_element_type=jnp.float32)
                acc = d if acc is None else acc + d
            y = _silu(acc + bias2)
            if shortcut:
                y = y + cur[off:off + tm]
            tiles.append(y)
            off += tm
        cur = tiles[0] if len(tiles) == 1 else jnp.concatenate(tiles, axis=0)

    # ---- CSP conv3 on concat(cur, x2): concat folded into split weights ----
    y3 = (jnp.dot(cur.astype(jnp.bfloat16), w3a_ref[...],
                  preferred_element_type=jnp.float32)
          + jnp.dot(x2b, w3b_ref[...], preferred_element_type=jnp.float32))
    y3 = _silu(y3 + b3_ref[...])
    cout = y3.shape[-1]
    # Single compaction: drop the (stride - w) pad columns once, at the end.
    o_ref[0] = (y3.reshape(h, stride, cout)[:, :w, :]
                .reshape(h * w, cout).astype(o_ref.dtype))


# ---------------------------------------------------------------------------
# Wrapper
# ---------------------------------------------------------------------------
def _fold_bn(gamma, beta, mean, var):
    scale = gamma / jnp.sqrt(var + _BN_EPS)
    return scale.astype(jnp.float32), (beta - mean * scale).astype(jnp.float32)


def _rep_spec(arr):
    nd = arr.ndim
    return pl.BlockSpec(arr.shape, lambda i, _nd=nd: (0,) * _nd)


def csp_layer_forward(x_nchw, params, *, n=1, shortcut=True, tile_rows=512):
    """x_nchw: (N, Cin, H, W) float32 -> (N, Cout, H, W) float32."""
    assert tile_rows % 8 == 0
    N, Cin, H, W = x_nchw.shape
    stride, _, pad_rows = _padded_layout(H, W)

    # NCHW -> NHWC once; pad width W -> stride (flat padded-row layout) and
    # cast to bf16 once (halves the input DMA; MXU operands are bf16 anyway).
    xt = jnp.transpose(x_nchw, (0, 2, 3, 1))
    xp = jnp.pad(xt, ((0, 0), (0, 0), (0, stride - W), (0, 0)))
    xf = xp.reshape(N, H * stride, Cin).astype(jnp.bfloat16)

    Chid = params["w1"].shape[1]
    Cout = params["w3"].shape[1]

    s1, b1 = _fold_bn(params["bn1_g"], params["bn1_b"], params["bn1_m"], params["bn1_v"])
    s2, b2 = _fold_bn(params["bn2_g"], params["bn2_b"], params["bn2_m"], params["bn2_v"])
    sb1, bb1 = _fold_bn(params["bnb1_g"], params["bnb1_b"], params["bnb1_m"], params["bnb1_v"])
    sb2, bb2 = _fold_bn(params["bnb2_g"], params["bnb2_b"], params["bnb2_m"], params["bnb2_v"])
    s3, b3 = _fold_bn(params["bn3_g"], params["bn3_b"], params["bn3_m"], params["bn3_v"])

    # Fold BN scale into the weights (per output channel), then pre-cast bf16.
    w1s = (params["w1"] * s1[None, :]).astype(jnp.bfloat16)
    w2s = (params["w2"] * s2[None, :]).astype(jnp.bfloat16)
    wb1s = (params["wb1"] * sb1[:, None, :]).astype(jnp.bfloat16)            # (n, Chid, Chid)
    wb2s = (params["wb2"].reshape(n, 9, Chid, Chid)
            * sb2[:, None, None, :]).astype(jnp.bfloat16)                    # (n, 9, Chid, Chid)
    w3s = params["w3"] * s3[None, :]
    w3a = w3s[:Chid].astype(jnp.bfloat16)      # rows multiplying the x1 branch
    w3b = w3s[Chid:].astype(jnp.bfloat16)      # rows multiplying the x2 branch

    b1 = b1.reshape(1, Chid); b2 = b2.reshape(1, Chid)
    bb1 = bb1.reshape(n, 1, Chid); bb2 = bb2.reshape(n, 1, Chid)
    b3 = b3.reshape(1, Cout)

    # Interior-column mask in the flat padded-row layout (1.0 where col < W).
    mask = jnp.tile((jnp.arange(stride) < W).astype(jnp.float32), H).reshape(H * stride, 1)

    kernel = functools.partial(csp_layer_kernel, h=H, w=W, nb=n,
                               shortcut=shortcut, tile_rows=tile_rows)

    out = pl.pallas_call(
        kernel,
        out_shape=jax.ShapeDtypeStruct((N, H * W, Cout), jnp.float32),
        grid=(N,),
        in_specs=[
            pl.BlockSpec((1, H * stride, Cin), lambda i: (i, 0, 0)),
            _rep_spec(mask),
            _rep_spec(w1s), _rep_spec(b1),
            _rep_spec(w2s), _rep_spec(b2),
            _rep_spec(wb1s), _rep_spec(bb1),
            _rep_spec(wb2s), _rep_spec(bb2),
            _rep_spec(w3a), _rep_spec(w3b), _rep_spec(b3),
        ],
        out_specs=pl.BlockSpec((1, H * W, Cout), lambda i: (i, 0, 0)),
        scratch_shapes=[pltpu.VMEM((pad_rows, Chid), jnp.float32)],
        compiler_params=pltpu.CompilerParams(dimension_semantics=("parallel",)),
        # TODO(synk): for production shapes (e.g. 80x80x512) add a halo-aware
        # spatial row-tile grid axis ("parallel"), size tiles per generation
        # (smaller on v7x's 64 MiB VMEM, ~2x larger on v6e/v5e) and set
        # vmem_limit_bytes accordingly; also single-buffer the grid-invariant
        # weight blocks (pl.Buffered(1)) to avoid double-buffering wb2.
    )(xf, mask, w1s, b1, w2s, b2, wb1s, bb1, wb2s, bb2, w3a, w3b, b3)

    return jnp.transpose(out.reshape(N, H, W, Cout), (0, 3, 1, 2))   # back to NCHW


# ---------------------------------------------------------------------------
# Pure-JAX reference (for correctness check)
# ---------------------------------------------------------------------------
def csp_layer_reference(x_nchw, params, *, n=1, shortcut=True):
    dn = ("NHWC", "HWIO", "NHWC")
    x = jnp.transpose(x_nchw, (0, 2, 3, 1))

    def base_conv(t, w_hwio, g, b, m, v):
        s, bias = _fold_bn(g, b, m, v)
        y = jax.lax.conv_general_dilated(t, w_hwio, (1, 1), "SAME",
                                         dimension_numbers=dn)
        y = y * s.reshape(1, 1, 1, -1) + bias.reshape(1, 1, 1, -1)
        return y * jax.nn.sigmoid(y)

    def as_1x1(wm):
        return wm.reshape(1, 1, *wm.shape)

    x1 = base_conv(x, as_1x1(params["w1"]),
                   params["bn1_g"], params["bn1_b"], params["bn1_m"], params["bn1_v"])
    x2 = base_conv(x, as_1x1(params["w2"]),
                   params["bn2_g"], params["bn2_b"], params["bn2_m"], params["bn2_v"])
    for i in range(n):
        hmid = base_conv(x1, as_1x1(params["wb1"][i]),
                         params["bnb1_g"][i], params["bnb1_b"][i],
                         params["bnb1_m"][i], params["bnb1_v"][i])
        y = base_conv(hmid, params["wb2"][i],
                      params["bnb2_g"][i], params["bnb2_b"][i],
                      params["bnb2_m"][i], params["bnb2_v"][i])
        x1 = y + x1 if shortcut else y
    cat = jnp.concatenate([x1, x2], axis=-1)
    out = base_conv(cat, as_1x1(params["w3"]),
                    params["bn3_g"], params["bn3_b"], params["bn3_m"], params["bn3_v"])
    return jnp.transpose(out, (0, 3, 1, 2))


# ---------------------------------------------------------------------------
# Main
# ---------------------------------------------------------------------------
if __name__ == "__main__":
    # CSPLayer(in_channels=4, out_channels=4, n=1, shortcut=True, expansion=0.5)
    N, Cin, H, W = 2, 4, 16, 16
    Cout, n, shortcut, expansion = 4, 1, True, 0.5
    Chid = int(Cout * expansion)                 # 2

    key = jax.random.PRNGKey(0)
    keys = iter(jax.random.split(key, 32))

    def nrm(shape, scale=1.0):
        return scale * jax.random.normal(next(keys), shape, jnp.float32)

    def bn_params(prefix, shape):
        return {
            f"{prefix}_g": 1.0 + 0.1 * nrm(shape),
            f"{prefix}_b": 0.1 * nrm(shape),
            f"{prefix}_m": 0.1 * nrm(shape),
            f"{prefix}_v": 0.5 + 0.5 * jnp.abs(nrm(shape)),
        }

    x = nrm((N, Cin, H, W))

    params = {
        # csp conv1 / conv2 : torch (Chid, Cin, 1, 1) -> (Cin, Chid)
        "w1": nrm((Cin, Chid), 0.3),
        "w2": nrm((Cin, Chid), 0.3),
        # bottleneck conv1 : torch (Chid, Chid, 1, 1) -> (Chid, Chid), stacked over n
        "wb1": nrm((n, Chid, Chid), 0.3),
        # bottleneck conv2 : torch (Chid, Chid, 3, 3) -> HWIO (3, 3, Chid, Chid)
        "wb2": nrm((n, 3, 3, Chid, Chid), 0.2),
        # csp conv3 : torch (Cout, 2*Chid, 1, 1) -> (2*Chid, Cout)
        "w3": nrm((2 * Chid, Cout), 0.3),
    }
    params.update(bn_params("bn1", (Chid,)))
    params.update(bn_params("bn2", (Chid,)))
    params.update(bn_params("bnb1", (n, Chid)))
    params.update(bn_params("bnb2", (n, Chid)))
    params.update(bn_params("bn3", (Cout,)))

    fwd = jax.jit(functools.partial(csp_layer_forward, n=n, shortcut=shortcut))
    out = jax.block_until_ready(fwd(x, params))

    ref = jax.block_until_ready(csp_layer_reference(x, params, n=n, shortcut=shortcut))
    assert out.shape == (N, Cout, H, W), out.shape
    # Tolerance widened vs f32 reference because the kernel feeds the MXU bf16
    # operands (f32 accumulation) with the BN scale folded into bf16 weights.
    np.testing.assert_allclose(np.asarray(out), np.asarray(ref), rtol=3e-2, atol=3e-2)

    print("KERNEL_OK")
</pallas_src>

<mosaic_0001>
module attributes {stable_mosaic.version = 11 : i64} {
  func.func @csp_layer_kernel(%arg0: i32, %arg1: memref<1x384x4xbf16, #tpu.memory_space<vmem>>, %arg2: memref<384x1xf32, #tpu.memory_space<vmem>>, %arg3: memref<4x2xbf16, #tpu.memory_space<vmem>>, %arg4: memref<1x2xf32, #tpu.memory_space<vmem>>, %arg5: memref<4x2xbf16, #tpu.memory_space<vmem>>, %arg6: memref<1x2xf32, #tpu.memory_space<vmem>>, %arg7: memref<1x2x2xbf16, #tpu.memory_space<vmem>>, %arg8: memref<1x1x2xf32, #tpu.memory_space<vmem>>, %arg9: memref<1x9x2x2xbf16, #tpu.memory_space<vmem>>, %arg10: memref<1x1x2xf32, #tpu.memory_space<vmem>>, %arg11: memref<2x4xbf16, #tpu.memory_space<vmem>>, %arg12: memref<2x4xbf16, #tpu.memory_space<vmem>>, %arg13: memref<1x4xf32, #tpu.memory_space<vmem>>, %arg14: memref<1x256x4xf32, #tpu.memory_space<vmem>>, %arg15: memref<456x2xf32, #tpu.memory_space<vmem>>) attributes {dimension_semantics = [#tpu.dimension_semantics<parallel>], iteration_bounds = array<i64: 2>, scalar_prefetch = 0 : i64, scratch_operands = 1 : i64, tpu.core_type = #tpu.core_type<tc>, window_params = [{transform_indices = @transform_0, window_bounds = array<i64: 1, 384, 4>}, {pipeline_mode = #tpu.pipeline_mode<synchronous>, transform_indices = @transform_1, window_bounds = array<i64: 384, 1>}, {pipeline_mode = #tpu.pipeline_mode<synchronous>, transform_indices = @transform_2, window_bounds = array<i64: 4, 2>}, {pipeline_mode = #tpu.pipeline_mode<synchronous>, transform_indices = @transform_3, window_bounds = array<i64: 1, 2>}, {pipeline_mode = #tpu.pipeline_mode<synchronous>, transform_indices = @transform_4, window_bounds = array<i64: 4, 2>}, {pipeline_mode = #tpu.pipeline_mode<synchronous>, transform_indices = @transform_5, window_bounds = array<i64: 1, 2>}, {pipeline_mode = #tpu.pipeline_mode<synchronous>, transform_indices = @transform_6, window_bounds = array<i64: 1, 2, 2>}, {pipeline_mode = #tpu.pipeline_mode<synchronous>, transform_indices = @transform_7, window_bounds = array<i64: 1, 1, 2>}, {pipeline_mode = #tpu.pipeline_mode<synchronous>, transform_indices = @transform_8, window_bounds = array<i64: 1, 9, 2, 2>}, {pipeline_mode = #tpu.pipeline_mode<synchronous>, transform_indices = @transform_9, window_bounds = array<i64: 1, 1, 2>}, {pipeline_mode = #tpu.pipeline_mode<synchronous>, transform_indices = @transform_10, window_bounds = array<i64: 2, 4>}, {pipeline_mode = #tpu.pipeline_mode<synchronous>, transform_indices = @transform_11, window_bounds = array<i64: 2, 4>}, {pipeline_mode = #tpu.pipeline_mode<synchronous>, transform_indices = @transform_12, window_bounds = array<i64: 1, 4>}, {transform_indices = @transform_13, window_bounds = array<i64: 1, 256, 4>}]} {
    %c0 = arith.constant 0 : index
    %c0_0 = arith.constant 0 : index
    %c0_1 = arith.constant 0 : index
    %0 = vector.load %arg1[%c0, %c0_0, %c0_1] : memref<1x384x4xbf16, #tpu.memory_space<vmem>>, vector<1x384x4xbf16>
    %1 = vector.shape_cast %0 : vector<1x384x4xbf16> to vector<384x4xbf16>
    %c0_2 = arith.constant 0 : index
    %c0_3 = arith.constant 0 : index
    %2 = vector.load %arg2[%c0_2, %c0_3] : memref<384x1xf32, #tpu.memory_space<vmem>>, vector<384x1xf32>
    %c0_4 = arith.constant 0 : index
    %c0_5 = arith.constant 0 : index
    %3 = vector.load %arg3[%c0_4, %c0_5] : memref<4x2xbf16, #tpu.memory_space<vmem>>, vector<4x2xbf16>
    %cst = arith.constant dense<0.000000e+00> : vector<384x2xf32>
    %4 = tpu.matmul %1, %3, %cst {dimension_numbers = #tpu.dot_dimension_numbers<[1], [0], [0], [1], [0, 0, 1, 1], [], []>} : vector<384x4xbf16>, vector<4x2xbf16>, vector<384x2xf32> -> vector<384x2xf32>
    %c0_6 = arith.constant 0 : index
    %c0_7 = arith.constant 0 : index
    %5 = vector.load %arg4[%c0_6, %c0_7] : memref<1x2xf32, #tpu.memory_space<vmem>>, vector<1x2xf32>
    %6 = vector.broadcast %5 : vector<1x2xf32> to vector<384x2xf32>
    %7 = arith.addf %4, %6 : vector<384x2xf32>
    %8 = arith.negf %7 : vector<384x2xf32>
    %9 = math.exp %8 : vector<384x2xf32>
    %cst_8 = arith.constant 1.000000e+00 : f32
    %10 = vector.broadcast %cst_8 : f32 to vector<384x2xf32>
    %11 = arith.addf %10, %9 : vector<384x2xf32>
    %12 = arith.divf %10, %11 : vector<384x2xf32>
    %13 = arith.mulf %7, %12 : vector<384x2xf32>
    %c0_9 = arith.constant 0 : index
    %c0_10 = arith.constant 0 : index
    %14 = vector.load %arg5[%c0_9, %c0_10] : memref<4x2xbf16, #tpu.memory_space<vmem>>, vector<4x2xbf16>
    %cst_11 = arith.constant dense<0.000000e+00> : vector<384x2xf32>
    %15 = tpu.matmul %1, %14, %cst_11 {dimension_numbers = #tpu.dot_dimension_numbers<[1], [0], [0], [1], [0, 0, 1, 1], [], []>} : vector<384x4xbf16>, vector<4x2xbf16>, vector<384x2xf32> -> vector<384x2xf32>
    %c0_12 = arith.constant 0 : index
    %c0_13 = arith.constant 0 : index
    %16 = vector.load %arg6[%c0_12, %c0_13] : memref<1x2xf32, #tpu.memory_space<vmem>>, vector<1x2xf32>
    %17 = vector.broadcast %16 : vector<1x2xf32> to vector<384x2xf32>
    %18 = arith.addf %15, %17 : vector<384x2xf32>
    %19 = arith.negf %18 : vector<384x2xf32>
    %20 = math.exp %19 : vector<384x2xf32>
    %cst_14 = arith.constant 1.000000e+00 : f32
    %21 = vector.broadcast %cst_14 : f32 to vector<384x2xf32>
    %22 = arith.addf %21, %20 : vector<384x2xf32>
    %23 = arith.divf %21, %22 : vector<384x2xf32>
    %24 = arith.mulf %18, %23 : vector<384x2xf32>
    %25 = arith.truncf %24 : vector<384x2xf32> to vector<384x2xbf16>
    %cst_15 = arith.constant 0.000000e+00 : f32
    %26 = vector.broadcast %cst_15 : f32 to vector<32x2xf32>
    %c0_16 = arith.constant 0 : index
    %c0_17 = arith.constant 0 : index
    %27 = vector.load %arg15[%c0_16, %c0_17] : memref<456x2xf32, #tpu.memory_space<vmem>>, vector<32x2xf32>
    tpu.vector_store %arg15[%c0_16, %c0_17], %26 {strides = array<i32>} : memref<456x2xf32, #tpu.memory_space<vmem>>, vector<32x2xf32>,
    %cst_18 = arith.constant 0.000000e+00 : f32
    %28 = vector.broadcast %cst_18 : f32 to vector<40x2xf32>
    %c416 = arith.constant 416 : index
    %c0_19 = arith.constant 0 : index
    %29 = vector.load %arg15[%c416, %c0_19] : memref<456x2xf32, #tpu.memory_space<vmem>>, vector<40x2xf32>
    tpu.vector_store %arg15[%c416, %c0_19], %28 {strides = array<i32>} : memref<456x2xf32, #tpu.memory_space<vmem>>, vector<40x2xf32>,
    %30 = arith.truncf %13 : vector<384x2xf32> to vector<384x2xbf16>
    %c0_20 = arith.constant 0 : index
    %c0_21 = arith.constant 0 : index
    %c0_22 = arith.constant 0 : index
    %31 = vector.load %arg7[%c0_20, %c0_21, %c0_22] : memref<1x2x2xbf16, #tpu.memory_space<vmem>>, vector<1x2x2xbf16>
    %32 = vector.shape_cast %31 : vector<1x2x2xbf16> to vector<2x2xbf16>
    %cst_23 = arith.constant dense<0.000000e+00> : vector<384x2xf32>
    %33 = tpu.matmul %30, %32, %cst_23 {dimension_numbers = #tpu.dot_dimension_numbers<[1], [0], [0], [1], [0, 0, 1, 1], [], []>} : vector<384x2xbf16>, vector<2x2xbf16>, vector<384x2xf32> -> vector<384x2xf32>
    %c0_24 = arith.constant 0 : index
    %c0_25 = arith.constant 0 : index
    %c0_26 = arith.constant 0 : index
    %34 = vector.load %arg8[%c0_24, %c0_25, %c0_26] : memref<1x1x2xf32, #tpu.memory_space<vmem>>, vector<1x1x2xf32>
    %35 = vector.shape_cast %34 : vector<1x1x2xf32> to vector<1x2xf32>
    %36 = vector.broadcast %35 : vector<1x2xf32> to vector<384x2xf32>
    %37 = arith.addf %33, %36 : vector<384x2xf32>
    %38 = arith.negf %37 : vector<384x2xf32>
    %39 = math.exp %38 : vector<384x2xf32>
    %cst_27 = arith.constant 1.000000e+00 : f32
    %40 = vector.broadcast %cst_27 : f32 to vector<384x2xf32>
    %41 = arith.addf %40, %39 : vector<384x2xf32>
    %42 = arith.divf %40, %41 : vector<384x2xf32>
    %43 = arith.mulf %37, %42 : vector<384x2xf32>
    %44 = vector.broadcast %2 : vector<384x1xf32> to vector<384x2xf32>
    %45 = arith.mulf %43, %44 : vector<384x2xf32>
    %c32 = arith.constant 32 : index
    %c0_28 = arith.constant 0 : index
    %46 = vector.load %arg15[%c32, %c0_28] : memref<456x2xf32, #tpu.memory_space<vmem>>, vector<384x2xf32>
    tpu.vector_store %arg15[%c32, %c0_28], %45 {strides = array<i32>} : memref<456x2xf32, #tpu.memory_space<vmem>>, vector<384x2xf32>,
    %c0_29 = arith.constant 0 : index
    %c0_30 = arith.constant 0 : index
    %c0_31 = arith.constant 0 : index
    %47 = vector.load %arg10[%c0_29, %c0_30, %c0_31] : memref<1x1x2xf32, #tpu.memory_space<vmem>>, vector<1x1x2xf32>
    %48 = vector.shape_cast %47 : vector<1x1x2xf32> to vector<1x2xf32>
    %c7 = arith.constant 7 : index
    %c0_32 = arith.constant 0 : index
    %49 = vector.load %arg15[%c7, %c0_32] : memref<456x2xf32, #tpu.memory_space<vmem>>, vector<384x2xf32>
    %50 = arith.truncf %49 : vector<384x2xf32> to vector<384x2xbf16>
    %c0_33 = arith.constant 0 : index
    %c0_34 = arith.constant 0 : index
    %c0_35 = arith.constant 0 : index
    %c0_36 = arith.constant 0 : index
    %51 = vector.load %arg9[%c0_33, %c0_34, %c0_35, %c0_36] : memref<1x9x2x2xbf16, #tpu.memory_space<vmem>>, vector<1x1x2x2xbf16>
    %52 = vector.shape_cast %51 : vector<1x1x2x2xbf16> to vector<2x2xbf16>
    %cst_37 = arith.constant dense<0.000000e+00> : vector<384x2xf32>
    %53 = tpu.matmul %50, %52, %cst_37 {dimension_numbers = #tpu.dot_dimension_numbers<[1], [0], [0], [1], [0, 0, 1, 1], [], []>} : vector<384x2xbf16>, vector<2x2xbf16>, vector<384x2xf32> -> vector<384x2xf32>
    %c8 = arith.constant 8 : index
    %c0_38 = arith.constant 0 : index
    %54 = vector.load %arg15[%c8, %c0_38] : memref<456x2xf32, #tpu.memory_space<vmem>>, vector<384x2xf32>
    %55 = arith.truncf %54 : vector<384x2xf32> to vector<384x2xbf16>
    %c0_39 = arith.constant 0 : index
    %c1 = arith.constant 1 : index
    %c0_40 = arith.constant 0 : index
    %c0_41 = arith.constant 0 : index
    %56 = vector.load %arg9[%c0_39, %c1, %c0_40, %c0_41] : memref<1x9x2x2xbf16, #tpu.memory_space<vmem>>, vector<1x1x2x2xbf16>
    %57 = vector.shape_cast %56 : vector<1x1x2x2xbf16> to vector<2x2xbf16>
    %cst_42 = arith.constant dense<0.000000e+00> : vector<384x2xf32>
    %58 = tpu.matmul %55, %57, %cst_42 {dimension_numbers = #tpu.dot_dimension_numbers<[1], [0], [0], [1], [0, 0, 1, 1], [], []>} : vector<384x2xbf16>, vector<2x2xbf16>, vector<384x2xf32> -> vector<384x2xf32>
    %59 = arith.addf %53, %58 : vector<384x2xf32>
    %c9 = arith.constant 9 : index
    %c0_43 = arith.constant 0 : index
    %60 = vector.load %arg15[%c9, %c0_43] : memref<456x2xf32, #tpu.memory_space<vmem>>, vector<384x2xf32>
    %61 = arith.truncf %60 : vector<384x2xf32> to vector<384x2xbf16>
    %c0_44 = arith.constant 0 : index
    %c2 = arith.constant 2 : index
    %c0_45 = arith.constant 0 : index
    %c0_46 = arith.constant 0 : index
    %62 = vector.load %arg9[%c0_44, %c2, %c0_45, %c0_46] : memref<1x9x2x2xbf16, #tpu.memory_space<vmem>>, vector<1x1x2x2xbf16>
    %63 = vector.shape_cast %62 : vector<1x1x2x2xbf16> to vector<2x2xbf16>
    %cst_47 = arith.constant dense<0.000000e+00> : vector<384x2xf32>
    %64 = tpu.matmul %61, %63, %cst_47 {dimension_numbers = #tpu.dot_dimension_numbers<[1], [0], [0], [1], [0, 0, 1, 1], [], []>} : vector<384x2xbf16>, vector<2x2xbf16>, vector<384x2xf32> -> vector<384x2xf32>
    %65 = arith.addf %59, %64 : vector<384x2xf32>
    %c31 = arith.constant 31 : index
    %c0_48 = arith.constant 0 : index
    %66 = vector.load %arg15[%c31, %c0_48] : memref<456x2xf32, #tpu.memory_space<vmem>>, vector<384x2xf32>
    %67 = arith.truncf %66 : vector<384x2xf32> to vector<384x2xbf16>
    %c0_49 = arith.constant 0 : index
    %c3 = arith.constant 3 : index
    %c0_50 = arith.constant 0 : index
    %c0_51 = arith.constant 0 : index
    %68 = vector.load %arg9[%c0_49, %c3, %c0_50, %c0_51] : memref<1x9x2x2xbf16, #tpu.memory_space<vmem>>, vector<1x1x2x2xbf16>
    %69 = vector.shape_cast %68 : vector<1x1x2x2xbf16> to vector<2x2xbf16>
    %cst_52 = arith.constant dense<0.000000e+00> : vector<384x2xf32>
    %70 = tpu.matmul %67, %69, %cst_52 {dimension_numbers = #tpu.dot_dimension_numbers<[1], [0], [0], [1], [0, 0, 1, 1], [], []>} : vector<384x2xbf16>, vector<2x2xbf16>, vector<384x2xf32> -> vector<384x2xf32>
    %71 = arith.addf %65, %70 : vector<384x2xf32>
    %c32_53 = arith.constant 32 : index
    %c0_54 = arith.constant 0 : index
    %72 = vector.load %arg15[%c32_53, %c0_54] : memref<456x2xf32, #tpu.memory_space<vmem>>, vector<384x2xf32>
    %73 = arith.truncf %72 : vector<384x2xf32> to vector<384x2xbf16>
    %c0_55 = arith.constant 0 : index
    %c4 = arith.constant 4 : index
    %c0_56 = arith.constant 0 : index
    %c0_57 = arith.constant 0 : index
    %74 = vector.load %arg9[%c0_55, %c4, %c0_56, %c0_57] : memref<1x9x2x2xbf16, #tpu.memory_space<vmem>>, vector<1x1x2x2xbf16>
    %75 = vector.shape_cast %74 : vector<1x1x2x2xbf16> to vector<2x2xbf16>
    %cst_58 = arith.constant dense<0.000000e+00> : vector<384x2xf32>
    %76 = tpu.matmul %73, %75, %cst_58 {dimension_numbers = #tpu.dot_dimension_numbers<[1], [0], [0], [1], [0, 0, 1, 1], [], []>} : vector<384x2xbf16>, vector<2x2xbf16>, vector<384x2xf32> -> vector<384x2xf32>
    %77 = arith.addf %71, %76 : vector<384x2xf32>
    %c33 = arith.constant 33 : index
    %c0_59 = arith.constant 0 : index
    %78 = vector.load %arg15[%c33, %c0_59] : memref<456x2xf32, #tpu.memory_space<vmem>>, vector<384x2xf32>
    %79 = arith.truncf %78 : vector<384x2xf32> to vector<384x2xbf16>
    %c0_60 = arith.constant 0 : index
    %c5 = arith.constant 5 : index
    %c0_61 = arith.constant 0 : index
    %c0_62 = arith.constant 0 : index
    %80 = vector.load %arg9[%c0_60, %c5, %c0_61, %c0_62] : memref<1x9x2x2xbf16, #tpu.memory_space<vmem>>, vector<1x1x2x2xbf16>
    %81 = vector.shape_cast %80 : vector<1x1x2x2xbf16> to vector<2x2xbf16>
    %cst_63 = arith.constant dense<0.000000e+00> : vector<384x2xf32>
    %82 = tpu.matmul %79, %81, %cst_63 {dimension_numbers = #tpu.dot_dimension_numbers<[1], [0], [0], [1], [0, 0, 1, 1], [], []>} : vector<384x2xbf16>, vector<2x2xbf16>, vector<384x2xf32> -> vector<384x2xf32>
    %83 = arith.addf %77, %82 : vector<384x2xf32>
    %c55 = arith.constant 55 : index
    %c0_64 = arith.constant 0 : index
    %84 = vector.load %arg15[%c55, %c0_64] : memref<456x2xf32, #tpu.memory_space<vmem>>, vector<384x2xf32>
    %85 = arith.truncf %84 : vector<384x2xf32> to vector<384x2xbf16>
    %c0_65 = arith.constant 0 : index
    %c6 = arith.constant 6 : index
    %c0_66 = arith.constant 0 : index
    %c0_67 = arith.constant 0 : index
    %86 = vector.load %arg9[%c0_65, %c6, %c0_66, %c0_67] : memref<1x9x2x2xbf16, #tpu.memory_space<vmem>>, vector<1x1x2x2xbf16>
    %87 = vector.shape_cast %86 : vector<1x1x2x2xbf16> to vector<2x2xbf16>
    %cst_68 = arith.constant dense<0.000000e+00> : vector<384x2xf32>
    %88 = tpu.matmul %85, %87, %cst_68 {dimension_numbers = #tpu.dot_dimension_numbers<[1], [0], [0], [1], [0, 0, 1, 1], [], []>} : vector<384x2xbf16>, vector<2x2xbf16>, vector<384x2xf32> -> vector<384x2xf32>
    %89 = arith.addf %83, %88 : vector<384x2xf32>
    %c56 = arith.constant 56 : index
    %c0_69 = arith.constant 0 : index
    %90 = vector.load %arg15[%c56, %c0_69] : memref<456x2xf32, #tpu.memory_space<vmem>>, vector<384x2xf32>
    %91 = arith.truncf %90 : vector<384x2xf32> to vector<384x2xbf16>
    %c0_70 = arith.constant 0 : index
    %c7_71 = arith.constant 7 : index
    %c0_72 = arith.constant 0 : index
    %c0_73 = arith.constant 0 : index
    %92 = vector.load %arg9[%c0_70, %c7_71, %c0_72, %c0_73] : memref<1x9x2x2xbf16, #tpu.memory_space<vmem>>, vector<1x1x2x2xbf16>
    %93 = vector.shape_cast %92 : vector<1x1x2x2xbf16> to vector<2x2xbf16>
    %cst_74 = arith.constant dense<0.000000e+00> : vector<384x2xf32>
    %94 = tpu.matmul %91, %93, %cst_74 {dimension_numbers = #tpu.dot_dimension_numbers<[1], [0], [0], [1], [0, 0, 1, 1], [], []>} : vector<384x2xbf16>, vector<2x2xbf16>, vector<384x2xf32> -> vector<384x2xf32>
    %95 = arith.addf %89, %94 : vector<384x2xf32>
    %c57 = arith.constant 57 : index
    %c0_75 = arith.constant 0 : index
    %96 = vector.load %arg15[%c57, %c0_75] : memref<456x2xf32, #tpu.memory_space<vmem>>, vector<384x2xf32>
    %97 = arith.truncf %96 : vector<384x2xf32> to vector<384x2xbf16>
    %c0_76 = arith.constant 0 : index
    %c8_77 = arith.constant 8 : index
    %c0_78 = arith.constant 0 : index
    %c0_79 = arith.constant 0 : index
    %98 = vector.load %arg9[%c0_76, %c8_77, %c0_78, %c0_79] : memref<1x9x2x2xbf16, #tpu.memory_space<vmem>>, vector<1x1x2x2xbf16>
    %99 = vector.shape_cast %98 : vector<1x1x2x2xbf16> to vector<2x2xbf16>
    %cst_80 = arith.constant dense<0.000000e+00> : vector<384x2xf32>
    %100 = tpu.matmul %97, %99, %cst_80 {dimension_numbers = #tpu.dot_dimension_numbers<[1], [0], [0], [1], [0, 0, 1, 1], [], []>} : vector<384x2xbf16>, vector<2x2xbf16>, vector<384x2xf32> -> vector<384x2xf32>
    %101 = arith.addf %95, %100 : vector<384x2xf32>
    %102 = vector.broadcast %48 : vector<1x2xf32> to vector<384x2xf32>
    %103 = arith.addf %101, %102 : vector<384x2xf32>
    %104 = arith.negf %103 : vector<384x2xf32>
    %105 = math.exp %104 : vector<384x2xf32>
    %cst_81 = arith.constant 1.000000e+00 : f32
    %106 = vector.broadcast %cst_81 : f32 to vector<384x2xf32>
    %107 = arith.addf %106, %105 : vector<384x2xf32>
    %108 = arith.divf %106, %107 : vector<384x2xf32>
    %109 = arith.mulf %103, %108 : vector<384x2xf32>
    %110 = arith.addf %109, %13 : vector<384x2xf32>
    %111 = arith.truncf %110 : vector<384x2xf32> to vector<384x2xbf16>
    %c0_82 = arith.constant 0 : index
    %c0_83 = arith.constant 0 : index
    %112 = vector.load %arg11[%c0_82, %c0_83] : memref<2x4xbf16, #tpu.memory_space<vmem>>, vector<2x4xbf16>
    %cst_84 = arith.constant dense<0.000000e+00> : vector<384x4xf32>
    %113 = tpu.matmul %111, %112, %cst_84 {dimension_numbers = #tpu.dot_dimension_numbers<[1], [0], [0], [1], [0, 0, 1, 1], [], []>} : vector<384x2xbf16>, vector<2x4xbf16>, vector<384x4xf32> -> vector<384x4xf32>
    %c0_85 = arith.constant 0 : index
    %c0_86 = arith.constant 0 : index
    %114 = vector.load %arg12[%c0_85, %c0_86] : memref<2x4xbf16, #tpu.memory_space<vmem>>, vector<2x4xbf16>
    %cst_87 = arith.constant dense<0.000000e+00> : vector<384x4xf32>
    %115 = tpu.matmul %25, %114, %cst_87 {dimension_numbers = #tpu.dot_dimension_numbers<[1], [0], [0], [1], [0, 0, 1, 1], [], []>} : vector<384x2xbf16>, vector<2x4xbf16>, vector<384x4xf32> -> vector<384x4xf32>
    %116 = arith.addf %113, %115 : vector<384x4xf32>
    %c0_88 = arith.constant 0 : index
    %c0_89 = arith.constant 0 : index
    %117 = vector.load %arg13[%c0_88, %c0_89] : memref<1x4xf32, #tpu.memory_space<vmem>>, vector<1x4xf32>
    %118 = vector.broadcast %117 : vector<1x4xf32> to vector<384x4xf32>
    %119 = arith.addf %116, %118 : vector<384x4xf32>
    %120 = arith.negf %119 : vector<384x4xf32>
    %121 = math.exp %120 : vector<384x4xf32>
    %cst_90 = arith.constant 1.000000e+00 : f32
    %122 = vector.broadcast %cst_90 : f32 to vector<384x4xf32>
    %123 = arith.addf %122, %121 : vector<384x4xf32>
    %124 = arith.divf %122, %123 : vector<384x4xf32>
    %125 = arith.mulf %119, %124 : vector<384x4xf32>
    %126 = vector.shape_cast %125 : vector<384x4xf32> to vector<16x24x4xf32>
    %127 = vector.extract_strided_slice %126 {offsets = [0, 0, 0], sizes = [16, 16, 4], strides = [1, 1, 1]} : vector<16x24x4xf32> to vector<16x16x4xf32>
    %128 = vector.shape_cast %127 : vector<16x16x4xf32> to vector<256x4xf32>
    %c0_91 = arith.constant 0 : index
    %c0_92 = arith.constant 0 : index
    %c0_93 = arith.constant 0 : index
    %129 = vector.load %arg14[%c0_91, %c0_92, %c0_93] : memref<1x256x4xf32, #tpu.memory_space<vmem>>, vector<1x256x4xf32>
    %130 = vector.shape_cast %129 : vector<1x256x4xf32> to vector<256x4xf32>
    %131 = vector.shape_cast %128 : vector<256x4xf32> to vector<1x256x4xf32>
    tpu.vector_store %arg14[%c0_91, %c0_92, %c0_93], %131 {strides = array<i32>} : memref<1x256x4xf32, #tpu.memory_space<vmem>>, vector<1x256x4xf32>,
    return
  }
  func.func @transform_0(%arg0: i32) -> (i32, i32, i32) {
    %c0_i32 = arith.constant 0 : i32
    %c0_i32_0 = arith.constant 0 : i32
    %c0_i32_1 = arith.constant 0 : i32
    return %arg0, %c0_i32, %c0_i32_0 : i32, i32, i32
  }
  func.func @transform_1(%arg0: i32) -> (i32, i32) {
    %c0_i32 = arith.constant 0 : i32
    %c0_i32_0 = arith.constant 0 : i32
    %c0_i32_1 = arith.constant 0 : i32
    return %c0_i32, %c0_i32_0 : i32, i32
  }
  func.func @transform_2(%arg0: i32) -> (i32, i32) {
    %c0_i32 = arith.constant 0 : i32
    %c0_i32_0 = arith.constant 0 : i32
    %c0_i32_1 = arith.constant 0 : i32
    return %c0_i32, %c0_i32_0 : i32, i32
  }
  func.func @transform_3(%arg0: i32) -> (i32, i32) {
    %c0_i32 = arith.constant 0 : i32
    %c0_i32_0 = arith.constant 0 : i32
    %c0_i32_1 = arith.constant 0 : i32
    return %c0_i32, %c0_i32_0 : i32, i32
  }
  func.func @transform_4(%arg0: i32) -> (i32, i32) {
    %c0_i32 = arith.constant 0 : i32
    %c0_i32_0 = arith.constant 0 : i32
    %c0_i32_1 = arith.constant 0 : i32
    return %c0_i32, %c0_i32_0 : i32, i32
  }
  func.func @transform_5(%arg0: i32) -> (i32, i32) {
    %c0_i32 = arith.constant 0 : i32
    %c0_i32_0 = arith.constant 0 : i32
    %c0_i32_1 = arith.constant 0 : i32
    return %c0_i32, %c0_i32_0 : i32, i32
  }
  func.func @transform_6(%arg0: i32) -> (i32, i32, i32) {
    %c0_i32 = arith.constant 0 : i32
    %c0_i32_0 = arith.constant 0 : i32
    %c0_i32_1 = arith.constant 0 : i32
    %c0_i32_2 = arith.constant 0 : i32
    return %c0_i32, %c0_i32_0, %c0_i32_1 : i32, i32, i32
  }
  func.func @transform_7(%arg0: i32) -> (i32, i32, i32) {
    %c0_i32 = arith.constant 0 : i32
    %c0_i32_0 = arith.constant 0 : i32
    %c0_i32_1 = arith.constant 0 : i32
    %c0_i32_2 = arith.constant 0 : i32
    return %c0_i32, %c0_i32_0, %c0_i32_1 : i32, i32, i32
  }
  func.func @transform_8(%arg0: i32) -> (i32, i32, i32, i32) {
    %c0_i32 = arith.constant 0 : i32
    %c0_i32_0 = arith.constant 0 : i32
    %c0_i32_1 = arith.constant 0 : i32
    %c0_i32_2 = arith.constant 0 : i32
    %c0_i32_3 = arith.constant 0 : i32
    return %c0_i32, %c0_i32_0, %c0_i32_1, %c0_i32_2 : i32, i32, i32, i32
  }
  func.func @transform_9(%arg0: i32) -> (i32, i32, i32) {
    %c0_i32 = arith.constant 0 : i32
    %c0_i32_0 = arith.constant 0 : i32
    %c0_i32_1 = arith.constant 0 : i32
    %c0_i32_2 = arith.constant 0 : i32
    return %c0_i32, %c0_i32_0, %c0_i32_1 : i32, i32, i32
  }
  func.func @transform_10(%arg0: i32) -> (i32, i32) {
    %c0_i32 = arith.constant 0 : i32
    %c0_i32_0 = arith.constant 0 : i32
    %c0_i32_1 = arith.constant 0 : i32
    return %c0_i32, %c0_i32_0 : i32, i32
  }
  func.func @transform_11(%arg0: i32) -> (i32, i32) {
    %c0_i32 = arith.constant 0 : i32
    %c0_i32_0 = arith.constant 0 : i32
    %c0_i32_1 = arith.constant 0 : i32
    return %c0_i32, %c0_i32_0 : i32, i32
  }
  func.func @transform_12(%arg0: i32) -> (i32, i32) {
    %c0_i32 = arith.constant 0 : i32
    %c0_i32_0 = arith.constant 0 : i32
    %c0_i32_1 = arith.constant 0 : i32
    return %c0_i32, %c0_i32_0 : i32, i32
  }
  func.func @transform_13(%arg0: i32) -> (i32, i32, i32) {
    %c0_i32 = arith.constant 0 : i32
    %c0_i32_0 = arith.constant 0 : i32
    %c0_i32_1 = arith.constant 0 : i32
    return %arg0, %c0_i32, %c0_i32_0 : i32, i32, i32
  }
}

</mosaic_0001>

<llo_original>
// kernel: tile.8
$region0: #{tile.8}
  #allocation0 [shape = 's32[1]{0}', space=sflag, size = 0x4, scoped, tag = 'scoped memory for tile.8']
  %s0 = inlined_call_operand.vmem [shape: f32[24], index: 0, kind: input, shape index: {}]
  %s1 = inlined_call_operand.vmem [shape: f32[16,24], index: 1, kind: output, shape index: {}]
  // Predicated region
  $region2: #{tile.8} parent=0 // pred_check
    _
  $region3: #{tile.8} parent=0 // pred_check_branch
    %3 = sbr.rel (0) target = $region5
  $region4: #{tile.8} parent=0 // pred_region
    _
  $region5: #{tile.8} parent=0 // pred_fallthru
    _
  %v4 = vld [vmem:[%s0] ss:$0 sm:$0xff]
  %5 = vst [vmem:[%s1] sm:$0xff] %v4
  %s6 = scalar_lea.vmem %s1, 8
  %7 = vst [vmem:[%s6] sm:$0xff] %v4

// kernel: tile.0
$region0: #{tile.0}
  %s0 = inlined_call_operand.vmem [shape: f32[16,24], index: 0, kind: input, shape index: {}]
  %s1 = inlined_call_operand.vmem [shape: f32[384,1], index: 1, kind: output, shape index: {}]
  %v2 = vld [vmem:[%s0] sm:$0xff]
  %vm3 = vcmask 7168
  %4 = vst.msk [vmem:[%s1] ss:$24 sm:$0xf] %vm3, %v2
  %5 = vst.msk [vmem:[%s1] ss:$24 sm:$0xf0] %vm3, %v2
  %s6 = scalar_lea.vmem %s0, 8
  %v7 = vld [vmem:[%s6] sm:$0xff]
  %vm8 = vcmask 7168
  %s9 = scalar_lea.vmem %s1, 192
  %10 = vst.msk [vmem:[%s9] ss:$24 sm:$0xf] %vm8, %v7
  %s11 = scalar_lea.vmem %s1, 192
  %12 = vst.msk [vmem:[%s11] ss:$24 sm:$0xf0] %vm8, %v7
  %v13 = vld.sshfl [vmem:[%s0] sm:$0xff pattern:$0x56741230]
  %14 = vrot.lane.b32.xlu0 %v13, 127
  %v15 = vpop.permute.xlu0 %14
  %vm16 = vcmask 7168
  %s17 = scalar_lea.vmem %s1, 1
  %18 = vst.msk [vmem:[%s17] ss:$72 sm:$0x3] %vm16, %v15
  %s19 = scalar_lea.vmem %s1, 97
  %20 = vst.msk [vmem:[%s19] ss:$-24 sm:$0xc] %vm16, %v15
  %s21 = scalar_lea.vmem %s1, 4294967105
  %22 = vst.msk [vmem:[%s21] ss:$72 sm:$0x30] %vm16, %v15
  %s23 = scalar_lea.vmem %s1, 289
  %24 = vst.msk [vmem:[%s23] ss:$-24 sm:$0xc0] %vm16, %v15
  %s25 = scalar_lea.vmem %s0, 8
  %v26 = vld.sshfl [vmem:[%s25] sm:$0xff pattern:$0x56741230]
  %27 = vrot.lane.b32.xlu0 %v26, 127
  %v28 = vpop.permute.xlu0 %27
  %vm29 = vcmask 7168
  %s30 = scalar_lea.vmem %s1, 193
  %31 = vst.msk [vmem:[%s30] ss:$72 sm:$0x3] %vm29, %v28
  %s32 = scalar_lea.vmem %s1, 289
  %33 = vst.msk [vmem:[%s32] ss:$-24 sm:$0xc] %vm29, %v28
  %s34 = scalar_lea.vmem %s1, 1
  %35 = vst.msk [vmem:[%s34] ss:$72 sm:$0x30] %vm29, %v28
  %s36 = scalar_lea.vmem %s1, 481
  %37 = vst.msk [vmem:[%s36] ss:$-24 sm:$0xc0] %vm29, %v28
  %v38 = vld.sshfl [vmem:[%s0] sm:$0xff pattern:$0x56741230]
  %39 = vrot.lane.b32.xlu0 %v38, 126
  %v40 = vpop.permute.xlu0 %39
  %vm41 = vcmask 7168
  %s42 = scalar_lea.vmem %s1, 2
  %43 = vst.msk [vmem:[%s42] ss:$72 sm:$0x3] %vm41, %v40
  %s44 = scalar_lea.vmem %s1, 98
  %45 = vst.msk [vmem:[%s44] ss:$-24 sm:$0xc] %vm41, %v40
  %s46 = scalar_lea.vmem %s1, 4294967106
  %47 = vst.msk [vmem:[%s46] ss:$72 sm:$0x30] %vm41, %v40
  %s48 = scalar_lea.vmem %s1, 290
  %49 = vst.msk [vmem:[%s48] ss:$-24 sm:$0xc0] %vm41, %v40
  %s50 = scalar_lea.vmem %s0, 8
  %v51 = vld.sshfl [vmem:[%s50] sm:$0xff pattern:$0x56741230]
  %52 = vrot.lane.b32.xlu0 %v51, 126
  %v53 = vpop.permute.xlu0 %52
  %vm54 = vcmask 7168
  %s55 = scalar_lea.vmem %s1, 194
  %56 = vst.msk [vmem:[%s55] ss:$72 sm:$0x3] %vm54, %v53
  %s57 = scalar_lea.vmem %s1, 290
  %58 = vst.msk [vmem:[%s57] ss:$-24 sm:$0xc] %vm54, %v53
  %s59 = scalar_lea.vmem %s1, 2
  %60 = vst.msk [vmem:[%s59] ss:$72 sm:$0x30] %vm54, %v53
  %s61 = scalar_lea.vmem %s1, 482
  %62 = vst.msk [vmem:[%s61] ss:$-24 sm:$0xc0] %vm54, %v53
  %v63 = vld.sshfl [vmem:[%s0] sm:$0xff pattern:$0x56741230]
  %64 = vrot.lane.b32.xlu0 %v63, 125
  %v65 = vpop.permute.xlu0 %64
  %vm66 = vcmask 7168
  %s67 = scalar_lea.vmem %s1, 3
  %68 = vst.msk [vmem:[%s67] ss:$72 sm:$0x3] %vm66, %v65
  %s69 = scalar_lea.vmem %s1, 99
  %70 = vst.msk [vmem:[%s69] ss:$-24 sm:$0xc] %vm66, %v65
  %s71 = scalar_lea.vmem %s1, 4294967107
  %72 = vst.msk [vmem:[%s71] ss:$72 sm:$0x30] %vm66, %v65
  %s73 = scalar_lea.vmem %s1, 291
  %74 = vst.msk [vmem:[%s73] ss:$-24 sm:$0xc0] %vm66, %v65
  %s75 = scalar_lea.vmem %s0, 8
  %v76 = vld.sshfl [vmem:[%s75] sm:$0xff pattern:$0x56741230]
  %77 = vrot.lane.b32.xlu0 %v76, 125
  %v78 = vpop.permute.xlu0 %77
  %vm79 = vcmask 7168
  %s80 = scalar_lea.vmem %s1, 195
  %81 = vst.msk [vmem:[%s80] ss:$72 sm:$0x3] %vm79, %v78
  %s82 = scalar_lea.vmem %s1, 291
  %83 = vst.msk [vmem:[%s82] ss:$-24 sm:$0xc] %vm79, %v78
  %s84 = scalar_lea.vmem %s1, 3
  %85 = vst.msk [vmem:[%s84] ss:$72 sm:$0x30] %vm79, %v78
  %s86 = scalar_lea.vmem %s1, 483
  %87 = vst.msk [vmem:[%s86] ss:$-24 sm:$0xc0] %vm79, %v78
  %v88 = vld.sshfl [vmem:[%s0] sm:$0xff pattern:$0x56741230]
  %89 = vrot.lane.b32.xlu0 %v88, 124
  %v90 = vpop.permute.xlu0 %89
  %vm91 = vcmask 7168
  %s92 = scalar_lea.vmem %s1, 4
  %93 = vst.msk [vmem:[%s92] ss:$72 sm:$0x3] %vm91, %v90
  %s94 = scalar_lea.vmem %s1, 100
  %95 = vst.msk [vmem:[%s94] ss:$-24 sm:$0xc] %vm91, %v90
  %s96 = scalar_lea.vmem %s1, 4294967108
  %97 = vst.msk [vmem:[%s96] ss:$72 sm:$0x30] %vm91, %v90
  %s98 = scalar_lea.vmem %s1, 292
  %99 = vst.msk [vmem:[%s98] ss:$-24 sm:$0xc0] %vm91, %v90
  %s100 = scalar_lea.vmem %s0, 8
  %v101 = vld.sshfl [vmem:[%s100] sm:$0xff pattern:$0x56741230]
  %102 = vrot.lane.b32.xlu0 %v101, 124
  %v103 = vpop.permute.xlu0 %102
  %vm104 = vcmask 7168
  %s105 = scalar_lea.vmem %s1, 196
  %106 = vst.msk [vmem:[%s105] ss:$72 sm:$0x3] %vm104, %v103
  %s107 = scalar_lea.vmem %s1, 292
  %108 = vst.msk [vmem:[%s107] ss:$-24 sm:$0xc] %vm104, %v103
  %s109 = scalar_lea.vmem %s1, 4
  %110 = vst.msk [vmem:[%s109] ss:$72 sm:$0x30] %vm104, %v103
  %s111 = scalar_lea.vmem %s1, 484
  %112 = vst.msk [vmem:[%s111] ss:$-24 sm:$0xc0] %vm104, %v103
  %v113 = vld.sshfl [vmem:[%s0] sm:$0xff pattern:$0x56741230]
  %114 = vrot.lane.b32.xlu0 %v113, 123
  %v115 = vpop.permute.xlu0 %114
  %vm116 = vcmask 7168
  %s117 = scalar_lea.vmem %s1, 5
  %118 = vst.msk [vmem:[%s117] ss:$72 sm:$0x3] %vm116, %v115
  %s119 = scalar_lea.vmem %s1, 101
  %120 = vst.msk [vmem:[%s119] ss:$-24 sm:$0xc] %vm116, %v115
  %s121 = scalar_lea.vmem %s1, 4294967109
  %122 = vst.msk [vmem:[%s121] ss:$72 sm:$0x30] %vm116, %v115
  %s123 = scalar_lea.vmem %s1, 293
  %124 = vst.msk [vmem:[%s123] ss:$-24 sm:$0xc0] %vm116, %v115
  %s125 = scalar_lea.vmem %s0, 8
  %v126 = vld.sshfl [vmem:[%s125] sm:$0xff pattern:$0x56741230]
  %127 = vrot.lane.b32.xlu0 %v126, 123
  %v128 = vpop.permute.xlu0 %127
  %vm129 = vcmask 7168
  %s130 = scalar_lea.vmem %s1, 197
  %131 = vst.msk [vmem:[%s130] ss:$72 sm:$0x3] %vm129, %v128
  %s132 = scalar_lea.vmem %s1, 293
  %133 = vst.msk [vmem:[%s132] ss:$-24 sm:$0xc] %vm129, %v128
  %s134 = scalar_lea.vmem %s1, 5
  %135 = vst.msk [vmem:[%s134] ss:$72 sm:$0x30] %vm129, %v128
  %s136 = scalar_lea.vmem %s1, 485
  %137 = vst.msk [vmem:[%s136] ss:$-24 sm:$0xc0] %vm129, %v128
  %v138 = vld.sshfl [vmem:[%s0] sm:$0xff pattern:$0x56741230]
  %139 = vrot.lane.b32.xlu0 %v138, 122
  %v140 = vpop.permute.xlu0 %139
  %vm141 = vcmask 7168
  %s142 = scalar_lea.vmem %s1, 6
  %143 = vst.msk [vmem:[%s142] ss:$72 sm:$0x3] %vm141, %v140
  %s144 = scalar_lea.vmem %s1, 102
  %145 = vst.msk [vmem:[%s144] ss:$-24 sm:$0xc] %vm141, %v140
  %s146 = scalar_lea.vmem %s1, 4294967110
  %147 = vst.msk [vmem:[%s146] ss:$72 sm:$0x30] %vm141, %v140
  %s148 = scalar_lea.vmem %s1, 294
  %149 = vst.msk [vmem:[%s148] ss:$-24 sm:$0xc0] %vm141, %v140
  %s150 = scalar_lea.vmem %s0, 8
  %v151 = vld.sshfl [vmem:[%s150] sm:$0xff pattern:$0x56741230]
  %152 = vrot.lane.b32.xlu0 %v151, 122
  %v153 = vpop.permute.xlu0 %152
  %vm154 = vcmask 7168
  %s155 = scalar_lea.vmem %s1, 198
  %156 = vst.msk [vmem:[%s155] ss:$72 sm:$0x3] %vm154, %v153
  %s157 = scalar_lea.vmem %s1, 294
  %158 = vst.msk [vmem:[%s157] ss:$-24 sm:$0xc] %vm154, %v153
  %s159 = scalar_lea.vmem %s1, 6
  %160 = vst.msk [vmem:[%s159] ss:$72 sm:$0x30] %vm154, %v153
  %s161 = scalar_lea.vmem %s1, 486
  %162 = vst.msk [vmem:[%s161] ss:$-24 sm:$0xc0] %vm154, %v153
  %v163 = vld.sshfl [vmem:[%s0] sm:$0xff pattern:$0x56741230]
  %164 = vrot.lane.b32.xlu0 %v163, 121
  %v165 = vpop.permute.xlu0 %164
  %vm166 = vcmask 7168
  %s167 = scalar_lea.vmem %s1, 7
  %168 = vst.msk [vmem:[%s167] ss:$72 sm:$0x3] %vm166, %v165
  %s169 = scalar_lea.vmem %s1, 103
  %170 = vst.msk [vmem:[%s169] ss:$-24 sm:$0xc] %vm166, %v165
  %s171 = scalar_lea.vmem %s1, 4294967111
  %172 = vst.msk [vmem:[%s171] ss:$72 sm:$0x30] %vm166, %v165
  %s173 = scalar_lea.vmem %s1, 295
  %174 = vst.msk [vmem:[%s173] ss:$-24 sm:$0xc0] %vm166, %v165
  %s175 = scalar_lea.vmem %s0, 8
  %v176 = vld.sshfl [vmem:[%s175] sm:$0xff pattern:$0x56741230]
  %177 = vrot.lane.b32.xlu0 %v176, 121
  %v178 = vpop.permute.xlu0 %177
  %vm179 = vcmask 7168
  %s180 = scalar_lea.vmem %s1, 199
  %181 = vst.msk [vmem:[%s180] ss:$72 sm:$0x3] %vm179, %v178
  %s182 = scalar_lea.vmem %s1, 295
  %183 = vst.msk [vmem:[%s182] ss:$-24 sm:$0xc] %vm179, %v178
  %s184 = scalar_lea.vmem %s1, 7
  %185 = vst.msk [vmem:[%s184] ss:$72 sm:$0x30] %vm179, %v178
  %s186 = scalar_lea.vmem %s1, 487
  %187 = vst.msk [vmem:[%s186] ss:$-24 sm:$0xc0] %vm179, %v178
  %v188 = vld.sshfl [vmem:[%s0] sm:$0xff pattern:$0x67452301]
  %189 = vrot.lane.b32.xlu0 %v188, 120
  %v190 = vpop.permute.xlu0 %189
  %vm191 = vcmask 7168
  %s192 = scalar_lea.vmem %s1, 32
  %193 = vst.msk [vmem:[%s192] ss:$-24 sm:$0x3] %vm191, %v190
  %s194 = scalar_lea.vmem %s1, 128
  %195 = vst.msk [vmem:[%s194] ss:$-24 sm:$0xc] %vm191, %v190
  %s196 = scalar_lea.vmem %s1, 224
  %197 = vst.msk [vmem:[%s196] ss:$-24 sm:$0x30] %vm191, %v190
  %s198 = scalar_lea.vmem %s1, 320
  %199 = vst.msk [vmem:[%s198] ss:$-24 sm:$0xc0] %vm191, %v190
  %s200 = scalar_lea.vmem %s0, 8
  %v201 = vld.sshfl [vmem:[%s200] sm:$0xff pattern:$0x67452301]
  %202 = vrot.lane.b32.xlu0 %v201, 120
  %v203 = vpop.permute.xlu0 %202
  %vm204 = vcmask 7168
  %s205 = scalar_lea.vmem %s1, 224
  %206 = vst.msk [vmem:[%s205] ss:$-24 sm:$0x3] %vm204, %v203
  %s207 = scalar_lea.vmem %s1, 320
  %208 = vst.msk [vmem:[%s207] ss:$-24 sm:$0xc] %vm204, %v203
  %s209 = scalar_lea.vmem %s1, 416
  %210 = vst.msk [vmem:[%s209] ss:$-24 sm:$0x30] %vm204, %v203
  %s211 = scalar_lea.vmem %s1, 512
  %212 = vst.msk [vmem:[%s211] ss:$-24 sm:$0xc0] %vm204, %v203
  %v213 = vld.sshfl [vmem:[%s0] sm:$0xff pattern:$0x67452301]
  %214 = vrot.lane.b32.xlu0 %v213, 119
  %v215 = vpop.permute.xlu0 %214
  %vm216 = vcmask 7168
  %s217 = scalar_lea.vmem %s1, 33
  %218 = vst.msk [vmem:[%s217] ss:$-24 sm:$0x3] %vm216, %v215
  %s219 = scalar_lea.vmem %s1, 129
  %220 = vst.msk [vmem:[%s219] ss:$-24 sm:$0xc] %vm216, %v215
  %s221 = scalar_lea.vmem %s1, 225
  %222 = vst.msk [vmem:[%s221] ss:$-24 sm:$0x30] %vm216, %v215
  %s223 = scalar_lea.vmem %s1, 321
  %224 = vst.msk [vmem:[%s223] ss:$-24 sm:$0xc0] %vm216, %v215
  %s225 = scalar_lea.vmem %s0, 8
  %v226 = vld.sshfl [vmem:[%s225] sm:$0xff pattern:$0x67452301]
  %227 = vrot.lane.b32.xlu0 %v226, 119
  %v228 = vpop.permute.xlu0 %227
  %vm229 = vcmask 7168
  %s230 = scalar_lea.vmem %s1, 225
  %231 = vst.msk [vmem:[%s230] ss:$-24 sm:$0x3] %vm229, %v228
  %s232 = scalar_lea.vmem %s1, 321
  %233 = vst.msk [vmem:[%s232] ss:$-24 sm:$0xc] %vm229, %v228
  %s234 = scalar_lea.vmem %s1, 417
  %235 = vst.msk [vmem:[%s234] ss:$-24 sm:$0x30] %vm229, %v228
  %s236 = scalar_lea.vmem %s1, 513
  %237 = vst.msk [vmem:[%s236] ss:$-24 sm:$0xc0] %vm229, %v228
  %v238 = vld.sshfl [vmem:[%s0] sm:$0xff pattern:$0x67452301]
  %239 = vrot.lane.b32.xlu0 %v238, 118
  %v240 = vpop.permute.xlu0 %239
  %vm241 = vcmask 7168
  %s242 = scalar_lea.vmem %s1, 34
  %243 = vst.msk [vmem:[%s242] ss:$-24 sm:$0x3] %vm241, %v240
  %s244 = scalar_lea.vmem %s1, 130
  %245 = vst.msk [vmem:[%s244] ss:$-24 sm:$0xc] %vm241, %v240
  %s246 = scalar_lea.vmem %s1, 226
  %247 = vst.msk [vmem:[%s246] ss:$-24 sm:$0x30] %vm241, %v240
  %s248 = scalar_lea.vmem %s1, 322
  %249 = vst.msk [vmem:[%s248] ss:$-24 sm:$0xc0] %vm241, %v240
  %s250 = scalar_lea.vmem %s0, 8
  %v251 = vld.sshfl [vmem:[%s250] sm:$0xff pattern:$0x67452301]
  %252 = vrot.lane.b32.xlu0 %v251, 118
  %v253 = vpop.permute.xlu0 %252
  %vm254 = vcmask 7168
  %s255 = scalar_lea.vmem %s1, 226
  %256 = vst.msk [vmem:[%s255] ss:$-24 sm:$0x3] %vm254, %v253
  %s257 = scalar_lea.vmem %s1, 322
  %258 = vst.msk [vmem:[%s257] ss:$-24 sm:$0xc] %vm254, %v253
  %s259 = scalar_lea.vmem %s1, 418
  %260 = vst.msk [vmem:[%s259] ss:$-24 sm:$0x30] %vm254, %v253
  %s261 = scalar_lea.vmem %s1, 514
  %262 = vst.msk [vmem:[%s261] ss:$-24 sm:$0xc0] %vm254, %v253
  %v263 = vld.sshfl [vmem:[%s0] sm:$0xff pattern:$0x67452301]
  %264 = vrot.lane.b32.xlu0 %v263, 117
  %v265 = vpop.permute.xlu0 %264
  %vm266 = vcmask 7168
  %s267 = scalar_lea.vmem %s1, 35
  %268 = vst.msk [vmem:[%s267] ss:$-24 sm:$0x3] %vm266, %v265
  %s269 = scalar_lea.vmem %s1, 131
  %270 = vst.msk [vmem:[%s269] ss:$-24 sm:$0xc] %vm266, %v265
  %s271 = scalar_lea.vmem %s1, 227
  %272 = vst.msk [vmem:[%s271] ss:$-24 sm:$0x30] %vm266, %v265
  %s273 = scalar_lea.vmem %s1, 323
  %274 = vst.msk [vmem:[%s273] ss:$-24 sm:$0xc0] %vm266, %v265
  %s275 = scalar_lea.vmem %s0, 8
  %v276 = vld.sshfl [vmem:[%s275] sm:$0xff pattern:$0x67452301]
  %277 = vrot.lane.b32.xlu0 %v276, 117
  %v278 = vpop.permute.xlu0 %277
  %vm279 = vcmask 7168
  %s280 = scalar_lea.vmem %s1, 227
  %281 = vst.msk [vmem:[%s280] ss:$-24 sm:$0x3] %vm279, %v278
  %s282 = scalar_lea.vmem %s1, 323
  %283 = vst.msk [vmem:[%s282] ss:$-24 sm:$0xc] %vm279, %v278
  %s284 = scalar_lea.vmem %s1, 419
  %285 = vst.msk [vmem:[%s284] ss:$-24 sm:$0x30] %vm279, %v278
  %s286 = scalar_lea.vmem %s1, 515
  %287 = vst.msk [vmem:[%s286] ss:$-24 sm:$0xc0] %vm279, %v278
  %v288 = vld.sshfl [vmem:[%s0] sm:$0xff pattern:$0x67452301]
  %289 = vrot.lane.b32.xlu0 %v288, 116
  %v290 = vpop.permute.xlu0 %289
  %vm291 = vcmask 7168
  %s292 = scalar_lea.vmem %s1, 36
  %293 = vst.msk [vmem:[%s292] ss:$-24 sm:$0x3] %vm291, %v290
  %s294 = scalar_lea.vmem %s1, 132
  %295 = vst.msk [vmem:[%s294] ss:$-24 sm:$0xc] %vm291, %v290
  %s296 = scalar_lea.vmem %s1, 228
  %297 = vst.msk [vmem:[%s296] ss:$-24 sm:$0x30] %vm291, %v290
  %s298 = scalar_lea.vmem %s1, 324
  %299 = vst.msk [vmem:[%s298] ss:$-24 sm:$0xc0] %vm291, %v290
  %s300 = scalar_lea.vmem %s0, 8
  %v301 = vld.sshfl [vmem:[%s300] sm:$0xff pattern:$0x67452301]
  %302 = vrot.lane.b32.xlu0 %v301, 116
  %v303 = vpop.permute.xlu0 %302
  %vm304 = vcmask 7168
  %s305 = scalar_lea.vmem %s1, 228
  %306 = vst.msk [vmem:[%s305] ss:$-24 sm:$0x3] %vm304, %v303
  %s307 = scalar_lea.vmem %s1, 324
  %308 = vst.msk [vmem:[%s307] ss:$-24 sm:$0xc] %vm304, %v303
  %s309 = scalar_lea.vmem %s1, 420
  %310 = vst.msk [vmem:[%s309] ss:$-24 sm:$0x30] %vm304, %v303
  %s311 = scalar_lea.vmem %s1, 516
  %312 = vst.msk [vmem:[%s311] ss:$-24 sm:$0xc0] %vm304, %v303
  %v313 = vld.sshfl [vmem:[%s0] sm:$0xff pattern:$0x67452301]
  %314 = vrot.lane.b32.xlu0 %v313, 115
  %v315 = vpop.permute.xlu0 %314
  %vm316 = vcmask 7168
  %s317 = scalar_lea.vmem %s1, 37
  %318 = vst.msk [vmem:[%s317] ss:$-24 sm:$0x3] %vm316, %v315
  %s319 = scalar_lea.vmem %s1, 133
  %320 = vst.msk [vmem:[%s319] ss:$-24 sm:$0xc] %vm316, %v315
  %s321 = scalar_lea.vmem %s1, 229
  %322 = vst.msk [vmem:[%s321] ss:$-24 sm:$0x30] %vm316, %v315
  %s323 = scalar_lea.vmem %s1, 325
  %324 = vst.msk [vmem:[%s323] ss:$-24 sm:$0xc0] %vm316, %v315
  %s325 = scalar_lea.vmem %s0, 8
  %v326 = vld.sshfl [vmem:[%s325] sm:$0xff pattern:$0x67452301]
  %327 = vrot.lane.b32.xlu0 %v326, 115
  %v328 = vpop.permute.xlu0 %327
  %vm329 = vcmask 7168
  %s330 = scalar_lea.vmem %s1, 229
  %331 = vst.msk [vmem:[%s330] ss:$-24 sm:$0x3] %vm329, %v328
  %s332 = scalar_lea.vmem %s1, 325
  %333 = vst.msk [vmem:[%s332] ss:$-24 sm:$0xc] %vm329, %v328
  %s334 = scalar_lea.vmem %s1, 421
  %335 = vst.msk [vmem:[%s334] ss:$-24 sm:$0x30] %vm329, %v328
  %s336 = scalar_lea.vmem %s1, 517
  %337 = vst.msk [vmem:[%s336] ss:$-24 sm:$0xc0] %vm329, %v328
  %v338 = vld.sshfl [vmem:[%s0] sm:$0xff pattern:$0x67452301]
  %339 = vrot.lane.b32.xlu0 %v338, 114
  %v340 = vpop.permute.xlu0 %339
  %vm341 = vcmask 7168
  %s342 = scalar_lea.vmem %s1, 38
  %343 = vst.msk [vmem:[%s342] ss:$-24 sm:$0x3] %vm341, %v340
  %s344 = scalar_lea.vmem %s1, 134
  %345 = vst.msk [vmem:[%s344] ss:$-24 sm:$0xc] %vm341, %v340
  %s346 = scalar_lea.vmem %s1, 230
  %347 = vst.msk [vmem:[%s346] ss:$-24 sm:$0x30] %vm341, %v340
  %s348 = scalar_lea.vmem %s1, 326
  %349 = vst.msk [vmem:[%s348] ss:$-24 sm:$0xc0] %vm341, %v340
  %s350 = scalar_lea.vmem %s0, 8
  %v351 = vld.sshfl [vmem:[%s350] sm:$0xff pattern:$0x67452301]
  %352 = vrot.lane.b32.xlu0 %v351, 114
  %v353 = vpop.permute.xlu0 %352
  %vm354 = vcmask 7168
  %s355 = scalar_lea.vmem %s1, 230
  %356 = vst.msk [vmem:[%s355] ss:$-24 sm:$0x3] %vm354, %v353
  %s357 = scalar_lea.vmem %s1, 326
  %358 = vst.msk [vmem:[%s357] ss:$-24 sm:$0xc] %vm354, %v353
  %s359 = scalar_lea.vmem %s1, 422
  %360 = vst.msk [vmem:[%s359] ss:$-24 sm:$0x30] %vm354, %v353
  %s361 = scalar_lea.vmem %s1, 518
  %362 = vst.msk [vmem:[%s361] ss:$-24 sm:$0xc0] %vm354, %v353
  %v363 = vld.sshfl [vmem:[%s0] sm:$0xff pattern:$0x67452301]
  %364 = vrot.lane.b32.xlu0 %v363, 113
  %v365 = vpop.permute.xlu0 %364
  %vm366 = vcmask 7168
  %s367 = scalar_lea.vmem %s1, 39
  %368 = vst.msk [vmem:[%s367] ss:$-24 sm:$0x3] %vm366, %v365
  %s369 = scalar_lea.vmem %s1, 135
  %370 = vst.msk [vmem:[%s369] ss:$-24 sm:$0xc] %vm366, %v365
  %s371 = scalar_lea.vmem %s1, 231
  %372 = vst.msk [vmem:[%s371] ss:$-24 sm:$0x30] %vm366, %v365
  %s373 = scalar_lea.vmem %s1, 327
  %374 = vst.msk [vmem:[%s373] ss:$-24 sm:$0xc0] %vm366, %v365
  %s375 = scalar_lea.vmem %s0, 8
  %v376 = vld.sshfl [vmem:[%s375] sm:$0xff pattern:$0x67452301]
  %377 = vrot.lane.b32.xlu0 %v376, 113
  %v378 = vpop.permute.xlu0 %377
  %vm379 = vcmask 7168
  %s380 = scalar_lea.vmem %s1, 231
  %381 = vst.msk [vmem:[%s380] ss:$-24 sm:$0x3] %vm379, %v378
  %s382 = scalar_lea.vmem %s1, 327
  %383 = vst.msk [vmem:[%s382] ss:$-24 sm:$0xc] %vm379, %v378
  %s384 = scalar_lea.vmem %s1, 423
  %385 = vst.msk [vmem:[%s384] ss:$-24 sm:$0x30] %vm379, %v378
  %s386 = scalar_lea.vmem %s1, 519
  %387 = vst.msk [vmem:[%s386] ss:$-24 sm:$0xc0] %vm379, %v378
  %v388 = vld.sshfl [vmem:[%s0] sm:$0xff pattern:$0x74563012]
  %389 = vrot.lane.b32.xlu0 %v388, 112
  %v390 = vpop.permute.xlu0 %389
  %vm391 = vcmask 7168
  %s392 = scalar_lea.vmem %s1, 64
  %393 = vst.msk [vmem:[%s392] ss:$-24 sm:$0x7] %vm391, %v390
  %s394 = scalar_lea.vmem %s1, 4294967168
  %395 = vst.msk [vmem:[%s394] ss:$72 sm:$0x18] %vm391, %v390
  %s396 = scalar_lea.vmem %s1, 256
  %397 = vst.msk [vmem:[%s396] ss:$-24 sm:$0x60] %vm391, %v390
  %s398 = scalar_lea.vmem %s1, 177
  %399 = vst.msk [vmem:[%s398] sm:$0x80] %vm391, %v390
  %s400 = scalar_lea.vmem %s0, 8
  %v401 = vld.sshfl [vmem:[%s400] sm:$0xff pattern:$0x74563012]
  %402 = vrot.lane.b32.xlu0 %v401, 112
  %v403 = vpop.permute.xlu0 %402
  %vm404 = vcmask 7168
  %s405 = scalar_lea.vmem %s1, 256
  %406 = vst.msk [vmem:[%s405] ss:$-24 sm:$0x7] %vm404, %v403
  %s407 = scalar_lea.vmem %s1, 64
  %408 = vst.msk [vmem:[%s407] ss:$72 sm:$0x18] %vm404, %v403
  %s409 = scalar_lea.vmem %s1, 448
  %410 = vst.msk [vmem:[%s409] ss:$-24 sm:$0x60] %vm404, %v403
  %s411 = scalar_lea.vmem %s1, 369
  %412 = vst.msk [vmem:[%s411] sm:$0x80] %vm404, %v403
  %v413 = vld.sshfl [vmem:[%s0] sm:$0xff pattern:$0x74563012]
  %414 = vrot.lane.b32.xlu0 %v413, 111
  %v415 = vpop.permute.xlu0 %414
  %vm416 = vcmask 7168
  %s417 = scalar_lea.vmem %s1, 65
  %418 = vst.msk [vmem:[%s417] ss:$-24 sm:$0x7] %vm416, %v415
  %s419 = scalar_lea.vmem %s1, 4294967169
  %420 = vst.msk [vmem:[%s419] ss:$72 sm:$0x18] %vm416, %v415
  %s421 = scalar_lea.vmem %s1, 257
  %422 = vst.msk [vmem:[%s421] ss:$-24 sm:$0x60] %vm416, %v415
  %s423 = scalar_lea.vmem %s1, 178
  %424 = vst.msk [vmem:[%s423] sm:$0x80] %vm416, %v415
  %s425 = scalar_lea.vmem %s0, 8
  %v426 = vld.sshfl [vmem:[%s425] sm:$0xff pattern:$0x74563012]
  %427 = vrot.lane.b32.xlu0 %v426, 111
  %v428 = vpop.permute.xlu0 %427
  %vm429 = vcmask 7168
  %s430 = scalar_lea.vmem %s1, 257
  %431 = vst.msk [vmem:[%s430] ss:$-24 sm:$0x7] %vm429, %v428
  %s432 = scalar_lea.vmem %s1, 65
  %433 = vst.msk [vmem:[%s432] ss:$72 sm:$0x18] %vm429, %v428
  %s434 = scalar_lea.vmem %s1, 449
  %435 = vst.msk [vmem:[%s434] ss:$-24 sm:$0x60] %vm429, %v428
  %s436 = scalar_lea.vmem %s1, 370
  %437 = vst.msk [vmem:[%s436] sm:$0x80] %vm429, %v428
  %v438 = vld.sshfl [vmem:[%s0] sm:$0xff pattern:$0x74563012]
  %439 = vrot.lane.b32.xlu0 %v438, 110
  %v440 = vpop.permute.xlu0 %439
  %vm441 = vcmask 7168
  %s442 = scalar_lea.vmem %s1, 66
  %443 = vst.msk [vmem:[%s442] ss:$-24 sm:$0x7] %vm441, %v440
  %s444 = scalar_lea.vmem %s1, 4294967170
  %445 = vst.msk [vmem:[%s444] ss:$72 sm:$0x18] %vm441, %v440
  %s446 = scalar_lea.vmem %s1, 258
  %447 = vst.msk [vmem:[%s446] ss:$-24 sm:$0x60] %vm441, %v440
  %s448 = scalar_lea.vmem %s1, 179
  %449 = vst.msk [vmem:[%s448] sm:$0x80] %vm441, %v440
  %s450 = scalar_lea.vmem %s0, 8
  %v451 = vld.sshfl [vmem:[%s450] sm:$0xff pattern:$0x74563012]
  %452 = vrot.lane.b32.xlu0 %v451, 110
  %v453 = vpop.permute.xlu0 %452
  %vm454 = vcmask 7168
  %s455 = scalar_lea.vmem %s1, 258
  %456 = vst.msk [vmem:[%s455] ss:$-24 sm:$0x7] %vm454, %v453
  %s457 = scalar_lea.vmem %s1, 66
  %458 = vst.msk [vmem:[%s457] ss:$72 sm:$0x18] %vm454, %v453
  %s459 = scalar_lea.vmem %s1, 450
  %460 = vst.msk [vmem:[%s459] ss:$-24 sm:$0x60] %vm454, %v453
  %s461 = scalar_lea.vmem %s1, 371
  %462 = vst.msk [vmem:[%s461] sm:$0x80] %vm454, %v453
  %v463 = vld.sshfl [vmem:[%s0] sm:$0xff pattern:$0x74563012]
  %464 = vrot.lane.b32.xlu0 %v463, 109
  %v465 = vpop.permute.xlu0 %464
  %vm466 = vcmask 7168
  %s467 = scalar_lea.vmem %s1, 67
  %468 = vst.msk [vmem:[%s467] ss:$-24 sm:$0x7] %vm466, %v465
  %s469 = scalar_lea.vmem %s1, 4294967171
  %470 = vst.msk [vmem:[%s469] ss:$72 sm:$0x18] %vm466, %v465
  %s471 = scalar_lea.vmem %s1, 259
  %472 = vst.msk [vmem:[%s471] ss:$-24 sm:$0x60] %vm466, %v465
  %s473 = scalar_lea.vmem %s1, 180
  %474 = vst.msk [vmem:[%s473] sm:$0x80] %vm466, %v465
  %s475 = scalar_lea.vmem %s0, 8
  %v476 = vld.sshfl [vmem:[%s475] sm:$0xff pattern:$0x74563012]
  %477 = vrot.lane.b32.xlu0 %v476, 109
  %v478 = vpop.permute.xlu0 %477
  %vm479 = vcmask 7168
  %s480 = scalar_lea.vmem %s1, 259
  %481 = vst.msk [vmem:[%s480] ss:$-24 sm:$0x7] %vm479, %v478
  %s482 = scalar_lea.vmem %s1, 67
  %483 = vst.msk [vmem:[%s482] ss:$72 sm:$0x18] %vm479, %v478
  %s484 = scalar_lea.vmem %s1, 451
  %485 = vst.msk [vmem:[%s484] ss:$-24 sm:$0x60] %vm479, %v478
  %s486 = scalar_lea.vmem %s1, 372
  %487 = vst.msk [vmem:[%s486] sm:$0x80] %vm479, %v478
  %v488 = vld.sshfl [vmem:[%s0] sm:$0xff pattern:$0x74563012]
  %489 = vrot.lane.b32.xlu0 %v488, 108
  %v490 = vpop.permute.xlu0 %489
  %vm491 = vcmask 7168
  %s492 = scalar_lea.vmem %s1, 68
  %493 = vst.msk [vmem:[%s492] ss:$-24 sm:$0x7] %vm491, %v490
  %s494 = scalar_lea.vmem %s1, 4294967172
  %495 = vst.msk [vmem:[%s494] ss:$72 sm:$0x18] %vm491, %v490
  %s496 = scalar_lea.vmem %s1, 260
  %497 = vst.msk [vmem:[%s496] ss:$-24 sm:$0x60] %vm491, %v490
  %s498 = scalar_lea.vmem %s1, 181
  %499 = vst.msk [vmem:[%s498] sm:$0x80] %vm491, %v490
  %s500 = scalar_lea.vmem %s0, 8
  %v501 = vld.sshfl [vmem:[%s500] sm:$0xff pattern:$0x74563012]
  %502 = vrot.lane.b32.xlu0 %v501, 108
  %v503 = vpop.permute.xlu0 %502
  %vm504 = vcmask 7168
  %s505 = scalar_lea.vmem %s1, 260
  %506 = vst.msk [vmem:[%s505] ss:$-24 sm:$0x7] %vm504, %v503
  %s507 = scalar_lea.vmem %s1, 68
  %508 = vst.msk [vmem:[%s507] ss:$72 sm:$0x18] %vm504, %v503
  %s509 = scalar_lea.vmem %s1, 452
  %510 = vst.msk [vmem:[%s509] ss:$-24 sm:$0x60] %vm504, %v503
  %s511 = scalar_lea.vmem %s1, 373
  %512 = vst.msk [vmem:[%s511] sm:$0x80] %vm504, %v503
  %v513 = vld.sshfl [vmem:[%s0] sm:$0xff pattern:$0x74563012]
  %514 = vrot.lane.b32.xlu0 %v513, 107
  %v515 = vpop.permute.xlu0 %514
  %vm516 = vcmask 7168
  %s517 = scalar_lea.vmem %s1, 69
  %518 = vst.msk [vmem:[%s517] ss:$-24 sm:$0x7] %vm516, %v515
  %s519 = scalar_lea.vmem %s1, 4294967173
  %520 = vst.msk [vmem:[%s519] ss:$72 sm:$0x18] %vm516, %v515
  %s521 = scalar_lea.vmem %s1, 261
  %522 = vst.msk [vmem:[%s521] ss:$-24 sm:$0x60] %vm516, %v515
  %s523 = scalar_lea.vmem %s1, 182
  %524 = vst.msk [vmem:[%s523] sm:$0x80] %vm516, %v515
  %s525 = scalar_lea.vmem %s0, 8
  %v526 = vld.sshfl [vmem:[%s525] sm:$0xff pattern:$0x74563012]
  %527 = vrot.lane.b32.xlu0 %v526, 107
  %v528 = vpop.permute.xlu0 %527
  %vm529 = vcmask 7168
  %s530 = scalar_lea.vmem %s1, 261
  %531 = vst.msk [vmem:[%s530] ss:$-24 sm:$0x7] %vm529, %v528
  %s532 = scalar_lea.vmem %s1, 69
  %533 = vst.msk [vmem:[%s532] ss:$72 sm:$0x18] %vm529, %v528
  %s534 = scalar_lea.vmem %s1, 453
  %535 = vst.msk [vmem:[%s534] ss:$-24 sm:$0x60] %vm529, %v528
  %s536 = scalar_lea.vmem %s1, 374
  %537 = vst.msk [vmem:[%s536] sm:$0x80] %vm529, %v528
  %v538 = vld.sshfl [vmem:[%s0] sm:$0xff pattern:$0x74563012]
  %539 = vrot.lane.b32.xlu0 %v538, 106
  %v540 = vpop.permute.xlu0 %539
  %vm541 = vcmask 7168
  %s542 = scalar_lea.vmem %s1, 70
  %543 = vst.msk [vmem:[%s542] ss:$-24 sm:$0x7] %vm541, %v540
  %s544 = scalar_lea.vmem %s1, 4294967174
  %545 = vst.msk [vmem:[%s544] ss:$72 sm:$0x18] %vm541, %v540
  %s546 = scalar_lea.vmem %s1, 262
  %547 = vst.msk [vmem:[%s546] ss:$-24 sm:$0x60] %vm541, %v540
  %s548 = scalar_lea.vmem %s1, 183
  %549 = vst.msk [vmem:[%s548] sm:$0x80] %vm541, %v540
  %s550 = scalar_lea.vmem %s0, 8
  %v551 = vld.sshfl [vmem:[%s550] sm:$0xff pattern:$0x74563012]
  %552 = vrot.lane.b32.xlu0 %v551, 106
  %v553 = vpop.permute.xlu0 %552
  %vm554 = vcmask 7168
  %s555 = scalar_lea.vmem %s1, 262
  %556 = vst.msk [vmem:[%s555] ss:$-24 sm:$0x7] %vm554, %v553
  %s557 = scalar_lea.vmem %s1, 70
  %558 = vst.msk [vmem:[%s557] ss:$72 sm:$0x18] %vm554, %v553
  %s559 = scalar_lea.vmem %s1, 454
  %560 = vst.msk [vmem:[%s559] ss:$-24 sm:$0x60] %vm554, %v553
  %s561 = scalar_lea.vmem %s1, 375
  %562 = vst.msk [vmem:[%s561] sm:$0x80] %vm554, %v553
  %v563 = vld.sshfl [vmem:[%s0] sm:$0xff pattern:$0x74563012]
  %564 = vrot.lane.b32.xlu0 %v563, 105
  %v565 = vpop.permute.xlu0 %564
  %vm566 = vcmask 7168
  %s567 = scalar_lea.vmem %s1, 71
  %568 = vst.msk [vmem:[%s567] ss:$-24 sm:$0x7] %vm566, %v565
  %s569 = scalar_lea.vmem %s1, 4294967175
  %570 = vst.msk [vmem:[%s569] ss:$72 sm:$0x18] %vm566, %v565
  %s571 = scalar_lea.vmem %s1, 263
  %572 = vst.msk [vmem:[%s571] ss:$-24 sm:$0x60] %vm566, %v565
  %s573 = scalar_lea.vmem %s1, 184
  %574 = vst.msk [vmem:[%s573] sm:$0x80] %vm566, %v565
  %s575 = scalar_lea.vmem %s0, 8
  %v576 = vld.sshfl [vmem:[%s575] sm:$0xff pattern:$0x74563012]
  %577 = vrot.lane.b32.xlu0 %v576, 105
  %v578 = vpop.permute.xlu0 %577
  %vm579 = vcmask 7168
  %s580 = scalar_lea.vmem %s1, 263
  %581 = vst.msk [vmem:[%s580] ss:$-24 sm:$0x7] %vm579, %v578
  %s582 = scalar_lea.vmem %s1, 71
  %583 = vst.msk [vmem:[%s582] ss:$72 sm:$0x18] %vm579, %v578
  %s584 = scalar_lea.vmem %s1, 455
  %585 = vst.msk [vmem:[%s584] ss:$-24 sm:$0x60] %vm579, %v578
  %s586 = scalar_lea.vmem %s1, 376
  %587 = vst.msk [vmem:[%s586] sm:$0x80] %vm579, %v578

// kernel: csp_layer_forward.1
$region0: #{csp_layer_forward.1}
  #allocation0 [shape = 'u32[]', space=smem, size = 0x4, offset = 0x4, fixed_abs, tag = 'smem constant byte address 0x4 - core index']
  #allocation1 [shape = 'u32[144,128]{1,0:T(1,128)}', space=vmem, size = 0x12000, scoped, tag = 'internal scratch']
  #allocation2 [shape = 'f32[456,2]{1,0:T(8,128)}', space=vmem, size = 0x39000, scoped, tag = 'scratch operand']
  %s0 = inlined_call_operand.vmem [shape: bf16[2,384,4], index: 0, kind: input, shape index: {}]
  %s1 = inlined_call_operand.vmem [shape: f32[384,1], index: 1, kind: input, shape index: {}]
  %s2 = inlined_call_operand.vmem [shape: bf16[4,2], index: 2, kind: input, shape index: {}]
  %s3 = inlined_call_operand.vmem [shape: f32[1,2], index: 3, kind: input, shape index: {}]
  %s4 = inlined_call_operand.vmem [shape: bf16[4,2], index: 4, kind: input, shape index: {}]
  %s5 = inlined_call_operand.vmem [shape: f32[1,2], index: 5, kind: input, shape index: {}]
  %s6 = inlined_call_operand.vmem [shape: bf16[1,2,2], index: 6, kind: input, shape index: {}]
  %s7 = inlined_call_operand.vmem [shape: f32[1,1,2], index: 7, kind: input, shape index: {}]
  %s8 = inlined_call_operand.vmem [shape: bf16[1,9,2,2], index: 8, kind: input, shape index: {}]
  %s9 = inlined_call_operand.vmem [shape: f32[1,1,2], index: 9, kind: input, shape index: {}]
  %s10 = inlined_call_operand.vmem [shape: bf16[2,4], index: 10, kind: input, shape index: {}]
  %s11 = inlined_call_operand.vmem [shape: bf16[2,4], index: 11, kind: input, shape index: {}]
  %s12 = inlined_call_operand.vmem [shape: f32[1,4], index: 12, kind: input, shape index: {}]
  %s13 = inlined_call_operand.vmem [shape: f32[2,256,4], index: 13, kind: output, shape index: {}]
  %s14 = sld [smem:[#allocation0]]
  $region85: #{csp_layer_forward.1} parent=0
    _
  %s16 = ssub.s32 1, %s14
  %s17 = scalar_select 0, %s16, %s14
  loop: start=0, step=1, limit=4
  $region2: #{csp_layer_forward.1} parent=0 // loop_pre_header
    _
  $region3: #{csp_layer_forward.1} parent=0 // loop_header
    %s19 = sphi 0, %s23
    %p20 = scmp.ge.s32.totalorder %s19, 4
    %s29 = sphi 0, %s31
    %s32 = sphi 0, %s29
    %s33 = sphi 0, %s32
    %s49 = sphi 0, %s33
    %s53 = sphi 0, %s53
    %s55 = sphi 0, %s53
    %s56 = sphi 0, %s55
    %s70 = sphi 0, %s56
    %s74 = sphi 0, %s74
    %s76 = sphi 0, %s74
    %s77 = sphi 0, %s76
    %s91 = sphi 0, %s77
    %s95 = sphi 0, %s95
    %s97 = sphi 0, %s95
    %s98 = sphi 0, %s97
    %s112 = sphi 0, %s98
    %s116 = sphi 0, %s116
    %s118 = sphi 0, %s116
    %s119 = sphi 0, %s118
    %s133 = sphi 0, %s119
    %s137 = sphi 0, %s137
    %s139 = sphi 0, %s137
    %s140 = sphi 0, %s139
    %s154 = sphi 0, %s140
    %s158 = sphi 0, %s158
    %s160 = sphi 0, %s158
    %s161 = sphi 0, %s160
    %s175 = sphi 0, %s161
    %s179 = sphi 0, %s179
    %s181 = sphi 0, %s179
    %s182 = sphi 0, %s181
    %s196 = sphi 0, %s182
    %s200 = sphi 0, %s200
    %s202 = sphi 0, %s200
    %s203 = sphi 0, %s202
    %s217 = sphi 0, %s203
    %s221 = sphi 0, %s221
    %s223 = sphi 0, %s221
    %s224 = sphi 0, %s223
    %s238 = sphi 0, %s224
    %s242 = sphi 0, %s242
    %s244 = sphi 0, %s242
    %s245 = sphi 0, %s244
    %s259 = sphi 0, %s245
    %s263 = sphi 0, %s263
    %s265 = sphi 0, %s263
    %s266 = sphi 0, %s265
    %s280 = sphi 0, %s266
    %s284 = sphi 0, %s284
    %s286 = sphi 0, %s284
    %s287 = sphi 0, %s286
    %s301 = sphi 0, %s287
    %s307 = sphi 0, %s309
    %s310 = sphi 0, %s307
    %s311 = sphi 0, %s310
    %s327 = sphi 0, %s311
  $region4: #{csp_layer_forward.1} parent=0 // loop_header_branch
    %22 = sbr.rel (%p20) target = $region8
  $region5: #{csp_layer_forward.1} parent=0 // loop_body
    %s24 = ssub.s32 %s19, 1
    %s25 = ssub.s32 %s19, 2
    %s26 = sadd.s32 %s19, 1
    %s27 = ssub.s32 %s19, %s26
    %p28 = scmp.eq.s32.totalorder %s27, 0
    %s30 = sadd.s32 %s29, 1
    %s31 = scalar_select %p28, %s29, %s30
    %p34 = pneg %p28
    %p35 = scmp.eq.s32.totalorder %s19, 1
    %p36 = por %p34, %p35
    %p37 = scmp.ne.s32.totalorder %s29, %s32
    %p38 = scmp.eq.s32.totalorder %s19, 0
    %p39 = por %p37, %p38
    %p40 = scmp.ne.s32.totalorder %s29, %s32
    %p41 = scmp.eq.s32.totalorder %s24, 1
    %p42 = por %p40, %p41
    %p43 = scmp.ne.s32.totalorder %s32, %s33
    %p44 = scmp.eq.s32.totalorder %s24, 0
    %p45 = por %p43, %p44
    %p46 = scmp.ne.s32.totalorder %s32, %s33
    %p47 = scmp.eq.s32.totalorder %s25, 1
    %p48 = por %p46, %p47
    %p50 = scmp.ne.s32.totalorder %s33, %s49
    %p51 = scmp.eq.s32.totalorder %s25, 0
    %p52 = por %p50, %p51
    %s54 = sadd.s32 %s53, 1
    %p57 = scmp.eq.s32.totalorder %s19, 1
    %p58 = scmp.ne.s32.totalorder %s53, %s55
    %p59 = scmp.eq.s32.totalorder %s19, 0
    %p60 = por %p58, %p59
    %p61 = scmp.ne.s32.totalorder %s53, %s55
    %p62 = scmp.eq.s32.totalorder %s24, 1
    %p63 = por %p61, %p62
    %p64 = scmp.ne.s32.totalorder %s55, %s56
    %p65 = scmp.eq.s32.totalorder %s24, 0
    %p66 = por %p64, %p65
    %p67 = scmp.ne.s32.totalorder %s55, %s56
    %p68 = scmp.eq.s32.totalorder %s25, 1
    %p69 = por %p67, %p68
    %p71 = scmp.ne.s32.totalorder %s56, %s70
    %p72 = scmp.eq.s32.totalorder %s25, 0
    %p73 = por %p71, %p72
    %s75 = sadd.s32 %s74, 1
    %p78 = scmp.eq.s32.totalorder %s19, 1
    %p79 = scmp.ne.s32.totalorder %s74, %s76
    %p80 = scmp.eq.s32.totalorder %s19, 0
    %p81 = por %p79, %p80
    %p82 = scmp.ne.s32.totalorder %s74, %s76
    %p83 = scmp.eq.s32.totalorder %s24, 1
    %p84 = por %p82, %p83
    %p85 = scmp.ne.s32.totalorder %s76, %s77
    %p86 = scmp.eq.s32.totalorder %s24, 0
    %p87 = por %p85, %p86
    %p88 = scmp.ne.s32.totalorder %s76, %s77
    %p89 = scmp.eq.s32.totalorder %s25, 1
    %p90 = por %p88, %p89
    %p92 = scmp.ne.s32.totalorder %s77, %s91
    %p93 = scmp.eq.s32.totalorder %s25, 0
    %p94 = por %p92, %p93
    %s96 = sadd.s32 %s95, 1
    %p99 = scmp.eq.s32.totalorder %s19, 1
    %p100 = scmp.ne.s32.totalorder %s95, %s97
    %p101 = scmp.eq.s32.totalorder %s19, 0
    %p102 = por %p100, %p101
    %p103 = scmp.ne.s32.totalorder %s95, %s97
    %p104 = scmp.eq.s32.totalorder %s24, 1
    %p105 = por %p103, %p104
    %p106 = scmp.ne.s32.totalorder %s97, %s98
    %p107 = scmp.eq.s32.totalorder %s24, 0
    %p108 = por %p106, %p107
    %p109 = scmp.ne.s32.totalorder %s97, %s98
    %p110 = scmp.eq.s32.totalorder %s25, 1
    %p111 = por %p109, %p110
    %p113 = scmp.ne.s32.totalorder %s98, %s112
    %p114 = scmp.eq.s32.totalorder %s25, 0
    %p115 = por %p113, %p114
    %s117 = sadd.s32 %s116, 1
    %p120 = scmp.eq.s32.totalorder %s19, 1
    %p121 = scmp.ne.s32.totalorder %s116, %s118
    %p122 = scmp.eq.s32.totalorder %s19, 0
    %p123 = por %p121, %p122
    %p124 = scmp.ne.s32.totalorder %s116, %s118
    %p125 = scmp.eq.s32.totalorder %s24, 1
    %p126 = por %p124, %p125
    %p127 = scmp.ne.s32.totalorder %s118, %s119
    %p128 = scmp.eq.s32.totalorder %s24, 0
    %p129 = por %p127, %p128
    %p130 = scmp.ne.s32.totalorder %s118, %s119
    %p131 = scmp.eq.s32.totalorder %s25, 1
    %p132 = por %p130, %p131
    %p134 = scmp.ne.s32.totalorder %s119, %s133
    %p135 = scmp.eq.s32.totalorder %s25, 0
    %p136 = por %p134, %p135
    %s138 = sadd.s32 %s137, 1
    %p141 = scmp.eq.s32.totalorder %s19, 1
    %p142 = scmp.ne.s32.totalorder %s137, %s139
    %p143 = scmp.eq.s32.totalorder %s19, 0
    %p144 = por %p142, %p143
    %p145 = scmp.ne.s32.totalorder %s137, %s139
    %p146 = scmp.eq.s32.totalorder %s24, 1
    %p147 = por %p145, %p146
    %p148 = scmp.ne.s32.totalorder %s139, %s140
    %p149 = scmp.eq.s32.totalorder %s24, 0
    %p150 = por %p148, %p149
    %p151 = scmp.ne.s32.totalorder %s139, %s140
    %p152 = scmp.eq.s32.totalorder %s25, 1
    %p153 = por %p151, %p152
    %p155 = scmp.ne.s32.totalorder %s140, %s154
    %p156 = scmp.eq.s32.totalorder %s25, 0
    %p157 = por %p155, %p156
    %s159 = sadd.s32 %s158, 1
    %p162 = scmp.eq.s32.totalorder %s19, 1
    %p163 = scmp.ne.s32.totalorder %s158, %s160
    %p164 = scmp.eq.s32.totalorder %s19, 0
    %p165 = por %p163, %p164
    %p166 = scmp.ne.s32.totalorder %s158, %s160
    %p167 = scmp.eq.s32.totalorder %s24, 1
    %p168 = por %p166, %p167
    %p169 = scmp.ne.s32.totalorder %s160, %s161
    %p170 = scmp.eq.s32.totalorder %s24, 0
    %p171 = por %p169, %p170
    %p172 = scmp.ne.s32.totalorder %s160, %s161
    %p173 = scmp.eq.s32.totalorder %s25, 1
    %p174 = por %p172, %p173
    %p176 = scmp.ne.s32.totalorder %s161, %s175
    %p177 = scmp.eq.s32.totalorder %s25, 0
    %p178 = por %p176, %p177
    %s180 = sadd.s32 %s179, 1
    %p183 = scmp.eq.s32.totalorder %s19, 1
    %p184 = scmp.ne.s32.totalorder %s179, %s181
    %p185 = scmp.eq.s32.totalorder %s19, 0
    %p186 = por %p184, %p185
    %p187 = scmp.ne.s32.totalorder %s179, %s181
    %p188 = scmp.eq.s32.totalorder %s24, 1
    %p189 = por %p187, %p188
    %p190 = scmp.ne.s32.totalorder %s181, %s182
    %p191 = scmp.eq.s32.totalorder %s24, 0
    %p192 = por %p190, %p191
    %p193 = scmp.ne.s32.totalorder %s181, %s182
    %p194 = scmp.eq.s32.totalorder %s25, 1
    %p195 = por %p193, %p194
    %p197 = scmp.ne.s32.totalorder %s182, %s196
    %p198 = scmp.eq.s32.totalorder %s25, 0
    %p199 = por %p197, %p198
    %s201 = sadd.s32 %s200, 1
    %p204 = scmp.eq.s32.totalorder %s19, 1
    %p205 = scmp.ne.s32.totalorder %s200, %s202
    %p206 = scmp.eq.s32.totalorder %s19, 0
    %p207 = por %p205, %p206
    %p208 = scmp.ne.s32.totalorder %s200, %s202
    %p209 = scmp.eq.s32.totalorder %s24, 1
    %p210 = por %p208, %p209
    %p211 = scmp.ne.s32.totalorder %s202, %s203
    %p212 = scmp.eq.s32.totalorder %s24, 0
    %p213 = por %p211, %p212
    %p214 = scmp.ne.s32.totalorder %s202, %s203
    %p215 = scmp.eq.s32.totalorder %s25, 1
    %p216 = por %p214, %p215
    %p218 = scmp.ne.s32.totalorder %s203, %s217
    %p219 = scmp.eq.s32.totalorder %s25, 0
    %p220 = por %p218, %p219
    %s222 = sadd.s32 %s221, 1
    %p225 = scmp.eq.s32.totalorder %s19, 1
    %p226 = scmp.ne.s32.totalorder %s221, %s223
    %p227 = scmp.eq.s32.totalorder %s19, 0
    %p228 = por %p226, %p227
    %p229 = scmp.ne.s32.totalorder %s221, %s223
    %p230 = scmp.eq.s32.totalorder %s24, 1
    %p231 = por %p229, %p230
    %p232 = scmp.ne.s32.totalorder %s223, %s224
    %p233 = scmp.eq.s32.totalorder %s24, 0
    %p234 = por %p232, %p233
    %p235 = scmp.ne.s32.totalorder %s223, %s224
    %p236 = scmp.eq.s32.totalorder %s25, 1
    %p237 = por %p235, %p236
    %p239 = scmp.ne.s32.totalorder %s224, %s238
    %p240 = scmp.eq.s32.totalorder %s25, 0
    %p241 = por %p239, %p240
    %s243 = sadd.s32 %s242, 1
    %p246 = scmp.eq.s32.totalorder %s19, 1
    %p247 = scmp.ne.s32.totalorder %s242, %s244
    %p248 = scmp.eq.s32.totalorder %s19, 0
    %p249 = por %p247, %p248
    %p250 = scmp.ne.s32.totalorder %s242, %s244
    %p251 = scmp.eq.s32.totalorder %s24, 1
    %p252 = por %p250, %p251
    %p253 = scmp.ne.s32.totalorder %s244, %s245
    %p254 = scmp.eq.s32.totalorder %s24, 0
    %p255 = por %p253, %p254
    %p256 = scmp.ne.s32.totalorder %s244, %s245
    %p257 = scmp.eq.s32.totalorder %s25, 1
    %p258 = por %p256, %p257
    %p260 = scmp.ne.s32.totalorder %s245, %s259
    %p261 = scmp.eq.s32.totalorder %s25, 0
    %p262 = por %p260, %p261
    %s264 = sadd.s32 %s263, 1
    %p267 = scmp.eq.s32.totalorder %s19, 1
    %p268 = scmp.ne.s32.totalorder %s263, %s265
    %p269 = scmp.eq.s32.totalorder %s19, 0
    %p270 = por %p268, %p269
    %p271 = scmp.ne.s32.totalorder %s263, %s265
    %p272 = scmp.eq.s32.totalorder %s24, 1
    %p273 = por %p271, %p272
    %p274 = scmp.ne.s32.totalorder %s265, %s266
    %p275 = scmp.eq.s32.totalorder %s24, 0
    %p276 = por %p274, %p275
    %p277 = scmp.ne.s32.totalorder %s265, %s266
    %p278 = scmp.eq.s32.totalorder %s25, 1
    %p279 = por %p277, %p278
    %p281 = scmp.ne.s32.totalorder %s266, %s280
    %p282 = scmp.eq.s32.totalorder %s25, 0
    %p283 = por %p281, %p282
    %s285 = sadd.s32 %s284, 1
    %p288 = scmp.eq.s32.totalorder %s19, 1
    %p289 = scmp.ne.s32.totalorder %s284, %s286
    %p290 = scmp.eq.s32.totalorder %s19, 0
    %p291 = por %p289, %p290
    %p292 = scmp.ne.s32.totalorder %s284, %s286
    %p293 = scmp.eq.s32.totalorder %s24, 1
    %p294 = por %p292, %p293
    %p295 = scmp.ne.s32.totalorder %s286, %s287
    %p296 = scmp.eq.s32.totalorder %s24, 0
    %p297 = por %p295, %p296
    %p298 = scmp.ne.s32.totalorder %s286, %s287
    %p299 = scmp.eq.s32.totalorder %s25, 1
    %p300 = por %p298, %p299
    %p302 = scmp.ne.s32.totalorder %s287, %s301
    %p303 = scmp.eq.s32.totalorder %s25, 0
    %p304 = por %p302, %p303
    %s305 = ssub.s32 %s19, %s26
    %p306 = scmp.eq.s32.totalorder %s305, 0
    %s308 = sadd.s32 %s307, 1
    %s309 = scalar_select %p306, %s307, %s308
    %p312 = pneg %p306
    %p313 = scmp.eq.s32.totalorder %s19, 1
    %p314 = por %p312, %p313
    %p315 = scmp.ne.s32.totalorder %s307, %s310
    %p316 = scmp.eq.s32.totalorder %s19, 0
    %p317 = por %p315, %p316
    %p318 = scmp.ne.s32.totalorder %s307, %s310
    %p319 = scmp.eq.s32.totalorder %s24, 1
    %p320 = por %p318, %p319
    %p321 = scmp.ne.s32.totalorder %s310, %s311
    %p322 = scmp.eq.s32.totalorder %s24, 0
    %p323 = por %p321, %p322
    %p324 = scmp.ne.s32.totalorder %s310, %s311
    %p325 = scmp.eq.s32.totalorder %s25, 1
    %p326 = por %p324, %p325
    %p328 = scmp.ne.s32.totalorder %s311, %s327
    %p329 = scmp.eq.s32.totalorder %s25, 0
    %p330 = por %p328, %p329
    %p331 = scmp.le.s32.totalorder 1, %s19
    %p332 = scmp.lt.s32.totalorder %s19, 3
    %p333 = pnand %p331, %p332
    %p334 = pneg %p333
    // Predicated region
    $region9: #{csp_layer_forward.1} parent=5 // pred_check
      _
    $region10: #{csp_layer_forward.1} parent=5 // pred_check_branch
      %336 = sbr.rel (%p333) target = $region12
    $region11: #{csp_layer_forward.1} parent=5 // pred_region
      %s337 = ssub.s32 %s19, 1
      // Predicated region
      $region13: #{csp_layer_forward.1} parent=11 // pred_check
        %p338 = pneg %p66
      $region14: #{csp_layer_forward.1} parent=11 // pred_check_branch
        %340 = sbr.rel (%p338) target = $region16
      $region15: #{csp_layer_forward.1} parent=11 // pred_region
        _
      $region16: #{csp_layer_forward.1} parent=11 // pred_fallthru
        _
      // Predicated region
      $region17: #{csp_layer_forward.1} parent=11 // pred_check
        %p341 = pneg %p87
      $region18: #{csp_layer_forward.1} parent=11 // pred_check_branch
        %343 = sbr.rel (%p341) target = $region20
      $region19: #{csp_layer_forward.1} parent=11 // pred_region
        _
      $region20: #{csp_layer_forward.1} parent=11 // pred_fallthru
        _
      // Predicated region
      $region21: #{csp_layer_forward.1} parent=11 // pred_check
        %p344 = pneg %p108
      $region22: #{csp_layer_forward.1} parent=11 // pred_check_branch
        %346 = sbr.rel (%p344) target = $region24
      $region23: #{csp_layer_forward.1} parent=11 // pred_region
        _
      $region24: #{csp_layer_forward.1} parent=11 // pred_fallthru
        _
      // Predicated region
      $region25: #{csp_layer_forward.1} parent=11 // pred_check
        %p347 = pneg %p129
      $region26: #{csp_layer_forward.1} parent=11 // pred_check_branch
        %349 = sbr.rel (%p347) target = $region28
      $region27: #{csp_layer_forward.1} parent=11 // pred_region
        _
      $region28: #{csp_layer_forward.1} parent=11 // pred_fallthru
        _
      // Predicated region
      $region29: #{csp_layer_forward.1} parent=11 // pred_check
        %p350 = pneg %p150
      $region30: #{csp_layer_forward.1} parent=11 // pred_check_branch
        %352 = sbr.rel (%p350) target = $region32
      $region31: #{csp_layer_forward.1} parent=11 // pred_region
        _
      $region32: #{csp_layer_forward.1} parent=11 // pred_fallthru
        _
      // Predicated region
      $region33: #{csp_layer_forward.1} parent=11 // pred_check
        %p353 = pneg %p171
      $region34: #{csp_layer_forward.1} parent=11 // pred_check_branch
        %355 = sbr.rel (%p353) target = $region36
      $region35: #{csp_layer_forward.1} parent=11 // pred_region
        _
      $region36: #{csp_layer_forward.1} parent=11 // pred_fallthru
        _
      // Predicated region
      $region37: #{csp_layer_forward.1} parent=11 // pred_check
        %p356 = pneg %p192
      $region38: #{csp_layer_forward.1} parent=11 // pred_check_branch
        %358 = sbr.rel (%p356) target = $region40
      $region39: #{csp_layer_forward.1} parent=11 // pred_region
        _
      $region40: #{csp_layer_forward.1} parent=11 // pred_fallthru
        _
      // Predicated region
      $region41: #{csp_layer_forward.1} parent=11 // pred_check
        %p359 = pneg %p213
      $region42: #{csp_layer_forward.1} parent=11 // pred_check_branch
        %361 = sbr.rel (%p359) target = $region44
      $region43: #{csp_layer_forward.1} parent=11 // pred_region
        _
      $region44: #{csp_layer_forward.1} parent=11 // pred_fallthru
        _
      // Predicated region
      $region45: #{csp_layer_forward.1} parent=11 // pred_check
        %p362 = pneg %p234
      $region46: #{csp_layer_forward.1} parent=11 // pred_check_branch
        %364 = sbr.rel (%p362) target = $region48
      $region47: #{csp_layer_forward.1} parent=11 // pred_region
        _
      $region48: #{csp_layer_forward.1} parent=11 // pred_fallthru
        _
      // Predicated region
      $region49: #{csp_layer_forward.1} parent=11 // pred_check
        %p365 = pneg %p255
      $region50: #{csp_layer_forward.1} parent=11 // pred_check_branch
        %367 = sbr.rel (%p365) target = $region52
      $region51: #{csp_layer_forward.1} parent=11 // pred_region
        _
      $region52: #{csp_layer_forward.1} parent=11 // pred_fallthru
        _
      // Predicated region
      $region53: #{csp_layer_forward.1} parent=11 // pred_check
        %p368 = pneg %p276
      $region54: #{csp_layer_forward.1} parent=11 // pred_check_branch
        %370 = sbr.rel (%p368) target = $region56
      $region55: #{csp_layer_forward.1} parent=11 // pred_region
        _
      $region56: #{csp_layer_forward.1} parent=11 // pred_fallthru
        _
      // Predicated region
      $region57: #{csp_layer_forward.1} parent=11 // pred_check
        %p371 = pneg %p297
      $region58: #{csp_layer_forward.1} parent=11 // pred_check_branch
        %373 = sbr.rel (%p371) target = $region60
      $region59: #{csp_layer_forward.1} parent=11 // pred_region
        _
      $region60: #{csp_layer_forward.1} parent=11 // pred_fallthru
        _
    $region12: #{csp_layer_forward.1} parent=5 // pred_fallthru
      _
    %p374 = scmp.lt.s32.totalorder %s19, 2
    // Predicated region
    $region61: #{csp_layer_forward.1} parent=5 // pred_check
      %p375 = pneg %p374
    $region62: #{csp_layer_forward.1} parent=5 // pred_check_branch
      %377 = sbr.rel (%p375) target = $region64
    $region63: #{csp_layer_forward.1} parent=5 // pred_region
      // Predicated region
      $region65: #{csp_layer_forward.1} parent=63 // pred_check
        %p378 = pneg %p39
      $region66: #{csp_layer_forward.1} parent=63 // pred_check_branch
        %380 = sbr.rel (%p378) target = $region68
      $region67: #{csp_layer_forward.1} parent=63 // pred_region
        %p381 = scmp.lt.s32.totalorder %s19, 1
        %s382 = scalar_select %p381, %s19, 1
        %s383 = smul.addr %s382, 48
        %s384 = smul.addr %s383, 4
        %s385 = scalar_lea.vmem %s0, %s384
      $region68: #{csp_layer_forward.1} parent=63 // pred_fallthru
        _
    $region64: #{csp_layer_forward.1} parent=5 // pred_fallthru
      _
    %p386 = scmp.le.s32.totalorder 1, %s19
    %p387 = scmp.lt.s32.totalorder %s19, 3
    %p388 = pnand %p386, %p387
    %p389 = pneg %p388
    // Predicated region
    $region69: #{csp_layer_forward.1} parent=5 // pred_check
      _
    $region70: #{csp_layer_forward.1} parent=5 // pred_check_branch
      %391 = sbr.rel (%p388) target = $region72
    $region71: #{csp_layer_forward.1} parent=5 // pred_region
      %s392 = ssub.s32 %s19, 1
      %p393 = scmp.lt.s32.totalorder %s24, 1
      %s394 = scalar_select %p393, %s24, 1
      %s395 = smul.addr %s394, 48
      %s396 = smul.addr %s395, 4
      %s397 = scalar_lea.vmem %s0, %s396
      %p398 = pneg %p45
      %p399 = pneg %p42
      %p400 = pneg %p66
      %p401 = pneg %p63
      %p402 = pneg %p87
      %p403 = pneg %p84
      %p404 = pneg %p108
      %p405 = pneg %p105
      %p406 = pneg %p129
      %p407 = pneg %p126
      %p408 = pneg %p150
      %p409 = pneg %p147
      %p410 = pneg %p171
      %p411 = pneg %p168
      %p412 = pneg %p192
      %p413 = pneg %p189
      %p414 = pneg %p213
      %p415 = pneg %p210
      %p416 = pneg %p234
      %p417 = pneg %p231
      %p418 = pneg %p255
      %p419 = pneg %p252
      %p420 = pneg %p276
      %p421 = pneg %p273
      %p422 = pneg %p297
      %p423 = pneg %p294
      %p424 = pneg %p323
      %p425 = pneg %p320
      %p426 = scmp.lt.s32.totalorder %s24, 1
      %s427 = scalar_select %p426, %s24, 1
      %s428 = smul.addr %s427, 32
      %s429 = smul.addr %s428, 8
      %s430 = scalar_lea.vmem %s13, %s429
      %p431 = scmp.lt.s32.totalorder %s24, 1
      %s432 = scalar_select %p431, %s24, 1
      %s433 = smul.addr %s432, 48
      %s434 = smul.addr %s433, 4
      %s435 = scalar_lea.vmem %s0, %s434
      %p436 = scmp.lt.s32.totalorder %s24, 1
      %s437 = scalar_select %p436, %s24, 1
      %s438 = smul.addr %s437, 32
      %s439 = smul.addr %s438, 8
      %s440 = scalar_lea.vmem %s13, %s439
      %v442 = vld [vmem:[%s435] sm:$0xf]
      %v443 = vld [vmem:[%s435 + $0x4] sm:$0xf]
      %v444 = vld [vmem:[%s435 + $0x8] sm:$0xf]
      %v445 = vld [vmem:[%s435 + $0xc] sm:$0xf]
      %v446 = vld [vmem:[%s435 + $0x10] sm:$0xf]
      %v447 = vld [vmem:[%s435 + $0x14] sm:$0xf]
      %v448 = vld [vmem:[%s435 + $0x18] sm:$0xf]
      %v449 = vld [vmem:[%s435 + $0x1c] sm:$0xf]
      %v450 = vld [vmem:[%s435 + $0x20] sm:$0xf]
      %v451 = vld [vmem:[%s435 + $0x24] sm:$0xf]
      %v452 = vld [vmem:[%s435 + $0x28] sm:$0xf]
      %v453 = vld [vmem:[%s435 + $0x2c] sm:$0xf]
      %v454 = vld [vmem:[%s435 + $0x30] sm:$0xf]
      %v455 = vld [vmem:[%s435 + $0x34] sm:$0xf]
      %v456 = vld [vmem:[%s435 + $0x38] sm:$0xf]
      %v457 = vld [vmem:[%s435 + $0x3c] sm:$0xf]
      %v458 = vld [vmem:[%s435 + $0x40] sm:$0xf]
      %v459 = vld [vmem:[%s435 + $0x44] sm:$0xf]
      %v460 = vld [vmem:[%s435 + $0x48] sm:$0xf]
      %v461 = vld [vmem:[%s435 + $0x4c] sm:$0xf]
      %v462 = vld [vmem:[%s435 + $0x50] sm:$0xf]
      %v463 = vld [vmem:[%s435 + $0x54] sm:$0xf]
      %v464 = vld [vmem:[%s435 + $0x58] sm:$0xf]
      %v465 = vld [vmem:[%s435 + $0x5c] sm:$0xf]
      %v466 = vld [vmem:[%s435 + $0x60] sm:$0xf]
      %v467 = vld [vmem:[%s435 + $0x64] sm:$0xf]
      %v468 = vld [vmem:[%s435 + $0x68] sm:$0xf]
      %v469 = vld [vmem:[%s435 + $0x6c] sm:$0xf]
      %v470 = vld [vmem:[%s435 + $0x70] sm:$0xf]
      %v471 = vld [vmem:[%s435 + $0x74] sm:$0xf]
      %v472 = vld [vmem:[%s435 + $0x78] sm:$0xf]
      %v473 = vld [vmem:[%s435 + $0x7c] sm:$0xf]
      %v474 = vld [vmem:[%s435 + $0x80] sm:$0xf]
      %v475 = vld [vmem:[%s435 + $0x84] sm:$0xf]
      %v476 = vld [vmem:[%s435 + $0x88] sm:$0xf]
      %v477 = vld [vmem:[%s435 + $0x8c] sm:$0xf]
      %v478 = vld [vmem:[%s435 + $0x90] sm:$0xf]
      %v479 = vld [vmem:[%s435 + $0x94] sm:$0xf]
      %v480 = vld [vmem:[%s435 + $0x98] sm:$0xf]
      %v481 = vld [vmem:[%s435 + $0x9c] sm:$0xf]
      %v482 = vld [vmem:[%s435 + $0xa0] sm:$0xf]
      %v483 = vld [vmem:[%s435 + $0xa4] sm:$0xf]
      %v484 = vld [vmem:[%s435 + $0xa8] sm:$0xf]
      %v485 = vld [vmem:[%s435 + $0xac] sm:$0xf]
      %v486 = vld [vmem:[%s435 + $0xb0] sm:$0xf]
      %v487 = vld [vmem:[%s435 + $0xb4] sm:$0xf]
      %v488 = vld [vmem:[%s435 + $0xb8] sm:$0xf]
      %v489 = vld [vmem:[%s435 + $0xbc] sm:$0xf]
      %v490 = vld [vmem:[%s1] sm:$0xff]
      %v491 = vld [vmem:[%s1 + $0x8] sm:$0xff]
      %v492 = vld [vmem:[%s1 + $0x10] sm:$0xff]
      %v493 = vld [vmem:[%s1 + $0x18] sm:$0xff]
      %v494 = vld [vmem:[%s1 + $0x20] sm:$0xff]
      %v495 = vld [vmem:[%s1 + $0x28] sm:$0xff]
      %v496 = vld [vmem:[%s1 + $0x30] sm:$0xff]
      %v497 = vld [vmem:[%s1 + $0x38] sm:$0xff]
      %v498 = vld [vmem:[%s1 + $0x40] sm:$0xff]
      %v499 = vld [vmem:[%s1 + $0x48] sm:$0xff]
      %v500 = vld [vmem:[%s1 + $0x50] sm:$0xff]
      %v501 = vld [vmem:[%s1 + $0x58] sm:$0xff]
      %v502 = vld [vmem:[%s1 + $0x60] sm:$0xff]
      %v503 = vld [vmem:[%s1 + $0x68] sm:$0xff]
      %v504 = vld [vmem:[%s1 + $0x70] sm:$0xff]
      %v505 = vld [vmem:[%s1 + $0x78] sm:$0xff]
      %v506 = vld [vmem:[%s1 + $0x80] sm:$0xff]
      %v507 = vld [vmem:[%s1 + $0x88] sm:$0xff]
      %v508 = vld [vmem:[%s1 + $0x90] sm:$0xff]
      %v509 = vld [vmem:[%s1 + $0x98] sm:$0xff]
      %v510 = vld [vmem:[%s1 + $0xa0] sm:$0xff]
      %v511 = vld [vmem:[%s1 + $0xa8] sm:$0xff]
      %v512 = vld [vmem:[%s1 + $0xb0] sm:$0xff]
      %v513 = vld [vmem:[%s1 + $0xb8] sm:$0xff]
      %v514 = vld [vmem:[%s1 + $0xc0] sm:$0xff]
      %v515 = vld [vmem:[%s1 + $0xc8] sm:$0xff]
      %v516 = vld [vmem:[%s1 + $0xd0] sm:$0xff]
      %v517 = vld [vmem:[%s1 + $0xd8] sm:$0xff]
      %v518 = vld [vmem:[%s1 + $0xe0] sm:$0xff]
      %v519 = vld [vmem:[%s1 + $0xe8] sm:$0xff]
      %v520 = vld [vmem:[%s1 + $0xf0] sm:$0xff]
      %v521 = vld [vmem:[%s1 + $0xf8] sm:$0xff]
      %v522 = vld [vmem:[%s1 + $0x100] sm:$0xff]
      %v523 = vld [vmem:[%s1 + $0x108] sm:$0xff]
      %v524 = vld [vmem:[%s1 + $0x110] sm:$0xff]
      %v525 = vld [vmem:[%s1 + $0x118] sm:$0xff]
      %v526 = vld [vmem:[%s1 + $0x120] sm:$0xff]
      %v527 = vld [vmem:[%s1 + $0x128] sm:$0xff]
      %v528 = vld [vmem:[%s1 + $0x130] sm:$0xff]
      %v529 = vld [vmem:[%s1 + $0x138] sm:$0xff]
      %v530 = vld [vmem:[%s1 + $0x140] sm:$0xff]
      %v531 = vld [vmem:[%s1 + $0x148] sm:$0xff]
      %v532 = vld [vmem:[%s1 + $0x150] sm:$0xff]
      %v533 = vld [vmem:[%s1 + $0x158] sm:$0xff]
      %v534 = vld [vmem:[%s1 + $0x160] sm:$0xff]
      %v535 = vld [vmem:[%s1 + $0x168] sm:$0xff]
      %v536 = vld [vmem:[%s1 + $0x170] sm:$0xff]
      %v537 = vld [vmem:[%s1 + $0x178] sm:$0xff]
      %v538 = vld [vmem:[%s2] sm:$0x3]
      %v539 = vld [vmem:[%s3] sm:$0x1]
      %v541 = vlaneseq
      %v542 = vshrl.u32 %v541, 7
      %v543 = vsub.s32 0, %v542
      %v544 = vrot.slane %v539, %v543
      %v594 = vunpack.c.l.b16 %v442
      %v595 = vunpack.c.l.b16 %v443
      %v596 = vunpack.c.l.b16 %v444
      %v597 = vunpack.c.l.b16 %v445
      %v598 = vunpack.c.l.b16 %v446
      %v599 = vunpack.c.l.b16 %v447
      %v600 = vunpack.c.l.b16 %v448
      %v601 = vunpack.c.l.b16 %v449
      %v602 = vunpack.c.l.b16 %v450
      %v603 = vunpack.c.l.b16 %v451
      %v604 = vunpack.c.l.b16 %v452
      %v605 = vunpack.c.l.b16 %v453
      %v606 = vunpack.c.l.b16 %v454
      %v607 = vunpack.c.l.b16 %v455
      %v608 = vunpack.c.l.b16 %v456
      %v609 = vunpack.c.l.b16 %v457
      %v610 = vunpack.c.l.b16 %v458
      %v611 = vunpack.c.l.b16 %v459
      %v612 = vunpack.c.l.b16 %v460
      %v613 = vunpack.c.l.b16 %v461
      %v614 = vunpack.c.l.b16 %v462
      %v615 = vunpack.c.l.b16 %v463
      %v616 = vunpack.c.l.b16 %v464
      %v617 = vunpack.c.l.b16 %v465
      %v618 = vunpack.c.l.b16 %v466
      %v619 = vunpack.c.l.b16 %v467
      %v620 = vunpack.c.l.b16 %v468
      %v621 = vunpack.c.l.b16 %v469
      %v622 = vunpack.c.l.b16 %v470
      %v623 = vunpack.c.l.b16 %v471
      %v624 = vunpack.c.l.b16 %v472
      %v625 = vunpack.c.l.b16 %v473
      %v626 = vunpack.c.l.b16 %v474
      %v627 = vunpack.c.l.b16 %v475
      %v628 = vunpack.c.l.b16 %v476
      %v629 = vunpack.c.l.b16 %v477
      %v630 = vunpack.c.l.b16 %v478
      %v631 = vunpack.c.l.b16 %v479
      %v632 = vunpack.c.l.b16 %v480
      %v633 = vunpack.c.l.b16 %v481
      %v634 = vunpack.c.l.b16 %v482
      %v635 = vunpack.c.l.b16 %v483
      %v636 = vunpack.c.l.b16 %v484
      %v637 = vunpack.c.l.b16 %v485
      %v638 = vunpack.c.l.b16 %v486
      %v639 = vunpack.c.l.b16 %v487
      %v640 = vunpack.c.l.b16 %v488
      %v641 = vunpack.c.l.b16 %v489
      %v642 = vpack.c.b16 %v595, %v594
      %v643 = vpack.c.b16 %v597, %v596
      %v644 = vpack.c.b16 %v599, %v598
      %v645 = vpack.c.b16 %v601, %v600
      %v646 = vpack.c.b16 %v603, %v602
      %v647 = vpack.c.b16 %v605, %v604
      %v648 = vpack.c.b16 %v607, %v606
      %v649 = vpack.c.b16 %v609, %v608
      %v650 = vpack.c.b16 %v611, %v610
      %v651 = vpack.c.b16 %v613, %v612
      %v652 = vpack.c.b16 %v615, %v614
      %v653 = vpack.c.b16 %v617, %v616
      %v654 = vpack.c.b16 %v619, %v618
      %v655 = vpack.c.b16 %v621, %v620
      %v656 = vpack.c.b16 %v623, %v622
      %v657 = vpack.c.b16 %v625, %v624
      %v658 = vpack.c.b16 %v627, %v626
      %v659 = vpack.c.b16 %v629, %v628
      %v660 = vpack.c.b16 %v631, %v630
      %v661 = vpack.c.b16 %v633, %v632
      %v662 = vpack.c.b16 %v635, %v634
      %v663 = vpack.c.b16 %v637, %v636
      %v664 = vpack.c.b16 %v639, %v638
      %v665 = vpack.c.b16 %v641, %v640
      %vm666 = vcmask 31744
      %v668 = vsel %vm666, %v642, 0
      %v671 = vsel %vm666, %v643, 0
      %v674 = vsel %vm666, %v644, 0
      %v677 = vsel %vm666, %v645, 0
      %v680 = vsel %vm666, %v646, 0
      %v683 = vsel %vm666, %v647, 0
      %v686 = vsel %vm666, %v648, 0
      %v689 = vsel %vm666, %v649, 0
      %v692 = vsel %vm666, %v650, 0
      %v695 = vsel %vm666, %v651, 0
      %v698 = vsel %vm666, %v652, 0
      %v701 = vsel %vm666, %v653, 0
      %v704 = vsel %vm666, %v654, 0
      %v707 = vsel %vm666, %v655, 0
      %v710 = vsel %vm666, %v656, 0
      %v713 = vsel %vm666, %v657, 0
      %v716 = vsel %vm666, %v658, 0
      %v719 = vsel %vm666, %v659, 0
      %v722 = vsel %vm666, %v660, 0
      %v725 = vsel %vm666, %v661, 0
      %v728 = vsel %vm666, %v662, 0
      %v731 = vsel %vm666, %v663, 0
      %v734 = vsel %vm666, %v664, 0
      %v737 = vsel %vm666, %v665, 0
      %vm739 = vcmask 1041408
      %v741 = vsel %vm739, %v538, 0
      %743 = vmatprep.subr.bf16.mxu0 0
      %744 = vmatpush1.bf16.msra.mxu0 0
      %745 = vmatprep.subr.bf16.mxu0 0
      %746 = vmatpush1.bf16.msra.mxu0 0
      %747 = vmatprep.subr.bf16.mxu0 0
      %748 = vmatpush1.bf16.msra.mxu0 0
      %749 = vmatprep.subr.bf16.mxu0 0
      %750 = vmatpush1.bf16.msra.mxu0 0
      %751 = vmatprep.subr.bf16.mxu0 0
      %752 = vmatpush1.bf16.msra.mxu0 0
      %753 = vmatprep.subr.bf16.mxu0 0
      %754 = vmatpush1.bf16.msra.mxu0 0
      %755 = vmatprep.subr.bf16.mxu0 0
      %756 = vmatpush1.bf16.msra.mxu0 0
      %757 = vmatprep.subr.bf16.mxu0 0
      %758 = vmatpush1.bf16.msra.mxu0 %v741
      %759 = vmatprep.subr.bf16.mxu0 0
      %760 = vmatpush2.bf16.msra.mxu0 0
      %761 = vmatprep.subr.bf16.mxu0 0
      %762 = vmatpush2.bf16.msra.mxu0 0
      %763 = vmatprep.subr.bf16.mxu0 0
      %764 = vmatpush2.bf16.msra.mxu0 0
      %765 = vmatprep.subr.bf16.mxu0 0
      %766 = vmatpush2.bf16.msra.mxu0 0
      %767 = vmatprep.subr.bf16.mxu0 0
      %768 = vmatpush2.bf16.msra.mxu0 0
      %769 = vmatprep.subr.bf16.mxu0 0
      %770 = vmatpush2.bf16.msra.mxu0 0
      %771 = vmatprep.subr.bf16.mxu0 0
      %772 = vmatpush2.bf16.msra.mxu0 0
      %773 = vmatprep.subr.bf16.mxu0 0
      %774 = vmatpush2.bf16.msra.mxu0 0
      %775 = vmatprep.mubr.bf16.mxu0 0
      %776 = vmatmul.mubr.bf16.gmra.mxu0 %v668
      %v777 = vpop.f32.mrf.mxu0
      %v778 = vadd.f32 %v544, %v777
      %v779 = vpop.f32.mrf.mxu0
      %v780 = vpop.f32.mrf.mxu0
      %v781 = vadd.f32 %v544, %v780
      %v782 = vpop.f32.mrf.mxu0
      %783 = vmatprep.mubr.bf16.mxu0 0
      %784 = vmatmul.mubr.bf16.gmra.mxu0 %v671
      %v785 = vpop.f32.mrf.mxu0
      %v786 = vadd.f32 %v544, %v785
      %v787 = vpop.f32.mrf.mxu0
      %v788 = vpop.f32.mrf.mxu0
      %v789 = vadd.f32 %v544, %v788
      %v790 = vpop.f32.mrf.mxu0
      %791 = vmatprep.mubr.bf16.mxu0 0
      %792 = vmatmul.mubr.bf16.gmra.mxu0 %v674
      %v793 = vpop.f32.mrf.mxu0
      %v794 = vadd.f32 %v544, %v793
      %v795 = vpop.f32.mrf.mxu0
      %v796 = vpop.f32.mrf.mxu0
      %v797 = vadd.f32 %v544, %v796
      %v798 = vpop.f32.mrf.mxu0
      %799 = vmatprep.mubr.bf16.mxu0 0
      %800 = vmatmul.mubr.bf16.gmra.mxu0 %v677
      %v801 = vpop.f32.mrf.mxu0
      %v802 = vadd.f32 %v544, %v801
      %v803 = vpop.f32.mrf.mxu0
      %v804 = vpop.f32.mrf.mxu0
      %v805 = vadd.f32 %v544, %v804
      %v806 = vpop.f32.mrf.mxu0
      %807 = vmatprep.mubr.bf16.mxu0 0
      %808 = vmatmul.mubr.bf16.gmra.mxu0 %v680
      %v809 = vpop.f32.mrf.mxu0
      %v810 = vadd.f32 %v544, %v809
      %v811 = vpop.f32.mrf.mxu0
      %v812 = vpop.f32.mrf.mxu0
      %v813 = vadd.f32 %v544, %v812
      %v814 = vpop.f32.mrf.mxu0
      %815 = vmatprep.mubr.bf16.mxu0 0
      %816 = vmatmul.mubr.bf16.gmra.mxu0 %v683
      %v817 = vpop.f32.mrf.mxu0
      %v818 = vadd.f32 %v544, %v817
      %v819 = vpop.f32.mrf.mxu0
      %v820 = vpop.f32.mrf.mxu0
      %v821 = vadd.f32 %v544, %v820
      %v822 = vpop.f32.mrf.mxu0
      %823 = vmatprep.mubr.bf16.mxu0 0
      %824 = vmatmul.mubr.bf16.gmra.mxu0 %v686
      %v825 = vpop.f32.mrf.mxu0
      %v826 = vadd.f32 %v544, %v825
      %v827 = vpop.f32.mrf.mxu0
      %v828 = vpop.f32.mrf.mxu0
      %v829 = vadd.f32 %v544, %v828
      %v830 = vpop.f32.mrf.mxu0
      %831 = vmatprep.mubr.bf16.mxu0 0
      %832 = vmatmul.mubr.bf16.gmra.mxu0 %v689
      %v833 = vpop.f32.mrf.mxu0
      %v834 = vadd.f32 %v544, %v833
      %v835 = vpop.f32.mrf.mxu0
      %v836 = vpop.f32.mrf.mxu0
      %v837 = vadd.f32 %v544, %v836
      %v838 = vpop.f32.mrf.mxu0
      %839 = vmatprep.mubr.bf16.mxu0 0
      %840 = vmatmul.mubr.bf16.gmra.mxu0 %v692
      %v841 = vpop.f32.mrf.mxu0
      %v842 = vadd.f32 %v544, %v841
      %v843 = vpop.f32.mrf.mxu0
      %v844 = vpop.f32.mrf.mxu0
      %v845 = vadd.f32 %v544, %v844
      %v846 = vpop.f32.mrf.mxu0
      %847 = vmatprep.mubr.bf16.mxu0 0
      %848 = vmatmul.mubr.bf16.gmra.mxu0 %v695
      %v849 = vpop.f32.mrf.mxu0
      %v850 = vadd.f32 %v544, %v849
      %v851 = vpop.f32.mrf.mxu0
      %v852 = vpop.f32.mrf.mxu0
      %v853 = vadd.f32 %v544, %v852
      %v854 = vpop.f32.mrf.mxu0
      %855 = vmatprep.mubr.bf16.mxu0 0
      %856 = vmatmul.mubr.bf16.gmra.mxu0 %v698
      %v857 = vpop.f32.mrf.mxu0
      %v858 = vadd.f32 %v544, %v857
      %v859 = vpop.f32.mrf.mxu0
      %v860 = vpop.f32.mrf.mxu0
      %v861 = vadd.f32 %v544, %v860
      %v862 = vpop.f32.mrf.mxu0
      %863 = vmatprep.mubr.bf16.mxu0 0
      %864 = vmatmul.mubr.bf16.gmra.mxu0 %v701
      %v865 = vpop.f32.mrf.mxu0
      %v866 = vadd.f32 %v544, %v865
      %v867 = vpop.f32.mrf.mxu0
      %v868 = vpop.f32.mrf.mxu0
      %v869 = vadd.f32 %v544, %v868
      %v870 = vpop.f32.mrf.mxu0
      %871 = vmatprep.mubr.bf16.mxu0 0
      %872 = vmatmul.mubr.bf16.gmra.mxu0 %v704
      %v873 = vpop.f32.mrf.mxu0
      %v874 = vadd.f32 %v544, %v873
      %v875 = vpop.f32.mrf.mxu0
      %v876 = vpop.f32.mrf.mxu0
      %v877 = vadd.f32 %v544, %v876
      %v878 = vpop.f32.mrf.mxu0
      %879 = vmatprep.mubr.bf16.mxu0 0
      %880 = vmatmul.mubr.bf16.gmra.mxu0 %v707
      %v881 = vpop.f32.mrf.mxu0
      %v882 = vadd.f32 %v544, %v881
      %v883 = vpop.f32.mrf.mxu0
      %v884 = vpop.f32.mrf.mxu0
      %v885 = vadd.f32 %v544, %v884
      %v886 = vpop.f32.mrf.mxu0
      %887 = vmatprep.mubr.bf16.mxu0 0
      %888 = vmatmul.mubr.bf16.gmra.mxu0 %v710
      %v889 = vpop.f32.mrf.mxu0
      %v890 = vadd.f32 %v544, %v889
      %v891 = vpop.f32.mrf.mxu0
      %v892 = vpop.f32.mrf.mxu0
      %v893 = vadd.f32 %v544, %v892
      %v894 = vpop.f32.mrf.mxu0
      %895 = vmatprep.mubr.bf16.mxu0 0
      %896 = vmatmul.mubr.bf16.gmra.mxu0 %v713
      %v897 = vpop.f32.mrf.mxu0
      %v898 = vadd.f32 %v544, %v897
      %v899 = vpop.f32.mrf.mxu0
      %v900 = vpop.f32.mrf.mxu0
      %v901 = vadd.f32 %v544, %v900
      %v902 = vpop.f32.mrf.mxu0
      %903 = vmatprep.mubr.bf16.mxu0 0
      %904 = vmatmul.mubr.bf16.gmra.mxu0 %v716
      %v905 = vpop.f32.mrf.mxu0
      %v906 = vadd.f32 %v544, %v905
      %v907 = vpop.f32.mrf.mxu0
      %v908 = vpop.f32.mrf.mxu0
      %v909 = vadd.f32 %v544, %v908
      %v910 = vpop.f32.mrf.mxu0
      %911 = vmatprep.mubr.bf16.mxu0 0
      %912 = vmatmul.mubr.bf16.gmra.mxu0 %v719
      %v913 = vpop.f32.mrf.mxu0
      %v914 = vadd.f32 %v544, %v913
      %v915 = vpop.f32.mrf.mxu0
      %v916 = vpop.f32.mrf.mxu0
      %v917 = vadd.f32 %v544, %v916
      %v918 = vpop.f32.mrf.mxu0
      %919 = vmatprep.mubr.bf16.mxu0 0
      %920 = vmatmul.mubr.bf16.gmra.mxu0 %v722
      %v921 = vpop.f32.mrf.mxu0
      %v922 = vadd.f32 %v544, %v921
      %v923 = vpop.f32.mrf.mxu0
      %v924 = vpop.f32.mrf.mxu0
      %v925 = vadd.f32 %v544, %v924
      %v926 = vpop.f32.mrf.mxu0
      %927 = vmatprep.mubr.bf16.mxu0 0
      %928 = vmatmul.mubr.bf16.gmra.mxu0 %v725
      %v929 = vpop.f32.mrf.mxu0
      %v930 = vadd.f32 %v544, %v929
      %v931 = vpop.f32.mrf.mxu0
      %v932 = vpop.f32.mrf.mxu0
      %v933 = vadd.f32 %v544, %v932
      %v934 = vpop.f32.mrf.mxu0
      %935 = vmatprep.mubr.bf16.mxu0 0
      %936 = vmatmul.mubr.bf16.gmra.mxu0 %v728
      %v937 = vpop.f32.mrf.mxu0
      %v938 = vadd.f32 %v544, %v937
      %v939 = vpop.f32.mrf.mxu0
      %v940 = vpop.f32.mrf.mxu0
      %v941 = vadd.f32 %v544, %v940
      %v942 = vpop.f32.mrf.mxu0
      %943 = vmatprep.mubr.bf16.mxu0 0
      %944 = vmatmul.mubr.bf16.gmra.mxu0 %v731
      %v945 = vpop.f32.mrf.mxu0
      %v946 = vadd.f32 %v544, %v945
      %v947 = vpop.f32.mrf.mxu0
      %v948 = vpop.f32.mrf.mxu0
      %v949 = vadd.f32 %v544, %v948
      %v950 = vpop.f32.mrf.mxu0
      %951 = vmatprep.mubr.bf16.mxu0 0
      %952 = vmatmul.mubr.bf16.gmra.mxu0 %v734
      %v953 = vpop.f32.mrf.mxu0
      %v954 = vadd.f32 %v544, %v953
      %v955 = vpop.f32.mrf.mxu0
      %v956 = vpop.f32.mrf.mxu0
      %v957 = vadd.f32 %v544, %v956
      %v958 = vpop.f32.mrf.mxu0
      %959 = vmatprep.mubr.bf16.mxu0 0
      %960 = vmatmul.mubr.bf16.gmra.mxu0 %v737
      %v961 = vpop.f32.mrf.mxu0
      %v962 = vadd.f32 %v544, %v961
      %v963 = vpop.f32.mrf.mxu0
      %v964 = vpop.f32.mrf.mxu0
      %v965 = vadd.f32 %v544, %v964
      %v966 = vpop.f32.mrf.mxu0
      %967 = vdwg.mxu0
      %v968 = vxor.u32 %v778, 2147483648
      %v969 = vxor.u32 %v781, 2147483648
      %v970 = vxor.u32 %v786, 2147483648
      %v971 = vxor.u32 %v789, 2147483648
      %v972 = vxor.u32 %v794, 2147483648
      %v973 = vxor.u32 %v797, 2147483648
      %v974 = vxor.u32 %v802, 2147483648
      %v975 = vxor.u32 %v805, 2147483648
      %v976 = vxor.u32 %v810, 2147483648
      %v977 = vxor.u32 %v813, 2147483648
      %v978 = vxor.u32 %v818, 2147483648
      %v979 = vxor.u32 %v821, 2147483648
      %v980 = vxor.u32 %v826, 2147483648
      %v981 = vxor.u32 %v829, 2147483648
      %v982 = vxor.u32 %v834, 2147483648
      %v983 = vxor.u32 %v837, 2147483648
      %v984 = vxor.u32 %v842, 2147483648
      %v985 = vxor.u32 %v845, 2147483648
      %v986 = vxor.u32 %v850, 2147483648
      %v987 = vxor.u32 %v853, 2147483648
      %v988 = vxor.u32 %v858, 2147483648
      %v989 = vxor.u32 %v861, 2147483648
      %v990 = vxor.u32 %v866, 2147483648
      %v991 = vxor.u32 %v869, 2147483648
      %v992 = vxor.u32 %v874, 2147483648
      %v993 = vxor.u32 %v877, 2147483648
      %v994 = vxor.u32 %v882, 2147483648
      %v995 = vxor.u32 %v885, 2147483648
      %v996 = vxor.u32 %v890, 2147483648
      %v997 = vxor.u32 %v893, 2147483648
      %v998 = vxor.u32 %v898, 2147483648
      %v999 = vxor.u32 %v901, 2147483648
      %v1000 = vxor.u32 %v906, 2147483648
      %v1001 = vxor.u32 %v909, 2147483648
      %v1002 = vxor.u32 %v914, 2147483648
      %v1003 = vxor.u32 %v917, 2147483648
      %v1004 = vxor.u32 %v922, 2147483648
      %v1005 = vxor.u32 %v925, 2147483648
      %v1006 = vxor.u32 %v930, 2147483648
      %v1007 = vxor.u32 %v933, 2147483648
      %v1008 = vxor.u32 %v938, 2147483648
      %v1009 = vxor.u32 %v941, 2147483648
      %v1010 = vxor.u32 %v946, 2147483648
      %v1011 = vxor.u32 %v949, 2147483648
      %v1012 = vxor.u32 %v954, 2147483648
      %v1013 = vxor.u32 %v957, 2147483648
      %v1014 = vxor.u32 %v962, 2147483648
      %v1015 = vxor.u32 %v965, 2147483648
      %v1016 = vmul.f32 %v968, 1.442695
      %v1017 = vpow.pop %v1016
      %v1018 = vmul.f32 %v969, 1.442695
      %v1019 = vpow.pop %v1018
      %v1020 = vmul.f32 %v970, 1.442695
      %v1021 = vpow.pop %v1020
      %v1022 = vmul.f32 %v971, 1.442695
      %v1023 = vpow.pop %v1022
      %v1024 = vmul.f32 %v972, 1.442695
      %v1025 = vpow.pop %v1024
      %v1026 = vmul.f32 %v973, 1.442695
      %v1027 = vpow.pop %v1026
      %v1028 = vmul.f32 %v974, 1.442695
      %v1029 = vpow.pop %v1028
      %v1030 = vmul.f32 %v975, 1.442695
      %v1031 = vpow.pop %v1030
      %v1032 = vmul.f32 %v976, 1.442695
      %v1033 = vpow.pop %v1032
      %v1034 = vmul.f32 %v977, 1.442695
      %v1035 = vpow.pop %v1034
      %v1036 = vmul.f32 %v978, 1.442695
      %v1037 = vpow.pop %v1036
      %v1038 = vmul.f32 %v979, 1.442695
      %v1039 = vpow.pop %v1038
      %v1040 = vmul.f32 %v980, 1.442695
      %v1041 = vpow.pop %v1040
      %v1042 = vmul.f32 %v981, 1.442695
      %v1043 = vpow.pop %v1042
      %v1044 = vmul.f32 %v982, 1.442695
      %v1045 = vpow.pop %v1044
      %v1046 = vmul.f32 %v983, 1.442695
      %v1047 = vpow.pop %v1046
      %v1048 = vmul.f32 %v984, 1.442695
      %v1049 = vpow.pop %v1048
      %v1050 = vmul.f32 %v985, 1.442695
      %v1051 = vpow.pop %v1050
      %v1052 = vmul.f32 %v986, 1.442695
      %v1053 = vpow.pop %v1052
      %v1054 = vmul.f32 %v987, 1.442695
      %v1055 = vpow.pop %v1054
      %v1056 = vmul.f32 %v988, 1.442695
      %v1057 = vpow.pop %v1056
      %v1058 = vmul.f32 %v989, 1.442695
      %v1059 = vpow.pop %v1058
      %v1060 = vmul.f32 %v990, 1.442695
      %v1061 = vpow.pop %v1060
      %v1062 = vmul.f32 %v991, 1.442695
      %v1063 = vpow.pop %v1062
      %v1064 = vmul.f32 %v992, 1.442695
      %v1065 = vpow.pop %v1064
      %v1066 = vmul.f32 %v993, 1.442695
      %v1067 = vpow.pop %v1066
      %v1068 = vmul.f32 %v994, 1.442695
      %v1069 = vpow.pop %v1068
      %v1070 = vmul.f32 %v995, 1.442695
      %v1071 = vpow.pop %v1070
      %v1072 = vmul.f32 %v996, 1.442695
      %v1073 = vpow.pop %v1072
      %v1074 = vmul.f32 %v997, 1.442695
      %v1075 = vpow.pop %v1074
      %v1076 = vmul.f32 %v998, 1.442695
      %v1077 = vpow.pop %v1076
      %v1078 = vmul.f32 %v999, 1.442695
      %v1079 = vpow.pop %v1078
      %v1080 = vmul.f32 %v1000, 1.442695
      %v1081 = vpow.pop %v1080
      %v1082 = vmul.f32 %v1001, 1.442695
      %v1083 = vpow.pop %v1082
      %v1084 = vmul.f32 %v1002, 1.442695
      %v1085 = vpow.pop %v1084
      %v1086 = vmul.f32 %v1003, 1.442695
      %v1087 = vpow.pop %v1086
      %v1088 = vmul.f32 %v1004, 1.442695
      %v1089 = vpow.pop %v1088
      %v1090 = vmul.f32 %v1005, 1.442695
      %v1091 = vpow.pop %v1090
      %v1092 = vmul.f32 %v1006, 1.442695
      %v1093 = vpow.pop %v1092
      %v1094 = vmul.f32 %v1007, 1.442695
      %v1095 = vpow.pop %v1094
      %v1096 = vmul.f32 %v1008, 1.442695
      %v1097 = vpow.pop %v1096
      %v1098 = vmul.f32 %v1009, 1.442695
      %v1099 = vpow.pop %v1098
      %v1100 = vmul.f32 %v1010, 1.442695
      %v1101 = vpow.pop %v1100
      %v1102 = vmul.f32 %v1011, 1.442695
      %v1103 = vpow.pop %v1102
      %v1104 = vmul.f32 %v1012, 1.442695
      %v1105 = vpow.pop %v1104
      %v1106 = vmul.f32 %v1013, 1.442695
      %v1107 = vpow.pop %v1106
      %v1108 = vmul.f32 %v1014, 1.442695
      %v1109 = vpow.pop %v1108
      %v1110 = vmul.f32 %v1015, 1.442695
      %v1111 = vpow.pop %v1110
      %v1112 = vadd.f32 %v1017, 1.0
      %v1113 = vadd.f32 %v1019, 1.0
      %v1114 = vadd.f32 %v1021, 1.0
      %v1115 = vadd.f32 %v1023, 1.0
      %v1116 = vadd.f32 %v1025, 1.0
      %v1117 = vadd.f32 %v1027, 1.0
      %v1118 = vadd.f32 %v1029, 1.0
      %v1119 = vadd.f32 %v1031, 1.0
      %v1120 = vadd.f32 %v1033, 1.0
      %v1121 = vadd.f32 %v1035, 1.0
      %v1122 = vadd.f32 %v1037, 1.0
      %v1123 = vadd.f32 %v1039, 1.0
      %v1124 = vadd.f32 %v1041, 1.0
      %v1125 = vadd.f32 %v1043, 1.0
      %v1126 = vadd.f32 %v1045, 1.0
      %v1127 = vadd.f32 %v1047, 1.0
      %v1128 = vadd.f32 %v1049, 1.0
      %v1129 = vadd.f32 %v1051, 1.0
      %v1130 = vadd.f32 %v1053, 1.0
      %v1131 = vadd.f32 %v1055, 1.0
      %v1132 = vadd.f32 %v1057, 1.0
      %v1133 = vadd.f32 %v1059, 1.0
      %v1134 = vadd.f32 %v1061, 1.0
      %v1135 = vadd.f32 %v1063, 1.0
      %v1136 = vadd.f32 %v1065, 1.0
      %v1137 = vadd.f32 %v1067, 1.0
      %v1138 = vadd.f32 %v1069, 1.0
      %v1139 = vadd.f32 %v1071, 1.0
      %v1140 = vadd.f32 %v1073, 1.0
      %v1141 = vadd.f32 %v1075, 1.0
      %v1142 = vadd.f32 %v1077, 1.0
      %v1143 = vadd.f32 %v1079, 1.0
      %v1144 = vadd.f32 %v1081, 1.0
      %v1145 = vadd.f32 %v1083, 1.0
      %v1146 = vadd.f32 %v1085, 1.0
      %v1147 = vadd.f32 %v1087, 1.0
      %v1148 = vadd.f32 %v1089, 1.0
      %v1149 = vadd.f32 %v1091, 1.0
      %v1150 = vadd.f32 %v1093, 1.0
      %v1151 = vadd.f32 %v1095, 1.0
      %v1152 = vadd.f32 %v1097, 1.0
      %v1153 = vadd.f32 %v1099, 1.0
      %v1154 = vadd.f32 %v1101, 1.0
      %v1155 = vadd.f32 %v1103, 1.0
      %v1156 = vadd.f32 %v1105, 1.0
      %v1157 = vadd.f32 %v1107, 1.0
      %v1158 = vadd.f32 %v1109, 1.0
      %v1159 = vadd.f32 %v1111, 1.0
      %v1160 = vrcp.pop %v1112
      %v1161 = vmul.f32 1.0, %v1160
      %v1162 = vrcp.pop %v1113
      %v1163 = vmul.f32 1.0, %v1162
      %v1164 = vrcp.pop %v1114
      %v1165 = vmul.f32 1.0, %v1164
      %v1166 = vrcp.pop %v1115
      %v1167 = vmul.f32 1.0, %v1166
      %v1168 = vrcp.pop %v1116
      %v1169 = vmul.f32 1.0, %v1168
      %v1170 = vrcp.pop %v1117
      %v1171 = vmul.f32 1.0, %v1170
      %v1172 = vrcp.pop %v1118
      %v1173 = vmul.f32 1.0, %v1172
      %v1174 = vrcp.pop %v1119
      %v1175 = vmul.f32 1.0, %v1174
      %v1176 = vrcp.pop %v1120
      %v1177 = vmul.f32 1.0, %v1176
      %v1178 = vrcp.pop %v1121
      %v1179 = vmul.f32 1.0, %v1178
      %v1180 = vrcp.pop %v1122
      %v1181 = vmul.f32 1.0, %v1180
      %v1182 = vrcp.pop %v1123
      %v1183 = vmul.f32 1.0, %v1182
      %v1184 = vrcp.pop %v1124
      %v1185 = vmul.f32 1.0, %v1184
      %v1186 = vrcp.pop %v1125
      %v1187 = vmul.f32 1.0, %v1186
      %v1188 = vrcp.pop %v1126
      %v1189 = vmul.f32 1.0, %v1188
      %v1190 = vrcp.pop %v1127
      %v1191 = vmul.f32 1.0, %v1190
      %v1192 = vrcp.pop %v1128
      %v1193 = vmul.f32 1.0, %v1192
      %v1194 = vrcp.pop %v1129
      %v1195 = vmul.f32 1.0, %v1194
      %v1196 = vrcp.pop %v1130
      %v1197 = vmul.f32 1.0, %v1196
      %v1198 = vrcp.pop %v1131
      %v1199 = vmul.f32 1.0, %v1198
      %v1200 = vrcp.pop %v1132
      %v1201 = vmul.f32 1.0, %v1200
      %v1202 = vrcp.pop %v1133
      %v1203 = vmul.f32 1.0, %v1202
      %v1204 = vrcp.pop %v1134
      %v1205 = vmul.f32 1.0, %v1204
      %v1206 = vrcp.pop %v1135
      %v1207 = vmul.f32 1.0, %v1206
      %v1208 = vrcp.pop %v1136
      %v1209 = vmul.f32 1.0, %v1208
      %v1210 = vrcp.pop %v1137
      %v1211 = vmul.f32 1.0, %v1210
      %v1212 = vrcp.pop %v1138
      %v1213 = vmul.f32 1.0, %v1212
      %v1214 = vrcp.pop %v1139
      %v1215 = vmul.f32 1.0, %v1214
      %v1216 = vrcp.pop %v1140
      %v1217 = vmul.f32 1.0, %v1216
      %v1218 = vrcp.pop %v1141
      %v1219 = vmul.f32 1.0, %v1218
      %v1220 = vrcp.pop %v1142
      %v1221 = vmul.f32 1.0, %v1220
      %v1222 = vrcp.pop %v1143
      %v1223 = vmul.f32 1.0, %v1222
      %v1224 = vrcp.pop %v1144
      %v1225 = vmul.f32 1.0, %v1224
      %v1226 = vrcp.pop %v1145
      %v1227 = vmul.f32 1.0, %v1226
      %v1228 = vrcp.pop %v1146
      %v1229 = vmul.f32 1.0, %v1228
      %v1230 = vrcp.pop %v1147
      %v1231 = vmul.f32 1.0, %v1230
      %v1232 = vrcp.pop %v1148
      %v1233 = vmul.f32 1.0, %v1232
      %v1234 = vrcp.pop %v1149
      %v1235 = vmul.f32 1.0, %v1234
      %v1236 = vrcp.pop %v1150
      %v1237 = vmul.f32 1.0, %v1236
      %v1238 = vrcp.pop %v1151
      %v1239 = vmul.f32 1.0, %v1238
      %v1240 = vrcp.pop %v1152
      %v1241 = vmul.f32 1.0, %v1240
      %v1242 = vrcp.pop %v1153
      %v1243 = vmul.f32 1.0, %v1242
      %v1244 = vrcp.pop %v1154
      %v1245 = vmul.f32 1.0, %v1244
      %v1246 = vrcp.pop %v1155
      %v1247 = vmul.f32 1.0, %v1246
      %v1248 = vrcp.pop %v1156
      %v1249 = vmul.f32 1.0, %v1248
      %v1250 = vrcp.pop %v1157
      %v1251 = vmul.f32 1.0, %v1250
      %v1252 = vrcp.pop %v1158
      %v1253 = vmul.f32 1.0, %v1252
      %v1254 = vrcp.pop %v1159
      %v1255 = vmul.f32 1.0, %v1254
      %v1256 = vmul.f32 %v778, %v1161
      %v1257 = vmul.f32 %v781, %v1163
      %v1258 = vmul.f32 %v786, %v1165
      %v1259 = vmul.f32 %v789, %v1167
      %v1260 = vmul.f32 %v794, %v1169
      %v1261 = vmul.f32 %v797, %v1171
      %v1262 = vmul.f32 %v802, %v1173
      %v1263 = vmul.f32 %v805, %v1175
      %v1264 = vmul.f32 %v810, %v1177
      %v1265 = vmul.f32 %v813, %v1179
      %v1266 = vmul.f32 %v818, %v1181
      %v1267 = vmul.f32 %v821, %v1183
      %v1268 = vmul.f32 %v826, %v1185
      %v1269 = vmul.f32 %v829, %v1187
      %v1270 = vmul.f32 %v834, %v1189
      %v1271 = vmul.f32 %v837, %v1191
      %v1272 = vmul.f32 %v842, %v1193
      %v1273 = vmul.f32 %v845, %v1195
      %v1274 = vmul.f32 %v850, %v1197
      %v1275 = vmul.f32 %v853, %v1199
      %v1276 = vmul.f32 %v858, %v1201
      %v1277 = vmul.f32 %v861, %v1203
      %v1278 = vmul.f32 %v866, %v1205
      %v1279 = vmul.f32 %v869, %v1207
      %v1280 = vmul.f32 %v874, %v1209
      %v1281 = vmul.f32 %v877, %v1211
      %v1282 = vmul.f32 %v882, %v1213
      %v1283 = vmul.f32 %v885, %v1215
      %v1284 = vmul.f32 %v890, %v1217
      %v1285 = vmul.f32 %v893, %v1219
      %v1286 = vmul.f32 %v898, %v1221
      %v1287 = vmul.f32 %v901, %v1223
      %v1288 = vmul.f32 %v906, %v1225
      %v1289 = vmul.f32 %v909, %v1227
      %v1290 = vmul.f32 %v914, %v1229
      %v1291 = vmul.f32 %v917, %v1231
      %v1292 = vmul.f32 %v922, %v1233
      %v1293 = vmul.f32 %v925, %v1235
      %v1294 = vmul.f32 %v930, %v1237
      %v1295 = vmul.f32 %v933, %v1239
      %v1296 = vmul.f32 %v938, %v1241
      %v1297 = vmul.f32 %v941, %v1243
      %v1298 = vmul.f32 %v946, %v1245
      %v1299 = vmul.f32 %v949, %v1247
      %v1300 = vmul.f32 %v954, %v1249
      %v1301 = vmul.f32 %v957, %v1251
      %v1302 = vmul.f32 %v962, %v1253
      %v1303 = vmul.f32 %v965, %v1255
      %v1304 = vld [vmem:[%s4] sm:$0x3]
      %v1305 = vld [vmem:[%s5] sm:$0x1]
      %v1307 = vlaneseq
      %v1308 = vshrl.u32 %v1307, 7
      %v1309 = vsub.s32 0, %v1308
      %v1310 = vrot.slane %v1305, %v1309
      %v1313 = vsel %vm739, %v1304, 0
      %1315 = vmatprep.subr.bf16.mxu0 0
      %1316 = vmatpush1.bf16.msra.mxu0 0
      %1317 = vmatprep.subr.bf16.mxu0 0
      %1318 = vmatpush1.bf16.msra.mxu0 0
      %1319 = vmatprep.subr.bf16.mxu0 0
      %1320 = vmatpush1.bf16.msra.mxu0 0
      %1321 = vmatprep.subr.bf16.mxu0 0
      %1322 = vmatpush1.bf16.msra.mxu0 0
      %1323 = vmatprep.subr.bf16.mxu0 0
      %1324 = vmatpush1.bf16.msra.mxu0 0
      %1325 = vmatprep.subr.bf16.mxu0 0
      %1326 = vmatpush1.bf16.msra.mxu0 0
      %1327 = vmatprep.subr.bf16.mxu0 0
      %1328 = vmatpush1.bf16.msra.mxu0 0
      %1329 = vmatprep.subr.bf16.mxu0 0
      %1330 = vmatpush1.bf16.msra.mxu0 %v1313
      %1331 = vmatprep.subr.bf16.mxu0 0
      %1332 = vmatpush2.bf16.msra.mxu0 0
      %1333 = vmatprep.subr.bf16.mxu0 0
      %1334 = vmatpush2.bf16.msra.mxu0 0
      %1335 = vmatprep.subr.bf16.mxu0 0
      %1336 = vmatpush2.bf16.msra.mxu0 0
      %1337 = vmatprep.subr.bf16.mxu0 0
      %1338 = vmatpush2.bf16.msra.mxu0 0
      %1339 = vmatprep.subr.bf16.mxu0 0
      %1340 = vmatpush2.bf16.msra.mxu0 0
      %1341 = vmatprep.subr.bf16.mxu0 0
      %1342 = vmatpush2.bf16.msra.mxu0 0
      %1343 = vmatprep.subr.bf16.mxu0 0
      %1344 = vmatpush2.bf16.msra.mxu0 0
      %1345 = vmatprep.subr.bf16.mxu0 0
      %1346 = vmatpush2.bf16.msra.mxu0 0
      %1347 = vmatprep.mubr.bf16.mxu0 0
      %1348 = vmatmul.mubr.bf16.gmra.mxu0 %v668
      %v1349 = vpop.f32.mrf.mxu0
      %v1350 = vadd.f32 %v1310, %v1349
      %v1351 = vpop.f32.mrf.mxu0
      %v1352 = vpop.f32.mrf.mxu0
      %v1353 = vadd.f32 %v1310, %v1352
      %v1354 = vpop.f32.mrf.mxu0
      %1355 = vmatprep.mubr.bf16.mxu0 0
      %1356 = vmatmul.mubr.bf16.gmra.mxu0 %v671
      %v1357 = vpop.f32.mrf.mxu0
      %v1358 = vadd.f32 %v1310, %v1357
      %v1359 = vpop.f32.mrf.mxu0
      %v1360 = vpop.f32.mrf.mxu0
      %v1361 = vadd.f32 %v1310, %v1360
      %v1362 = vpop.f32.mrf.mxu0
      %1363 = vmatprep.mubr.bf16.mxu0 0
      %1364 = vmatmul.mubr.bf16.gmra.mxu0 %v674
      %v1365 = vpop.f32.mrf.mxu0
      %v1366 = vadd.f32 %v1310, %v1365
      %v1367 = vpop.f32.mrf.mxu0
      %v1368 = vpop.f32.mrf.mxu0
      %v1369 = vadd.f32 %v1310, %v1368
      %v1370 = vpop.f32.mrf.mxu0
      %1371 = vmatprep.mubr.bf16.mxu0 0
      %1372 = vmatmul.mubr.bf16.gmra.mxu0 %v677
      %v1373 = vpop.f32.mrf.mxu0
      %v1374 = vadd.f32 %v1310, %v1373
      %v1375 = vpop.f32.mrf.mxu0
      %v1376 = vpop.f32.mrf.mxu0
      %v1377 = vadd.f32 %v1310, %v1376
      %v1378 = vpop.f32.mrf.mxu0
      %1379 = vmatprep.mubr.bf16.mxu0 0
      %1380 = vmatmul.mubr.bf16.gmra.mxu0 %v680
      %v1381 = vpop.f32.mrf.mxu0
      %v1382 = vadd.f32 %v1310, %v1381
      %v1383 = vpop.f32.mrf.mxu0
      %v1384 = vpop.f32.mrf.mxu0
      %v1385 = vadd.f32 %v1310, %v1384
      %v1386 = vpop.f32.mrf.mxu0
      %1387 = vmatprep.mubr.bf16.mxu0 0
      %1388 = vmatmul.mubr.bf16.gmra.mxu0 %v683
      %v1389 = vpop.f32.mrf.mxu0
      %v1390 = vadd.f32 %v1310, %v1389
      %v1391 = vpop.f32.mrf.mxu0
      %v1392 = vpop.f32.mrf.mxu0
      %v1393 = vadd.f32 %v1310, %v1392
      %v1394 = vpop.f32.mrf.mxu0
      %1395 = vmatprep.mubr.bf16.mxu0 0
      %1396 = vmatmul.mubr.bf16.gmra.mxu0 %v686
      %v1397 = vpop.f32.mrf.mxu0
      %v1398 = vadd.f32 %v1310, %v1397
      %v1399 = vpop.f32.mrf.mxu0
      %v1400 = vpop.f32.mrf.mxu0
      %v1401 = vadd.f32 %v1310, %v1400
      %v1402 = vpop.f32.mrf.mxu0
      %1403 = vmatprep.mubr.bf16.mxu0 0
      %1404 = vmatmul.mubr.bf16.gmra.mxu0 %v689
      %v1405 = vpop.f32.mrf.mxu0
      %v1406 = vadd.f32 %v1310, %v1405
      %v1407 = vpop.f32.mrf.mxu0
      %v1408 = vpop.f32.mrf.mxu0
      %v1409 = vadd.f32 %v1310, %v1408
      %v1410 = vpop.f32.mrf.mxu0
      %1411 = vmatprep.mubr.bf16.mxu0 0
      %1412 = vmatmul.mubr.bf16.gmra.mxu0 %v692
      %v1413 = vpop.f32.mrf.mxu0
      %v1414 = vadd.f32 %v1310, %v1413
      %v1415 = vpop.f32.mrf.mxu0
      %v1416 = vpop.f32.mrf.mxu0
      %v1417 = vadd.f32 %v1310, %v1416
      %v1418 = vpop.f32.mrf.mxu0
      %1419 = vmatprep.mubr.bf16.mxu0 0
      %1420 = vmatmul.mubr.bf16.gmra.mxu0 %v695
      %v1421 = vpop.f32.mrf.mxu0
      %v1422 = vadd.f32 %v1310, %v1421
      %v1423 = vpop.f32.mrf.mxu0
      %v1424 = vpop.f32.mrf.mxu0
      %v1425 = vadd.f32 %v1310, %v1424
      %v1426 = vpop.f32.mrf.mxu0
      %1427 = vmatprep.mubr.bf16.mxu0 0
      %1428 = vmatmul.mubr.bf16.gmra.mxu0 %v698
      %v1429 = vpop.f32.mrf.mxu0
      %v1430 = vadd.f32 %v1310, %v1429
      %v1431 = vpop.f32.mrf.mxu0
      %v1432 = vpop.f32.mrf.mxu0
      %v1433 = vadd.f32 %v1310, %v1432
      %v1434 = vpop.f32.mrf.mxu0
      %1435 = vmatprep.mubr.bf16.mxu0 0
      %1436 = vmatmul.mubr.bf16.gmra.mxu0 %v701
      %v1437 = vpop.f32.mrf.mxu0
      %v1438 = vadd.f32 %v1310, %v1437
      %v1439 = vpop.f32.mrf.mxu0
      %v1440 = vpop.f32.mrf.mxu0
      %v1441 = vadd.f32 %v1310, %v1440
      %v1442 = vpop.f32.mrf.mxu0
      %1443 = vmatprep.mubr.bf16.mxu0 0
      %1444 = vmatmul.mubr.bf16.gmra.mxu0 %v704
      %v1445 = vpop.f32.mrf.mxu0
      %v1446 = vadd.f32 %v1310, %v1445
      %v1447 = vpop.f32.mrf.mxu0
      %v1448 = vpop.f32.mrf.mxu0
      %v1449 = vadd.f32 %v1310, %v1448
      %v1450 = vpop.f32.mrf.mxu0
      %1451 = vmatprep.mubr.bf16.mxu0 0
      %1452 = vmatmul.mubr.bf16.gmra.mxu0 %v707
      %v1453 = vpop.f32.mrf.mxu0
      %v1454 = vadd.f32 %v1310, %v1453
      %v1455 = vpop.f32.mrf.mxu0
      %v1456 = vpop.f32.mrf.mxu0
      %v1457 = vadd.f32 %v1310, %v1456
      %v1458 = vpop.f32.mrf.mxu0
      %1459 = vmatprep.mubr.bf16.mxu0 0
      %1460 = vmatmul.mubr.bf16.gmra.mxu0 %v710
      %v1461 = vpop.f32.mrf.mxu0
      %v1462 = vadd.f32 %v1310, %v1461
      %v1463 = vpop.f32.mrf.mxu0
      %v1464 = vpop.f32.mrf.mxu0
      %v1465 = vadd.f32 %v1310, %v1464
      %v1466 = vpop.f32.mrf.mxu0
      %1467 = vmatprep.mubr.bf16.mxu0 0
      %1468 = vmatmul.mubr.bf16.gmra.mxu0 %v713
      %v1469 = vpop.f32.mrf.mxu0
      %v1470 = vadd.f32 %v1310, %v1469
      %v1471 = vpop.f32.mrf.mxu0
      %v1472 = vpop.f32.mrf.mxu0
      %v1473 = vadd.f32 %v1310, %v1472
      %v1474 = vpop.f32.mrf.mxu0
      %1475 = vmatprep.mubr.bf16.mxu0 0
      %1476 = vmatmul.mubr.bf16.gmra.mxu0 %v716
      %v1477 = vpop.f32.mrf.mxu0
      %v1478 = vadd.f32 %v1310, %v1477
      %v1479 = vpop.f32.mrf.mxu0
      %v1480 = vpop.f32.mrf.mxu0
      %v1481 = vadd.f32 %v1310, %v1480
      %v1482 = vpop.f32.mrf.mxu0
      %1483 = vmatprep.mubr.bf16.mxu0 0
      %1484 = vmatmul.mubr.bf16.gmra.mxu0 %v719
      %v1485 = vpop.f32.mrf.mxu0
      %v1486 = vadd.f32 %v1310, %v1485
      %v1487 = vpop.f32.mrf.mxu0
      %v1488 = vpop.f32.mrf.mxu0
      %v1489 = vadd.f32 %v1310, %v1488
      %v1490 = vpop.f32.mrf.mxu0
      %1491 = vmatprep.mubr.bf16.mxu0 0
      %1492 = vmatmul.mubr.bf16.gmra.mxu0 %v722
      %v1493 = vpop.f32.mrf.mxu0
      %v1494 = vadd.f32 %v1310, %v1493
      %v1495 = vpop.f32.mrf.mxu0
      %v1496 = vpop.f32.mrf.mxu0
      %v1497 = vadd.f32 %v1310, %v1496
      %v1498 = vpop.f32.mrf.mxu0
      %1499 = vmatprep.mubr.bf16.mxu0 0
      %1500 = vmatmul.mubr.bf16.gmra.mxu0 %v725
      %v1501 = vpop.f32.mrf.mxu0
      %v1502 = vadd.f32 %v1310, %v1501
      %v1503 = vpop.f32.mrf.mxu0
      %v1504 = vpop.f32.mrf.mxu0
      %v1505 = vadd.f32 %v1310, %v1504
      %v1506 = vpop.f32.mrf.mxu0
      %1507 = vmatprep.mubr.bf16.mxu0 0
      %1508 = vmatmul.mubr.bf16.gmra.mxu0 %v728
      %v1509 = vpop.f32.mrf.mxu0
      %v1510 = vadd.f32 %v1310, %v1509
      %v1511 = vpop.f32.mrf.mxu0
      %v1512 = vpop.f32.mrf.mxu0
      %v1513 = vadd.f32 %v1310, %v1512
      %v1514 = vpop.f32.mrf.mxu0
      %1515 = vmatprep.mubr.bf16.mxu0 0
      %1516 = vmatmul.mubr.bf16.gmra.mxu0 %v731
      %v1517 = vpop.f32.mrf.mxu0
      %v1518 = vadd.f32 %v1310, %v1517
      %v1519 = vpop.f32.mrf.mxu0
      %v1520 = vpop.f32.mrf.mxu0
      %v1521 = vadd.f32 %v1310, %v1520
      %v1522 = vpop.f32.mrf.mxu0
      %1523 = vmatprep.mubr.bf16.mxu0 0
      %1524 = vmatmul.mubr.bf16.gmra.mxu0 %v734
      %v1525 = vpop.f32.mrf.mxu0
      %v1526 = vadd.f32 %v1310, %v1525
      %v1527 = vpop.f32.mrf.mxu0
      %v1528 = vpop.f32.mrf.mxu0
      %v1529 = vadd.f32 %v1310, %v1528
      %v1530 = vpop.f32.mrf.mxu0
      %1531 = vmatprep.mubr.bf16.mxu0 0
      %1532 = vmatmul.mubr.bf16.gmra.mxu0 %v737
      %v1533 = vpop.f32.mrf.mxu0
      %v1534 = vadd.f32 %v1310, %v1533
      %v1535 = vpop.f32.mrf.mxu0
      %v1536 = vpop.f32.mrf.mxu0
      %v1537 = vadd.f32 %v1310, %v1536
      %v1538 = vpop.f32.mrf.mxu0
      %1539 = vdwg.mxu0
      %v1540 = vxor.u32 %v1350, 2147483648
      %v1541 = vxor.u32 %v1353, 2147483648
      %v1542 = vxor.u32 %v1358, 2147483648
      %v1543 = vxor.u32 %v1361, 2147483648
      %v1544 = vxor.u32 %v1366, 2147483648
      %v1545 = vxor.u32 %v1369, 2147483648
      %v1546 = vxor.u32 %v1374, 2147483648
      %v1547 = vxor.u32 %v1377, 2147483648
      %v1548 = vxor.u32 %v1382, 2147483648
      %v1549 = vxor.u32 %v1385, 2147483648
      %v1550 = vxor.u32 %v1390, 2147483648
      %v1551 = vxor.u32 %v1393, 2147483648
      %v1552 = vxor.u32 %v1398, 2147483648
      %v1553 = vxor.u32 %v1401, 2147483648
      %v1554 = vxor.u32 %v1406, 2147483648
      %v1555 = vxor.u32 %v1409, 2147483648
      %v1556 = vxor.u32 %v1414, 2147483648
      %v1557 = vxor.u32 %v1417, 2147483648
      %v1558 = vxor.u32 %v1422, 2147483648
      %v1559 = vxor.u32 %v1425, 2147483648
      %v1560 = vxor.u32 %v1430, 2147483648
      %v1561 = vxor.u32 %v1433, 2147483648
      %v1562 = vxor.u32 %v1438, 2147483648
      %v1563 = vxor.u32 %v1441, 2147483648
      %v1564 = vxor.u32 %v1446, 2147483648
      %v1565 = vxor.u32 %v1449, 2147483648
      %v1566 = vxor.u32 %v1454, 2147483648
      %v1567 = vxor.u32 %v1457, 2147483648
      %v1568 = vxor.u32 %v1462, 2147483648
      %v1569 = vxor.u32 %v1465, 2147483648
      %v1570 = vxor.u32 %v1470, 2147483648
      %v1571 = vxor.u32 %v1473, 2147483648
      %v1572 = vxor.u32 %v1478, 2147483648
      %v1573 = vxor.u32 %v1481, 2147483648
      %v1574 = vxor.u32 %v1486, 2147483648
      %v1575 = vxor.u32 %v1489, 2147483648
      %v1576 = vxor.u32 %v1494, 2147483648
      %v1577 = vxor.u32 %v1497, 2147483648
      %v1578 = vxor.u32 %v1502, 2147483648
      %v1579 = vxor.u32 %v1505, 2147483648
      %v1580 = vxor.u32 %v1510, 2147483648
      %v1581 = vxor.u32 %v1513, 2147483648
      %v1582 = vxor.u32 %v1518, 2147483648
      %v1583 = vxor.u32 %v1521, 2147483648
      %v1584 = vxor.u32 %v1526, 2147483648
      %v1585 = vxor.u32 %v1529, 2147483648
      %v1586 = vxor.u32 %v1534, 2147483648
      %v1587 = vxor.u32 %v1537, 2147483648
      %v1588 = vmul.f32 %v1540, 1.442695
      %v1589 = vpow.pop %v1588
      %v1590 = vmul.f32 %v1541, 1.442695
      %v1591 = vpow.pop %v1590
      %v1592 = vmul.f32 %v1542, 1.442695
      %v1593 = vpow.pop %v1592
      %v1594 = vmul.f32 %v1543, 1.442695
      %v1595 = vpow.pop %v1594
      %v1596 = vmul.f32 %v1544, 1.442695
      %v1597 = vpow.pop %v1596
      %v1598 = vmul.f32 %v1545, 1.442695
      %v1599 = vpow.pop %v1598
      %v1600 = vmul.f32 %v1546, 1.442695
      %v1601 = vpow.pop %v1600
      %v1602 = vmul.f32 %v1547, 1.442695
      %v1603 = vpow.pop %v1602
      %v1604 = vmul.f32 %v1548, 1.442695
      %v1605 = vpow.pop %v1604
      %v1606 = vmul.f32 %v1549, 1.442695
      %v1607 = vpow.pop %v1606
      %v1608 = vmul.f32 %v1550, 1.442695
      %v1609 = vpow.pop %v1608
      %v1610 = vmul.f32 %v1551, 1.442695
      %v1611 = vpow.pop %v1610
      %v1612 = vmul.f32 %v1552, 1.442695
      %v1613 = vpow.pop %v1612
      %v1614 = vmul.f32 %v1553, 1.442695
      %v1615 = vpow.pop %v1614
      %v1616 = vmul.f32 %v1554, 1.442695
      %v1617 = vpow.pop %v1616
      %v1618 = vmul.f32 %v1555, 1.442695
      %v1619 = vpow.pop %v1618
      %v1620 = vmul.f32 %v1556, 1.442695
      %v1621 = vpow.pop %v1620
      %v1622 = vmul.f32 %v1557, 1.442695
      %v1623 = vpow.pop %v1622
      %v1624 = vmul.f32 %v1558, 1.442695
      %v1625 = vpow.pop %v1624
      %v1626 = vmul.f32 %v1559, 1.442695
      %v1627 = vpow.pop %v1626
      %v1628 = vmul.f32 %v1560, 1.442695
      %v1629 = vpow.pop %v1628
      %v1630 = vmul.f32 %v1561, 1.442695
      %v1631 = vpow.pop %v1630
      %v1632 = vmul.f32 %v1562, 1.442695
      %v1633 = vpow.pop %v1632
      %v1634 = vmul.f32 %v1563, 1.442695
      %v1635 = vpow.pop %v1634
      %v1636 = vmul.f32 %v1564, 1.442695
      %v1637 = vpow.pop %v1636
      %v1638 = vmul.f32 %v1565, 1.442695
      %v1639 = vpow.pop %v1638
      %v1640 = vmul.f32 %v1566, 1.442695
      %v1641 = vpow.pop %v1640
      %v1642 = vmul.f32 %v1567, 1.442695
      %v1643 = vpow.pop %v1642
      %v1644 = vmul.f32 %v1568, 1.442695
      %v1645 = vpow.pop %v1644
      %v1646 = vmul.f32 %v1569, 1.442695
      %v1647 = vpow.pop %v1646
      %v1648 = vmul.f32 %v1570, 1.442695
      %v1649 = vpow.pop %v1648
      %v1650 = vmul.f32 %v1571, 1.442695
      %v1651 = vpow.pop %v1650
      %v1652 = vmul.f32 %v1572, 1.442695
      %v1653 = vpow.pop %v1652
      %v1654 = vmul.f32 %v1573, 1.442695
      %v1655 = vpow.pop %v1654
      %v1656 = vmul.f32 %v1574, 1.442695
      %v1657 = vpow.pop %v1656
      %v1658 = vmul.f32 %v1575, 1.442695
      %v1659 = vpow.pop %v1658
      %v1660 = vmul.f32 %v1576, 1.442695
      %v1661 = vpow.pop %v1660
      %v1662 = vmul.f32 %v1577, 1.442695
      %v1663 = vpow.pop %v1662
      %v1664 = vmul.f32 %v1578, 1.442695
      %v1665 = vpow.pop %v1664
      %v1666 = vmul.f32 %v1579, 1.442695
      %v1667 = vpow.pop %v1666
      %v1668 = vmul.f32 %v1580, 1.442695
      %v1669 = vpow.pop %v1668
      %v1670 = vmul.f32 %v1581, 1.442695
      %v1671 = vpow.pop %v1670
      %v1672 = vmul.f32 %v1582, 1.442695
      %v1673 = vpow.pop %v1672
      %v1674 = vmul.f32 %v1583, 1.442695
      %v1675 = vpow.pop %v1674
      %v1676 = vmul.f32 %v1584, 1.442695
      %v1677 = vpow.pop %v1676
      %v1678 = vmul.f32 %v1585, 1.442695
      %v1679 = vpow.pop %v1678
      %v1680 = vmul.f32 %v1586, 1.442695
      %v1681 = vpow.pop %v1680
      %v1682 = vmul.f32 %v1587, 1.442695
      %v1683 = vpow.pop %v1682
      %v1684 = vadd.f32 %v1589, 1.0
      %v1685 = vadd.f32 %v1591, 1.0
      %v1686 = vadd.f32 %v1593, 1.0
      %v1687 = vadd.f32 %v1595, 1.0
      %v1688 = vadd.f32 %v1597, 1.0
      %v1689 = vadd.f32 %v1599, 1.0
      %v1690 = vadd.f32 %v1601, 1.0
      %v1691 = vadd.f32 %v1603, 1.0
      %v1692 = vadd.f32 %v1605, 1.0
      %v1693 = vadd.f32 %v1607, 1.0
      %v1694 = vadd.f32 %v1609, 1.0
      %v1695 = vadd.f32 %v1611, 1.0
      %v1696 = vadd.f32 %v1613, 1.0
      %v1697 = vadd.f32 %v1615, 1.0
      %v1698 = vadd.f32 %v1617, 1.0
      %v1699 = vadd.f32 %v1619, 1.0
      %v1700 = vadd.f32 %v1621, 1.0
      %v1701 = vadd.f32 %v1623, 1.0
      %v1702 = vadd.f32 %v1625, 1.0
      %v1703 = vadd.f32 %v1627, 1.0
      %v1704 = vadd.f32 %v1629, 1.0
      %v1705 = vadd.f32 %v1631, 1.0
      %v1706 = vadd.f32 %v1633, 1.0
      %v1707 = vadd.f32 %v1635, 1.0
      %v1708 = vadd.f32 %v1637, 1.0
      %v1709 = vadd.f32 %v1639, 1.0
      %v1710 = vadd.f32 %v1641, 1.0
      %v1711 = vadd.f32 %v1643, 1.0
      %v1712 = vadd.f32 %v1645, 1.0
      %v1713 = vadd.f32 %v1647, 1.0
      %v1714 = vadd.f32 %v1649, 1.0
      %v1715 = vadd.f32 %v1651, 1.0
      %v1716 = vadd.f32 %v1653, 1.0
      %v1717 = vadd.f32 %v1655, 1.0
      %v1718 = vadd.f32 %v1657, 1.0
      %v1719 = vadd.f32 %v1659, 1.0
      %v1720 = vadd.f32 %v1661, 1.0
      %v1721 = vadd.f32 %v1663, 1.0
      %v1722 = vadd.f32 %v1665, 1.0
      %v1723 = vadd.f32 %v1667, 1.0
      %v1724 = vadd.f32 %v1669, 1.0
      %v1725 = vadd.f32 %v1671, 1.0
      %v1726 = vadd.f32 %v1673, 1.0
      %v1727 = vadd.f32 %v1675, 1.0
      %v1728 = vadd.f32 %v1677, 1.0
      %v1729 = vadd.f32 %v1679, 1.0
      %v1730 = vadd.f32 %v1681, 1.0
      %v1731 = vadd.f32 %v1683, 1.0
      %v1732 = vrcp.pop %v1684
      %v1733 = vmul.f32 1.0, %v1732
      %v1734 = vrcp.pop %v1685
      %v1735 = vmul.f32 1.0, %v1734
      %v1736 = vrcp.pop %v1686
      %v1737 = vmul.f32 1.0, %v1736
      %v1738 = vrcp.pop %v1687
      %v1739 = vmul.f32 1.0, %v1738
      %v1740 = vrcp.pop %v1688
      %v1741 = vmul.f32 1.0, %v1740
      %v1742 = vrcp.pop %v1689
      %v1743 = vmul.f32 1.0, %v1742
      %v1744 = vrcp.pop %v1690
      %v1745 = vmul.f32 1.0, %v1744
      %v1746 = vrcp.pop %v1691
      %v1747 = vmul.f32 1.0, %v1746
      %v1748 = vrcp.pop %v1692
      %v1749 = vmul.f32 1.0, %v1748
      %v1750 = vrcp.pop %v1693
      %v1751 = vmul.f32 1.0, %v1750
      %v1752 = vrcp.pop %v1694
      %v1753 = vmul.f32 1.0, %v1752
      %v1754 = vrcp.pop %v1695
      %v1755 = vmul.f32 1.0, %v1754
      %v1756 = vrcp.pop %v1696
      %v1757 = vmul.f32 1.0, %v1756
      %v1758 = vrcp.pop %v1697
      %v1759 = vmul.f32 1.0, %v1758
      %v1760 = vrcp.pop %v1698
      %v1761 = vmul.f32 1.0, %v1760
      %v1762 = vrcp.pop %v1699
      %v1763 = vmul.f32 1.0, %v1762
      %v1764 = vrcp.pop %v1700
      %v1765 = vmul.f32 1.0, %v1764
      %v1766 = vrcp.pop %v1701
      %v1767 = vmul.f32 1.0, %v1766
      %v1768 = vrcp.pop %v1702
      %v1769 = vmul.f32 1.0, %v1768
      %v1770 = vrcp.pop %v1703
      %v1771 = vmul.f32 1.0, %v1770
      %v1772 = vrcp.pop %v1704
      %v1773 = vmul.f32 1.0, %v1772
      %v1774 = vrcp.pop %v1705
      %v1775 = vmul.f32 1.0, %v1774
      %v1776 = vrcp.pop %v1706
      %v1777 = vmul.f32 1.0, %v1776
      %v1778 = vrcp.pop %v1707
      %v1779 = vmul.f32 1.0, %v1778
      %v1780 = vrcp.pop %v1708
      %v1781 = vmul.f32 1.0, %v1780
      %v1782 = vrcp.pop %v1709
      %v1783 = vmul.f32 1.0, %v1782
      %v1784 = vrcp.pop %v1710
      %v1785 = vmul.f32 1.0, %v1784
      %v1786 = vrcp.pop %v1711
      %v1787 = vmul.f32 1.0, %v1786
      %v1788 = vrcp.pop %v1712
      %v1789 = vmul.f32 1.0, %v1788
      %v1790 = vrcp.pop %v1713
      %v1791 = vmul.f32 1.0, %v1790
      %v1792 = vrcp.pop %v1714
      %v1793 = vmul.f32 1.0, %v1792
      %v1794 = vrcp.pop %v1715
      %v1795 = vmul.f32 1.0, %v1794
      %v1796 = vrcp.pop %v1716
      %v1797 = vmul.f32 1.0, %v1796
      %v1798 = vrcp.pop %v1717
      %v1799 = vmul.f32 1.0, %v1798
      %v1800 = vrcp.pop %v1718
      %v1801 = vmul.f32 1.0, %v1800
      %v1802 = vrcp.pop %v1719
      %v1803 = vmul.f32 1.0, %v1802
      %v1804 = vrcp.pop %v1720
      %v1805 = vmul.f32 1.0, %v1804
      %v1806 = vrcp.pop %v1721
      %v1807 = vmul.f32 1.0, %v1806
      %v1808 = vrcp.pop %v1722
      %v1809 = vmul.f32 1.0, %v1808
      %v1810 = vrcp.pop %v1723
      %v1811 = vmul.f32 1.0, %v1810
      %v1812 = vrcp.pop %v1724
      %v1813 = vmul.f32 1.0, %v1812
      %v1814 = vrcp.pop %v1725
      %v1815 = vmul.f32 1.0, %v1814
      %v1816 = vrcp.pop %v1726
      %v1817 = vmul.f32 1.0, %v1816
      %v1818 = vrcp.pop %v1727
      %v1819 = vmul.f32 1.0, %v1818
      %v1820 = vrcp.pop %v1728
      %v1821 = vmul.f32 1.0, %v1820
      %v1822 = vrcp.pop %v1729
      %v1823 = vmul.f32 1.0, %v1822
      %v1824 = vrcp.pop %v1730
      %v1825 = vmul.f32 1.0, %v1824
      %v1826 = vrcp.pop %v1731
      %v1827 = vmul.f32 1.0, %v1826
      %v1828 = vmul.f32 %v1350, %v1733
      %v1829 = vmul.f32 %v1353, %v1735
      %v1830 = vmul.f32 %v1358, %v1737
      %v1831 = vmul.f32 %v1361, %v1739
      %v1832 = vmul.f32 %v1366, %v1741
      %v1833 = vmul.f32 %v1369, %v1743
      %v1834 = vmul.f32 %v1374, %v1745
      %v1835 = vmul.f32 %v1377, %v1747
      %v1836 = vmul.f32 %v1382, %v1749
      %v1837 = vmul.f32 %v1385, %v1751
      %v1838 = vmul.f32 %v1390, %v1753
      %v1839 = vmul.f32 %v1393, %v1755
      %v1840 = vmul.f32 %v1398, %v1757
      %v1841 = vmul.f32 %v1401, %v1759
      %v1842 = vmul.f32 %v1406, %v1761
      %v1843 = vmul.f32 %v1409, %v1763
      %v1844 = vmul.f32 %v1414, %v1765
      %v1845 = vmul.f32 %v1417, %v1767
      %v1846 = vmul.f32 %v1422, %v1769
      %v1847 = vmul.f32 %v1425, %v1771
      %v1848 = vmul.f32 %v1430, %v1773
      %v1849 = vmul.f32 %v1433, %v1775
      %v1850 = vmul.f32 %v1438, %v1777
      %v1851 = vmul.f32 %v1441, %v1779
      %v1852 = vmul.f32 %v1446, %v1781
      %v1853 = vmul.f32 %v1449, %v1783
      %v1854 = vmul.f32 %v1454, %v1785
      %v1855 = vmul.f32 %v1457, %v1787
      %v1856 = vmul.f32 %v1462, %v1789
      %v1857 = vmul.f32 %v1465, %v1791
      %v1858 = vmul.f32 %v1470, %v1793
      %v1859 = vmul.f32 %v1473, %v1795
      %v1860 = vmul.f32 %v1478, %v1797
      %v1861 = vmul.f32 %v1481, %v1799
      %v1862 = vmul.f32 %v1486, %v1801
      %v1863 = vmul.f32 %v1489, %v1803
      %v1864 = vmul.f32 %v1494, %v1805
      %v1865 = vmul.f32 %v1497, %v1807
      %v1866 = vmul.f32 %v1502, %v1809
      %v1867 = vmul.f32 %v1505, %v1811
      %v1868 = vmul.f32 %v1510, %v1813
      %v1869 = vmul.f32 %v1513, %v1815
      %v1870 = vmul.f32 %v1518, %v1817
      %v1871 = vmul.f32 %v1521, %v1819
      %v1872 = vmul.f32 %v1526, %v1821
      %v1873 = vmul.f32 %v1529, %v1823
      %v1874 = vmul.f32 %v1534, %v1825
      %v1875 = vmul.f32 %v1537, %v1827
      %v1876 = vpack.c.bf16 %v1829, %v1828
      %v1877 = vpack.c.bf16 %v1831, %v1830
      %v1878 = vpack.c.bf16 %v1833, %v1832
      %v1879 = vpack.c.bf16 %v1835, %v1834
      %v1880 = vpack.c.bf16 %v1837, %v1836
      %v1881 = vpack.c.bf16 %v1839, %v1838
      %v1882 = vpack.c.bf16 %v1841, %v1840
      %v1883 = vpack.c.bf16 %v1843, %v1842
      %v1884 = vpack.c.bf16 %v1845, %v1844
      %v1885 = vpack.c.bf16 %v1847, %v1846
      %v1886 = vpack.c.bf16 %v1849, %v1848
      %v1887 = vpack.c.bf16 %v1851, %v1850
      %v1888 = vpack.c.bf16 %v1853, %v1852
      %v1889 = vpack.c.bf16 %v1855, %v1854
      %v1890 = vpack.c.bf16 %v1857, %v1856
      %v1891 = vpack.c.bf16 %v1859, %v1858
      %v1892 = vpack.c.bf16 %v1861, %v1860
      %v1893 = vpack.c.bf16 %v1863, %v1862
      %v1894 = vpack.c.bf16 %v1865, %v1864
      %v1895 = vpack.c.bf16 %v1867, %v1866
      %v1896 = vpack.c.bf16 %v1869, %v1868
      %v1897 = vpack.c.bf16 %v1871, %v1870
      %v1898 = vpack.c.bf16 %v1873, %v1872
      %v1899 = vpack.c.bf16 %v1875, %v1874
      %vm1900 = vcmask 15360
      %1901 = vst.msk [vmem:[#allocation2] sm:$0xff] %vm1900, 0.0
      %1902 = vst.msk [vmem:[#allocation2 + $0x8] sm:$0xff] %vm1900, 0.0
      %1903 = vst.msk [vmem:[#allocation2 + $0x10] sm:$0xff] %vm1900, 0.0
      %1904 = vst.msk [vmem:[#allocation2 + $0x18] sm:$0xff] %vm1900, 0.0
      %1905 = vst.msk [vmem:[#allocation2 + $0x1a0] sm:$0xff] %vm1900, 0.0
      %1906 = vst.msk [vmem:[#allocation2 + $0x1a8] sm:$0xff] %vm1900, 0.0
      %1907 = vst.msk [vmem:[#allocation2 + $0x1b0] sm:$0xff] %vm1900, 0.0
      %1908 = vst.msk [vmem:[#allocation2 + $0x1b8] sm:$0xff] %vm1900, 0.0
      %1909 = vst.msk [vmem:[#allocation2 + $0x1c0] sm:$0xff] %vm1900, 0.0
      %v1910 = vpack.c.bf16 %v1257, %v1256
      %v1911 = vpack.c.bf16 %v1259, %v1258
      %v1912 = vpack.c.bf16 %v1261, %v1260
      %v1913 = vpack.c.bf16 %v1263, %v1262
      %v1914 = vpack.c.bf16 %v1265, %v1264
      %v1915 = vpack.c.bf16 %v1267, %v1266
      %v1916 = vpack.c.bf16 %v1269, %v1268
      %v1917 = vpack.c.bf16 %v1271, %v1270
      %v1918 = vpack.c.bf16 %v1273, %v1272
      %v1919 = vpack.c.bf16 %v1275, %v1274
      %v1920 = vpack.c.bf16 %v1277, %v1276
      %v1921 = vpack.c.bf16 %v1279, %v1278
      %v1922 = vpack.c.bf16 %v1281, %v1280
      %v1923 = vpack.c.bf16 %v1283, %v1282
      %v1924 = vpack.c.bf16 %v1285, %v1284
      %v1925 = vpack.c.bf16 %v1287, %v1286
      %v1926 = vpack.c.bf16 %v1289, %v1288
      %v1927 = vpack.c.bf16 %v1291, %v1290
      %v1928 = vpack.c.bf16 %v1293, %v1292
      %v1929 = vpack.c.bf16 %v1295, %v1294
      %v1930 = vpack.c.bf16 %v1297, %v1296
      %v1931 = vpack.c.bf16 %v1299, %v1298
      %v1932 = vpack.c.bf16 %v1301, %v1300
      %v1933 = vpack.c.bf16 %v1303, %v1302
      %v1934 = vld [vmem:[%s6] sm:$0x1]
      %v1935 = vld [vmem:[%s7] sm:$0x1]
      %v1937 = vlaneseq
      %v1938 = vshrl.u32 %v1937, 7
      %v1939 = vsub.s32 0, %v1938
      %v1940 = vrot.slane %v1935, %v1939
      %v1943 = vsel %vm1900, %v1910, 0
      %v1946 = vsel %vm1900, %v1911, 0
      %v1949 = vsel %vm1900, %v1912, 0
      %v1952 = vsel %vm1900, %v1913, 0
      %v1955 = vsel %vm1900, %v1914, 0
      %v1958 = vsel %vm1900, %v1915, 0
      %v1961 = vsel %vm1900, %v1916, 0
      %v1964 = vsel %vm1900, %v1917, 0
      %v1967 = vsel %vm1900, %v1918, 0
      %v1970 = vsel %vm1900, %v1919, 0
      %v1973 = vsel %vm1900, %v1920, 0
      %v1976 = vsel %vm1900, %v1921, 0
      %v1979 = vsel %vm1900, %v1922, 0
      %v1982 = vsel %vm1900, %v1923, 0
      %v1985 = vsel %vm1900, %v1924, 0
      %v1988 = vsel %vm1900, %v1925, 0
      %v1991 = vsel %vm1900, %v1926, 0
      %v1994 = vsel %vm1900, %v1927, 0
      %v1997 = vsel %vm1900, %v1928, 0
      %v2000 = vsel %vm1900, %v1929, 0
      %v2003 = vsel %vm1900, %v1930, 0
      %v2006 = vsel %vm1900, %v1931, 0
      %v2009 = vsel %vm1900, %v1932, 0
      %v2012 = vsel %vm1900, %v1933, 0
      %vm2014 = vcmask 1040384
      %v2016 = vsel %vm2014, %v1934, 0
      %2018 = vmatprep.subr.bf16.mxu0 0
      %2019 = vmatpush1.bf16.msra.mxu0 0
      %2020 = vmatprep.subr.bf16.mxu0 0
      %2021 = vmatpush1.bf16.msra.mxu0 0
      %2022 = vmatprep.subr.bf16.mxu0 0
      %2023 = vmatpush1.bf16.msra.mxu0 0
      %2024 = vmatprep.subr.bf16.mxu0 0
      %2025 = vmatpush1.bf16.msra.mxu0 0
      %2026 = vmatprep.subr.bf16.mxu0 0
      %2027 = vmatpush1.bf16.msra.mxu0 0
      %2028 = vmatprep.subr.bf16.mxu0 0
      %2029 = vmatpush1.bf16.msra.mxu0 0
      %2030 = vmatprep.subr.bf16.mxu0 0
      %2031 = vmatpush1.bf16.msra.mxu0 0
      %2032 = vmatprep.subr.bf16.mxu0 0
      %2033 = vmatpush1.bf16.msra.mxu0 %v2016
      %2034 = vmatprep.subr.bf16.mxu0 0
      %2035 = vmatpush2.bf16.msra.mxu0 0
      %2036 = vmatprep.subr.bf16.mxu0 0
      %2037 = vmatpush2.bf16.msra.mxu0 0
      %2038 = vmatprep.subr.bf16.mxu0 0
      %2039 = vmatpush2.bf16.msra.mxu0 0
      %2040 = vmatprep.subr.bf16.mxu0 0
      %2041 = vmatpush2.bf16.msra.mxu0 0
      %2042 = vmatprep.subr.bf16.mxu0 0
      %2043 = vmatpush2.bf16.msra.mxu0 0
      %2044 = vmatprep.subr.bf16.mxu0 0
      %2045 = vmatpush2.bf16.msra.mxu0 0
      %2046 = vmatprep.subr.bf16.mxu0 0
      %2047 = vmatpush2.bf16.msra.mxu0 0
      %2048 = vmatprep.subr.bf16.mxu0 0
      %2049 = vmatpush2.bf16.msra.mxu0 0
      %2050 = vmatprep.mubr.bf16.mxu0 0
      %2051 = vmatmul.mubr.bf16.gmra.mxu0 %v1943
      %v2052 = vpop.f32.mrf.mxu0
      %v2053 = vadd.f32 %v1940, %v2052
      %v2054 = vpop.f32.mrf.mxu0
      %v2055 = vpop.f32.mrf.mxu0
      %v2056 = vadd.f32 %v1940, %v2055
      %v2057 = vpop.f32.mrf.mxu0
      %2058 = vmatprep.mubr.bf16.mxu0 0
      %2059 = vmatmul.mubr.bf16.gmra.mxu0 %v1946
      %v2060 = vpop.f32.mrf.mxu0
      %v2061 = vadd.f32 %v1940, %v2060
      %v2062 = vpop.f32.mrf.mxu0
      %v2063 = vpop.f32.mrf.mxu0
      %v2064 = vadd.f32 %v1940, %v2063
      %v2065 = vpop.f32.mrf.mxu0
      %2066 = vmatprep.mubr.bf16.mxu0 0
      %2067 = vmatmul.mubr.bf16.gmra.mxu0 %v1949
      %v2068 = vpop.f32.mrf.mxu0
      %v2069 = vadd.f32 %v1940, %v2068
      %v2070 = vpop.f32.mrf.mxu0
      %v2071 = vpop.f32.mrf.mxu0
      %v2072 = vadd.f32 %v1940, %v2071
      %v2073 = vpop.f32.mrf.mxu0
      %2074 = vmatprep.mubr.bf16.mxu0 0
      %2075 = vmatmul.mubr.bf16.gmra.mxu0 %v1952
      %v2076 = vpop.f32.mrf.mxu0
      %v2077 = vadd.f32 %v1940, %v2076
      %v2078 = vpop.f32.mrf.mxu0
      %v2079 = vpop.f32.mrf.mxu0
      %v2080 = vadd.f32 %v1940, %v2079
      %v2081 = vpop.f32.mrf.mxu0
      %2082 = vmatprep.mubr.bf16.mxu0 0
      %2083 = vmatmul.mubr.bf16.gmra.mxu0 %v1955
      %v2084 = vpop.f32.mrf.mxu0
      %v2085 = vadd.f32 %v1940, %v2084
      %v2086 = vpop.f32.mrf.mxu0
      %v2087 = vpop.f32.mrf.mxu0
      %v2088 = vadd.f32 %v1940, %v2087
      %v2089 = vpop.f32.mrf.mxu0
      %2090 = vmatprep.mubr.bf16.mxu0 0
      %2091 = vmatmul.mubr.bf16.gmra.mxu0 %v1958
      %v2092 = vpop.f32.mrf.mxu0
      %v2093 = vadd.f32 %v1940, %v2092
      %v2094 = vpop.f32.mrf.mxu0
      %v2095 = vpop.f32.mrf.mxu0
      %v2096 = vadd.f32 %v1940, %v2095
      %v2097 = vpop.f32.mrf.mxu0
      %2098 = vmatprep.mubr.bf16.mxu0 0
      %2099 = vmatmul.mubr.bf16.gmra.mxu0 %v1961
      %v2100 = vpop.f32.mrf.mxu0
      %v2101 = vadd.f32 %v1940, %v2100
      %v2102 = vpop.f32.mrf.mxu0
      %v2103 = vpop.f32.mrf.mxu0
      %v2104 = vadd.f32 %v1940, %v2103
      %v2105 = vpop.f32.mrf.mxu0
      %2106 = vmatprep.mubr.bf16.mxu0 0
      %2107 = vmatmul.mubr.bf16.gmra.mxu0 %v1964
      %v2108 = vpop.f32.mrf.mxu0
      %v2109 = vadd.f32 %v1940, %v2108
      %v2110 = vpop.f32.mrf.mxu0
      %v2111 = vpop.f32.mrf.mxu0
      %v2112 = vadd.f32 %v1940, %v2111
      %v2113 = vpop.f32.mrf.mxu0
      %2114 = vmatprep.mubr.bf16.mxu0 0
      %2115 = vmatmul.mubr.bf16.gmra.mxu0 %v1967
      %v2116 = vpop.f32.mrf.mxu0
      %v2117 = vadd.f32 %v1940, %v2116
      %v2118 = vpop.f32.mrf.mxu0
      %v2119 = vpop.f32.mrf.mxu0
      %v2120 = vadd.f32 %v1940, %v2119
      %v2121 = vpop.f32.mrf.mxu0
      %2122 = vmatprep.mubr.bf16.mxu0 0
      %2123 = vmatmul.mubr.bf16.gmra.mxu0 %v1970
      %v2124 = vpop.f32.mrf.mxu0
      %v2125 = vadd.f32 %v1940, %v2124
      %v2126 = vpop.f32.mrf.mxu0
      %v2127 = vpop.f32.mrf.mxu0
      %v2128 = vadd.f32 %v1940, %v2127
      %v2129 = vpop.f32.mrf.mxu0
      %2130 = vmatprep.mubr.bf16.mxu0 0
      %2131 = vmatmul.mubr.bf16.gmra.mxu0 %v1973
      %v2132 = vpop.f32.mrf.mxu0
      %v2133 = vadd.f32 %v1940, %v2132
      %v2134 = vpop.f32.mrf.mxu0
      %v2135 = vpop.f32.mrf.mxu0
      %v2136 = vadd.f32 %v1940, %v2135
      %v2137 = vpop.f32.mrf.mxu0
      %2138 = vmatprep.mubr.bf16.mxu0 0
      %2139 = vmatmul.mubr.bf16.gmra.mxu0 %v1976
      %v2140 = vpop.f32.mrf.mxu0
      %v2141 = vadd.f32 %v1940, %v2140
      %v2142 = vpop.f32.mrf.mxu0
      %v2143 = vpop.f32.mrf.mxu0
      %v2144 = vadd.f32 %v1940, %v2143
      %v2145 = vpop.f32.mrf.mxu0
      %2146 = vmatprep.mubr.bf16.mxu0 0
      %2147 = vmatmul.mubr.bf16.gmra.mxu0 %v1979
      %v2148 = vpop.f32.mrf.mxu0
      %v2149 = vadd.f32 %v1940, %v2148
      %v2150 = vpop.f32.mrf.mxu0
      %v2151 = vpop.f32.mrf.mxu0
      %v2152 = vadd.f32 %v1940, %v2151
      %v2153 = vpop.f32.mrf.mxu0
      %2154 = vmatprep.mubr.bf16.mxu0 0
      %2155 = vmatmul.mubr.bf16.gmra.mxu0 %v1982
      %v2156 = vpop.f32.mrf.mxu0
      %v2157 = vadd.f32 %v1940, %v2156
      %v2158 = vpop.f32.mrf.mxu0
      %v2159 = vpop.f32.mrf.mxu0
      %v2160 = vadd.f32 %v1940, %v2159
      %v2161 = vpop.f32.mrf.mxu0
      %2162 = vmatprep.mubr.bf16.mxu0 0
      %2163 = vmatmul.mubr.bf16.gmra.mxu0 %v1985
      %v2164 = vpop.f32.mrf.mxu0
      %v2165 = vadd.f32 %v1940, %v2164
      %v2166 = vpop.f32.mrf.mxu0
      %v2167 = vpop.f32.mrf.mxu0
      %v2168 = vadd.f32 %v1940, %v2167
      %v2169 = vpop.f32.mrf.mxu0
      %2170 = vmatprep.mubr.bf16.mxu0 0
      %2171 = vmatmul.mubr.bf16.gmra.mxu0 %v1988
      %v2172 = vpop.f32.mrf.mxu0
      %v2173 = vadd.f32 %v1940, %v2172
      %v2174 = vpop.f32.mrf.mxu0
      %v2175 = vpop.f32.mrf.mxu0
      %v2176 = vadd.f32 %v1940, %v2175
      %v2177 = vpop.f32.mrf.mxu0
      %2178 = vmatprep.mubr.bf16.mxu0 0
      %2179 = vmatmul.mubr.bf16.gmra.mxu0 %v1991
      %v2180 = vpop.f32.mrf.mxu0
      %v2181 = vadd.f32 %v1940, %v2180
      %v2182 = vpop.f32.mrf.mxu0
      %v2183 = vpop.f32.mrf.mxu0
      %v2184 = vadd.f32 %v1940, %v2183
      %v2185 = vpop.f32.mrf.mxu0
      %2186 = vmatprep.mubr.bf16.mxu0 0
      %2187 = vmatmul.mubr.bf16.gmra.mxu0 %v1994
      %v2188 = vpop.f32.mrf.mxu0
      %v2189 = vadd.f32 %v1940, %v2188
      %v2190 = vpop.f32.mrf.mxu0
      %v2191 = vpop.f32.mrf.mxu0
      %v2192 = vadd.f32 %v1940, %v2191
      %v2193 = vpop.f32.mrf.mxu0
      %2194 = vmatprep.mubr.bf16.mxu0 0
      %2195 = vmatmul.mubr.bf16.gmra.mxu0 %v1997
      %v2196 = vpop.f32.mrf.mxu0
      %v2197 = vadd.f32 %v1940, %v2196
      %v2198 = vpop.f32.mrf.mxu0
      %v2199 = vpop.f32.mrf.mxu0
      %v2200 = vadd.f32 %v1940, %v2199
      %v2201 = vpop.f32.mrf.mxu0
      %2202 = vmatprep.mubr.bf16.mxu0 0
      %2203 = vmatmul.mubr.bf16.gmra.mxu0 %v2000
      %v2204 = vpop.f32.mrf.mxu0
      %v2205 = vadd.f32 %v1940, %v2204
      %v2206 = vpop.f32.mrf.mxu0
      %v2207 = vpop.f32.mrf.mxu0
      %v2208 = vadd.f32 %v1940, %v2207
      %v2209 = vpop.f32.mrf.mxu0
      %2210 = vmatprep.mubr.bf16.mxu0 0
      %2211 = vmatmul.mubr.bf16.gmra.mxu0 %v2003
      %v2212 = vpop.f32.mrf.mxu0
      %v2213 = vadd.f32 %v1940, %v2212
      %v2214 = vpop.f32.mrf.mxu0
      %v2215 = vpop.f32.mrf.mxu0
      %v2216 = vadd.f32 %v1940, %v2215
      %v2217 = vpop.f32.mrf.mxu0
      %2218 = vmatprep.mubr.bf16.mxu0 0
      %2219 = vmatmul.mubr.bf16.gmra.mxu0 %v2006
      %v2220 = vpop.f32.mrf.mxu0
      %v2221 = vadd.f32 %v1940, %v2220
      %v2222 = vpop.f32.mrf.mxu0
      %v2223 = vpop.f32.mrf.mxu0
      %v2224 = vadd.f32 %v1940, %v2223
      %v2225 = vpop.f32.mrf.mxu0
      %2226 = vmatprep.mubr.bf16.mxu0 0
      %2227 = vmatmul.mubr.bf16.gmra.mxu0 %v2009
      %v2228 = vpop.f32.mrf.mxu0
      %v2229 = vadd.f32 %v1940, %v2228
      %v2230 = vpop.f32.mrf.mxu0
      %v2231 = vpop.f32.mrf.mxu0
      %v2232 = vadd.f32 %v1940, %v2231
      %v2233 = vpop.f32.mrf.mxu0
      %2234 = vmatprep.mubr.bf16.mxu0 0
      %2235 = vmatmul.mubr.bf16.gmra.mxu0 %v2012
      %v2236 = vpop.f32.mrf.mxu0
      %v2237 = vadd.f32 %v1940, %v2236
      %v2238 = vpop.f32.mrf.mxu0
      %v2239 = vpop.f32.mrf.mxu0
      %v2240 = vadd.f32 %v1940, %v2239
      %v2241 = vpop.f32.mrf.mxu0
      %2242 = vdwg.mxu0
      %v2243 = vxor.u32 %v2053, 2147483648
      %v2244 = vxor.u32 %v2056, 2147483648
      %v2245 = vxor.u32 %v2061, 2147483648
      %v2246 = vxor.u32 %v2064, 2147483648
      %v2247 = vxor.u32 %v2069, 2147483648
      %v2248 = vxor.u32 %v2072, 2147483648
      %v2249 = vxor.u32 %v2077, 2147483648
      %v2250 = vxor.u32 %v2080, 2147483648
      %v2251 = vxor.u32 %v2085, 2147483648
      %v2252 = vxor.u32 %v2088, 2147483648
      %v2253 = vxor.u32 %v2093, 2147483648
      %v2254 = vxor.u32 %v2096, 2147483648
      %v2255 = vxor.u32 %v2101, 2147483648
      %v2256 = vxor.u32 %v2104, 2147483648
      %v2257 = vxor.u32 %v2109, 2147483648
      %v2258 = vxor.u32 %v2112, 2147483648
      %v2259 = vxor.u32 %v2117, 2147483648
      %v2260 = vxor.u32 %v2120, 2147483648
      %v2261 = vxor.u32 %v2125, 2147483648
      %v2262 = vxor.u32 %v2128, 2147483648
      %v2263 = vxor.u32 %v2133, 2147483648
      %v2264 = vxor.u32 %v2136, 2147483648
      %v2265 = vxor.u32 %v2141, 2147483648
      %v2266 = vxor.u32 %v2144, 2147483648
      %v2267 = vxor.u32 %v2149, 2147483648
      %v2268 = vxor.u32 %v2152, 2147483648
      %v2269 = vxor.u32 %v2157, 2147483648
      %v2270 = vxor.u32 %v2160, 2147483648
      %v2271 = vxor.u32 %v2165, 2147483648
      %v2272 = vxor.u32 %v2168, 2147483648
      %v2273 = vxor.u32 %v2173, 2147483648
      %v2274 = vxor.u32 %v2176, 2147483648
      %v2275 = vxor.u32 %v2181, 2147483648
      %v2276 = vxor.u32 %v2184, 2147483648
      %v2277 = vxor.u32 %v2189, 2147483648
      %v2278 = vxor.u32 %v2192, 2147483648
      %v2279 = vxor.u32 %v2197, 2147483648
      %v2280 = vxor.u32 %v2200, 2147483648
      %v2281 = vxor.u32 %v2205, 2147483648
      %v2282 = vxor.u32 %v2208, 2147483648
      %v2283 = vxor.u32 %v2213, 2147483648
      %v2284 = vxor.u32 %v2216, 2147483648
      %v2285 = vxor.u32 %v2221, 2147483648
      %v2286 = vxor.u32 %v2224, 2147483648
      %v2287 = vxor.u32 %v2229, 2147483648
      %v2288 = vxor.u32 %v2232, 2147483648
      %v2289 = vxor.u32 %v2237, 2147483648
      %v2290 = vxor.u32 %v2240, 2147483648
      %v2291 = vmul.f32 %v2243, 1.442695
      %v2292 = vpow.pop %v2291
      %v2293 = vmul.f32 %v2244, 1.442695
      %v2294 = vpow.pop %v2293
      %v2295 = vmul.f32 %v2245, 1.442695
      %v2296 = vpow.pop %v2295
      %v2297 = vmul.f32 %v2246, 1.442695
      %v2298 = vpow.pop %v2297
      %v2299 = vmul.f32 %v2247, 1.442695
      %v2300 = vpow.pop %v2299
      %v2301 = vmul.f32 %v2248, 1.442695
      %v2302 = vpow.pop %v2301
      %v2303 = vmul.f32 %v2249, 1.442695
      %v2304 = vpow.pop %v2303
      %v2305 = vmul.f32 %v2250, 1.442695
      %v2306 = vpow.pop %v2305
      %v2307 = vmul.f32 %v2251, 1.442695
      %v2308 = vpow.pop %v2307
      %v2309 = vmul.f32 %v2252, 1.442695
      %v2310 = vpow.pop %v2309
      %v2311 = vmul.f32 %v2253, 1.442695
      %v2312 = vpow.pop %v2311
      %v2313 = vmul.f32 %v2254, 1.442695
      %v2314 = vpow.pop %v2313
      %v2315 = vmul.f32 %v2255, 1.442695
      %v2316 = vpow.pop %v2315
      %v2317 = vmul.f32 %v2256, 1.442695
      %v2318 = vpow.pop %v2317
      %v2319 = vmul.f32 %v2257, 1.442695
      %v2320 = vpow.pop %v2319
      %v2321 = vmul.f32 %v2258, 1.442695
      %v2322 = vpow.pop %v2321
      %v2323 = vmul.f32 %v2259, 1.442695
      %v2324 = vpow.pop %v2323
      %v2325 = vmul.f32 %v2260, 1.442695
      %v2326 = vpow.pop %v2325
      %v2327 = vmul.f32 %v2261, 1.442695
      %v2328 = vpow.pop %v2327
      %v2329 = vmul.f32 %v2262, 1.442695
      %v2330 = vpow.pop %v2329
      %v2331 = vmul.f32 %v2263, 1.442695
      %v2332 = vpow.pop %v2331
      %v2333 = vmul.f32 %v2264, 1.442695
      %v2334 = vpow.pop %v2333
      %v2335 = vmul.f32 %v2265, 1.442695
      %v2336 = vpow.pop %v2335
      %v2337 = vmul.f32 %v2266, 1.442695
      %v2338 = vpow.pop %v2337
      %v2339 = vmul.f32 %v2267, 1.442695
      %v2340 = vpow.pop %v2339
      %v2341 = vmul.f32 %v2268, 1.442695
      %v2342 = vpow.pop %v2341
      %v2343 = vmul.f32 %v2269, 1.442695
      %v2344 = vpow.pop %v2343
      %v2345 = vmul.f32 %v2270, 1.442695
      %v2346 = vpow.pop %v2345
      %v2347 = vmul.f32 %v2271, 1.442695
      %v2348 = vpow.pop %v2347
      %v2349 = vmul.f32 %v2272, 1.442695
      %v2350 = vpow.pop %v2349
      %v2351 = vmul.f32 %v2273, 1.442695
      %v2352 = vpow.pop %v2351
      %v2353 = vmul.f32 %v2274, 1.442695
      %v2354 = vpow.pop %v2353
      %v2355 = vmul.f32 %v2275, 1.442695
      %v2356 = vpow.pop %v2355
      %v2357 = vmul.f32 %v2276, 1.442695
      %v2358 = vpow.pop %v2357
      %v2359 = vmul.f32 %v2277, 1.442695
      %v2360 = vpow.pop %v2359
      %v2361 = vmul.f32 %v2278, 1.442695
      %v2362 = vpow.pop %v2361
      %v2363 = vmul.f32 %v2279, 1.442695
      %v2364 = vpow.pop %v2363
      %v2365 = vmul.f32 %v2280, 1.442695
      %v2366 = vpow.pop %v2365
      %v2367 = vmul.f32 %v2281, 1.442695
      %v2368 = vpow.pop %v2367
      %v2369 = vmul.f32 %v2282, 1.442695
      %v2370 = vpow.pop %v2369
      %v2371 = vmul.f32 %v2283, 1.442695
      %v2372 = vpow.pop %v2371
      %v2373 = vmul.f32 %v2284, 1.442695
      %v2374 = vpow.pop %v2373
      %v2375 = vmul.f32 %v2285, 1.442695
      %v2376 = vpow.pop %v2375
      %v2377 = vmul.f32 %v2286, 1.442695
      %v2378 = vpow.pop %v2377
      %v2379 = vmul.f32 %v2287, 1.442695
      %v2380 = vpow.pop %v2379
      %v2381 = vmul.f32 %v2288, 1.442695
      %v2382 = vpow.pop %v2381
      %v2383 = vmul.f32 %v2289, 1.442695
      %v2384 = vpow.pop %v2383
      %v2385 = vmul.f32 %v2290, 1.442695
      %v2386 = vpow.pop %v2385
      %v2387 = vadd.f32 %v2292, 1.0
      %v2388 = vadd.f32 %v2294, 1.0
      %v2389 = vadd.f32 %v2296, 1.0
      %v2390 = vadd.f32 %v2298, 1.0
      %v2391 = vadd.f32 %v2300, 1.0
      %v2392 = vadd.f32 %v2302, 1.0
      %v2393 = vadd.f32 %v2304, 1.0
      %v2394 = vadd.f32 %v2306, 1.0
      %v2395 = vadd.f32 %v2308, 1.0
      %v2396 = vadd.f32 %v2310, 1.0
      %v2397 = vadd.f32 %v2312, 1.0
      %v2398 = vadd.f32 %v2314, 1.0
      %v2399 = vadd.f32 %v2316, 1.0
      %v2400 = vadd.f32 %v2318, 1.0
      %v2401 = vadd.f32 %v2320, 1.0
      %v2402 = vadd.f32 %v2322, 1.0
      %v2403 = vadd.f32 %v2324, 1.0
      %v2404 = vadd.f32 %v2326, 1.0
      %v2405 = vadd.f32 %v2328, 1.0
      %v2406 = vadd.f32 %v2330, 1.0
      %v2407 = vadd.f32 %v2332, 1.0
      %v2408 = vadd.f32 %v2334, 1.0
      %v2409 = vadd.f32 %v2336, 1.0
      %v2410 = vadd.f32 %v2338, 1.0
      %v2411 = vadd.f32 %v2340, 1.0
      %v2412 = vadd.f32 %v2342, 1.0
      %v2413 = vadd.f32 %v2344, 1.0
      %v2414 = vadd.f32 %v2346, 1.0
      %v2415 = vadd.f32 %v2348, 1.0
      %v2416 = vadd.f32 %v2350, 1.0
      %v2417 = vadd.f32 %v2352, 1.0
      %v2418 = vadd.f32 %v2354, 1.0
      %v2419 = vadd.f32 %v2356, 1.0
      %v2420 = vadd.f32 %v2358, 1.0
      %v2421 = vadd.f32 %v2360, 1.0
      %v2422 = vadd.f32 %v2362, 1.0
      %v2423 = vadd.f32 %v2364, 1.0
      %v2424 = vadd.f32 %v2366, 1.0
      %v2425 = vadd.f32 %v2368, 1.0
      %v2426 = vadd.f32 %v2370, 1.0
      %v2427 = vadd.f32 %v2372, 1.0
      %v2428 = vadd.f32 %v2374, 1.0
      %v2429 = vadd.f32 %v2376, 1.0
      %v2430 = vadd.f32 %v2378, 1.0
      %v2431 = vadd.f32 %v2380, 1.0
      %v2432 = vadd.f32 %v2382, 1.0
      %v2433 = vadd.f32 %v2384, 1.0
      %v2434 = vadd.f32 %v2386, 1.0
      %v2435 = vrcp.pop %v2387
      %v2436 = vmul.f32 1.0, %v2435
      %v2437 = vrcp.pop %v2388
      %v2438 = vmul.f32 1.0, %v2437
      %v2439 = vrcp.pop %v2389
      %v2440 = vmul.f32 1.0, %v2439
      %v2441 = vrcp.pop %v2390
      %v2442 = vmul.f32 1.0, %v2441
      %v2443 = vrcp.pop %v2391
      %v2444 = vmul.f32 1.0, %v2443
      %v2445 = vrcp.pop %v2392
      %v2446 = vmul.f32 1.0, %v2445
      %v2447 = vrcp.pop %v2393
      %v2448 = vmul.f32 1.0, %v2447
      %v2449 = vrcp.pop %v2394
      %v2450 = vmul.f32 1.0, %v2449
      %v2451 = vrcp.pop %v2395
      %v2452 = vmul.f32 1.0, %v2451
      %v2453 = vrcp.pop %v2396
      %v2454 = vmul.f32 1.0, %v2453
      %v2455 = vrcp.pop %v2397
      %v2456 = vmul.f32 1.0, %v2455
      %v2457 = vrcp.pop %v2398
      %v2458 = vmul.f32 1.0, %v2457
      %v2459 = vrcp.pop %v2399
      %v2460 = vmul.f32 1.0, %v2459
      %v2461 = vrcp.pop %v2400
      %v2462 = vmul.f32 1.0, %v2461
      %v2463 = vrcp.pop %v2401
      %v2464 = vmul.f32 1.0, %v2463
      %v2465 = vrcp.pop %v2402
      %v2466 = vmul.f32 1.0, %v2465
      %v2467 = vrcp.pop %v2403
      %v2468 = vmul.f32 1.0, %v2467
      %v2469 = vrcp.pop %v2404
      %v2470 = vmul.f32 1.0, %v2469
      %v2471 = vrcp.pop %v2405
      %v2472 = vmul.f32 1.0, %v2471
      %v2473 = vrcp.pop %v2406
      %v2474 = vmul.f32 1.0, %v2473
      %v2475 = vrcp.pop %v2407
      %v2476 = vmul.f32 1.0, %v2475
      %v2477 = vrcp.pop %v2408
      %v2478 = vmul.f32 1.0, %v2477
      %v2479 = vrcp.pop %v2409
      %v2480 = vmul.f32 1.0, %v2479
      %v2481 = vrcp.pop %v2410
      %v2482 = vmul.f32 1.0, %v2481
      %v2483 = vrcp.pop %v2411
      %v2484 = vmul.f32 1.0, %v2483
      %v2485 = vrcp.pop %v2412
      %v2486 = vmul.f32 1.0, %v2485
      %v2487 = vrcp.pop %v2413
      %v2488 = vmul.f32 1.0, %v2487
      %v2489 = vrcp.pop %v2414
      %v2490 = vmul.f32 1.0, %v2489
      %v2491 = vrcp.pop %v2415
      %v2492 = vmul.f32 1.0, %v2491
      %v2493 = vrcp.pop %v2416
      %v2494 = vmul.f32 1.0, %v2493
      %v2495 = vrcp.pop %v2417
      %v2496 = vmul.f32 1.0, %v2495
      %v2497 = vrcp.pop %v2418
      %v2498 = vmul.f32 1.0, %v2497
      %v2499 = vrcp.pop %v2419
      %v2500 = vmul.f32 1.0, %v2499
      %v2501 = vrcp.pop %v2420
      %v2502 = vmul.f32 1.0, %v2501
      %v2503 = vrcp.pop %v2421
      %v2504 = vmul.f32 1.0, %v2503
      %v2505 = vrcp.pop %v2422
      %v2506 = vmul.f32 1.0, %v2505
      %v2507 = vrcp.pop %v2423
      %v2508 = vmul.f32 1.0, %v2507
      %v2509 = vrcp.pop %v2424
      %v2510 = vmul.f32 1.0, %v2509
      %v2511 = vrcp.pop %v2425
      %v2512 = vmul.f32 1.0, %v2511
      %v2513 = vrcp.pop %v2426
      %v2514 = vmul.f32 1.0, %v2513
      %v2515 = vrcp.pop %v2427
      %v2516 = vmul.f32 1.0, %v2515
      %v2517 = vrcp.pop %v2428
      %v2518 = vmul.f32 1.0, %v2517
      %v2519 = vrcp.pop %v2429
      %v2520 = vmul.f32 1.0, %v2519
      %v2521 = vrcp.pop %v2430
      %v2522 = vmul.f32 1.0, %v2521
      %v2523 = vrcp.pop %v2431
      %v2524 = vmul.f32 1.0, %v2523
      %v2525 = vrcp.pop %v2432
      %v2526 = vmul.f32 1.0, %v2525
      %v2527 = vrcp.pop %v2433
      %v2528 = vmul.f32 1.0, %v2527
      %v2529 = vrcp.pop %v2434
      %v2530 = vmul.f32 1.0, %v2529
      %v2531 = vmul.f32 %v2053, %v2436
      %v2532 = vmul.f32 %v2056, %v2438
      %v2533 = vmul.f32 %v2061, %v2440
      %v2534 = vmul.f32 %v2064, %v2442
      %v2535 = vmul.f32 %v2069, %v2444
      %v2536 = vmul.f32 %v2072, %v2446
      %v2537 = vmul.f32 %v2077, %v2448
      %v2538 = vmul.f32 %v2080, %v2450
      %v2539 = vmul.f32 %v2085, %v2452
      %v2540 = vmul.f32 %v2088, %v2454
      %v2541 = vmul.f32 %v2093, %v2456
      %v2542 = vmul.f32 %v2096, %v2458
      %v2543 = vmul.f32 %v2101, %v2460
      %v2544 = vmul.f32 %v2104, %v2462
      %v2545 = vmul.f32 %v2109, %v2464
      %v2546 = vmul.f32 %v2112, %v2466
      %v2547 = vmul.f32 %v2117, %v2468
      %v2548 = vmul.f32 %v2120, %v2470
      %v2549 = vmul.f32 %v2125, %v2472
      %v2550 = vmul.f32 %v2128, %v2474
      %v2551 = vmul.f32 %v2133, %v2476
      %v2552 = vmul.f32 %v2136, %v2478
      %v2553 = vmul.f32 %v2141, %v2480
      %v2554 = vmul.f32 %v2144, %v2482
      %v2555 = vmul.f32 %v2149, %v2484
      %v2556 = vmul.f32 %v2152, %v2486
      %v2557 = vmul.f32 %v2157, %v2488
      %v2558 = vmul.f32 %v2160, %v2490
      %v2559 = vmul.f32 %v2165, %v2492
      %v2560 = vmul.f32 %v2168, %v2494
      %v2561 = vmul.f32 %v2173, %v2496
      %v2562 = vmul.f32 %v2176, %v2498
      %v2563 = vmul.f32 %v2181, %v2500
      %v2564 = vmul.f32 %v2184, %v2502
      %v2565 = vmul.f32 %v2189, %v2504
      %v2566 = vmul.f32 %v2192, %v2506
      %v2567 = vmul.f32 %v2197, %v2508
      %v2568 = vmul.f32 %v2200, %v2510
      %v2569 = vmul.f32 %v2205, %v2512
      %v2570 = vmul.f32 %v2208, %v2514
      %v2571 = vmul.f32 %v2213, %v2516
      %v2572 = vmul.f32 %v2216, %v2518
      %v2573 = vmul.f32 %v2221, %v2520
      %v2574 = vmul.f32 %v2224, %v2522
      %v2575 = vmul.f32 %v2229, %v2524
      %v2576 = vmul.f32 %v2232, %v2526
      %v2577 = vmul.f32 %v2237, %v2528
      %v2578 = vmul.f32 %v2240, %v2530
      %2580 = vset.pattern.permute.xlu0 0
      %2581 = vperm.xlu0 %2580, %v490
      %v2582 = vpop.permute.xlu0 %2581
      %2585 = vset.pattern.permute.xlu0 0
      %2586 = vperm.xlu0 %2585, %v491
      %v2587 = vpop.permute.xlu0 %2586
      %2590 = vset.pattern.permute.xlu0 0
      %2591 = vperm.xlu0 %2590, %v492
      %v2592 = vpop.permute.xlu0 %2591
      %2595 = vset.pattern.permute.xlu0 0
      %2596 = vperm.xlu0 %2595, %v493
      %v2597 = vpop.permute.xlu0 %2596
      %2600 = vset.pattern.permute.xlu0 0
      %2601 = vperm.xlu0 %2600, %v494
      %v2602 = vpop.permute.xlu0 %2601
      %2605 = vset.pattern.permute.xlu0 0
      %2606 = vperm.xlu0 %2605, %v495
      %v2607 = vpop.permute.xlu0 %2606
      %2610 = vset.pattern.permute.xlu0 0
      %2611 = vperm.xlu0 %2610, %v496
      %v2612 = vpop.permute.xlu0 %2611
      %2615 = vset.pattern.permute.xlu0 0
      %2616 = vperm.xlu0 %2615, %v497
      %v2617 = vpop.permute.xlu0 %2616
      %2620 = vset.pattern.permute.xlu0 0
      %2621 = vperm.xlu0 %2620, %v498
      %v2622 = vpop.permute.xlu0 %2621
      %2625 = vset.pattern.permute.xlu0 0
      %2626 = vperm.xlu0 %2625, %v499
      %v2627 = vpop.permute.xlu0 %2626
      %2630 = vset.pattern.permute.xlu0 0
      %2631 = vperm.xlu0 %2630, %v500
      %v2632 = vpop.permute.xlu0 %2631
      %2635 = vset.pattern.permute.xlu0 0
      %2636 = vperm.xlu0 %2635, %v501
      %v2637 = vpop.permute.xlu0 %2636
      %2640 = vset.pattern.permute.xlu0 0
      %2641 = vperm.xlu0 %2640, %v502
      %v2642 = vpop.permute.xlu0 %2641
      %2645 = vset.pattern.permute.xlu0 0
      %2646 = vperm.xlu0 %2645, %v503
      %v2647 = vpop.permute.xlu0 %2646
      %2650 = vset.pattern.permute.xlu0 0
      %2651 = vperm.xlu0 %2650, %v504
      %v2652 = vpop.permute.xlu0 %2651
      %2655 = vset.pattern.permute.xlu0 0
      %2656 = vperm.xlu0 %2655, %v505
      %v2657 = vpop.permute.xlu0 %2656
      %2660 = vset.pattern.permute.xlu0 0
      %2661 = vperm.xlu0 %2660, %v506
      %v2662 = vpop.permute.xlu0 %2661
      %2665 = vset.pattern.permute.xlu0 0
      %2666 = vperm.xlu0 %2665, %v507
      %v2667 = vpop.permute.xlu0 %2666
      %2670 = vset.pattern.permute.xlu0 0
      %2671 = vperm.xlu0 %2670, %v508
      %v2672 = vpop.permute.xlu0 %2671
      %2675 = vset.pattern.permute.xlu0 0
      %2676 = vperm.xlu0 %2675, %v509
      %v2677 = vpop.permute.xlu0 %2676
      %2680 = vset.pattern.permute.xlu0 0
      %2681 = vperm.xlu0 %2680, %v510
      %v2682 = vpop.permute.xlu0 %2681
      %2685 = vset.pattern.permute.xlu0 0
      %2686 = vperm.xlu0 %2685, %v511
      %v2687 = vpop.permute.xlu0 %2686
      %2690 = vset.pattern.permute.xlu0 0
      %2691 = vperm.xlu0 %2690, %v512
      %v2692 = vpop.permute.xlu0 %2691
      %2695 = vset.pattern.permute.xlu0 0
      %2696 = vperm.xlu0 %2695, %v513
      %v2697 = vpop.permute.xlu0 %2696
      %2700 = vset.pattern.permute.xlu0 0
      %2701 = vperm.xlu0 %2700, %v514
      %v2702 = vpop.permute.xlu0 %2701
      %2705 = vset.pattern.permute.xlu0 0
      %2706 = vperm.xlu0 %2705, %v515
      %v2707 = vpop.permute.xlu0 %2706
      %2710 = vset.pattern.permute.xlu0 0
      %2711 = vperm.xlu0 %2710, %v516
      %v2712 = vpop.permute.xlu0 %2711
      %2715 = vset.pattern.permute.xlu0 0
      %2716 = vperm.xlu0 %2715, %v517
      %v2717 = vpop.permute.xlu0 %2716
      %2720 = vset.pattern.permute.xlu0 0
      %2721 = vperm.xlu0 %2720, %v518
      %v2722 = vpop.permute.xlu0 %2721
      %2725 = vset.pattern.permute.xlu0 0
      %2726 = vperm.xlu0 %2725, %v519
      %v2727 = vpop.permute.xlu0 %2726
      %2730 = vset.pattern.permute.xlu0 0
      %2731 = vperm.xlu0 %2730, %v520
      %v2732 = vpop.permute.xlu0 %2731
      %2735 = vset.pattern.permute.xlu0 0
      %2736 = vperm.xlu0 %2735, %v521
      %v2737 = vpop.permute.xlu0 %2736
      %2740 = vset.pattern.permute.xlu0 0
      %2741 = vperm.xlu0 %2740, %v522
      %v2742 = vpop.permute.xlu0 %2741
      %2745 = vset.pattern.permute.xlu0 0
      %2746 = vperm.xlu0 %2745, %v523
      %v2747 = vpop.permute.xlu0 %2746
      %2750 = vset.pattern.permute.xlu0 0
      %2751 = vperm.xlu0 %2750, %v524
      %v2752 = vpop.permute.xlu0 %2751
      %2755 = vset.pattern.permute.xlu0 0
      %2756 = vperm.xlu0 %2755, %v525
      %v2757 = vpop.permute.xlu0 %2756
      %2760 = vset.pattern.permute.xlu0 0
      %2761 = vperm.xlu0 %2760, %v526
      %v2762 = vpop.permute.xlu0 %2761
      %2765 = vset.pattern.permute.xlu0 0
      %2766 = vperm.xlu0 %2765, %v527
      %v2767 = vpop.permute.xlu0 %2766
      %2770 = vset.pattern.permute.xlu0 0
      %2771 = vperm.xlu0 %2770, %v528
      %v2772 = vpop.permute.xlu0 %2771
      %2775 = vset.pattern.permute.xlu0 0
      %2776 = vperm.xlu0 %2775, %v529
      %v2777 = vpop.permute.xlu0 %2776
      %2780 = vset.pattern.permute.xlu0 0
      %2781 = vperm.xlu0 %2780, %v530
      %v2782 = vpop.permute.xlu0 %2781
      %2785 = vset.pattern.permute.xlu0 0
      %2786 = vperm.xlu0 %2785, %v531
      %v2787 = vpop.permute.xlu0 %2786
      %2790 = vset.pattern.permute.xlu0 0
      %2791 = vperm.xlu0 %2790, %v532
      %v2792 = vpop.permute.xlu0 %2791
      %2795 = vset.pattern.permute.xlu0 0
      %2796 = vperm.xlu0 %2795, %v533
      %v2797 = vpop.permute.xlu0 %2796
      %2800 = vset.pattern.permute.xlu0 0
      %2801 = vperm.xlu0 %2800, %v534
      %v2802 = vpop.permute.xlu0 %2801
      %2805 = vset.pattern.permute.xlu0 0
      %2806 = vperm.xlu0 %2805, %v535
      %v2807 = vpop.permute.xlu0 %2806
      %2810 = vset.pattern.permute.xlu0 0
      %2811 = vperm.xlu0 %2810, %v536
      %v2812 = vpop.permute.xlu0 %2811
      %2815 = vset.pattern.permute.xlu0 0
      %2816 = vperm.xlu0 %2815, %v537
      %v2817 = vpop.permute.xlu0 %2816
      %v2819 = vmul.f32 %v2531, %v2582
      %v2820 = vmul.f32 %v2532, %v2587
      %v2821 = vmul.f32 %v2533, %v2592
      %v2822 = vmul.f32 %v2534, %v2597
      %v2823 = vmul.f32 %v2535, %v2602
      %v2824 = vmul.f32 %v2536, %v2607
      %v2825 = vmul.f32 %v2537, %v2612
      %v2826 = vmul.f32 %v2538, %v2617
      %v2827 = vmul.f32 %v2539, %v2622
      %v2828 = vmul.f32 %v2540, %v2627
      %v2829 = vmul.f32 %v2541, %v2632
      %v2830 = vmul.f32 %v2542, %v2637
      %v2831 = vmul.f32 %v2543, %v2642
      %v2832 = vmul.f32 %v2544, %v2647
      %v2833 = vmul.f32 %v2545, %v2652
      %v2834 = vmul.f32 %v2546, %v2657
      %v2835 = vmul.f32 %v2547, %v2662
      %v2836 = vmul.f32 %v2548, %v2667
      %v2837 = vmul.f32 %v2549, %v2672
      %v2838 = vmul.f32 %v2550, %v2677
      %v2839 = vmul.f32 %v2551, %v2682
      %v2840 = vmul.f32 %v2552, %v2687
      %v2841 = vmul.f32 %v2553, %v2692
      %v2842 = vmul.f32 %v2554, %v2697
      %v2843 = vmul.f32 %v2555, %v2702
      %v2844 = vmul.f32 %v2556, %v2707
      %v2845 = vmul.f32 %v2557, %v2712
      %v2846 = vmul.f32 %v2558, %v2717
      %v2847 = vmul.f32 %v2559, %v2722
      %v2848 = vmul.f32 %v2560, %v2727
      %v2849 = vmul.f32 %v2561, %v2732
      %v2850 = vmul.f32 %v2562, %v2737
      %v2851 = vmul.f32 %v2563, %v2742
      %v2852 = vmul.f32 %v2564, %v2747
      %v2853 = vmul.f32 %v2565, %v2752
      %v2854 = vmul.f32 %v2566, %v2757
      %v2855 = vmul.f32 %v2567, %v2762
      %v2856 = vmul.f32 %v2568, %v2767
      %v2857 = vmul.f32 %v2569, %v2772
      %v2858 = vmul.f32 %v2570, %v2777
      %v2859 = vmul.f32 %v2571, %v2782
      %v2860 = vmul.f32 %v2572, %v2787
      %v2861 = vmul.f32 %v2573, %v2792
      %v2862 = vmul.f32 %v2574, %v2797
      %v2863 = vmul.f32 %v2575, %v2802
      %v2864 = vmul.f32 %v2576, %v2807
      %v2865 = vmul.f32 %v2577, %v2812
      %v2866 = vmul.f32 %v2578, %v2817
      %2867 = vst.msk [vmem:[#allocation2 + $0x20] sm:$0xff] %vm1900, %v2819
      %2868 = vst.msk [vmem:[#allocation2 + $0x28] sm:$0xff] %vm1900, %v2820
      %2869 = vst.msk [vmem:[#allocation2 + $0x30] sm:$0xff] %vm1900, %v2821
      %2870 = vst.msk [vmem:[#allocation2 + $0x38] sm:$0xff] %vm1900, %v2822
      %2871 = vst.msk [vmem:[#allocation2 + $0x40] sm:$0xff] %vm1900, %v2823
      %2872 = vst.msk [vmem:[#allocation2 + $0x48] sm:$0xff] %vm1900, %v2824
      %2873 = vst.msk [vmem:[#allocation2 + $0x50] sm:$0xff] %vm1900, %v2825
      %2874 = vst.msk [vmem:[#allocation2 + $0x58] sm:$0xff] %vm1900, %v2826
      %2875 = vst.msk [vmem:[#allocation2 + $0x60] sm:$0xff] %vm1900, %v2827
      %2876 = vst.msk [vmem:[#allocation2 + $0x68] sm:$0xff] %vm1900, %v2828
      %2877 = vst.msk [vmem:[#allocation2 + $0x70] sm:$0xff] %vm1900, %v2829
      %2878 = vst.msk [vmem:[#allocation2 + $0x78] sm:$0xff] %vm1900, %v2830
      %2879 = vst.msk [vmem:[#allocation2 + $0x80] sm:$0xff] %vm1900, %v2831
      %2880 = vst.msk [vmem:[#allocation2 + $0x88] sm:$0xff] %vm1900, %v2832
      %2881 = vst.msk [vmem:[#allocation2 + $0x90] sm:$0xff] %vm1900, %v2833
      %2882 = vst.msk [vmem:[#allocation2 + $0x98] sm:$0xff] %vm1900, %v2834
      %2883 = vst.msk [vmem:[#allocation2 + $0xa0] sm:$0xff] %vm1900, %v2835
      %2884 = vst.msk [vmem:[#allocation2 + $0xa8] sm:$0xff] %vm1900, %v2836
      %2885 = vst.msk [vmem:[#allocation2 + $0xb0] sm:$0xff] %vm1900, %v2837
      %2886 = vst.msk [vmem:[#allocation2 + $0xb8] sm:$0xff] %vm1900, %v2838
      %2887 = vst.msk [vmem:[#allocation2 + $0xc0] sm:$0xff] %vm1900, %v2839
      %2888 = vst.msk [vmem:[#allocation2 + $0xc8] sm:$0xff] %vm1900, %v2840
      %2889 = vst.msk [vmem:[#allocation2 + $0xd0] sm:$0xff] %vm1900, %v2841
      %2890 = vst.msk [vmem:[#allocation2 + $0xd8] sm:$0xff] %vm1900, %v2842
      %2891 = vst.msk [vmem:[#allocation2 + $0xe0] sm:$0xff] %vm1900, %v2843
      %2892 = vst.msk [vmem:[#allocation2 + $0xe8] sm:$0xff] %vm1900, %v2844
      %2893 = vst.msk [vmem:[#allocation2 + $0xf0] sm:$0xff] %vm1900, %v2845
      %2894 = vst.msk [vmem:[#allocation2 + $0xf8] sm:$0xff] %vm1900, %v2846
      %2895 = vst.msk [vmem:[#allocation2 + $0x100] sm:$0xff] %vm1900, %v2847
      %2896 = vst.msk [vmem:[#allocation2 + $0x108] sm:$0xff] %vm1900, %v2848
      %2897 = vst.msk [vmem:[#allocation2 + $0x110] sm:$0xff] %vm1900, %v2849
      %2898 = vst.msk [vmem:[#allocation2 + $0x118] sm:$0xff] %vm1900, %v2850
      %2899 = vst.msk [vmem:[#allocation2 + $0x120] sm:$0xff] %vm1900, %v2851
      %2900 = vst.msk [vmem:[#allocation2 + $0x128] sm:$0xff] %vm1900, %v2852
      %2901 = vst.msk [vmem:[#allocation2 + $0x130] sm:$0xff] %vm1900, %v2853
      %2902 = vst.msk [vmem:[#allocation2 + $0x138] sm:$0xff] %vm1900, %v2854
      %2903 = vst.msk [vmem:[#allocation2 + $0x140] sm:$0xff] %vm1900, %v2855
      %2904 = vst.msk [vmem:[#allocation2 + $0x148] sm:$0xff] %vm1900, %v2856
      %2905 = vst.msk [vmem:[#allocation2 + $0x150] sm:$0xff] %vm1900, %v2857
      %2906 = vst.msk [vmem:[#allocation2 + $0x158] sm:$0xff] %vm1900, %v2858
      %2907 = vst.msk [vmem:[#allocation2 + $0x160] sm:$0xff] %vm1900, %v2859
      %2908 = vst.msk [vmem:[#allocation2 + $0x168] sm:$0xff] %vm1900, %v2860
      %2909 = vst.msk [vmem:[#allocation2 + $0x170] sm:$0xff] %vm1900, %v2861
      %2910 = vst.msk [vmem:[#allocation2 + $0x178] sm:$0xff] %vm1900, %v2862
      %2911 = vst.msk [vmem:[#allocation2 + $0x180] sm:$0xff] %vm1900, %v2863
      %2912 = vst.msk [vmem:[#allocation2 + $0x188] sm:$0xff] %vm1900, %v2864
      %2913 = vst.msk [vmem:[#allocation2 + $0x190] sm:$0xff] %vm1900, %v2865
      %2914 = vst.msk [vmem:[#allocation2 + $0x198] sm:$0xff] %vm1900, %v2866
      %v2915 = vld [vmem:[%s9] sm:$0x1]
      %v2916 = vld [vmem:[#allocation2 + $0x7] sm:$0xff]
      %v2917 = vld [vmem:[#allocation2 + $0xf] sm:$0xff]
      %v2918 = vld [vmem:[#allocation2 + $0x17] sm:$0xff]
      %v2919 = vld [vmem:[#allocation2 + $0x1f] sm:$0xff]
      %v2920 = vld [vmem:[#allocation2 + $0x27] sm:$0xff]
      %v2921 = vld [vmem:[#allocation2 + $0x2f] sm:$0xff]
      %v2922 = vld [vmem:[#allocation2 + $0x37] sm:$0xff]
      %v2923 = vld [vmem:[#allocation2 + $0x3f] sm:$0xff]
      %v2924 = vld [vmem:[#allocation2 + $0x47] sm:$0xff]
      %v2925 = vld [vmem:[#allocation2 + $0x4f] sm:$0xff]
      %v2926 = vld [vmem:[#allocation2 + $0x57] sm:$0xff]
      %v2927 = vld [vmem:[#allocation2 + $0x5f] sm:$0xff]
      %v2928 = vld [vmem:[#allocation2 + $0x67] sm:$0xff]
      %v2929 = vld [vmem:[#allocation2 + $0x6f] sm:$0xff]
      %v2930 = vld [vmem:[#allocation2 + $0x77] sm:$0xff]
      %v2931 = vld [vmem:[#allocation2 + $0x7f] sm:$0xff]
      %v2932 = vld [vmem:[#allocation2 + $0x87] sm:$0xff]
      %v2933 = vld [vmem:[#allocation2 + $0x8f] sm:$0xff]
      %v2934 = vld [vmem:[#allocation2 + $0x97] sm:$0xff]
      %v2935 = vld [vmem:[#allocation2 + $0x9f] sm:$0xff]
      %v2936 = vld [vmem:[#allocation2 + $0xa7] sm:$0xff]
      %v2937 = vld [vmem:[#allocation2 + $0xaf] sm:$0xff]
      %v2938 = vld [vmem:[#allocation2 + $0xb7] sm:$0xff]
      %v2939 = vld [vmem:[#allocation2 + $0xbf] sm:$0xff]
      %v2940 = vld [vmem:[#allocation2 + $0xc7] sm:$0xff]
      %v2941 = vld [vmem:[#allocation2 + $0xcf] sm:$0xff]
      %v2942 = vld [vmem:[#allocation2 + $0xd7] sm:$0xff]
      %v2943 = vld [vmem:[#allocation2 + $0xdf] sm:$0xff]
      %v2944 = vld [vmem:[#allocation2 + $0xe7] sm:$0xff]
      %v2945 = vld [vmem:[#allocation2 + $0xef] sm:$0xff]
      %v2946 = vld [vmem:[#allocation2 + $0xf7] sm:$0xff]
      %v2947 = vld [vmem:[#allocation2 + $0xff] sm:$0xff]
      %v2948 = vld [vmem:[#allocation2 + $0x107] sm:$0xff]
      %v2949 = vld [vmem:[#allocation2 + $0x10f] sm:$0xff]
      %v2950 = vld [vmem:[#allocation2 + $0x117] sm:$0xff]
      %v2951 = vld [vmem:[#allocation2 + $0x11f] sm:$0xff]
      %v2952 = vld [vmem:[#allocation2 + $0x127] sm:$0xff]
      %v2953 = vld [vmem:[#allocation2 + $0x12f] sm:$0xff]
      %v2954 = vld [vmem:[#allocation2 + $0x137] sm:$0xff]
      %v2955 = vld [vmem:[#allocation2 + $0x13f] sm:$0xff]
      %v2956 = vld [vmem:[#allocation2 + $0x147] sm:$0xff]
      %v2957 = vld [vmem:[#allocation2 + $0x14f] sm:$0xff]
      %v2958 = vld [vmem:[#allocation2 + $0x157] sm:$0xff]
      %v2959 = vld [vmem:[#allocation2 + $0x15f] sm:$0xff]
      %v2960 = vld [vmem:[#allocation2 + $0x167] sm:$0xff]
      %v2961 = vld [vmem:[#allocation2 + $0x16f] sm:$0xff]
      %v2962 = vld [vmem:[#allocation2 + $0x177] sm:$0xff]
      %v2963 = vld [vmem:[#allocation2 + $0x17f] sm:$0xff]
      %v2964 = vpack.c.bf16 %v2917, %v2916
      %v2965 = vpack.c.bf16 %v2919, %v2918
      %v2966 = vpack.c.bf16 %v2921, %v2920
      %v2967 = vpack.c.bf16 %v2923, %v2922
      %v2968 = vpack.c.bf16 %v2925, %v2924
      %v2969 = vpack.c.bf16 %v2927, %v2926
      %v2970 = vpack.c.bf16 %v2929, %v2928
      %v2971 = vpack.c.bf16 %v2931, %v2930
      %v2972 = vpack.c.bf16 %v2933, %v2932
      %v2973 = vpack.c.bf16 %v2935, %v2934
      %v2974 = vpack.c.bf16 %v2937, %v2936
      %v2975 = vpack.c.bf16 %v2939, %v2938
      %v2976 = vpack.c.bf16 %v2941, %v2940
      %v2977 = vpack.c.bf16 %v2943, %v2942
      %v2978 = vpack.c.bf16 %v2945, %v2944
      %v2979 = vpack.c.bf16 %v2947, %v2946
      %v2980 = vpack.c.bf16 %v2949, %v2948
      %v2981 = vpack.c.bf16 %v2951, %v2950
      %v2982 = vpack.c.bf16 %v2953, %v2952
      %v2983 = vpack.c.bf16 %v2955, %v2954
      %v2984 = vpack.c.bf16 %v2957, %v2956
      %v2985 = vpack.c.bf16 %v2959, %v2958
      %v2986 = vpack.c.bf16 %v2961, %v2960
      %v2987 = vpack.c.bf16 %v2963, %v2962
      %v2988 = vld [vmem:[%s8] sm:$0x1]
      %v2989 = vld [vmem:[#allocation2 + $0x8] sm:$0xff]
      %v2990 = vld [vmem:[#allocation2 + $0x10] sm:$0xff]
      %v2991 = vld [vmem:[#allocation2 + $0x18] sm:$0xff]
      %v2992 = vld [vmem:[#allocation2 + $0x20] sm:$0xff]
      %v2993 = vld [vmem:[#allocation2 + $0x28] sm:$0xff]
      %v2994 = vld [vmem:[#allocation2 + $0x30] sm:$0xff]
      %v2995 = vld [vmem:[#allocation2 + $0x38] sm:$0xff]
      %v2996 = vld [vmem:[#allocation2 + $0x40] sm:$0xff]
      %v2997 = vld [vmem:[#allocation2 + $0x48] sm:$0xff]
      %v2998 = vld [vmem:[#allocation2 + $0x50] sm:$0xff]
      %v2999 = vld [vmem:[#allocation2 + $0x58] sm:$0xff]
      %v3000 = vld [vmem:[#allocation2 + $0x60] sm:$0xff]
      %v3001 = vld [vmem:[#allocation2 + $0x68] sm:$0xff]
      %v3002 = vld [vmem:[#allocation2 + $0x70] sm:$0xff]
      %v3003 = vld [vmem:[#allocation2 + $0x78] sm:$0xff]
      %v3004 = vld [vmem:[#allocation2 + $0x80] sm:$0xff]
      %v3005 = vld [vmem:[#allocation2 + $0x88] sm:$0xff]
      %v3006 = vld [vmem:[#allocation2 + $0x90] sm:$0xff]
      %v3007 = vld [vmem:[#allocation2 + $0x98] sm:$0xff]
      %v3008 = vld [vmem:[#allocation2 + $0xa0] sm:$0xff]
      %v3009 = vld [vmem:[#allocation2 + $0xa8] sm:$0xff]
      %v3010 = vld [vmem:[#allocation2 + $0xb0] sm:$0xff]
      %v3011 = vld [vmem:[#allocation2 + $0xb8] sm:$0xff]
      %v3012 = vld [vmem:[#allocation2 + $0xc0] sm:$0xff]
      %v3013 = vld [vmem:[#allocation2 + $0xc8] sm:$0xff]
      %v3014 = vld [vmem:[#allocation2 + $0xd0] sm:$0xff]
      %v3015 = vld [vmem:[#allocation2 + $0xd8] sm:$0xff]
      %v3016 = vld [vmem:[#allocation2 + $0xe0] sm:$0xff]
      %v3017 = vld [vmem:[#allocation2 + $0xe8] sm:$0xff]
      %v3018 = vld [vmem:[#allocation2 + $0xf0] sm:$0xff]
      %v3019 = vld [vmem:[#allocation2 + $0xf8] sm:$0xff]
      %v3020 = vld [vmem:[#allocation2 + $0x100] sm:$0xff]
      %v3021 = vld [vmem:[#allocation2 + $0x108] sm:$0xff]
      %v3022 = vld [vmem:[#allocation2 + $0x110] sm:$0xff]
      %v3023 = vld [vmem:[#allocation2 + $0x118] sm:$0xff]
      %v3024 = vld [vmem:[#allocation2 + $0x120] sm:$0xff]
      %v3025 = vld [vmem:[#allocation2 + $0x128] sm:$0xff]
      %v3026 = vld [vmem:[#allocation2 + $0x130] sm:$0xff]
      %v3027 = vld [vmem:[#allocation2 + $0x138] sm:$0xff]
      %v3028 = vld [vmem:[#allocation2 + $0x140] sm:$0xff]
      %v3029 = vld [vmem:[#allocation2 + $0x148] sm:$0xff]
      %v3030 = vld [vmem:[#allocation2 + $0x150] sm:$0xff]
      %v3031 = vld [vmem:[#allocation2 + $0x158] sm:$0xff]
      %v3032 = vld [vmem:[#allocation2 + $0x160] sm:$0xff]
      %v3033 = vld [vmem:[#allocation2 + $0x168] sm:$0xff]
      %v3034 = vld [vmem:[#allocation2 + $0x170] sm:$0xff]
      %v3035 = vld [vmem:[#allocation2 + $0x178] sm:$0xff]
      %v3036 = vld [vmem:[#allocation2 + $0x180] sm:$0xff]
      %v3037 = vpack.c.bf16 %v2990, %v2989
      %v3038 = vpack.c.bf16 %v2992, %v2991
      %v3039 = vpack.c.bf16 %v2994, %v2993
      %v3040 = vpack.c.bf16 %v2996, %v2995
      %v3041 = vpack.c.bf16 %v2998, %v2997
      %v3042 = vpack.c.bf16 %v3000, %v2999
      %v3043 = vpack.c.bf16 %v3002, %v3001
      %v3044 = vpack.c.bf16 %v3004, %v3003
      %v3045 = vpack.c.bf16 %v3006, %v3005
      %v3046 = vpack.c.bf16 %v3008, %v3007
      %v3047 = vpack.c.bf16 %v3010, %v3009
      %v3048 = vpack.c.bf16 %v3012, %v3011
      %v3049 = vpack.c.bf16 %v3014, %v3013
      %v3050 = vpack.c.bf16 %v3016, %v3015
      %v3051 = vpack.c.bf16 %v3018, %v3017
      %v3052 = vpack.c.bf16 %v3020, %v3019
      %v3053 = vpack.c.bf16 %v3022, %v3021
      %v3054 = vpack.c.bf16 %v3024, %v3023
      %v3055 = vpack.c.bf16 %v3026, %v3025
      %v3056 = vpack.c.bf16 %v3028, %v3027
      %v3057 = vpack.c.bf16 %v3030, %v3029
      %v3058 = vpack.c.bf16 %v3032, %v3031
      %v3059 = vpack.c.bf16 %v3034, %v3033
      %v3060 = vpack.c.bf16 %v3036, %v3035
      %s3061 = scalar_lea.vmem %s8, 1
      %v3062 = vld [vmem:[%s3061] sm:$0x1]
      %v3064 = vsel %vm1900, %v3037, 0
      %v3067 = vsel %vm1900, %v3038, 0
      %v3070 = vsel %vm1900, %v3039, 0
      %v3073 = vsel %vm1900, %v3040, 0
      %v3076 = vsel %vm1900, %v3041, 0
      %v3079 = vsel %vm1900, %v3042, 0
      %v3082 = vsel %vm1900, %v3043, 0
      %v3085 = vsel %vm1900, %v3044, 0
      %v3088 = vsel %vm1900, %v3045, 0
      %v3091 = vsel %vm1900, %v3046, 0
      %v3094 = vsel %vm1900, %v3047, 0
      %v3097 = vsel %vm1900, %v3048, 0
      %v3100 = vsel %vm1900, %v3049, 0
      %v3103 = vsel %vm1900, %v3050, 0
      %v3106 = vsel %vm1900, %v3051, 0
      %v3109 = vsel %vm1900, %v3052, 0
      %v3112 = vsel %vm1900, %v3053, 0
      %v3115 = vsel %vm1900, %v3054, 0
      %v3118 = vsel %vm1900, %v3055, 0
      %v3121 = vsel %vm1900, %v3056, 0
      %v3124 = vsel %vm1900, %v3057, 0
      %v3127 = vsel %vm1900, %v3058, 0
      %v3130 = vsel %vm1900, %v3059, 0
      %v3133 = vsel %vm1900, %v3060, 0
      %v3136 = vsel %vm2014, %v3062, 0
      %3138 = vmatprep.subr.bf16.mxu0 0
      %3139 = vmatpush1.bf16.msra.mxu0 0
      %3140 = vmatprep.subr.bf16.mxu0 0
      %3141 = vmatpush1.bf16.msra.mxu0 0
      %3142 = vmatprep.subr.bf16.mxu0 0
      %3143 = vmatpush1.bf16.msra.mxu0 0
      %3144 = vmatprep.subr.bf16.mxu0 0
      %3145 = vmatpush1.bf16.msra.mxu0 0
      %3146 = vmatprep.subr.bf16.mxu0 0
      %3147 = vmatpush1.bf16.msra.mxu0 0
      %3148 = vmatprep.subr.bf16.mxu0 0
      %3149 = vmatpush1.bf16.msra.mxu0 0
      %3150 = vmatprep.subr.bf16.mxu0 0
      %3151 = vmatpush1.bf16.msra.mxu0 0
      %3152 = vmatprep.subr.bf16.mxu0 0
      %3153 = vmatpush1.bf16.msra.mxu0 %v3136
      %3154 = vmatprep.subr.bf16.mxu0 0
      %3155 = vmatpush2.bf16.msra.mxu0 0
      %3156 = vmatprep.subr.bf16.mxu0 0
      %3157 = vmatpush2.bf16.msra.mxu0 0
      %3158 = vmatprep.subr.bf16.mxu0 0
      %3159 = vmatpush2.bf16.msra.mxu0 0
      %3160 = vmatprep.subr.bf16.mxu0 0
      %3161 = vmatpush2.bf16.msra.mxu0 0
      %3162 = vmatprep.subr.bf16.mxu0 0
      %3163 = vmatpush2.bf16.msra.mxu0 0
      %3164 = vmatprep.subr.bf16.mxu0 0
      %3165 = vmatpush2.bf16.msra.mxu0 0
      %3166 = vmatprep.subr.bf16.mxu0 0
      %3167 = vmatpush2.bf16.msra.mxu0 0
      %3168 = vmatprep.subr.bf16.mxu0 0
      %3169 = vmatpush2.bf16.msra.mxu0 0
      %3170 = vmatprep.mubr.bf16.mxu0 0
      %3171 = vmatmul.mubr.bf16.gmra.mxu0 %v3064
      %v3172 = vpop.f32.mrf.mxu0
      %v3173 = vadd.f32 0.0, %v3172
      %v3174 = vpop.f32.mrf.mxu0
      %v3175 = vpop.f32.mrf.mxu0
      %v3176 = vadd.f32 0.0, %v3175
      %v3177 = vpop.f32.mrf.mxu0
      %3178 = vmatprep.mubr.bf16.mxu0 0
      %3179 = vmatmul.mubr.bf16.gmra.mxu0 %v3067
      %v3180 = vpop.f32.mrf.mxu0
      %v3181 = vadd.f32 0.0, %v3180
      %v3182 = vpop.f32.mrf.mxu0
      %v3183 = vpop.f32.mrf.mxu0
      %v3184 = vadd.f32 0.0, %v3183
      %v3185 = vpop.f32.mrf.mxu0
      %3186 = vmatprep.mubr.bf16.mxu0 0
      %3187 = vmatmul.mubr.bf16.gmra.mxu0 %v3070
      %v3188 = vpop.f32.mrf.mxu0
      %v3189 = vadd.f32 0.0, %v3188
      %v3190 = vpop.f32.mrf.mxu0
      %v3191 = vpop.f32.mrf.mxu0
      %v3192 = vadd.f32 0.0, %v3191
      %v3193 = vpop.f32.mrf.mxu0
      %3194 = vmatprep.mubr.bf16.mxu0 0
      %3195 = vmatmul.mubr.bf16.gmra.mxu0 %v3073
      %v3196 = vpop.f32.mrf.mxu0
      %v3197 = vadd.f32 0.0, %v3196
      %v3198 = vpop.f32.mrf.mxu0
      %v3199 = vpop.f32.mrf.mxu0
      %v3200 = vadd.f32 0.0, %v3199
      %v3201 = vpop.f32.mrf.mxu0
      %3202 = vmatprep.mubr.bf16.mxu0 0
      %3203 = vmatmul.mubr.bf16.gmra.mxu0 %v3076
      %v3204 = vpop.f32.mrf.mxu0
      %v3205 = vadd.f32 0.0, %v3204
      %v3206 = vpop.f32.mrf.mxu0
      %v3207 = vpop.f32.mrf.mxu0
      %v3208 = vadd.f32 0.0, %v3207
      %v3209 = vpop.f32.mrf.mxu0
      %3210 = vmatprep.mubr.bf16.mxu0 0
      %3211 = vmatmul.mubr.bf16.gmra.mxu0 %v3079
      %v3212 = vpop.f32.mrf.mxu0
      %v3213 = vadd.f32 0.0, %v3212
      %v3214 = vpop.f32.mrf.mxu0
      %v3215 = vpop.f32.mrf.mxu0
      %v3216 = vadd.f32 0.0, %v3215
      %v3217 = vpop.f32.mrf.mxu0
      %3218 = vmatprep.mubr.bf16.mxu0 0
      %3219 = vmatmul.mubr.bf16.gmra.mxu0 %v3082
      %v3220 = vpop.f32.mrf.mxu0
      %v3221 = vadd.f32 0.0, %v3220
      %v3222 = vpop.f32.mrf.mxu0
      %v3223 = vpop.f32.mrf.mxu0
      %v3224 = vadd.f32 0.0, %v3223
      %v3225 = vpop.f32.mrf.mxu0
      %3226 = vmatprep.mubr.bf16.mxu0 0
      %3227 = vmatmul.mubr.bf16.gmra.mxu0 %v3085
      %v3228 = vpop.f32.mrf.mxu0
      %v3229 = vadd.f32 0.0, %v3228
      %v3230 = vpop.f32.mrf.mxu0
      %v3231 = vpop.f32.mrf.mxu0
      %v3232 = vadd.f32 0.0, %v3231
      %v3233 = vpop.f32.mrf.mxu0
      %3234 = vmatprep.mubr.bf16.mxu0 0
      %3235 = vmatmul.mubr.bf16.gmra.mxu0 %v3088
      %v3236 = vpop.f32.mrf.mxu0
      %v3237 = vadd.f32 0.0, %v3236
      %v3238 = vpop.f32.mrf.mxu0
      %v3239 = vpop.f32.mrf.mxu0
      %v3240 = vadd.f32 0.0, %v3239
      %v3241 = vpop.f32.mrf.mxu0
      %3242 = vmatprep.mubr.bf16.mxu0 0
      %3243 = vmatmul.mubr.bf16.gmra.mxu0 %v3091
      %v3244 = vpop.f32.mrf.mxu0
      %v3245 = vadd.f32 0.0, %v3244
      %v3246 = vpop.f32.mrf.mxu0
      %v3247 = vpop.f32.mrf.mxu0
      %v3248 = vadd.f32 0.0, %v3247
      %v3249 = vpop.f32.mrf.mxu0
      %3250 = vmatprep.mubr.bf16.mxu0 0
      %3251 = vmatmul.mubr.bf16.gmra.mxu0 %v3094
      %v3252 = vpop.f32.mrf.mxu0
      %v3253 = vadd.f32 0.0, %v3252
      %v3254 = vpop.f32.mrf.mxu0
      %v3255 = vpop.f32.mrf.mxu0
      %v3256 = vadd.f32 0.0, %v3255
      %v3257 = vpop.f32.mrf.mxu0
      %3258 = vmatprep.mubr.bf16.mxu0 0
      %3259 = vmatmul.mubr.bf16.gmra.mxu0 %v3097
      %v3260 = vpop.f32.mrf.mxu0
      %v3261 = vadd.f32 0.0, %v3260
      %v3262 = vpop.f32.mrf.mxu0
      %v3263 = vpop.f32.mrf.mxu0
      %v3264 = vadd.f32 0.0, %v3263
      %v3265 = vpop.f32.mrf.mxu0
      %3266 = vmatprep.mubr.bf16.mxu0 0
      %3267 = vmatmul.mubr.bf16.gmra.mxu0 %v3100
      %v3268 = vpop.f32.mrf.mxu0
      %v3269 = vadd.f32 0.0, %v3268
      %v3270 = vpop.f32.mrf.mxu0
      %v3271 = vpop.f32.mrf.mxu0
      %v3272 = vadd.f32 0.0, %v3271
      %v3273 = vpop.f32.mrf.mxu0
      %3274 = vmatprep.mubr.bf16.mxu0 0
      %3275 = vmatmul.mubr.bf16.gmra.mxu0 %v3103
      %v3276 = vpop.f32.mrf.mxu0
      %v3277 = vadd.f32 0.0, %v3276
      %v3278 = vpop.f32.mrf.mxu0
      %v3279 = vpop.f32.mrf.mxu0
      %v3280 = vadd.f32 0.0, %v3279
      %v3281 = vpop.f32.mrf.mxu0
      %3282 = vmatprep.mubr.bf16.mxu0 0
      %3283 = vmatmul.mubr.bf16.gmra.mxu0 %v3106
      %v3284 = vpop.f32.mrf.mxu0
      %v3285 = vadd.f32 0.0, %v3284
      %v3286 = vpop.f32.mrf.mxu0
      %v3287 = vpop.f32.mrf.mxu0
      %v3288 = vadd.f32 0.0, %v3287
      %v3289 = vpop.f32.mrf.mxu0
      %3290 = vmatprep.mubr.bf16.mxu0 0
      %3291 = vmatmul.mubr.bf16.gmra.mxu0 %v3109
      %v3292 = vpop.f32.mrf.mxu0
      %v3293 = vadd.f32 0.0, %v3292
      %v3294 = vpop.f32.mrf.mxu0
      %v3295 = vpop.f32.mrf.mxu0
      %v3296 = vadd.f32 0.0, %v3295
      %v3297 = vpop.f32.mrf.mxu0
      %3298 = vmatprep.mubr.bf16.mxu0 0
      %3299 = vmatmul.mubr.bf16.gmra.mxu0 %v3112
      %v3300 = vpop.f32.mrf.mxu0
      %v3301 = vadd.f32 0.0, %v3300
      %v3302 = vpop.f32.mrf.mxu0
      %v3303 = vpop.f32.mrf.mxu0
      %v3304 = vadd.f32 0.0, %v3303
      %v3305 = vpop.f32.mrf.mxu0
      %3306 = vmatprep.mubr.bf16.mxu0 0
      %3307 = vmatmul.mubr.bf16.gmra.mxu0 %v3115
      %v3308 = vpop.f32.mrf.mxu0
      %v3309 = vadd.f32 0.0, %v3308
      %v3310 = vpop.f32.mrf.mxu0
      %v3311 = vpop.f32.mrf.mxu0
      %v3312 = vadd.f32 0.0, %v3311
      %v3313 = vpop.f32.mrf.mxu0
      %3314 = vmatprep.mubr.bf16.mxu0 0
      %3315 = vmatmul.mubr.bf16.gmra.mxu0 %v3118
      %v3316 = vpop.f32.mrf.mxu0
      %v3317 = vadd.f32 0.0, %v3316
      %v3318 = vpop.f32.mrf.mxu0
      %v3319 = vpop.f32.mrf.mxu0
      %v3320 = vadd.f32 0.0, %v3319
      %v3321 = vpop.f32.mrf.mxu0
      %3322 = vmatprep.mubr.bf16.mxu0 0
      %3323 = vmatmul.mubr.bf16.gmra.mxu0 %v3121
      %v3324 = vpop.f32.mrf.mxu0
      %v3325 = vadd.f32 0.0, %v3324
      %v3326 = vpop.f32.mrf.mxu0
      %v3327 = vpop.f32.mrf.mxu0
      %v3328 = vadd.f32 0.0, %v3327
      %v3329 = vpop.f32.mrf.mxu0
      %3330 = vmatprep.mubr.bf16.mxu0 0
      %3331 = vmatmul.mubr.bf16.gmra.mxu0 %v3124
      %v3332 = vpop.f32.mrf.mxu0
      %v3333 = vadd.f32 0.0, %v3332
      %v3334 = vpop.f32.mrf.mxu0
      %v3335 = vpop.f32.mrf.mxu0
      %v3336 = vadd.f32 0.0, %v3335
      %v3337 = vpop.f32.mrf.mxu0
      %3338 = vmatprep.mubr.bf16.mxu0 0
      %3339 = vmatmul.mubr.bf16.gmra.mxu0 %v3127
      %v3340 = vpop.f32.mrf.mxu0
      %v3341 = vadd.f32 0.0, %v3340
      %v3342 = vpop.f32.mrf.mxu0
      %v3343 = vpop.f32.mrf.mxu0
      %v3344 = vadd.f32 0.0, %v3343
      %v3345 = vpop.f32.mrf.mxu0
      %3346 = vmatprep.mubr.bf16.mxu0 0
      %3347 = vmatmul.mubr.bf16.gmra.mxu0 %v3130
      %v3348 = vpop.f32.mrf.mxu0
      %v3349 = vadd.f32 0.0, %v3348
      %v3350 = vpop.f32.mrf.mxu0
      %v3351 = vpop.f32.mrf.mxu0
      %v3352 = vadd.f32 0.0, %v3351
      %v3353 = vpop.f32.mrf.mxu0
      %3354 = vmatprep.mubr.bf16.mxu0 0
      %3355 = vmatmul.mubr.bf16.gmra.mxu0 %v3133
      %v3356 = vpop.f32.mrf.mxu0
      %v3357 = vadd.f32 0.0, %v3356
      %v3358 = vpop.f32.mrf.mxu0
      %v3359 = vpop.f32.mrf.mxu0
      %v3360 = vadd.f32 0.0, %v3359
      %v3361 = vpop.f32.mrf.mxu0
      %3362 = vdwg.mxu0
      %v3364 = vsel %vm1900, %v2964, 0
      %v3367 = vsel %vm1900, %v2965, 0
      %v3370 = vsel %vm1900, %v2966, 0
      %v3373 = vsel %vm1900, %v2967, 0
      %v3376 = vsel %vm1900, %v2968, 0
      %v3379 = vsel %vm1900, %v2969, 0
      %v3382 = vsel %vm1900, %v2970, 0
      %v3385 = vsel %vm1900, %v2971, 0
      %v3388 = vsel %vm1900, %v2972, 0
      %v3391 = vsel %vm1900, %v2973, 0
      %v3394 = vsel %vm1900, %v2974, 0
      %v3397 = vsel %vm1900, %v2975, 0
      %v3400 = vsel %vm1900, %v2976, 0
      %v3403 = vsel %vm1900, %v2977, 0
      %v3406 = vsel %vm1900, %v2978, 0
      %v3409 = vsel %vm1900, %v2979, 0
      %v3412 = vsel %vm1900, %v2980, 0
      %v3415 = vsel %vm1900, %v2981, 0
      %v3418 = vsel %vm1900, %v2982, 0
      %v3421 = vsel %vm1900, %v2983, 0
      %v3424 = vsel %vm1900, %v2984, 0
      %v3427 = vsel %vm1900, %v2985, 0
      %v3430 = vsel %vm1900, %v2986, 0
      %v3433 = vsel %vm1900, %v2987, 0
      %v3436 = vsel %vm2014, %v2988, 0
      %3438 = vmatprep.subr.bf16.mxu0 0
      %3439 = vmatpush1.bf16.msra.mxu0 0
      %3440 = vmatprep.subr.bf16.mxu0 0
      %3441 = vmatpush1.bf16.msra.mxu0 0
      %3442 = vmatprep.subr.bf16.mxu0 0
      %3443 = vmatpush1.bf16.msra.mxu0 0
      %3444 = vmatprep.subr.bf16.mxu0 0
      %3445 = vmatpush1.bf16.msra.mxu0 0
      %3446 = vmatprep.subr.bf16.mxu0 0
      %3447 = vmatpush1.bf16.msra.mxu0 0
      %3448 = vmatprep.subr.bf16.mxu0 0
      %3449 = vmatpush1.bf16.msra.mxu0 0
      %3450 = vmatprep.subr.bf16.mxu0 0
      %3451 = vmatpush1.bf16.msra.mxu0 0
      %3452 = vmatprep.subr.bf16.mxu0 0
      %3453 = vmatpush1.bf16.msra.mxu0 %v3436
      %3454 = vmatprep.subr.bf16.mxu0 0
      %3455 = vmatpush2.bf16.msra.mxu0 0
      %3456 = vmatprep.subr.bf16.mxu0 0
      %3457 = vmatpush2.bf16.msra.mxu0 0
      %3458 = vmatprep.subr.bf16.mxu0 0
      %3459 = vmatpush2.bf16.msra.mxu0 0
      %3460 = vmatprep.subr.bf16.mxu0 0
      %3461 = vmatpush2.bf16.msra.mxu0 0
      %3462 = vmatprep.subr.bf16.mxu0 0
      %3463 = vmatpush2.bf16.msra.mxu0 0
      %3464 = vmatprep.subr.bf16.mxu0 0
      %3465 = vmatpush2.bf16.msra.mxu0 0
      %3466 = vmatprep.subr.bf16.mxu0 0
      %3467 = vmatpush2.bf16.msra.mxu0 0
      %3468 = vmatprep.subr.bf16.mxu0 0
      %3469 = vmatpush2.bf16.msra.mxu0 0
      %3470 = vmatprep.mubr.bf16.mxu0 0
      %3471 = vmatmul.mubr.bf16.gmra.mxu0 %v3364
      %v3472 = vpop.f32.mrf.mxu0
      %v3473 = vadd.f32 %v3173, %v3472
      %v3474 = vpop.f32.mrf.mxu0
      %v3475 = vpop.f32.mrf.mxu0
      %v3476 = vadd.f32 %v3176, %v3475
      %v3477 = vpop.f32.mrf.mxu0
      %3478 = vmatprep.mubr.bf16.mxu0 0
      %3479 = vmatmul.mubr.bf16.gmra.mxu0 %v3367
      %v3480 = vpop.f32.mrf.mxu0
      %v3481 = vadd.f32 %v3181, %v3480
      %v3482 = vpop.f32.mrf.mxu0
      %v3483 = vpop.f32.mrf.mxu0
      %v3484 = vadd.f32 %v3184, %v3483
      %v3485 = vpop.f32.mrf.mxu0
      %3486 = vmatprep.mubr.bf16.mxu0 0
      %3487 = vmatmul.mubr.bf16.gmra.mxu0 %v3370
      %v3488 = vpop.f32.mrf.mxu0
      %v3489 = vadd.f32 %v3189, %v3488
      %v3490 = vpop.f32.mrf.mxu0
      %v3491 = vpop.f32.mrf.mxu0
      %v3492 = vadd.f32 %v3192, %v3491
      %v3493 = vpop.f32.mrf.mxu0
      %3494 = vmatprep.mubr.bf16.mxu0 0
      %3495 = vmatmul.mubr.bf16.gmra.mxu0 %v3373
      %v3496 = vpop.f32.mrf.mxu0
      %v3497 = vadd.f32 %v3197, %v3496
      %v3498 = vpop.f32.mrf.mxu0
      %v3499 = vpop.f32.mrf.mxu0
      %v3500 = vadd.f32 %v3200, %v3499
      %v3501 = vpop.f32.mrf.mxu0
      %3502 = vmatprep.mubr.bf16.mxu0 0
      %3503 = vmatmul.mubr.bf16.gmra.mxu0 %v3376
      %v3504 = vpop.f32.mrf.mxu0
      %v3505 = vadd.f32 %v3205, %v3504
      %v3506 = vpop.f32.mrf.mxu0
      %v3507 = vpop.f32.mrf.mxu0
      %v3508 = vadd.f32 %v3208, %v3507
      %v3509 = vpop.f32.mrf.mxu0
      %3510 = vmatprep.mubr.bf16.mxu0 0
      %3511 = vmatmul.mubr.bf16.gmra.mxu0 %v3379
      %v3512 = vpop.f32.mrf.mxu0
      %v3513 = vadd.f32 %v3213, %v3512
      %v3514 = vpop.f32.mrf.mxu0
      %v3515 = vpop.f32.mrf.mxu0
      %v3516 = vadd.f32 %v3216, %v3515
      %v3517 = vpop.f32.mrf.mxu0
      %3518 = vmatprep.mubr.bf16.mxu0 0
      %3519 = vmatmul.mubr.bf16.gmra.mxu0 %v3382
      %v3520 = vpop.f32.mrf.mxu0
      %v3521 = vadd.f32 %v3221, %v3520
      %v3522 = vpop.f32.mrf.mxu0
      %v3523 = vpop.f32.mrf.mxu0
      %v3524 = vadd.f32 %v3224, %v3523
      %v3525 = vpop.f32.mrf.mxu0
      %3526 = vmatprep.mubr.bf16.mxu0 0
      %3527 = vmatmul.mubr.bf16.gmra.mxu0 %v3385
      %v3528 = vpop.f32.mrf.mxu0
      %v3529 = vadd.f32 %v3229, %v3528
      %v3530 = vpop.f32.mrf.mxu0
      %v3531 = vpop.f32.mrf.mxu0
      %v3532 = vadd.f32 %v3232, %v3531
      %v3533 = vpop.f32.mrf.mxu0
      %3534 = vmatprep.mubr.bf16.mxu0 0
      %3535 = vmatmul.mubr.bf16.gmra.mxu0 %v3388
      %v3536 = vpop.f32.mrf.mxu0
      %v3537 = vadd.f32 %v3237, %v3536
      %v3538 = vpop.f32.mrf.mxu0
      %v3539 = vpop.f32.mrf.mxu0
      %v3540 = vadd.f32 %v3240, %v3539
      %v3541 = vpop.f32.mrf.mxu0
      %3542 = vmatprep.mubr.bf16.mxu0 0
      %3543 = vmatmul.mubr.bf16.gmra.mxu0 %v3391
      %v3544 = vpop.f32.mrf.mxu0
      %v3545 = vadd.f32 %v3245, %v3544
      %v3546 = vpop.f32.mrf.mxu0
      %v3547 = vpop.f32.mrf.mxu0
      %v3548 = vadd.f32 %v3248, %v3547
      %v3549 = vpop.f32.mrf.mxu0
      %3550 = vmatprep.mubr.bf16.mxu0 0
      %3551 = vmatmul.mubr.bf16.gmra.mxu0 %v3394
      %v3552 = vpop.f32.mrf.mxu0
      %v3553 = vadd.f32 %v3253, %v3552
      %v3554 = vpop.f32.mrf.mxu0
      %v3555 = vpop.f32.mrf.mxu0
      %v3556 = vadd.f32 %v3256, %v3555
      %v3557 = vpop.f32.mrf.mxu0
      %3558 = vmatprep.mubr.bf16.mxu0 0
      %3559 = vmatmul.mubr.bf16.gmra.mxu0 %v3397
      %v3560 = vpop.f32.mrf.mxu0
      %v3561 = vadd.f32 %v3261, %v3560
      %v3562 = vpop.f32.mrf.mxu0
      %v3563 = vpop.f32.mrf.mxu0
      %v3564 = vadd.f32 %v3264, %v3563
      %v3565 = vpop.f32.mrf.mxu0
      %3566 = vmatprep.mubr.bf16.mxu0 0
      %3567 = vmatmul.mubr.bf16.gmra.mxu0 %v3400
      %v3568 = vpop.f32.mrf.mxu0
      %v3569 = vadd.f32 %v3269, %v3568
      %v3570 = vpop.f32.mrf.mxu0
      %v3571 = vpop.f32.mrf.mxu0
      %v3572 = vadd.f32 %v3272, %v3571
      %v3573 = vpop.f32.mrf.mxu0
      %3574 = vmatprep.mubr.bf16.mxu0 0
      %3575 = vmatmul.mubr.bf16.gmra.mxu0 %v3403
      %v3576 = vpop.f32.mrf.mxu0
      %v3577 = vadd.f32 %v3277, %v3576
      %v3578 = vpop.f32.mrf.mxu0
      %v3579 = vpop.f32.mrf.mxu0
      %v3580 = vadd.f32 %v3280, %v3579
      %v3581 = vpop.f32.mrf.mxu0
      %3582 = vmatprep.mubr.bf16.mxu0 0
      %3583 = vmatmul.mubr.bf16.gmra.mxu0 %v3406
      %v3584 = vpop.f32.mrf.mxu0
      %v3585 = vadd.f32 %v3285, %v3584
      %v3586 = vpop.f32.mrf.mxu0
      %v3587 = vpop.f32.mrf.mxu0
      %v3588 = vadd.f32 %v3288, %v3587
      %v3589 = vpop.f32.mrf.mxu0
      %3590 = vmatprep.mubr.bf16.mxu0 0
      %3591 = vmatmul.mubr.bf16.gmra.mxu0 %v3409
      %v3592 = vpop.f32.mrf.mxu0
      %v3593 = vadd.f32 %v3293, %v3592
      %v3594 = vpop.f32.mrf.mxu0
      %v3595 = vpop.f32.mrf.mxu0
      %v3596 = vadd.f32 %v3296, %v3595
      %v3597 = vpop.f32.mrf.mxu0
      %3598 = vmatprep.mubr.bf16.mxu0 0
      %3599 = vmatmul.mubr.bf16.gmra.mxu0 %v3412
      %v3600 = vpop.f32.mrf.mxu0
      %v3601 = vadd.f32 %v3301, %v3600
      %v3602 = vpop.f32.mrf.mxu0
      %v3603 = vpop.f32.mrf.mxu0
      %v3604 = vadd.f32 %v3304, %v3603
      %v3605 = vpop.f32.mrf.mxu0
      %3606 = vmatprep.mubr.bf16.mxu0 0
      %3607 = vmatmul.mubr.bf16.gmra.mxu0 %v3415
      %v3608 = vpop.f32.mrf.mxu0
      %v3609 = vadd.f32 %v3309, %v3608
      %v3610 = vpop.f32.mrf.mxu0
      %v3611 = vpop.f32.mrf.mxu0
      %v3612 = vadd.f32 %v3312, %v3611
      %v3613 = vpop.f32.mrf.mxu0
      %3614 = vmatprep.mubr.bf16.mxu0 0
      %3615 = vmatmul.mubr.bf16.gmra.mxu0 %v3418
      %v3616 = vpop.f32.mrf.mxu0
      %v3617 = vadd.f32 %v3317, %v3616
      %v3618 = vpop.f32.mrf.mxu0
      %v3619 = vpop.f32.mrf.mxu0
      %v3620 = vadd.f32 %v3320, %v3619
      %v3621 = vpop.f32.mrf.mxu0
      %3622 = vmatprep.mubr.bf16.mxu0 0
      %3623 = vmatmul.mubr.bf16.gmra.mxu0 %v3421
      %v3624 = vpop.f32.mrf.mxu0
      %v3625 = vadd.f32 %v3325, %v3624
      %v3626 = vpop.f32.mrf.mxu0
      %v3627 = vpop.f32.mrf.mxu0
      %v3628 = vadd.f32 %v3328, %v3627
      %v3629 = vpop.f32.mrf.mxu0
      %3630 = vmatprep.mubr.bf16.mxu0 0
      %3631 = vmatmul.mubr.bf16.gmra.mxu0 %v3424
      %v3632 = vpop.f32.mrf.mxu0
      %v3633 = vadd.f32 %v3333, %v3632
      %v3634 = vpop.f32.mrf.mxu0
      %v3635 = vpop.f32.mrf.mxu0
      %v3636 = vadd.f32 %v3336, %v3635
      %v3637 = vpop.f32.mrf.mxu0
      %3638 = vmatprep.mubr.bf16.mxu0 0
      %3639 = vmatmul.mubr.bf16.gmra.mxu0 %v3427
      %v3640 = vpop.f32.mrf.mxu0
      %v3641 = vadd.f32 %v3341, %v3640
      %v3642 = vpop.f32.mrf.mxu0
      %v3643 = vpop.f32.mrf.mxu0
      %v3644 = vadd.f32 %v3344, %v3643
      %v3645 = vpop.f32.mrf.mxu0
      %3646 = vmatprep.mubr.bf16.mxu0 0
      %3647 = vmatmul.mubr.bf16.gmra.mxu0 %v3430
      %v3648 = vpop.f32.mrf.mxu0
      %v3649 = vadd.f32 %v3349, %v3648
      %v3650 = vpop.f32.mrf.mxu0
      %v3651 = vpop.f32.mrf.mxu0
      %v3652 = vadd.f32 %v3352, %v3651
      %v3653 = vpop.f32.mrf.mxu0
      %3654 = vmatprep.mubr.bf16.mxu0 0
      %3655 = vmatmul.mubr.bf16.gmra.mxu0 %v3433
      %v3656 = vpop.f32.mrf.mxu0
      %v3657 = vadd.f32 %v3357, %v3656
      %v3658 = vpop.f32.mrf.mxu0
      %v3659 = vpop.f32.mrf.mxu0
      %v3660 = vadd.f32 %v3360, %v3659
      %v3661 = vpop.f32.mrf.mxu0
      %3662 = vdwg.mxu0
      %v3663 = vld [vmem:[#allocation2 + $0x9] sm:$0xff]
      %v3664 = vld [vmem:[#allocation2 + $0x11] sm:$0xff]
      %v3665 = vld [vmem:[#allocation2 + $0x19] sm:$0xff]
      %v3666 = vld [vmem:[#allocation2 + $0x21] sm:$0xff]
      %v3667 = vld [vmem:[#allocation2 + $0x29] sm:$0xff]
      %v3668 = vld [vmem:[#allocation2 + $0x31] sm:$0xff]
      %v3669 = vld [vmem:[#allocation2 + $0x39] sm:$0xff]
      %v3670 = vld [vmem:[#allocation2 + $0x41] sm:$0xff]
      %v3671 = vld [vmem:[#allocation2 + $0x49] sm:$0xff]
      %v3672 = vld [vmem:[#allocation2 + $0x51] sm:$0xff]
      %v3673 = vld [vmem:[#allocation2 + $0x59] sm:$0xff]
      %v3674 = vld [vmem:[#allocation2 + $0x61] sm:$0xff]
      %v3675 = vld [vmem:[#allocation2 + $0x69] sm:$0xff]
      %v3676 = vld [vmem:[#allocation2 + $0x71] sm:$0xff]
      %v3677 = vld [vmem:[#allocation2 + $0x79] sm:$0xff]
      %v3678 = vld [vmem:[#allocation2 + $0x81] sm:$0xff]
      %v3679 = vld [vmem:[#allocation2 + $0x89] sm:$0xff]
      %v3680 = vld [vmem:[#allocation2 + $0x91] sm:$0xff]
      %v3681 = vld [vmem:[#allocation2 + $0x99] sm:$0xff]
      %v3682 = vld [vmem:[#allocation2 + $0xa1] sm:$0xff]
      %v3683 = vld [vmem:[#allocation2 + $0xa9] sm:$0xff]
      %v3684 = vld [vmem:[#allocation2 + $0xb1] sm:$0xff]
      %v3685 = vld [vmem:[#allocation2 + $0xb9] sm:$0xff]
      %v3686 = vld [vmem:[#allocation2 + $0xc1] sm:$0xff]
      %v3687 = vld [vmem:[#allocation2 + $0xc9] sm:$0xff]
      %v3688 = vld [vmem:[#allocation2 + $0xd1] sm:$0xff]
      %v3689 = vld [vmem:[#allocation2 + $0xd9] sm:$0xff]
      %v3690 = vld [vmem:[#allocation2 + $0xe1] sm:$0xff]
      %v3691 = vld [vmem:[#allocation2 + $0xe9] sm:$0xff]
      %v3692 = vld [vmem:[#allocation2 + $0xf1] sm:$0xff]
      %v3693 = vld [vmem:[#allocation2 + $0xf9] sm:$0xff]
      %v3694 = vld [vmem:[#allocation2 + $0x101] sm:$0xff]
      %v3695 = vld [vmem:[#allocation2 + $0x109] sm:$0xff]
      %v3696 = vld [vmem:[#allocation2 + $0x111] sm:$0xff]
      %v3697 = vld [vmem:[#allocation2 + $0x119] sm:$0xff]
      %v3698 = vld [vmem:[#allocation2 + $0x121] sm:$0xff]
      %v3699 = vld [vmem:[#allocation2 + $0x129] sm:$0xff]
      %v3700 = vld [vmem:[#allocation2 + $0x131] sm:$0xff]
      %v3701 = vld [vmem:[#allocation2 + $0x139] sm:$0xff]
      %v3702 = vld [vmem:[#allocation2 + $0x141] sm:$0xff]
      %v3703 = vld [vmem:[#allocation2 + $0x149] sm:$0xff]
      %v3704 = vld [vmem:[#allocation2 + $0x151] sm:$0xff]
      %v3705 = vld [vmem:[#allocation2 + $0x159] sm:$0xff]
      %v3706 = vld [vmem:[#allocation2 + $0x161] sm:$0xff]
      %v3707 = vld [vmem:[#allocation2 + $0x169] sm:$0xff]
      %v3708 = vld [vmem:[#allocation2 + $0x171] sm:$0xff]
      %v3709 = vld [vmem:[#allocation2 + $0x179] sm:$0xff]
      %v3710 = vld [vmem:[#allocation2 + $0x181] sm:$0xff]
      %v3711 = vpack.c.bf16 %v3664, %v3663
      %v3712 = vpack.c.bf16 %v3666, %v3665
      %v3713 = vpack.c.bf16 %v3668, %v3667
      %v3714 = vpack.c.bf16 %v3670, %v3669
      %v3715 = vpack.c.bf16 %v3672, %v3671
      %v3716 = vpack.c.bf16 %v3674, %v3673
      %v3717 = vpack.c.bf16 %v3676, %v3675
      %v3718 = vpack.c.bf16 %v3678, %v3677
      %v3719 = vpack.c.bf16 %v3680, %v3679
      %v3720 = vpack.c.bf16 %v3682, %v3681
      %v3721 = vpack.c.bf16 %v3684, %v3683
      %v3722 = vpack.c.bf16 %v3686, %v3685
      %v3723 = vpack.c.bf16 %v3688, %v3687
      %v3724 = vpack.c.bf16 %v3690, %v3689
      %v3725 = vpack.c.bf16 %v3692, %v3691
      %v3726 = vpack.c.bf16 %v3694, %v3693
      %v3727 = vpack.c.bf16 %v3696, %v3695
      %v3728 = vpack.c.bf16 %v3698, %v3697
      %v3729 = vpack.c.bf16 %v3700, %v3699
      %v3730 = vpack.c.bf16 %v3702, %v3701
      %v3731 = vpack.c.bf16 %v3704, %v3703
      %v3732 = vpack.c.bf16 %v3706, %v3705
      %v3733 = vpack.c.bf16 %v3708, %v3707
      %v3734 = vpack.c.bf16 %v3710, %v3709
      %s3735 = scalar_lea.vmem %s8, 2
      %v3736 = vld [vmem:[%s3735] sm:$0x1]
      %v3738 = vsel %vm1900, %v3711, 0
      %v3741 = vsel %vm1900, %v3712, 0
      %v3744 = vsel %vm1900, %v3713, 0
      %v3747 = vsel %vm1900, %v3714, 0
      %v3750 = vsel %vm1900, %v3715, 0
      %v3753 = vsel %vm1900, %v3716, 0
      %v3756 = vsel %vm1900, %v3717, 0
      %v3759 = vsel %vm1900, %v3718, 0
      %v3762 = vsel %vm1900, %v3719, 0
      %v3765 = vsel %vm1900, %v3720, 0
      %v3768 = vsel %vm1900, %v3721, 0
      %v3771 = vsel %vm1900, %v3722, 0
      %v3774 = vsel %vm1900, %v3723, 0
      %v3777 = vsel %vm1900, %v3724, 0
      %v3780 = vsel %vm1900, %v3725, 0
      %v3783 = vsel %vm1900, %v3726, 0
      %v3786 = vsel %vm1900, %v3727, 0
      %v3789 = vsel %vm1900, %v3728, 0
      %v3792 = vsel %vm1900, %v3729, 0
      %v3795 = vsel %vm1900, %v3730, 0
      %v3798 = vsel %vm1900, %v3731, 0
      %v3801 = vsel %vm1900, %v3732, 0
      %v3804 = vsel %vm1900, %v3733, 0
      %v3807 = vsel %vm1900, %v3734, 0
      %v3810 = vsel %vm2014, %v3736, 0
      %3812 = vmatprep.subr.bf16.mxu0 0
      %3813 = vmatpush1.bf16.msra.mxu0 0
      %3814 = vmatprep.subr.bf16.mxu0 0
      %3815 = vmatpush1.bf16.msra.mxu0 0
      %3816 = vmatprep.subr.bf16.mxu0 0
      %3817 = vmatpush1.bf16.msra.mxu0 0
      %3818 = vmatprep.subr.bf16.mxu0 0
      %3819 = vmatpush1.bf16.msra.mxu0 0
      %3820 = vmatprep.subr.bf16.mxu0 0
      %3821 = vmatpush1.bf16.msra.mxu0 0
      %3822 = vmatprep.subr.bf16.mxu0 0
      %3823 = vmatpush1.bf16.msra.mxu0 0
      %3824 = vmatprep.subr.bf16.mxu0 0
      %3825 = vmatpush1.bf16.msra.mxu0 0
      %3826 = vmatprep.subr.bf16.mxu0 0
      %3827 = vmatpush1.bf16.msra.mxu0 %v3810
      %3828 = vmatprep.subr.bf16.mxu0 0
      %3829 = vmatpush2.bf16.msra.mxu0 0
      %3830 = vmatprep.subr.bf16.mxu0 0
      %3831 = vmatpush2.bf16.msra.mxu0 0
      %3832 = vmatprep.subr.bf16.mxu0 0
      %3833 = vmatpush2.bf16.msra.mxu0 0
      %3834 = vmatprep.subr.bf16.mxu0 0
      %3835 = vmatpush2.bf16.msra.mxu0 0
      %3836 = vmatprep.subr.bf16.mxu0 0
      %3837 = vmatpush2.bf16.msra.mxu0 0
      %3838 = vmatprep.subr.bf16.mxu0 0
      %3839 = vmatpush2.bf16.msra.mxu0 0
      %3840 = vmatprep.subr.bf16.mxu0 0
      %3841 = vmatpush2.bf16.msra.mxu0 0
      %3842 = vmatprep.subr.bf16.mxu0 0
      %3843 = vmatpush2.bf16.msra.mxu0 0
      %3844 = vmatprep.mubr.bf16.mxu0 0
      %3845 = vmatmul.mubr.bf16.gmra.mxu0 %v3738
      %v3846 = vpop.f32.mrf.mxu0
      %v3847 = vadd.f32 0.0, %v3846
      %v3848 = vpop.f32.mrf.mxu0
      %v3849 = vpop.f32.mrf.mxu0
      %v3850 = vadd.f32 0.0, %v3849
      %v3851 = vpop.f32.mrf.mxu0
      %3852 = vmatprep.mubr.bf16.mxu0 0
      %3853 = vmatmul.mubr.bf16.gmra.mxu0 %v3741
      %v3854 = vpop.f32.mrf.mxu0
      %v3855 = vadd.f32 0.0, %v3854
      %v3856 = vpop.f32.mrf.mxu0
      %v3857 = vpop.f32.mrf.mxu0
      %v3858 = vadd.f32 0.0, %v3857
      %v3859 = vpop.f32.mrf.mxu0
      %3860 = vmatprep.mubr.bf16.mxu0 0
      %3861 = vmatmul.mubr.bf16.gmra.mxu0 %v3744
      %v3862 = vpop.f32.mrf.mxu0
      %v3863 = vadd.f32 0.0, %v3862
      %v3864 = vpop.f32.mrf.mxu0
      %v3865 = vpop.f32.mrf.mxu0
      %v3866 = vadd.f32 0.0, %v3865
      %v3867 = vpop.f32.mrf.mxu0
      %3868 = vmatprep.mubr.bf16.mxu0 0
      %3869 = vmatmul.mubr.bf16.gmra.mxu0 %v3747
      %v3870 = vpop.f32.mrf.mxu0
      %v3871 = vadd.f32 0.0, %v3870
      %v3872 = vpop.f32.mrf.mxu0
      %v3873 = vpop.f32.mrf.mxu0
      %v3874 = vadd.f32 0.0, %v3873
      %v3875 = vpop.f32.mrf.mxu0
      %3876 = vmatprep.mubr.bf16.mxu0 0
      %3877 = vmatmul.mubr.bf16.gmra.mxu0 %v3750
      %v3878 = vpop.f32.mrf.mxu0
      %v3879 = vadd.f32 0.0, %v3878
      %v3880 = vpop.f32.mrf.mxu0
      %v3881 = vpop.f32.mrf.mxu0
      %v3882 = vadd.f32 0.0, %v3881
      %v3883 = vpop.f32.mrf.mxu0
      %3884 = vmatprep.mubr.bf16.mxu0 0
      %3885 = vmatmul.mubr.bf16.gmra.mxu0 %v3753
      %v3886 = vpop.f32.mrf.mxu0
      %v3887 = vadd.f32 0.0, %v3886
      %v3888 = vpop.f32.mrf.mxu0
      %v3889 = vpop.f32.mrf.mxu0
      %v3890 = vadd.f32 0.0, %v3889
      %v3891 = vpop.f32.mrf.mxu0
      %3892 = vmatprep.mubr.bf16.mxu0 0
      %3893 = vmatmul.mubr.bf16.gmra.mxu0 %v3756
      %v3894 = vpop.f32.mrf.mxu0
      %v3895 = vadd.f32 0.0, %v3894
      %v3896 = vpop.f32.mrf.mxu0
      %v3897 = vpop.f32.mrf.mxu0
      %v3898 = vadd.f32 0.0, %v3897
      %v3899 = vpop.f32.mrf.mxu0
      %3900 = vmatprep.mubr.bf16.mxu0 0
      %3901 = vmatmul.mubr.bf16.gmra.mxu0 %v3759
      %v3902 = vpop.f32.mrf.mxu0
      %v3903 = vadd.f32 0.0, %v3902
      %v3904 = vpop.f32.mrf.mxu0
      %v3905 = vpop.f32.mrf.mxu0
      %v3906 = vadd.f32 0.0, %v3905
      %v3907 = vpop.f32.mrf.mxu0
      %3908 = vmatprep.mubr.bf16.mxu0 0
      %3909 = vmatmul.mubr.bf16.gmra.mxu0 %v3762
      %v3910 = vpop.f32.mrf.mxu0
      %v3911 = vadd.f32 0.0, %v3910
      %v3912 = vpop.f32.mrf.mxu0
      %v3913 = vpop.f32.mrf.mxu0
      %v3914 = vadd.f32 0.0, %v3913
      %v3915 = vpop.f32.mrf.mxu0
      %3916 = vmatprep.mubr.bf16.mxu0 0
      %3917 = vmatmul.mubr.bf16.gmra.mxu0 %v3765
      %v3918 = vpop.f32.mrf.mxu0
      %v3919 = vadd.f32 0.0, %v3918
      %v3920 = vpop.f32.mrf.mxu0
      %v3921 = vpop.f32.mrf.mxu0
      %v3922 = vadd.f32 0.0, %v3921
      %v3923 = vpop.f32.mrf.mxu0
      %3924 = vmatprep.mubr.bf16.mxu0 0
      %3925 = vmatmul.mubr.bf16.gmra.mxu0 %v3768
      %v3926 = vpop.f32.mrf.mxu0
      %v3927 = vadd.f32 0.0, %v3926
      %v3928 = vpop.f32.mrf.mxu0
      %v3929 = vpop.f32.mrf.mxu0
      %v3930 = vadd.f32 0.0, %v3929
      %v3931 = vpop.f32.mrf.mxu0
      %3932 = vmatprep.mubr.bf16.mxu0 0
      %3933 = vmatmul.mubr.bf16.gmra.mxu0 %v3771
      %v3934 = vpop.f32.mrf.mxu0
      %v3935 = vadd.f32 0.0, %v3934
      %v3936 = vpop.f32.mrf.mxu0
      %v3937 = vpop.f32.mrf.mxu0
      %v3938 = vadd.f32 0.0, %v3937
      %v3939 = vpop.f32.mrf.mxu0
      %3940 = vmatprep.mubr.bf16.mxu0 0
      %3941 = vmatmul.mubr.bf16.gmra.mxu0 %v3774
      %v3942 = vpop.f32.mrf.mxu0
      %v3943 = vadd.f32 0.0, %v3942
      %v3944 = vpop.f32.mrf.mxu0
      %v3945 = vpop.f32.mrf.mxu0
      %v3946 = vadd.f32 0.0, %v3945
      %v3947 = vpop.f32.mrf.mxu0
      %3948 = vmatprep.mubr.bf16.mxu0 0
      %3949 = vmatmul.mubr.bf16.gmra.mxu0 %v3777
      %v3950 = vpop.f32.mrf.mxu0
      %v3951 = vadd.f32 0.0, %v3950
      %v3952 = vpop.f32.mrf.mxu0
      %v3953 = vpop.f32.mrf.mxu0
      %v3954 = vadd.f32 0.0, %v3953
      %v3955 = vpop.f32.mrf.mxu0
      %3956 = vmatprep.mubr.bf16.mxu0 0
      %3957 = vmatmul.mubr.bf16.gmra.mxu0 %v3780
      %v3958 = vpop.f32.mrf.mxu0
      %v3959 = vadd.f32 0.0, %v3958
      %v3960 = vpop.f32.mrf.mxu0
      %v3961 = vpop.f32.mrf.mxu0
      %v3962 = vadd.f32 0.0, %v3961
      %v3963 = vpop.f32.mrf.mxu0
      %3964 = vmatprep.mubr.bf16.mxu0 0
      %3965 = vmatmul.mubr.bf16.gmra.mxu0 %v3783
      %v3966 = vpop.f32.mrf.mxu0
      %v3967 = vadd.f32 0.0, %v3966
      %v3968 = vpop.f32.mrf.mxu0
      %v3969 = vpop.f32.mrf.mxu0
      %v3970 = vadd.f32 0.0, %v3969
      %v3971 = vpop.f32.mrf.mxu0
      %3972 = vmatprep.mubr.bf16.mxu0 0
      %3973 = vmatmul.mubr.bf16.gmra.mxu0 %v3786
      %v3974 = vpop.f32.mrf.mxu0
      %v3975 = vadd.f32 0.0, %v3974
      %v3976 = vpop.f32.mrf.mxu0
      %v3977 = vpop.f32.mrf.mxu0
      %v3978 = vadd.f32 0.0, %v3977
      %v3979 = vpop.f32.mrf.mxu0
      %3980 = vmatprep.mubr.bf16.mxu0 0
      %3981 = vmatmul.mubr.bf16.gmra.mxu0 %v3789
      %v3982 = vpop.f32.mrf.mxu0
      %v3983 = vadd.f32 0.0, %v3982
      %v3984 = vpop.f32.mrf.mxu0
      %v3985 = vpop.f32.mrf.mxu0
      %v3986 = vadd.f32 0.0, %v3985
      %v3987 = vpop.f32.mrf.mxu0
      %3988 = vmatprep.mubr.bf16.mxu0 0
      %3989 = vmatmul.mubr.bf16.gmra.mxu0 %v3792
      %v3990 = vpop.f32.mrf.mxu0
      %v3991 = vadd.f32 0.0, %v3990
      %v3992 = vpop.f32.mrf.mxu0
      %v3993 = vpop.f32.mrf.mxu0
      %v3994 = vadd.f32 0.0, %v3993
      %v3995 = vpop.f32.mrf.mxu0
      %3996 = vmatprep.mubr.bf16.mxu0 0
      %3997 = vmatmul.mubr.bf16.gmra.mxu0 %v3795
      %v3998 = vpop.f32.mrf.mxu0
      %v3999 = vadd.f32 0.0, %v3998
      %v4000 = vpop.f32.mrf.mxu0
      %v4001 = vpop.f32.mrf.mxu0
      %v4002 = vadd.f32 0.0, %v4001
      %v4003 = vpop.f32.mrf.mxu0
      %4004 = vmatprep.mubr.bf16.mxu0 0
      %4005 = vmatmul.mubr.bf16.gmra.mxu0 %v3798
      %v4006 = vpop.f32.mrf.mxu0
      %v4007 = vadd.f32 0.0, %v4006
      %v4008 = vpop.f32.mrf.mxu0
      %v4009 = vpop.f32.mrf.mxu0
      %v4010 = vadd.f32 0.0, %v4009
      %v4011 = vpop.f32.mrf.mxu0
      %4012 = vmatprep.mubr.bf16.mxu0 0
      %4013 = vmatmul.mubr.bf16.gmra.mxu0 %v3801
      %v4014 = vpop.f32.mrf.mxu0
      %v4015 = vadd.f32 0.0, %v4014
      %v4016 = vpop.f32.mrf.mxu0
      %v4017 = vpop.f32.mrf.mxu0
      %v4018 = vadd.f32 0.0, %v4017
      %v4019 = vpop.f32.mrf.mxu0
      %4020 = vmatprep.mubr.bf16.mxu0 0
      %4021 = vmatmul.mubr.bf16.gmra.mxu0 %v3804
      %v4022 = vpop.f32.mrf.mxu0
      %v4023 = vadd.f32 0.0, %v4022
      %v4024 = vpop.f32.mrf.mxu0
      %v4025 = vpop.f32.mrf.mxu0
      %v4026 = vadd.f32 0.0, %v4025
      %v4027 = vpop.f32.mrf.mxu0
      %4028 = vmatprep.mubr.bf16.mxu0 0
      %4029 = vmatmul.mubr.bf16.gmra.mxu0 %v3807
      %v4030 = vpop.f32.mrf.mxu0
      %v4031 = vadd.f32 0.0, %v4030
      %v4032 = vpop.f32.mrf.mxu0
      %v4033 = vpop.f32.mrf.mxu0
      %v4034 = vadd.f32 0.0, %v4033
      %v4035 = vpop.f32.mrf.mxu0
      %4036 = vdwg.mxu0
      %v4037 = vadd.f32 %v3473, %v3847
      %v4038 = vadd.f32 %v3476, %v3850
      %v4039 = vadd.f32 %v3481, %v3855
      %v4040 = vadd.f32 %v3484, %v3858
      %v4041 = vadd.f32 %v3489, %v3863
      %v4042 = vadd.f32 %v3492, %v3866
      %v4043 = vadd.f32 %v3497, %v3871
      %v4044 = vadd.f32 %v3500, %v3874
      %v4045 = vadd.f32 %v3505, %v3879
      %v4046 = vadd.f32 %v3508, %v3882
      %v4047 = vadd.f32 %v3513, %v3887
      %v4048 = vadd.f32 %v3516, %v3890
      %v4049 = vadd.f32 %v3521, %v3895
      %v4050 = vadd.f32 %v3524, %v3898
      %v4051 = vadd.f32 %v3529, %v3903
      %v4052 = vadd.f32 %v3532, %v3906
      %v4053 = vadd.f32 %v3537, %v3911
      %v4054 = vadd.f32 %v3540, %v3914
      %v4055 = vadd.f32 %v3545, %v3919
      %v4056 = vadd.f32 %v3548, %v3922
      %v4057 = vadd.f32 %v3553, %v3927
      %v4058 = vadd.f32 %v3556, %v3930
      %v4059 = vadd.f32 %v3561, %v3935
      %v4060 = vadd.f32 %v3564, %v3938
      %v4061 = vadd.f32 %v3569, %v3943
      %v4062 = vadd.f32 %v3572, %v3946
      %v4063 = vadd.f32 %v3577, %v3951
      %v4064 = vadd.f32 %v3580, %v3954
      %v4065 = vadd.f32 %v3585, %v3959
      %v4066 = vadd.f32 %v3588, %v3962
      %v4067 = vadd.f32 %v3593, %v3967
      %v4068 = vadd.f32 %v3596, %v3970
      %v4069 = vadd.f32 %v3601, %v3975
      %v4070 = vadd.f32 %v3604, %v3978
      %v4071 = vadd.f32 %v3609, %v3983
      %v4072 = vadd.f32 %v3612, %v3986
      %v4073 = vadd.f32 %v3617, %v3991
      %v4074 = vadd.f32 %v3620, %v3994
      %v4075 = vadd.f32 %v3625, %v3999
      %v4076 = vadd.f32 %v3628, %v4002
      %v4077 = vadd.f32 %v3633, %v4007
      %v4078 = vadd.f32 %v3636, %v4010
      %v4079 = vadd.f32 %v3641, %v4015
      %v4080 = vadd.f32 %v3644, %v4018
      %v4081 = vadd.f32 %v3649, %v4023
      %v4082 = vadd.f32 %v3652, %v4026
      %v4083 = vadd.f32 %v3657, %v4031
      %v4084 = vadd.f32 %v3660, %v4034
      %v4085 = vld [vmem:[#allocation2 + $0x1f] sm:$0xff]
      %v4086 = vld [vmem:[#allocation2 + $0x27] sm:$0xff]
      %v4087 = vld [vmem:[#allocation2 + $0x2f] sm:$0xff]
      %v4088 = vld [vmem:[#allocation2 + $0x37] sm:$0xff]
      %v4089 = vld [vmem:[#allocation2 + $0x3f] sm:$0xff]
      %v4090 = vld [vmem:[#allocation2 + $0x47] sm:$0xff]
      %v4091 = vld [vmem:[#allocation2 + $0x4f] sm:$0xff]
      %v4092 = vld [vmem:[#allocation2 + $0x57] sm:$0xff]
      %v4093 = vld [vmem:[#allocation2 + $0x5f] sm:$0xff]
      %v4094 = vld [vmem:[#allocation2 + $0x67] sm:$0xff]
      %v4095 = vld [vmem:[#allocation2 + $0x6f] sm:$0xff]
      %v4096 = vld [vmem:[#allocation2 + $0x77] sm:$0xff]
      %v4097 = vld [vmem:[#allocation2 + $0x7f] sm:$0xff]
      %v4098 = vld [vmem:[#allocation2 + $0x87] sm:$0xff]
      %v4099 = vld [vmem:[#allocation2 + $0x8f] sm:$0xff]
      %v4100 = vld [vmem:[#allocation2 + $0x97] sm:$0xff]
      %v4101 = vld [vmem:[#allocation2 + $0x9f] sm:$0xff]
      %v4102 = vld [vmem:[#allocation2 + $0xa7] sm:$0xff]
      %v4103 = vld [vmem:[#allocation2 + $0xaf] sm:$0xff]
      %v4104 = vld [vmem:[#allocation2 + $0xb7] sm:$0xff]
      %v4105 = vld [vmem:[#allocation2 + $0xbf] sm:$0xff]
      %v4106 = vld [vmem:[#allocation2 + $0xc7] sm:$0xff]
      %v4107 = vld [vmem:[#allocation2 + $0xcf] sm:$0xff]
      %v4108 = vld [vmem:[#allocation2 + $0xd7] sm:$0xff]
      %v4109 = vld [vmem:[#allocation2 + $0xdf] sm:$0xff]
      %v4110 = vld [vmem:[#allocation2 + $0xe7] sm:$0xff]
      %v4111 = vld [vmem:[#allocation2 + $0xef] sm:$0xff]
      %v4112 = vld [vmem:[#allocation2 + $0xf7] sm:$0xff]
      %v4113 = vld [vmem:[#allocation2 + $0xff] sm:$0xff]
      %v4114 = vld [vmem:[#allocation2 + $0x107] sm:$0xff]
      %v4115 = vld [vmem:[#allocation2 + $0x10f] sm:$0xff]
      %v4116 = vld [vmem:[#allocation2 + $0x117] sm:$0xff]
      %v4117 = vld [vmem:[#allocation2 + $0x11f] sm:$0xff]
      %v4118 = vld [vmem:[#allocation2 + $0x127] sm:$0xff]
      %v4119 = vld [vmem:[#allocation2 + $0x12f] sm:$0xff]
      %v4120 = vld [vmem:[#allocation2 + $0x137] sm:$0xff]
      %v4121 = vld [vmem:[#allocation2 + $0x13f] sm:$0xff]
      %v4122 = vld [vmem:[#allocation2 + $0x147] sm:$0xff]
      %v4123 = vld [vmem:[#allocation2 + $0x14f] sm:$0xff]
      %v4124 = vld [vmem:[#allocation2 + $0x157] sm:$0xff]
      %v4125 = vld [vmem:[#allocation2 + $0x15f] sm:$0xff]
      %v4126 = vld [vmem:[#allocation2 + $0x167] sm:$0xff]
      %v4127 = vld [vmem:[#allocation2 + $0x16f] sm:$0xff]
      %v4128 = vld [vmem:[#allocation2 + $0x177] sm:$0xff]
      %v4129 = vld [vmem:[#allocation2 + $0x17f] sm:$0xff]
      %v4130 = vld [vmem:[#allocation2 + $0x187] sm:$0xff]
      %v4131 = vld [vmem:[#allocation2 + $0x18f] sm:$0xff]
      %v4132 = vld [vmem:[#allocation2 + $0x197] sm:$0xff]
      %v4133 = vpack.c.bf16 %v4086, %v4085
      %v4134 = vpack.c.bf16 %v4088, %v4087
      %v4135 = vpack.c.bf16 %v4090, %v4089
      %v4136 = vpack.c.bf16 %v4092, %v4091
      %v4137 = vpack.c.bf16 %v4094, %v4093
      %v4138 = vpack.c.bf16 %v4096, %v4095
      %v4139 = vpack.c.bf16 %v4098, %v4097
      %v4140 = vpack.c.bf16 %v4100, %v4099
      %v4141 = vpack.c.bf16 %v4102, %v4101
      %v4142 = vpack.c.bf16 %v4104, %v4103
      %v4143 = vpack.c.bf16 %v4106, %v4105
      %v4144 = vpack.c.bf16 %v4108, %v4107
      %v4145 = vpack.c.bf16 %v4110, %v4109
      %v4146 = vpack.c.bf16 %v4112, %v4111
      %v4147 = vpack.c.bf16 %v4114, %v4113
      %v4148 = vpack.c.bf16 %v4116, %v4115
      %v4149 = vpack.c.bf16 %v4118, %v4117
      %v4150 = vpack.c.bf16 %v4120, %v4119
      %v4151 = vpack.c.bf16 %v4122, %v4121
      %v4152 = vpack.c.bf16 %v4124, %v4123
      %v4153 = vpack.c.bf16 %v4126, %v4125
      %v4154 = vpack.c.bf16 %v4128, %v4127
      %v4155 = vpack.c.bf16 %v4130, %v4129
      %v4156 = vpack.c.bf16 %v4132, %v4131
      %s4157 = scalar_lea.vmem %s8, 3
      %v4158 = vld [vmem:[%s4157] sm:$0x1]
      %v4160 = vsel %vm1900, %v4133, 0
      %v4163 = vsel %vm1900, %v4134, 0
      %v4166 = vsel %vm1900, %v4135, 0
      %v4169 = vsel %vm1900, %v4136, 0
      %v4172 = vsel %vm1900, %v4137, 0
      %v4175 = vsel %vm1900, %v4138, 0
      %v4178 = vsel %vm1900, %v4139, 0
      %v4181 = vsel %vm1900, %v4140, 0
      %v4184 = vsel %vm1900, %v4141, 0
      %v4187 = vsel %vm1900, %v4142, 0
      %v4190 = vsel %vm1900, %v4143, 0
      %v4193 = vsel %vm1900, %v4144, 0
      %v4196 = vsel %vm1900, %v4145, 0
      %v4199 = vsel %vm1900, %v4146, 0
      %v4202 = vsel %vm1900, %v4147, 0
      %v4205 = vsel %vm1900, %v4148, 0
      %v4208 = vsel %vm1900, %v4149, 0
      %v4211 = vsel %vm1900, %v4150, 0
      %v4214 = vsel %vm1900, %v4151, 0
      %v4217 = vsel %vm1900, %v4152, 0
      %v4220 = vsel %vm1900, %v4153, 0
      %v4223 = vsel %vm1900, %v4154, 0
      %v4226 = vsel %vm1900, %v4155, 0
      %v4229 = vsel %vm1900, %v4156, 0
      %v4232 = vsel %vm2014, %v4158, 0
      %4234 = vmatprep.subr.bf16.mxu0 0
      %4235 = vmatpush1.bf16.msra.mxu0 0
      %4236 = vmatprep.subr.bf16.mxu0 0
      %4237 = vmatpush1.bf16.msra.mxu0 0
      %4238 = vmatprep.subr.bf16.mxu0 0
      %4239 = vmatpush1.bf16.msra.mxu0 0
      %4240 = vmatprep.subr.bf16.mxu0 0
      %4241 = vmatpush1.bf16.msra.mxu0 0
      %4242 = vmatprep.subr.bf16.mxu0 0
      %4243 = vmatpush1.bf16.msra.mxu0 0
      %4244 = vmatprep.subr.bf16.mxu0 0
      %4245 = vmatpush1.bf16.msra.mxu0 0
      %4246 = vmatprep.subr.bf16.mxu0 0
      %4247 = vmatpush1.bf16.msra.mxu0 0
      %4248 = vmatprep.subr.bf16.mxu0 0
      %4249 = vmatpush1.bf16.msra.mxu0 %v4232
      %4250 = vmatprep.subr.bf16.mxu0 0
      %4251 = vmatpush2.bf16.msra.mxu0 0
      %4252 = vmatprep.subr.bf16.mxu0 0
      %4253 = vmatpush2.bf16.msra.mxu0 0
      %4254 = vmatprep.subr.bf16.mxu0 0
      %4255 = vmatpush2.bf16.msra.mxu0 0
      %4256 = vmatprep.subr.bf16.mxu0 0
      %4257 = vmatpush2.bf16.msra.mxu0 0
      %4258 = vmatprep.subr.bf16.mxu0 0
      %4259 = vmatpush2.bf16.msra.mxu0 0
      %4260 = vmatprep.subr.bf16.mxu0 0
      %4261 = vmatpush2.bf16.msra.mxu0 0
      %4262 = vmatprep.subr.bf16.mxu0 0
      %4263 = vmatpush2.bf16.msra.mxu0 0
      %4264 = vmatprep.subr.bf16.mxu0 0
      %4265 = vmatpush2.bf16.msra.mxu0 0
      %4266 = vmatprep.mubr.bf16.mxu0 0
      %4267 = vmatmul.mubr.bf16.gmra.mxu0 %v4160
      %v4268 = vpop.f32.mrf.mxu0
      %v4269 = vadd.f32 0.0, %v4268
      %v4270 = vpop.f32.mrf.mxu0
      %v4271 = vpop.f32.mrf.mxu0
      %v4272 = vadd.f32 0.0, %v4271
      %v4273 = vpop.f32.mrf.mxu0
      %4274 = vmatprep.mubr.bf16.mxu0 0
      %4275 = vmatmul.mubr.bf16.gmra.mxu0 %v4163
      %v4276 = vpop.f32.mrf.mxu0
      %v4277 = vadd.f32 0.0, %v4276
      %v4278 = vpop.f32.mrf.mxu0
      %v4279 = vpop.f32.mrf.mxu0
      %v4280 = vadd.f32 0.0, %v4279
      %v4281 = vpop.f32.mrf.mxu0
      %4282 = vmatprep.mubr.bf16.mxu0 0
      %4283 = vmatmul.mubr.bf16.gmra.mxu0 %v4166
      %v4284 = vpop.f32.mrf.mxu0
      %v4285 = vadd.f32 0.0, %v4284
      %v4286 = vpop.f32.mrf.mxu0
      %v4287 = vpop.f32.mrf.mxu0
      %v4288 = vadd.f32 0.0, %v4287
      %v4289 = vpop.f32.mrf.mxu0
      %4290 = vmatprep.mubr.bf16.mxu0 0
      %4291 = vmatmul.mubr.bf16.gmra.mxu0 %v4169
      %v4292 = vpop.f32.mrf.mxu0
      %v4293 = vadd.f32 0.0, %v4292
      %v4294 = vpop.f32.mrf.mxu0
      %v4295 = vpop.f32.mrf.mxu0
      %v4296 = vadd.f32 0.0, %v4295
      %v4297 = vpop.f32.mrf.mxu0
      %4298 = vmatprep.mubr.bf16.mxu0 0
      %4299 = vmatmul.mubr.bf16.gmra.mxu0 %v4172
      %v4300 = vpop.f32.mrf.mxu0
      %v4301 = vadd.f32 0.0, %v4300
      %v4302 = vpop.f32.mrf.mxu0
      %v4303 = vpop.f32.mrf.mxu0
      %v4304 = vadd.f32 0.0, %v4303
      %v4305 = vpop.f32.mrf.mxu0
      %4306 = vmatprep.mubr.bf16.mxu0 0
      %4307 = vmatmul.mubr.bf16.gmra.mxu0 %v4175
      %v4308 = vpop.f32.mrf.mxu0
      %v4309 = vadd.f32 0.0, %v4308
      %v4310 = vpop.f32.mrf.mxu0
      %v4311 = vpop.f32.mrf.mxu0
      %v4312 = vadd.f32 0.0, %v4311
      %v4313 = vpop.f32.mrf.mxu0
      %4314 = vmatprep.mubr.bf16.mxu0 0
      %4315 = vmatmul.mubr.bf16.gmra.mxu0 %v4178
      %v4316 = vpop.f32.mrf.mxu0
      %v4317 = vadd.f32 0.0, %v4316
      %v4318 = vpop.f32.mrf.mxu0
      %v4319 = vpop.f32.mrf.mxu0
      %v4320 = vadd.f32 0.0, %v4319
      %v4321 = vpop.f32.mrf.mxu0
      %4322 = vmatprep.mubr.bf16.mxu0 0
      %4323 = vmatmul.mubr.bf16.gmra.mxu0 %v4181
      %v4324 = vpop.f32.mrf.mxu0
      %v4325 = vadd.f32 0.0, %v4324
      %v4326 = vpop.f32.mrf.mxu0
      %v4327 = vpop.f32.mrf.mxu0
      %v4328 = vadd.f32 0.0, %v4327
      %v4329 = vpop.f32.mrf.mxu0
      %4330 = vmatprep.mubr.bf16.mxu0 0
      %4331 = vmatmul.mubr.bf16.gmra.mxu0 %v4184
      %v4332 = vpop.f32.mrf.mxu0
      %v4333 = vadd.f32 0.0, %v4332
      %v4334 = vpop.f32.mrf.mxu0
      %v4335 = vpop.f32.mrf.mxu0
      %v4336 = vadd.f32 0.0, %v4335
      %v4337 = vpop.f32.mrf.mxu0
      %4338 = vmatprep.mubr.bf16.mxu0 0
      %4339 = vmatmul.mubr.bf16.gmra.mxu0 %v4187
      %v4340 = vpop.f32.mrf.mxu0
      %v4341 = vadd.f32 0.0, %v4340
      %v4342 = vpop.f32.mrf.mxu0
      %v4343 = vpop.f32.mrf.mxu0
      %v4344 = vadd.f32 0.0, %v4343
      %v4345 = vpop.f32.mrf.mxu0
      %4346 = vmatprep.mubr.bf16.mxu0 0
      %4347 = vmatmul.mubr.bf16.gmra.mxu0 %v4190
      %v4348 = vpop.f32.mrf.mxu0
      %v4349 = vadd.f32 0.0, %v4348
      %v4350 = vpop.f32.mrf.mxu0
      %v4351 = vpop.f32.mrf.mxu0
      %v4352 = vadd.f32 0.0, %v4351
      %v4353 = vpop.f32.mrf.mxu0
      %4354 = vmatprep.mubr.bf16.mxu0 0
      %4355 = vmatmul.mubr.bf16.gmra.mxu0 %v4193
      %v4356 = vpop.f32.mrf.mxu0
      %v4357 = vadd.f32 0.0, %v4356
      %v4358 = vpop.f32.mrf.mxu0
      %v4359 = vpop.f32.mrf.mxu0
      %v4360 = vadd.f32 0.0, %v4359
      %v4361 = vpop.f32.mrf.mxu0
      %4362 = vmatprep.mubr.bf16.mxu0 0
      %4363 = vmatmul.mubr.bf16.gmra.mxu0 %v4196
      %v4364 = vpop.f32.mrf.mxu0
      %v4365 = vadd.f32 0.0, %v4364
      %v4366 = vpop.f32.mrf.mxu0
      %v4367 = vpop.f32.mrf.mxu0
      %v4368 = vadd.f32 0.0, %v4367
      %v4369 = vpop.f32.mrf.mxu0
      %4370 = vmatprep.mubr.bf16.mxu0 0
      %4371 = vmatmul.mubr.bf16.gmra.mxu0 %v4199
      %v4372 = vpop.f32.mrf.mxu0
      %v4373 = vadd.f32 0.0, %v4372
      %v4374 = vpop.f32.mrf.mxu0
      %v4375 = vpop.f32.mrf.mxu0
      %v4376 = vadd.f32 0.0, %v4375
      %v4377 = vpop.f32.mrf.mxu0
      %4378 = vmatprep.mubr.bf16.mxu0 0
      %4379 = vmatmul.mubr.bf16.gmra.mxu0 %v4202
      %v4380 = vpop.f32.mrf.mxu0
      %v4381 = vadd.f32 0.0, %v4380
      %v4382 = vpop.f32.mrf.mxu0
      %v4383 = vpop.f32.mrf.mxu0
      %v4384 = vadd.f32 0.0, %v4383
      %v4385 = vpop.f32.mrf.mxu0
      %4386 = vmatprep.mubr.bf16.mxu0 0
      %4387 = vmatmul.mubr.bf16.gmra.mxu0 %v4205
      %v4388 = vpop.f32.mrf.mxu0
      %v4389 = vadd.f32 0.0, %v4388
      %v4390 = vpop.f32.mrf.mxu0
      %v4391 = vpop.f32.mrf.mxu0
      %v4392 = vadd.f32 0.0, %v4391
      %v4393 = vpop.f32.mrf.mxu0
      %4394 = vmatprep.mubr.bf16.mxu0 0
      %4395 = vmatmul.mubr.bf16.gmra.mxu0 %v4208
      %v4396 = vpop.f32.mrf.mxu0
      %v4397 = vadd.f32 0.0, %v4396
      %v4398 = vpop.f32.mrf.mxu0
      %v4399 = vpop.f32.mrf.mxu0
      %v4400 = vadd.f32 0.0, %v4399
      %v4401 = vpop.f32.mrf.mxu0
      %4402 = vmatprep.mubr.bf16.mxu0 0
      %4403 = vmatmul.mubr.bf16.gmra.mxu0 %v4211
      %v4404 = vpop.f32.mrf.mxu0
      %v4405 = vadd.f32 0.0, %v4404
      %v4406 = vpop.f32.mrf.mxu0
      %v4407 = vpop.f32.mrf.mxu0
      %v4408 = vadd.f32 0.0, %v4407
      %v4409 = vpop.f32.mrf.mxu0
      %4410 = vmatprep.mubr.bf16.mxu0 0
      %4411 = vmatmul.mubr.bf16.gmra.mxu0 %v4214
      %v4412 = vpop.f32.mrf.mxu0
      %v4413 = vadd.f32 0.0, %v4412
      %v4414 = vpop.f32.mrf.mxu0
      %v4415 = vpop.f32.mrf.mxu0
      %v4416 = vadd.f32 0.0, %v4415
      %v4417 = vpop.f32.mrf.mxu0
      %4418 = vmatprep.mubr.bf16.mxu0 0
      %4419 = vmatmul.mubr.bf16.gmra.mxu0 %v4217
      %v4420 = vpop.f32.mrf.mxu0
      %v4421 = vadd.f32 0.0, %v4420
      %v4422 = vpop.f32.mrf.mxu0
      %v4423 = vpop.f32.mrf.mxu0
      %v4424 = vadd.f32 0.0, %v4423
      %v4425 = vpop.f32.mrf.mxu0
      %4426 = vmatprep.mubr.bf16.mxu0 0
      %4427 = vmatmul.mubr.bf16.gmra.mxu0 %v4220
      %v4428 = vpop.f32.mrf.mxu0
      %v4429 = vadd.f32 0.0, %v4428
      %v4430 = vpop.f32.mrf.mxu0
      %v4431 = vpop.f32.mrf.mxu0
      %v4432 = vadd.f32 0.0, %v4431
      %v4433 = vpop.f32.mrf.mxu0
      %4434 = vmatprep.mubr.bf16.mxu0 0
      %4435 = vmatmul.mubr.bf16.gmra.mxu0 %v4223
      %v4436 = vpop.f32.mrf.mxu0
      %v4437 = vadd.f32 0.0, %v4436
      %v4438 = vpop.f32.mrf.mxu0
      %v4439 = vpop.f32.mrf.mxu0
      %v4440 = vadd.f32 0.0, %v4439
      %v4441 = vpop.f32.mrf.mxu0
      %4442 = vmatprep.mubr.bf16.mxu0 0
      %4443 = vmatmul.mubr.bf16.gmra.mxu0 %v4226
      %v4444 = vpop.f32.mrf.mxu0
      %v4445 = vadd.f32 0.0, %v4444
      %v4446 = vpop.f32.mrf.mxu0
      %v4447 = vpop.f32.mrf.mxu0
      %v4448 = vadd.f32 0.0, %v4447
      %v4449 = vpop.f32.mrf.mxu0
      %4450 = vmatprep.mubr.bf16.mxu0 0
      %4451 = vmatmul.mubr.bf16.gmra.mxu0 %v4229
      %v4452 = vpop.f32.mrf.mxu0
      %v4453 = vadd.f32 0.0, %v4452
      %v4454 = vpop.f32.mrf.mxu0
      %v4455 = vpop.f32.mrf.mxu0
      %v4456 = vadd.f32 0.0, %v4455
      %v4457 = vpop.f32.mrf.mxu0
      %4458 = vdwg.mxu0
      %v4459 = vadd.f32 %v4037, %v4269
      %v4460 = vadd.f32 %v4038, %v4272
      %v4461 = vadd.f32 %v4039, %v4277
      %v4462 = vadd.f32 %v4040, %v4280
      %v4463 = vadd.f32 %v4041, %v4285
      %v4464 = vadd.f32 %v4042, %v4288
      %v4465 = vadd.f32 %v4043, %v4293
      %v4466 = vadd.f32 %v4044, %v4296
      %v4467 = vadd.f32 %v4045, %v4301
      %v4468 = vadd.f32 %v4046, %v4304
      %v4469 = vadd.f32 %v4047, %v4309
      %v4470 = vadd.f32 %v4048, %v4312
      %v4471 = vadd.f32 %v4049, %v4317
      %v4472 = vadd.f32 %v4050, %v4320
      %v4473 = vadd.f32 %v4051, %v4325
      %v4474 = vadd.f32 %v4052, %v4328
      %v4475 = vadd.f32 %v4053, %v4333
      %v4476 = vadd.f32 %v4054, %v4336
      %v4477 = vadd.f32 %v4055, %v4341
      %v4478 = vadd.f32 %v4056, %v4344
      %v4479 = vadd.f32 %v4057, %v4349
      %v4480 = vadd.f32 %v4058, %v4352
      %v4481 = vadd.f32 %v4059, %v4357
      %v4482 = vadd.f32 %v4060, %v4360
      %v4483 = vadd.f32 %v4061, %v4365
      %v4484 = vadd.f32 %v4062, %v4368
      %v4485 = vadd.f32 %v4063, %v4373
      %v4486 = vadd.f32 %v4064, %v4376
      %v4487 = vadd.f32 %v4065, %v4381
      %v4488 = vadd.f32 %v4066, %v4384
      %v4489 = vadd.f32 %v4067, %v4389
      %v4490 = vadd.f32 %v4068, %v4392
      %v4491 = vadd.f32 %v4069, %v4397
      %v4492 = vadd.f32 %v4070, %v4400
      %v4493 = vadd.f32 %v4071, %v4405
      %v4494 = vadd.f32 %v4072, %v4408
      %v4495 = vadd.f32 %v4073, %v4413
      %v4496 = vadd.f32 %v4074, %v4416
      %v4497 = vadd.f32 %v4075, %v4421
      %v4498 = vadd.f32 %v4076, %v4424
      %v4499 = vadd.f32 %v4077, %v4429
      %v4500 = vadd.f32 %v4078, %v4432
      %v4501 = vadd.f32 %v4079, %v4437
      %v4502 = vadd.f32 %v4080, %v4440
      %v4503 = vadd.f32 %v4081, %v4445
      %v4504 = vadd.f32 %v4082, %v4448
      %v4505 = vadd.f32 %v4083, %v4453
      %v4506 = vadd.f32 %v4084, %v4456
      %v4507 = vld [vmem:[#allocation2 + $0x20] sm:$0xff]
      %v4508 = vld [vmem:[#allocation2 + $0x28] sm:$0xff]
      %v4509 = vld [vmem:[#allocation2 + $0x30] sm:$0xff]
      %v4510 = vld [vmem:[#allocation2 + $0x38] sm:$0xff]
      %v4511 = vld [vmem:[#allocation2 + $0x40] sm:$0xff]
      %v4512 = vld [vmem:[#allocation2 + $0x48] sm:$0xff]
      %v4513 = vld [vmem:[#allocation2 + $0x50] sm:$0xff]
      %v4514 = vld [vmem:[#allocation2 + $0x58] sm:$0xff]
      %v4515 = vld [vmem:[#allocation2 + $0x60] sm:$0xff]
      %v4516 = vld [vmem:[#allocation2 + $0x68] sm:$0xff]
      %v4517 = vld [vmem:[#allocation2 + $0x70] sm:$0xff]
      %v4518 = vld [vmem:[#allocation2 + $0x78] sm:$0xff]
      %v4519 = vld [vmem:[#allocation2 + $0x80] sm:$0xff]
      %v4520 = vld [vmem:[#allocation2 + $0x88] sm:$0xff]
      %v4521 = vld [vmem:[#allocation2 + $0x90] sm:$0xff]
      %v4522 = vld [vmem:[#allocation2 + $0x98] sm:$0xff]
      %v4523 = vld [vmem:[#allocation2 + $0xa0] sm:$0xff]
      %v4524 = vld [vmem:[#allocation2 + $0xa8] sm:$0xff]
      %v4525 = vld [vmem:[#allocation2 + $0xb0] sm:$0xff]
      %v4526 = vld [vmem:[#allocation2 + $0xb8] sm:$0xff]
      %v4527 = vld [vmem:[#allocation2 + $0xc0] sm:$0xff]
      %v4528 = vld [vmem:[#allocation2 + $0xc8] sm:$0xff]
      %v4529 = vld [vmem:[#allocation2 + $0xd0] sm:$0xff]
      %v4530 = vld [vmem:[#allocation2 + $0xd8] sm:$0xff]
      %v4531 = vld [vmem:[#allocation2 + $0xe0] sm:$0xff]
      %v4532 = vld [vmem:[#allocation2 + $0xe8] sm:$0xff]
      %v4533 = vld [vmem:[#allocation2 + $0xf0] sm:$0xff]
      %v4534 = vld [vmem:[#allocation2 + $0xf8] sm:$0xff]
      %v4535 = vld [vmem:[#allocation2 + $0x100] sm:$0xff]
      %v4536 = vld [vmem:[#allocation2 + $0x108] sm:$0xff]
      %v4537 = vld [vmem:[#allocation2 + $0x110] sm:$0xff]
      %v4538 = vld [vmem:[#allocation2 + $0x118] sm:$0xff]
      %v4539 = vld [vmem:[#allocation2 + $0x120] sm:$0xff]
      %v4540 = vld [vmem:[#allocation2 + $0x128] sm:$0xff]
      %v4541 = vld [vmem:[#allocation2 + $0x130] sm:$0xff]
      %v4542 = vld [vmem:[#allocation2 + $0x138] sm:$0xff]
      %v4543 = vld [vmem:[#allocation2 + $0x140] sm:$0xff]
      %v4544 = vld [vmem:[#allocation2 + $0x148] sm:$0xff]
      %v4545 = vld [vmem:[#allocation2 + $0x150] sm:$0xff]
      %v4546 = vld [vmem:[#allocation2 + $0x158] sm:$0xff]
      %v4547 = vld [vmem:[#allocation2 + $0x160] sm:$0xff]
      %v4548 = vld [vmem:[#allocation2 + $0x168] sm:$0xff]
      %v4549 = vld [vmem:[#allocation2 + $0x170] sm:$0xff]
      %v4550 = vld [vmem:[#allocation2 + $0x178] sm:$0xff]
      %v4551 = vld [vmem:[#allocation2 + $0x180] sm:$0xff]
      %v4552 = vld [vmem:[#allocation2 + $0x188] sm:$0xff]
      %v4553 = vld [vmem:[#allocation2 + $0x190] sm:$0xff]
      %v4554 = vld [vmem:[#allocation2 + $0x198] sm:$0xff]
      %v4555 = vpack.c.bf16 %v4508, %v4507
      %v4556 = vpack.c.bf16 %v4510, %v4509
      %v4557 = vpack.c.bf16 %v4512, %v4511
      %v4558 = vpack.c.bf16 %v4514, %v4513
      %v4559 = vpack.c.bf16 %v4516, %v4515
      %v4560 = vpack.c.bf16 %v4518, %v4517
      %v4561 = vpack.c.bf16 %v4520, %v4519
      %v4562 = vpack.c.bf16 %v4522, %v4521
      %v4563 = vpack.c.bf16 %v4524, %v4523
      %v4564 = vpack.c.bf16 %v4526, %v4525
      %v4565 = vpack.c.bf16 %v4528, %v4527
      %v4566 = vpack.c.bf16 %v4530, %v4529
      %v4567 = vpack.c.bf16 %v4532, %v4531
      %v4568 = vpack.c.bf16 %v4534, %v4533
      %v4569 = vpack.c.bf16 %v4536, %v4535
      %v4570 = vpack.c.bf16 %v4538, %v4537
      %v4571 = vpack.c.bf16 %v4540, %v4539
      %v4572 = vpack.c.bf16 %v4542, %v4541
      %v4573 = vpack.c.bf16 %v4544, %v4543
      %v4574 = vpack.c.bf16 %v4546, %v4545
      %v4575 = vpack.c.bf16 %v4548, %v4547
      %v4576 = vpack.c.bf16 %v4550, %v4549
      %v4577 = vpack.c.bf16 %v4552, %v4551
      %v4578 = vpack.c.bf16 %v4554, %v4553
      %s4579 = scalar_lea.vmem %s8, 4
      %v4580 = vld [vmem:[%s4579] sm:$0x1]
      %v4582 = vsel %vm1900, %v4555, 0
      %v4585 = vsel %vm1900, %v4556, 0
      %v4588 = vsel %vm1900, %v4557, 0
      %v4591 = vsel %vm1900, %v4558, 0
      %v4594 = vsel %vm1900, %v4559, 0
      %v4597 = vsel %vm1900, %v4560, 0
      %v4600 = vsel %vm1900, %v4561, 0
      %v4603 = vsel %vm1900, %v4562, 0
      %v4606 = vsel %vm1900, %v4563, 0
      %v4609 = vsel %vm1900, %v4564, 0
      %v4612 = vsel %vm1900, %v4565, 0
      %v4615 = vsel %vm1900, %v4566, 0
      %v4618 = vsel %vm1900, %v4567, 0
      %v4621 = vsel %vm1900, %v4568, 0
      %v4624 = vsel %vm1900, %v4569, 0
      %v4627 = vsel %vm1900, %v4570, 0
      %v4630 = vsel %vm1900, %v4571, 0
      %v4633 = vsel %vm1900, %v4572, 0
      %v4636 = vsel %vm1900, %v4573, 0
      %v4639 = vsel %vm1900, %v4574, 0
      %v4642 = vsel %vm1900, %v4575, 0
      %v4645 = vsel %vm1900, %v4576, 0
      %v4648 = vsel %vm1900, %v4577, 0
      %v4651 = vsel %vm1900, %v4578, 0
      %v4654 = vsel %vm2014, %v4580, 0
      %4656 = vmatprep.subr.bf16.mxu0 0
      %4657 = vmatpush1.bf16.msra.mxu0 0
      %4658 = vmatprep.subr.bf16.mxu0 0
      %4659 = vmatpush1.bf16.msra.mxu0 0
      %4660 = vmatprep.subr.bf16.mxu0 0
      %4661 = vmatpush1.bf16.msra.mxu0 0
      %4662 = vmatprep.subr.bf16.mxu0 0
      %4663 = vmatpush1.bf16.msra.mxu0 0
      %4664 = vmatprep.subr.bf16.mxu0 0
      %4665 = vmatpush1.bf16.msra.mxu0 0
      %4666 = vmatprep.subr.bf16.mxu0 0
      %4667 = vmatpush1.bf16.msra.mxu0 0
      %4668 = vmatprep.subr.bf16.mxu0 0
      %4669 = vmatpush1.bf16.msra.mxu0 0
      %4670 = vmatprep.subr.bf16.mxu0 0
      %4671 = vmatpush1.bf16.msra.mxu0 %v4654
      %4672 = vmatprep.subr.bf16.mxu0 0
      %4673 = vmatpush2.bf16.msra.mxu0 0
      %4674 = vmatprep.subr.bf16.mxu0 0
      %4675 = vmatpush2.bf16.msra.mxu0 0
      %4676 = vmatprep.subr.bf16.mxu0 0
      %4677 = vmatpush2.bf16.msra.mxu0 0
      %4678 = vmatprep.subr.bf16.mxu0 0
      %4679 = vmatpush2.bf16.msra.mxu0 0
      %4680 = vmatprep.subr.bf16.mxu0 0
      %4681 = vmatpush2.bf16.msra.mxu0 0
      %4682 = vmatprep.subr.bf16.mxu0 0
      %4683 = vmatpush2.bf16.msra.mxu0 0
      %4684 = vmatprep.subr.bf16.mxu0 0
      %4685 = vmatpush2.bf16.msra.mxu0 0
      %4686 = vmatprep.subr.bf16.mxu0 0
      %4687 = vmatpush2.bf16.msra.mxu0 0
      %4688 = vmatprep.mubr.bf16.mxu0 0
      %4689 = vmatmul.mubr.bf16.gmra.mxu0 %v4582
      %v4690 = vpop.f32.mrf.mxu0
      %v4691 = vadd.f32 0.0, %v4690
      %v4692 = vpop.f32.mrf.mxu0
      %v4693 = vpop.f32.mrf.mxu0
      %v4694 = vadd.f32 0.0, %v4693
      %v4695 = vpop.f32.mrf.mxu0
      %4696 = vmatprep.mubr.bf16.mxu0 0
      %4697 = vmatmul.mubr.bf16.gmra.mxu0 %v4585
      %v4698 = vpop.f32.mrf.mxu0
      %v4699 = vadd.f32 0.0, %v4698
      %v4700 = vpop.f32.mrf.mxu0
      %v4701 = vpop.f32.mrf.mxu0
      %v4702 = vadd.f32 0.0, %v4701
      %v4703 = vpop.f32.mrf.mxu0
      %4704 = vmatprep.mubr.bf16.mxu0 0
      %4705 = vmatmul.mubr.bf16.gmra.mxu0 %v4588
      %v4706 = vpop.f32.mrf.mxu0
      %v4707 = vadd.f32 0.0, %v4706
      %v4708 = vpop.f32.mrf.mxu0
      %v4709 = vpop.f32.mrf.mxu0
      %v4710 = vadd.f32 0.0, %v4709
      %v4711 = vpop.f32.mrf.mxu0
      %4712 = vmatprep.mubr.bf16.mxu0 0
      %4713 = vmatmul.mubr.bf16.gmra.mxu0 %v4591
      %v4714 = vpop.f32.mrf.mxu0
      %v4715 = vadd.f32 0.0, %v4714
      %v4716 = vpop.f32.mrf.mxu0
      %v4717 = vpop.f32.mrf.mxu0
      %v4718 = vadd.f32 0.0, %v4717
      %v4719 = vpop.f32.mrf.mxu0
      %4720 = vmatprep.mubr.bf16.mxu0 0
      %4721 = vmatmul.mubr.bf16.gmra.mxu0 %v4594
      %v4722 = vpop.f32.mrf.mxu0
      %v4723 = vadd.f32 0.0, %v4722
      %v4724 = vpop.f32.mrf.mxu0
      %v4725 = vpop.f32.mrf.mxu0
      %v4726 = vadd.f32 0.0, %v4725
      %v4727 = vpop.f32.mrf.mxu0
      %4728 = vmatprep.mubr.bf16.mxu0 0
      %4729 = vmatmul.mubr.bf16.gmra.mxu0 %v4597
      %v4730 = vpop.f32.mrf.mxu0
      %v4731 = vadd.f32 0.0, %v4730
      %v4732 = vpop.f32.mrf.mxu0
      %v4733 = vpop.f32.mrf.mxu0
      %v4734 = vadd.f32 0.0, %v4733
      %v4735 = vpop.f32.mrf.mxu0
      %4736 = vmatprep.mubr.bf16.mxu0 0
      %4737 = vmatmul.mubr.bf16.gmra.mxu0 %v4600
      %v4738 = vpop.f32.mrf.mxu0
      %v4739 = vadd.f32 0.0, %v4738
      %v4740 = vpop.f32.mrf.mxu0
      %v4741 = vpop.f32.mrf.mxu0
      %v4742 = vadd.f32 0.0, %v4741
      %v4743 = vpop.f32.mrf.mxu0
      %4744 = vmatprep.mubr.bf16.mxu0 0
      %4745 = vmatmul.mubr.bf16.gmra.mxu0 %v4603
      %v4746 = vpop.f32.mrf.mxu0
      %v4747 = vadd.f32 0.0, %v4746
      %v4748 = vpop.f32.mrf.mxu0
      %v4749 = vpop.f32.mrf.mxu0
      %v4750 = vadd.f32 0.0, %v4749
      %v4751 = vpop.f32.mrf.mxu0
      %4752 = vmatprep.mubr.bf16.mxu0 0
      %4753 = vmatmul.mubr.bf16.gmra.mxu0 %v4606
      %v4754 = vpop.f32.mrf.mxu0
      %v4755 = vadd.f32 0.0, %v4754
      %v4756 = vpop.f32.mrf.mxu0
      %v4757 = vpop.f32.mrf.mxu0
      %v4758 = vadd.f32 0.0, %v4757
      %v4759 = vpop.f32.mrf.mxu0
      %4760 = vmatprep.mubr.bf16.mxu0 0
      %4761 = vmatmul.mubr.bf16.gmra.mxu0 %v4609
      %v4762 = vpop.f32.mrf.mxu0
      %v4763 = vadd.f32 0.0, %v4762
      %v4764 = vpop.f32.mrf.mxu0
      %v4765 = vpop.f32.mrf.mxu0
      %v4766 = vadd.f32 0.0, %v4765
      %v4767 = vpop.f32.mrf.mxu0
      %4768 = vmatprep.mubr.bf16.mxu0 0
      %4769 = vmatmul.mubr.bf16.gmra.mxu0 %v4612
      %v4770 = vpop.f32.mrf.mxu0
      %v4771 = vadd.f32 0.0, %v4770
      %v4772 = vpop.f32.mrf.mxu0
      %v4773 = vpop.f32.mrf.mxu0
      %v4774 = vadd.f32 0.0, %v4773
      %v4775 = vpop.f32.mrf.mxu0
      %4776 = vmatprep.mubr.bf16.mxu0 0
      %4777 = vmatmul.mubr.bf16.gmra.mxu0 %v4615
      %v4778 = vpop.f32.mrf.mxu0
      %v4779 = vadd.f32 0.0, %v4778
      %v4780 = vpop.f32.mrf.mxu0
      %v4781 = vpop.f32.mrf.mxu0
      %v4782 = vadd.f32 0.0, %v4781
      %v4783 = vpop.f32.mrf.mxu0
      %4784 = vmatprep.mubr.bf16.mxu0 0
      %4785 = vmatmul.mubr.bf16.gmra.mxu0 %v4618
      %v4786 = vpop.f32.mrf.mxu0
      %v4787 = vadd.f32 0.0, %v4786
      %v4788 = vpop.f32.mrf.mxu0
      %v4789 = vpop.f32.mrf.mxu0
      %v4790 = vadd.f32 0.0, %v4789
      %v4791 = vpop.f32.mrf.mxu0
      %4792 = vmatprep.mubr.bf16.mxu0 0
      %4793 = vmatmul.mubr.bf16.gmra.mxu0 %v4621
      %v4794 = vpop.f32.mrf.mxu0
      %v4795 = vadd.f32 0.0, %v4794
      %v4796 = vpop.f32.mrf.mxu0
      %v4797 = vpop.f32.mrf.mxu0
      %v4798 = vadd.f32 0.0, %v4797
      %v4799 = vpop.f32.mrf.mxu0
      %4800 = vmatprep.mubr.bf16.mxu0 0
      %4801 = vmatmul.mubr.bf16.gmra.mxu0 %v4624
      %v4802 = vpop.f32.mrf.mxu0
      %v4803 = vadd.f32 0.0, %v4802
      %v4804 = vpop.f32.mrf.mxu0
      %v4805 = vpop.f32.mrf.mxu0
      %v4806 = vadd.f32 0.0, %v4805
      %v4807 = vpop.f32.mrf.mxu0
      %4808 = vmatprep.mubr.bf16.mxu0 0
      %4809 = vmatmul.mubr.bf16.gmra.mxu0 %v4627
      %v4810 = vpop.f32.mrf.mxu0
      %v4811 = vadd.f32 0.0, %v4810
      %v4812 = vpop.f32.mrf.mxu0
      %v4813 = vpop.f32.mrf.mxu0
      %v4814 = vadd.f32 0.0, %v4813
      %v4815 = vpop.f32.mrf.mxu0
      %4816 = vmatprep.mubr.bf16.mxu0 0
      %4817 = vmatmul.mubr.bf16.gmra.mxu0 %v4630
      %v4818 = vpop.f32.mrf.mxu0
      %v4819 = vadd.f32 0.0, %v4818
      %v4820 = vpop.f32.mrf.mxu0
      %v4821 = vpop.f32.mrf.mxu0
      %v4822 = vadd.f32 0.0, %v4821
      %v4823 = vpop.f32.mrf.mxu0
      %4824 = vmatprep.mubr.bf16.mxu0 0
      %4825 = vmatmul.mubr.bf16.gmra.mxu0 %v4633
      %v4826 = vpop.f32.mrf.mxu0
      %v4827 = vadd.f32 0.0, %v4826
      %v4828 = vpop.f32.mrf.mxu0
      %v4829 = vpop.f32.mrf.mxu0
      %v4830 = vadd.f32 0.0, %v4829
      %v4831 = vpop.f32.mrf.mxu0
      %4832 = vmatprep.mubr.bf16.mxu0 0
      %4833 = vmatmul.mubr.bf16.gmra.mxu0 %v4636
      %v4834 = vpop.f32.mrf.mxu0
      %v4835 = vadd.f32 0.0, %v4834
      %v4836 = vpop.f32.mrf.mxu0
      %v4837 = vpop.f32.mrf.mxu0
      %v4838 = vadd.f32 0.0, %v4837
      %v4839 = vpop.f32.mrf.mxu0
      %4840 = vmatprep.mubr.bf16.mxu0 0
      %4841 = vmatmul.mubr.bf16.gmra.mxu0 %v4639
      %v4842 = vpop.f32.mrf.mxu0
      %v4843 = vadd.f32 0.0, %v4842
      %v4844 = vpop.f32.mrf.mxu0
      %v4845 = vpop.f32.mrf.mxu0
      %v4846 = vadd.f32 0.0, %v4845
      %v4847 = vpop.f32.mrf.mxu0
      %4848 = vmatprep.mubr.bf16.mxu0 0
      %4849 = vmatmul.mubr.bf16.gmra.mxu0 %v4642
      %v4850 = vpop.f32.mrf.mxu0
      %v4851 = vadd.f32 0.0, %v4850
      %v4852 = vpop.f32.mrf.mxu0
      %v4853 = vpop.f32.mrf.mxu0
      %v4854 = vadd.f32 0.0, %v4853
      %v4855 = vpop.f32.mrf.mxu0
      %4856 = vmatprep.mubr.bf16.mxu0 0
      %4857 = vmatmul.mubr.bf16.gmra.mxu0 %v4645
      %v4858 = vpop.f32.mrf.mxu0
      %v4859 = vadd.f32 0.0, %v4858
      %v4860 = vpop.f32.mrf.mxu0
      %v4861 = vpop.f32.mrf.mxu0
      %v4862 = vadd.f32 0.0, %v4861
      %v4863 = vpop.f32.mrf.mxu0
      %4864 = vmatprep.mubr.bf16.mxu0 0
      %4865 = vmatmul.mubr.bf16.gmra.mxu0 %v4648
      %v4866 = vpop.f32.mrf.mxu0
      %v4867 = vadd.f32 0.0, %v4866
      %v4868 = vpop.f32.mrf.mxu0
      %v4869 = vpop.f32.mrf.mxu0
      %v4870 = vadd.f32 0.0, %v4869
      %v4871 = vpop.f32.mrf.mxu0
      %4872 = vmatprep.mubr.bf16.mxu0 0
      %4873 = vmatmul.mubr.bf16.gmra.mxu0 %v4651
      %v4874 = vpop.f32.mrf.mxu0
      %v4875 = vadd.f32 0.0, %v4874
      %v4876 = vpop.f32.mrf.mxu0
      %v4877 = vpop.f32.mrf.mxu0
      %v4878 = vadd.f32 0.0, %v4877
      %v4879 = vpop.f32.mrf.mxu0
      %4880 = vdwg.mxu0
      %v4881 = vadd.f32 %v4459, %v4691
      %v4882 = vadd.f32 %v4460, %v4694
      %v4883 = vadd.f32 %v4461, %v4699
      %v4884 = vadd.f32 %v4462, %v4702
      %v4885 = vadd.f32 %v4463, %v4707
      %v4886 = vadd.f32 %v4464, %v4710
      %v4887 = vadd.f32 %v4465, %v4715
      %v4888 = vadd.f32 %v4466, %v4718
      %v4889 = vadd.f32 %v4467, %v4723
      %v4890 = vadd.f32 %v4468, %v4726
      %v4891 = vadd.f32 %v4469, %v4731
      %v4892 = vadd.f32 %v4470, %v4734
      %v4893 = vadd.f32 %v4471, %v4739
      %v4894 = vadd.f32 %v4472, %v4742
      %v4895 = vadd.f32 %v4473, %v4747
      %v4896 = vadd.f32 %v4474, %v4750
      %v4897 = vadd.f32 %v4475, %v4755
      %v4898 = vadd.f32 %v4476, %v4758
      %v4899 = vadd.f32 %v4477, %v4763
      %v4900 = vadd.f32 %v4478, %v4766
      %v4901 = vadd.f32 %v4479, %v4771
      %v4902 = vadd.f32 %v4480, %v4774
      %v4903 = vadd.f32 %v4481, %v4779
      %v4904 = vadd.f32 %v4482, %v4782
      %v4905 = vadd.f32 %v4483, %v4787
      %v4906 = vadd.f32 %v4484, %v4790
      %v4907 = vadd.f32 %v4485, %v4795
      %v4908 = vadd.f32 %v4486, %v4798
      %v4909 = vadd.f32 %v4487, %v4803
      %v4910 = vadd.f32 %v4488, %v4806
      %v4911 = vadd.f32 %v4489, %v4811
      %v4912 = vadd.f32 %v4490, %v4814
      %v4913 = vadd.f32 %v4491, %v4819
      %v4914 = vadd.f32 %v4492, %v4822
      %v4915 = vadd.f32 %v4493, %v4827
      %v4916 = vadd.f32 %v4494, %v4830
      %v4917 = vadd.f32 %v4495, %v4835
      %v4918 = vadd.f32 %v4496, %v4838
      %v4919 = vadd.f32 %v4497, %v4843
      %v4920 = vadd.f32 %v4498, %v4846
      %v4921 = vadd.f32 %v4499, %v4851
      %v4922 = vadd.f32 %v4500, %v4854
      %v4923 = vadd.f32 %v4501, %v4859
      %v4924 = vadd.f32 %v4502, %v4862
      %v4925 = vadd.f32 %v4503, %v4867
      %v4926 = vadd.f32 %v4504, %v4870
      %v4927 = vadd.f32 %v4505, %v4875
      %v4928 = vadd.f32 %v4506, %v4878
      %v4929 = vld [vmem:[#allocation2 + $0x21] sm:$0xff]
      %v4930 = vld [vmem:[#allocation2 + $0x29] sm:$0xff]
      %v4931 = vld [vmem:[#allocation2 + $0x31] sm:$0xff]
      %v4932 = vld [vmem:[#allocation2 + $0x39] sm:$0xff]
      %v4933 = vld [vmem:[#allocation2 + $0x41] sm:$0xff]
      %v4934 = vld [vmem:[#allocation2 + $0x49] sm:$0xff]
      %v4935 = vld [vmem:[#allocation2 + $0x51] sm:$0xff]
      %v4936 = vld [vmem:[#allocation2 + $0x59] sm:$0xff]
      %v4937 = vld [vmem:[#allocation2 + $0x61] sm:$0xff]
      %v4938 = vld [vmem:[#allocation2 + $0x69] sm:$0xff]
      %v4939 = vld [vmem:[#allocation2 + $0x71] sm:$0xff]
      %v4940 = vld [vmem:[#allocation2 + $0x79] sm:$0xff]
      %v4941 = vld [vmem:[#allocation2 + $0x81] sm:$0xff]
      %v4942 = vld [vmem:[#allocation2 + $0x89] sm:$0xff]
      %v4943 = vld [vmem:[#allocation2 + $0x91] sm:$0xff]
      %v4944 = vld [vmem:[#allocation2 + $0x99] sm:$0xff]
      %v4945 = vld [vmem:[#allocation2 + $0xa1] sm:$0xff]
      %v4946 = vld [vmem:[#allocation2 + $0xa9] sm:$0xff]
      %v4947 = vld [vmem:[#allocation2 + $0xb1] sm:$0xff]
      %v4948 = vld [vmem:[#allocation2 + $0xb9] sm:$0xff]
      %v4949 = vld [vmem:[#allocation2 + $0xc1] sm:$0xff]
      %v4950 = vld [vmem:[#allocation2 + $0xc9] sm:$0xff]
      %v4951 = vld [vmem:[#allocation2 + $0xd1] sm:$0xff]
      %v4952 = vld [vmem:[#allocation2 + $0xd9] sm:$0xff]
      %v4953 = vld [vmem:[#allocation2 + $0xe1] sm:$0xff]
      %v4954 = vld [vmem:[#allocation2 + $0xe9] sm:$0xff]
      %v4955 = vld [vmem:[#allocation2 + $0xf1] sm:$0xff]
      %v4956 = vld [vmem:[#allocation2 + $0xf9] sm:$0xff]
      %v4957 = vld [vmem:[#allocation2 + $0x101] sm:$0xff]
      %v4958 = vld [vmem:[#allocation2 + $0x109] sm:$0xff]
      %v4959 = vld [vmem:[#allocation2 + $0x111] sm:$0xff]
      %v4960 = vld [vmem:[#allocation2 + $0x119] sm:$0xff]
      %v4961 = vld [vmem:[#allocation2 + $0x121] sm:$0xff]
      %v4962 = vld [vmem:[#allocation2 + $0x129] sm:$0xff]
      %v4963 = vld [vmem:[#allocation2 + $0x131] sm:$0xff]
      %v4964 = vld [vmem:[#allocation2 + $0x139] sm:$0xff]
      %v4965 = vld [vmem:[#allocation2 + $0x141] sm:$0xff]
      %v4966 = vld [vmem:[#allocation2 + $0x149] sm:$0xff]
      %v4967 = vld [vmem:[#allocation2 + $0x151] sm:$0xff]
      %v4968 = vld [vmem:[#allocation2 + $0x159] sm:$0xff]
      %v4969 = vld [vmem:[#allocation2 + $0x161] sm:$0xff]
      %v4970 = vld [vmem:[#allocation2 + $0x169] sm:$0xff]
      %v4971 = vld [vmem:[#allocation2 + $0x171] sm:$0xff]
      %v4972 = vld [vmem:[#allocation2 + $0x179] sm:$0xff]
      %v4973 = vld [vmem:[#allocation2 + $0x181] sm:$0xff]
      %v4974 = vld [vmem:[#allocation2 + $0x189] sm:$0xff]
      %v4975 = vld [vmem:[#allocation2 + $0x191] sm:$0xff]
      %v4976 = vld [vmem:[#allocation2 + $0x199] sm:$0xff]
      %v4977 = vpack.c.bf16 %v4930, %v4929
      %v4978 = vpack.c.bf16 %v4932, %v4931
      %v4979 = vpack.c.bf16 %v4934, %v4933
      %v4980 = vpack.c.bf16 %v4936, %v4935
      %v4981 = vpack.c.bf16 %v4938, %v4937
      %v4982 = vpack.c.bf16 %v4940, %v4939
      %v4983 = vpack.c.bf16 %v4942, %v4941
      %v4984 = vpack.c.bf16 %v4944, %v4943
      %v4985 = vpack.c.bf16 %v4946, %v4945
      %v4986 = vpack.c.bf16 %v4948, %v4947
      %v4987 = vpack.c.bf16 %v4950, %v4949
      %v4988 = vpack.c.bf16 %v4952, %v4951
      %v4989 = vpack.c.bf16 %v4954, %v4953
      %v4990 = vpack.c.bf16 %v4956, %v4955
      %v4991 = vpack.c.bf16 %v4958, %v4957
      %v4992 = vpack.c.bf16 %v4960, %v4959
      %v4993 = vpack.c.bf16 %v4962, %v4961
      %v4994 = vpack.c.bf16 %v4964, %v4963
      %v4995 = vpack.c.bf16 %v4966, %v4965
      %v4996 = vpack.c.bf16 %v4968, %v4967
      %v4997 = vpack.c.bf16 %v4970, %v4969
      %v4998 = vpack.c.bf16 %v4972, %v4971
      %v4999 = vpack.c.bf16 %v4974, %v4973
      %v5000 = vpack.c.bf16 %v4976, %v4975
      %s5001 = scalar_lea.vmem %s8, 5
      %v5002 = vld [vmem:[%s5001] sm:$0x1]
      %v5004 = vsel %vm1900, %v4977, 0
      %v5007 = vsel %vm1900, %v4978, 0
      %v5010 = vsel %vm1900, %v4979, 0
      %v5013 = vsel %vm1900, %v4980, 0
      %v5016 = vsel %vm1900, %v4981, 0
      %v5019 = vsel %vm1900, %v4982, 0
      %v5022 = vsel %vm1900, %v4983, 0
      %v5025 = vsel %vm1900, %v4984, 0
      %v5028 = vsel %vm1900, %v4985, 0
      %v5031 = vsel %vm1900, %v4986, 0
      %v5034 = vsel %vm1900, %v4987, 0
      %v5037 = vsel %vm1900, %v4988, 0
      %v5040 = vsel %vm1900, %v4989, 0
      %v5043 = vsel %vm1900, %v4990, 0
      %v5046 = vsel %vm1900, %v4991, 0
      %v5049 = vsel %vm1900, %v4992, 0
      %v5052 = vsel %vm1900, %v4993, 0
      %v5055 = vsel %vm1900, %v4994, 0
      %v5058 = vsel %vm1900, %v4995, 0
      %v5061 = vsel %vm1900, %v4996, 0
      %v5064 = vsel %vm1900, %v4997, 0
      %v5067 = vsel %vm1900, %v4998, 0
      %v5070 = vsel %vm1900, %v4999, 0
      %v5073 = vsel %vm1900, %v5000, 0
      %v5076 = vsel %vm2014, %v5002, 0
      %5078 = vmatprep.subr.bf16.mxu0 0
      %5079 = vmatpush1.bf16.msra.mxu0 0
      %5080 = vmatprep.subr.bf16.mxu0 0
      %5081 = vmatpush1.bf16.msra.mxu0 0
      %5082 = vmatprep.subr.bf16.mxu0 0
      %5083 = vmatpush1.bf16.msra.mxu0 0
      %5084 = vmatprep.subr.bf16.mxu0 0
      %5085 = vmatpush1.bf16.msra.mxu0 0
      %5086 = vmatprep.subr.bf16.mxu0 0
      %5087 = vmatpush1.bf16.msra.mxu0 0
      %5088 = vmatprep.subr.bf16.mxu0 0
      %5089 = vmatpush1.bf16.msra.mxu0 0
      %5090 = vmatprep.subr.bf16.mxu0 0
      %5091 = vmatpush1.bf16.msra.mxu0 0
      %5092 = vmatprep.subr.bf16.mxu0 0
      %5093 = vmatpush1.bf16.msra.mxu0 %v5076
      %5094 = vmatprep.subr.bf16.mxu0 0
      %5095 = vmatpush2.bf16.msra.mxu0 0
      %5096 = vmatprep.subr.bf16.mxu0 0
      %5097 = vmatpush2.bf16.msra.mxu0 0
      %5098 = vmatprep.subr.bf16.mxu0 0
      %5099 = vmatpush2.bf16.msra.mxu0 0
      %5100 = vmatprep.subr.bf16.mxu0 0
      %5101 = vmatpush2.bf16.msra.mxu0 0
      %5102 = vmatprep.subr.bf16.mxu0 0
      %5103 = vmatpush2.bf16.msra.mxu0 0
      %5104 = vmatprep.subr.bf16.mxu0 0
      %5105 = vmatpush2.bf16.msra.mxu0 0
      %5106 = vmatprep.subr.bf16.mxu0 0
      %5107 = vmatpush2.bf16.msra.mxu0 0
      %5108 = vmatprep.subr.bf16.mxu0 0
      %5109 = vmatpush2.bf16.msra.mxu0 0
      %5110 = vmatprep.mubr.bf16.mxu0 0
      %5111 = vmatmul.mubr.bf16.gmra.mxu0 %v5004
      %v5112 = vpop.f32.mrf.mxu0
      %v5113 = vadd.f32 0.0, %v5112
      %v5114 = vpop.f32.mrf.mxu0
      %v5115 = vpop.f32.mrf.mxu0
      %v5116 = vadd.f32 0.0, %v5115
      %v5117 = vpop.f32.mrf.mxu0
      %5118 = vmatprep.mubr.bf16.mxu0 0
      %5119 = vmatmul.mubr.bf16.gmra.mxu0 %v5007
      %v5120 = vpop.f32.mrf.mxu0
      %v5121 = vadd.f32 0.0, %v5120
      %v5122 = vpop.f32.mrf.mxu0
      %v5123 = vpop.f32.mrf.mxu0
      %v5124 = vadd.f32 0.0, %v5123
      %v5125 = vpop.f32.mrf.mxu0
      %5126 = vmatprep.mubr.bf16.mxu0 0
      %5127 = vmatmul.mubr.bf16.gmra.mxu0 %v5010
      %v5128 = vpop.f32.mrf.mxu0
      %v5129 = vadd.f32 0.0, %v5128
      %v5130 = vpop.f32.mrf.mxu0
      %v5131 = vpop.f32.mrf.mxu0
      %v5132 = vadd.f32 0.0, %v5131
      %v5133 = vpop.f32.mrf.mxu0
      %5134 = vmatprep.mubr.bf16.mxu0 0
      %5135 = vmatmul.mubr.bf16.gmra.mxu0 %v5013
      %v5136 = vpop.f32.mrf.mxu0
      %v5137 = vadd.f32 0.0, %v5136
      %v5138 = vpop.f32.mrf.mxu0
      %v5139 = vpop.f32.mrf.mxu0
      %v5140 = vadd.f32 0.0, %v5139
      %v5141 = vpop.f32.mrf.mxu0
      %5142 = vmatprep.mubr.bf16.mxu0 0
      %5143 = vmatmul.mubr.bf16.gmra.mxu0 %v5016
      %v5144 = vpop.f32.mrf.mxu0
      %v5145 = vadd.f32 0.0, %v5144
      %v5146 = vpop.f32.mrf.mxu0
      %v5147 = vpop.f32.mrf.mxu0
      %v5148 = vadd.f32 0.0, %v5147
      %v5149 = vpop.f32.mrf.mxu0
      %5150 = vmatprep.mubr.bf16.mxu0 0
      %5151 = vmatmul.mubr.bf16.gmra.mxu0 %v5019
      %v5152 = vpop.f32.mrf.mxu0
      %v5153 = vadd.f32 0.0, %v5152
      %v5154 = vpop.f32.mrf.mxu0
      %v5155 = vpop.f32.mrf.mxu0
      %v5156 = vadd.f32 0.0, %v5155
      %v5157 = vpop.f32.mrf.mxu0
      %5158 = vmatprep.mubr.bf16.mxu0 0
      %5159 = vmatmul.mubr.bf16.gmra.mxu0 %v5022
      %v5160 = vpop.f32.mrf.mxu0
      %v5161 = vadd.f32 0.0, %v5160
      %v5162 = vpop.f32.mrf.mxu0
      %v5163 = vpop.f32.mrf.mxu0
      %v5164 = vadd.f32 0.0, %v5163
      %v5165 = vpop.f32.mrf.mxu0
      %5166 = vmatprep.mubr.bf16.mxu0 0
      %5167 = vmatmul.mubr.bf16.gmra.mxu0 %v5025
      %v5168 = vpop.f32.mrf.mxu0
      %v5169 = vadd.f32 0.0, %v5168
      %v5170 = vpop.f32.mrf.mxu0
      %v5171 = vpop.f32.mrf.mxu0
      %v5172 = vadd.f32 0.0, %v5171
      %v5173 = vpop.f32.mrf.mxu0
      %5174 = vmatprep.mubr.bf16.mxu0 0
      %5175 = vmatmul.mubr.bf16.gmra.mxu0 %v5028
      %v5176 = vpop.f32.mrf.mxu0
      %v5177 = vadd.f32 0.0, %v5176
      %v5178 = vpop.f32.mrf.mxu0
      %v5179 = vpop.f32.mrf.mxu0
      %v5180 = vadd.f32 0.0, %v5179
      %v5181 = vpop.f32.mrf.mxu0
      %5182 = vmatprep.mubr.bf16.mxu0 0
      %5183 = vmatmul.mubr.bf16.gmra.mxu0 %v5031
      %v5184 = vpop.f32.mrf.mxu0
      %v5185 = vadd.f32 0.0, %v5184
      %v5186 = vpop.f32.mrf.mxu0
      %v5187 = vpop.f32.mrf.mxu0
      %v5188 = vadd.f32 0.0, %v5187
      %v5189 = vpop.f32.mrf.mxu0
      %5190 = vmatprep.mubr.bf16.mxu0 0
      %5191 = vmatmul.mubr.bf16.gmra.mxu0 %v5034
      %v5192 = vpop.f32.mrf.mxu0
      %v5193 = vadd.f32 0.0, %v5192
      %v5194 = vpop.f32.mrf.mxu0
      %v5195 = vpop.f32.mrf.mxu0
      %v5196 = vadd.f32 0.0, %v5195
      %v5197 = vpop.f32.mrf.mxu0
      %5198 = vmatprep.mubr.bf16.mxu0 0
      %5199 = vmatmul.mubr.bf16.gmra.mxu0 %v5037
      %v5200 = vpop.f32.mrf.mxu0
      %v5201 = vadd.f32 0.0, %v5200
      %v5202 = vpop.f32.mrf.mxu0
      %v5203 = vpop.f32.mrf.mxu0
      %v5204 = vadd.f32 0.0, %v5203
      %v5205 = vpop.f32.mrf.mxu0
      %5206 = vmatprep.mubr.bf16.mxu0 0
      %5207 = vmatmul.mubr.bf16.gmra.mxu0 %v5040
      %v5208 = vpop.f32.mrf.mxu0
      %v5209 = vadd.f32 0.0, %v5208
      %v5210 = vpop.f32.mrf.mxu0
      %v5211 = vpop.f32.mrf.mxu0
      %v5212 = vadd.f32 0.0, %v5211
      %v5213 = vpop.f32.mrf.mxu0
      %5214 = vmatprep.mubr.bf16.mxu0 0
      %5215 = vmatmul.mubr.bf16.gmra.mxu0 %v5043
      %v5216 = vpop.f32.mrf.mxu0
      %v5217 = vadd.f32 0.0, %v5216
      %v5218 = vpop.f32.mrf.mxu0
      %v5219 = vpop.f32.mrf.mxu0
      %v5220 = vadd.f32 0.0, %v5219
      %v5221 = vpop.f32.mrf.mxu0
      %5222 = vmatprep.mubr.bf16.mxu0 0
      %5223 = vmatmul.mubr.bf16.gmra.mxu0 %v5046
      %v5224 = vpop.f32.mrf.mxu0
      %v5225 = vadd.f32 0.0, %v5224
      %v5226 = vpop.f32.mrf.mxu0
      %v5227 = vpop.f32.mrf.mxu0
      %v5228 = vadd.f32 0.0, %v5227
      %v5229 = vpop.f32.mrf.mxu0
      %5230 = vmatprep.mubr.bf16.mxu0 0
      %5231 = vmatmul.mubr.bf16.gmra.mxu0 %v5049
      %v5232 = vpop.f32.mrf.mxu0
      %v5233 = vadd.f32 0.0, %v5232
      %v5234 = vpop.f32.mrf.mxu0
      %v5235 = vpop.f32.mrf.mxu0
      %v5236 = vadd.f32 0.0, %v5235
      %v5237 = vpop.f32.mrf.mxu0
      %5238 = vmatprep.mubr.bf16.mxu0 0
      %5239 = vmatmul.mubr.bf16.gmra.mxu0 %v5052
      %v5240 = vpop.f32.mrf.mxu0
      %v5241 = vadd.f32 0.0, %v5240
      %v5242 = vpop.f32.mrf.mxu0
      %v5243 = vpop.f32.mrf.mxu0
      %v5244 = vadd.f32 0.0, %v5243
      %v5245 = vpop.f32.mrf.mxu0
      %5246 = vmatprep.mubr.bf16.mxu0 0
      %5247 = vmatmul.mubr.bf16.gmra.mxu0 %v5055
      %v5248 = vpop.f32.mrf.mxu0
      %v5249 = vadd.f32 0.0, %v5248
      %v5250 = vpop.f32.mrf.mxu0
      %v5251 = vpop.f32.mrf.mxu0
      %v5252 = vadd.f32 0.0, %v5251
      %v5253 = vpop.f32.mrf.mxu0
      %5254 = vmatprep.mubr.bf16.mxu0 0
      %5255 = vmatmul.mubr.bf16.gmra.mxu0 %v5058
      %v5256 = vpop.f32.mrf.mxu0
      %v5257 = vadd.f32 0.0, %v5256
      %v5258 = vpop.f32.mrf.mxu0
      %v5259 = vpop.f32.mrf.mxu0
      %v5260 = vadd.f32 0.0, %v5259
      %v5261 = vpop.f32.mrf.mxu0
      %5262 = vmatprep.mubr.bf16.mxu0 0
      %5263 = vmatmul.mubr.bf16.gmra.mxu0 %v5061
      %v5264 = vpop.f32.mrf.mxu0
      %v5265 = vadd.f32 0.0, %v5264
      %v5266 = vpop.f32.mrf.mxu0
      %v5267 = vpop.f32.mrf.mxu0
      %v5268 = vadd.f32 0.0, %v5267
      %v5269 = vpop.f32.mrf.mxu0
      %5270 = vmatprep.mubr.bf16.mxu0 0
      %5271 = vmatmul.mubr.bf16.gmra.mxu0 %v5064
      %v5272 = vpop.f32.mrf.mxu0
      %v5273 = vadd.f32 0.0, %v5272
      %v5274 = vpop.f32.mrf.mxu0
      %v5275 = vpop.f32.mrf.mxu0
      %v5276 = vadd.f32 0.0, %v5275
      %v5277 = vpop.f32.mrf.mxu0
      %5278 = vmatprep.mubr.bf16.mxu0 0
      %5279 = vmatmul.mubr.bf16.gmra.mxu0 %v5067
      %v5280 = vpop.f32.mrf.mxu0
      %v5281 = vadd.f32 0.0, %v5280
      %v5282 = vpop.f32.mrf.mxu0
      %v5283 = vpop.f32.mrf.mxu0
      %v5284 = vadd.f32 0.0, %v5283
      %v5285 = vpop.f32.mrf.mxu0
      %5286 = vmatprep.mubr.bf16.mxu0 0
      %5287 = vmatmul.mubr.bf16.gmra.mxu0 %v5070
      %v5288 = vpop.f32.mrf.mxu0
      %v5289 = vadd.f32 0.0, %v5288
      %v5290 = vpop.f32.mrf.mxu0
      %v5291 = vpop.f32.mrf.mxu0
      %v5292 = vadd.f32 0.0, %v5291
      %v5293 = vpop.f32.mrf.mxu0
      %5294 = vmatprep.mubr.bf16.mxu0 0
      %5295 = vmatmul.mubr.bf16.gmra.mxu0 %v5073
      %v5296 = vpop.f32.mrf.mxu0
      %v5297 = vadd.f32 0.0, %v5296
      %v5298 = vpop.f32.mrf.mxu0
      %v5299 = vpop.f32.mrf.mxu0
      %v5300 = vadd.f32 0.0, %v5299
      %v5301 = vpop.f32.mrf.mxu0
      %5302 = vdwg.mxu0
      %v5303 = vadd.f32 %v4881, %v5113
      %v5304 = vadd.f32 %v4882, %v5116
      %v5305 = vadd.f32 %v4883, %v5121
      %v5306 = vadd.f32 %v4884, %v5124
      %v5307 = vadd.f32 %v4885, %v5129
      %v5308 = vadd.f32 %v4886, %v5132
      %v5309 = vadd.f32 %v4887, %v5137
      %v5310 = vadd.f32 %v4888, %v5140
      %v5311 = vadd.f32 %v4889, %v5145
      %v5312 = vadd.f32 %v4890, %v5148
      %v5313 = vadd.f32 %v4891, %v5153
      %v5314 = vadd.f32 %v4892, %v5156
      %v5315 = vadd.f32 %v4893, %v5161
      %v5316 = vadd.f32 %v4894, %v5164
      %v5317 = vadd.f32 %v4895, %v5169
      %v5318 = vadd.f32 %v4896, %v5172
      %v5319 = vadd.f32 %v4897, %v5177
      %v5320 = vadd.f32 %v4898, %v5180
      %v5321 = vadd.f32 %v4899, %v5185
      %v5322 = vadd.f32 %v4900, %v5188
      %v5323 = vadd.f32 %v4901, %v5193
      %v5324 = vadd.f32 %v4902, %v5196
      %v5325 = vadd.f32 %v4903, %v5201
      %v5326 = vadd.f32 %v4904, %v5204
      %v5327 = vadd.f32 %v4905, %v5209
      %v5328 = vadd.f32 %v4906, %v5212
      %v5329 = vadd.f32 %v4907, %v5217
      %v5330 = vadd.f32 %v4908, %v5220
      %v5331 = vadd.f32 %v4909, %v5225
      %v5332 = vadd.f32 %v4910, %v5228
      %v5333 = vadd.f32 %v4911, %v5233
      %v5334 = vadd.f32 %v4912, %v5236
      %v5335 = vadd.f32 %v4913, %v5241
      %v5336 = vadd.f32 %v4914, %v5244
      %v5337 = vadd.f32 %v4915, %v5249
      %v5338 = vadd.f32 %v4916, %v5252
      %v5339 = vadd.f32 %v4917, %v5257
      %v5340 = vadd.f32 %v4918, %v5260
      %v5341 = vadd.f32 %v4919, %v5265
      %v5342 = vadd.f32 %v4920, %v5268
      %v5343 = vadd.f32 %v4921, %v5273
      %v5344 = vadd.f32 %v4922, %v5276
      %v5345 = vadd.f32 %v4923, %v5281
      %v5346 = vadd.f32 %v4924, %v5284
      %v5347 = vadd.f32 %v4925, %v5289
      %v5348 = vadd.f32 %v4926, %v5292
      %v5349 = vadd.f32 %v4927, %v5297
      %v5350 = vadd.f32 %v4928, %v5300
      %v5351 = vld [vmem:[#allocation2 + $0x37] sm:$0xff]
      %v5352 = vld [vmem:[#allocation2 + $0x3f] sm:$0xff]
      %v5353 = vld [vmem:[#allocation2 + $0x47] sm:$0xff]
      %v5354 = vld [vmem:[#allocation2 + $0x4f] sm:$0xff]
      %v5355 = vld [vmem:[#allocation2 + $0x57] sm:$0xff]
      %v5356 = vld [vmem:[#allocation2 + $0x5f] sm:$0xff]
      %v5357 = vld [vmem:[#allocation2 + $0x67] sm:$0xff]
      %v5358 = vld [vmem:[#allocation2 + $0x6f] sm:$0xff]
      %v5359 = vld [vmem:[#allocation2 + $0x77] sm:$0xff]
      %v5360 = vld [vmem:[#allocation2 + $0x7f] sm:$0xff]
      %v5361 = vld [vmem:[#allocation2 + $0x87] sm:$0xff]
      %v5362 = vld [vmem:[#allocation2 + $0x8f] sm:$0xff]
      %v5363 = vld [vmem:[#allocation2 + $0x97] sm:$0xff]
      %v5364 = vld [vmem:[#allocation2 + $0x9f] sm:$0xff]
      %v5365 = vld [vmem:[#allocation2 + $0xa7] sm:$0xff]
      %v5366 = vld [vmem:[#allocation2 + $0xaf] sm:$0xff]
      %v5367 = vld [vmem:[#allocation2 + $0xb7] sm:$0xff]
      %v5368 = vld [vmem:[#allocation2 + $0xbf] sm:$0xff]
      %v5369 = vld [vmem:[#allocation2 + $0xc7] sm:$0xff]
      %v5370 = vld [vmem:[#allocation2 + $0xcf] sm:$0xff]
      %v5371 = vld [vmem:[#allocation2 + $0xd7] sm:$0xff]
      %v5372 = vld [vmem:[#allocation2 + $0xdf] sm:$0xff]
      %v5373 = vld [vmem:[#allocation2 + $0xe7] sm:$0xff]
      %v5374 = vld [vmem:[#allocation2 + $0xef] sm:$0xff]
      %v5375 = vld [vmem:[#allocation2 + $0xf7] sm:$0xff]
      %v5376 = vld [vmem:[#allocation2 + $0xff] sm:$0xff]
      %v5377 = vld [vmem:[#allocation2 + $0x107] sm:$0xff]
      %v5378 = vld [vmem:[#allocation2 + $0x10f] sm:$0xff]
      %v5379 = vld [vmem:[#allocation2 + $0x117] sm:$0xff]
      %v5380 = vld [vmem:[#allocation2 + $0x11f] sm:$0xff]
      %v5381 = vld [vmem:[#allocation2 + $0x127] sm:$0xff]
      %v5382 = vld [vmem:[#allocation2 + $0x12f] sm:$0xff]
      %v5383 = vld [vmem:[#allocation2 + $0x137] sm:$0xff]
      %v5384 = vld [vmem:[#allocation2 + $0x13f] sm:$0xff]
      %v5385 = vld [vmem:[#allocation2 + $0x147] sm:$0xff]
      %v5386 = vld [vmem:[#allocation2 + $0x14f] sm:$0xff]
      %v5387 = vld [vmem:[#allocation2 + $0x157] sm:$0xff]
      %v5388 = vld [vmem:[#allocation2 + $0x15f] sm:$0xff]
      %v5389 = vld [vmem:[#allocation2 + $0x167] sm:$0xff]
      %v5390 = vld [vmem:[#allocation2 + $0x16f] sm:$0xff]
      %v5391 = vld [vmem:[#allocation2 + $0x177] sm:$0xff]
      %v5392 = vld [vmem:[#allocation2 + $0x17f] sm:$0xff]
      %v5393 = vld [vmem:[#allocation2 + $0x187] sm:$0xff]
      %v5394 = vld [vmem:[#allocation2 + $0x18f] sm:$0xff]
      %v5395 = vld [vmem:[#allocation2 + $0x197] sm:$0xff]
      %v5396 = vld [vmem:[#allocation2 + $0x19f] sm:$0xff]
      %v5397 = vld [vmem:[#allocation2 + $0x1a7] sm:$0xff]
      %v5398 = vld [vmem:[#allocation2 + $0x1af] sm:$0xff]
      %v5399 = vpack.c.bf16 %v5352, %v5351
      %v5400 = vpack.c.bf16 %v5354, %v5353
      %v5401 = vpack.c.bf16 %v5356, %v5355
      %v5402 = vpack.c.bf16 %v5358, %v5357
      %v5403 = vpack.c.bf16 %v5360, %v5359
      %v5404 = vpack.c.bf16 %v5362, %v5361
      %v5405 = vpack.c.bf16 %v5364, %v5363
      %v5406 = vpack.c.bf16 %v5366, %v5365
      %v5407 = vpack.c.bf16 %v5368, %v5367
      %v5408 = vpack.c.bf16 %v5370, %v5369
      %v5409 = vpack.c.bf16 %v5372, %v5371
      %v5410 = vpack.c.bf16 %v5374, %v5373
      %v5411 = vpack.c.bf16 %v5376, %v5375
      %v5412 = vpack.c.bf16 %v5378, %v5377
      %v5413 = vpack.c.bf16 %v5380, %v5379
      %v5414 = vpack.c.bf16 %v5382, %v5381
      %v5415 = vpack.c.bf16 %v5384, %v5383
      %v5416 = vpack.c.bf16 %v5386, %v5385
      %v5417 = vpack.c.bf16 %v5388, %v5387
      %v5418 = vpack.c.bf16 %v5390, %v5389
      %v5419 = vpack.c.bf16 %v5392, %v5391
      %v5420 = vpack.c.bf16 %v5394, %v5393
      %v5421 = vpack.c.bf16 %v5396, %v5395
      %v5422 = vpack.c.bf16 %v5398, %v5397
      %s5423 = scalar_lea.vmem %s8, 6
      %v5424 = vld [vmem:[%s5423] sm:$0x1]
      %v5426 = vsel %vm1900, %v5399, 0
      %v5429 = vsel %vm1900, %v5400, 0
      %v5432 = vsel %vm1900, %v5401, 0
      %v5435 = vsel %vm1900, %v5402, 0
      %v5438 = vsel %vm1900, %v5403, 0
      %v5441 = vsel %vm1900, %v5404, 0
      %v5444 = vsel %vm1900, %v5405, 0
      %v5447 = vsel %vm1900, %v5406, 0
      %v5450 = vsel %vm1900, %v5407, 0
      %v5453 = vsel %vm1900, %v5408, 0
      %v5456 = vsel %vm1900, %v5409, 0
      %v5459 = vsel %vm1900, %v5410, 0
      %v5462 = vsel %vm1900, %v5411, 0
      %v5465 = vsel %vm1900, %v5412, 0
      %v5468 = vsel %vm1900, %v5413, 0
      %v5471 = vsel %vm1900, %v5414, 0
      %v5474 = vsel %vm1900, %v5415, 0
      %v5477 = vsel %vm1900, %v5416, 0
      %v5480 = vsel %vm1900, %v5417, 0
      %v5483 = vsel %vm1900, %v5418, 0
      %v5486 = vsel %vm1900, %v5419, 0
      %v5489 = vsel %vm1900, %v5420, 0
      %v5492 = vsel %vm1900, %v5421, 0
      %v5495 = vsel %vm1900, %v5422, 0
      %v5498 = vsel %vm2014, %v5424, 0
      %5500 = vmatprep.subr.bf16.mxu0 0
      %5501 = vmatpush1.bf16.msra.mxu0 0
      %5502 = vmatprep.subr.bf16.mxu0 0
      %5503 = vmatpush1.bf16.msra.mxu0 0
      %5504 = vmatprep.subr.bf16.mxu0 0
      %5505 = vmatpush1.bf16.msra.mxu0 0
      %5506 = vmatprep.subr.bf16.mxu0 0
      %5507 = vmatpush1.bf16.msra.mxu0 0
      %5508 = vmatprep.subr.bf16.mxu0 0
      %5509 = vmatpush1.bf16.msra.mxu0 0
      %5510 = vmatprep.subr.bf16.mxu0 0
      %5511 = vmatpush1.bf16.msra.mxu0 0
      %5512 = vmatprep.subr.bf16.mxu0 0
      %5513 = vmatpush1.bf16.msra.mxu0 0
      %5514 = vmatprep.subr.bf16.mxu0 0
      %5515 = vmatpush1.bf16.msra.mxu0 %v5498
      %5516 = vmatprep.subr.bf16.mxu0 0
      %5517 = vmatpush2.bf16.msra.mxu0 0
      %5518 = vmatprep.subr.bf16.mxu0 0
      %5519 = vmatpush2.bf16.msra.mxu0 0
      %5520 = vmatprep.subr.bf16.mxu0 0
      %5521 = vmatpush2.bf16.msra.mxu0 0
      %5522 = vmatprep.subr.bf16.mxu0 0
      %5523 = vmatpush2.bf16.msra.mxu0 0
      %5524 = vmatprep.subr.bf16.mxu0 0
      %5525 = vmatpush2.bf16.msra.mxu0 0
      %5526 = vmatprep.subr.bf16.mxu0 0
      %5527 = vmatpush2.bf16.msra.mxu0 0
      %5528 = vmatprep.subr.bf16.mxu0 0
      %5529 = vmatpush2.bf16.msra.mxu0 0
      %5530 = vmatprep.subr.bf16.mxu0 0
      %5531 = vmatpush2.bf16.msra.mxu0 0
      %5532 = vmatprep.mubr.bf16.mxu0 0
      %5533 = vmatmul.mubr.bf16.gmra.mxu0 %v5426
      %v5534 = vpop.f32.mrf.mxu0
      %v5535 = vadd.f32 0.0, %v5534
      %v5536 = vpop.f32.mrf.mxu0
      %v5537 = vpop.f32.mrf.mxu0
      %v5538 = vadd.f32 0.0, %v5537
      %v5539 = vpop.f32.mrf.mxu0
      %5540 = vmatprep.mubr.bf16.mxu0 0
      %5541 = vmatmul.mubr.bf16.gmra.mxu0 %v5429
      %v5542 = vpop.f32.mrf.mxu0
      %v5543 = vadd.f32 0.0, %v5542
      %v5544 = vpop.f32.mrf.mxu0
      %v5545 = vpop.f32.mrf.mxu0
      %v5546 = vadd.f32 0.0, %v5545
      %v5547 = vpop.f32.mrf.mxu0
      %5548 = vmatprep.mubr.bf16.mxu0 0
      %5549 = vmatmul.mubr.bf16.gmra.mxu0 %v5432
      %v5550 = vpop.f32.mrf.mxu0
      %v5551 = vadd.f32 0.0, %v5550
      %v5552 = vpop.f32.mrf.mxu0
      %v5553 = vpop.f32.mrf.mxu0
      %v5554 = vadd.f32 0.0, %v5553
      %v5555 = vpop.f32.mrf.mxu0
      %5556 = vmatprep.mubr.bf16.mxu0 0
      %5557 = vmatmul.mubr.bf16.gmra.mxu0 %v5435
      %v5558 = vpop.f32.mrf.mxu0
      %v5559 = vadd.f32 0.0, %v5558
      %v5560 = vpop.f32.mrf.mxu0
      %v5561 = vpop.f32.mrf.mxu0
      %v5562 = vadd.f32 0.0, %v5561
      %v5563 = vpop.f32.mrf.mxu0
      %5564 = vmatprep.mubr.bf16.mxu0 0
      %5565 = vmatmul.mubr.bf16.gmra.mxu0 %v5438
      %v5566 = vpop.f32.mrf.mxu0
      %v5567 = vadd.f32 0.0, %v5566
      %v5568 = vpop.f32.mrf.mxu0
      %v5569 = vpop.f32.mrf.mxu0
      %v5570 = vadd.f32 0.0, %v5569
      %v5571 = vpop.f32.mrf.mxu0
      %5572 = vmatprep.mubr.bf16.mxu0 0
      %5573 = vmatmul.mubr.bf16.gmra.mxu0 %v5441
      %v5574 = vpop.f32.mrf.mxu0
      %v5575 = vadd.f32 0.0, %v5574
      %v5576 = vpop.f32.mrf.mxu0
      %v5577 = vpop.f32.mrf.mxu0
      %v5578 = vadd.f32 0.0, %v5577
      %v5579 = vpop.f32.mrf.mxu0
      %5580 = vmatprep.mubr.bf16.mxu0 0
      %5581 = vmatmul.mubr.bf16.gmra.mxu0 %v5444
      %v5582 = vpop.f32.mrf.mxu0
      %v5583 = vadd.f32 0.0, %v5582
      %v5584 = vpop.f32.mrf.mxu0
      %v5585 = vpop.f32.mrf.mxu0
      %v5586 = vadd.f32 0.0, %v5585
      %v5587 = vpop.f32.mrf.mxu0
      %5588 = vmatprep.mubr.bf16.mxu0 0
      %5589 = vmatmul.mubr.bf16.gmra.mxu0 %v5447
      %v5590 = vpop.f32.mrf.mxu0
      %v5591 = vadd.f32 0.0, %v5590
      %v5592 = vpop.f32.mrf.mxu0
      %v5593 = vpop.f32.mrf.mxu0
      %v5594 = vadd.f32 0.0, %v5593
      %v5595 = vpop.f32.mrf.mxu0
      %5596 = vmatprep.mubr.bf16.mxu0 0
      %5597 = vmatmul.mubr.bf16.gmra.mxu0 %v5450
      %v5598 = vpop.f32.mrf.mxu0
      %v5599 = vadd.f32 0.0, %v5598
      %v5600 = vpop.f32.mrf.mxu0
      %v5601 = vpop.f32.mrf.mxu0
      %v5602 = vadd.f32 0.0, %v5601
      %v5603 = vpop.f32.mrf.mxu0
      %5604 = vmatprep.mubr.bf16.mxu0 0
      %5605 = vmatmul.mubr.bf16.gmra.mxu0 %v5453
      %v5606 = vpop.f32.mrf.mxu0
      %v5607 = vadd.f32 0.0, %v5606
      %v5608 = vpop.f32.mrf.mxu0
      %v5609 = vpop.f32.mrf.mxu0
      %v5610 = vadd.f32 0.0, %v5609
      %v5611 = vpop.f32.mrf.mxu0
      %5612 = vmatprep.mubr.bf16.mxu0 0
      %5613 = vmatmul.mubr.bf16.gmra.mxu0 %v5456
      %v5614 = vpop.f32.mrf.mxu0
      %v5615 = vadd.f32 0.0, %v5614
      %v5616 = vpop.f32.mrf.mxu0
      %v5617 = vpop.f32.mrf.mxu0
      %v5618 = vadd.f32 0.0, %v5617
      %v5619 = vpop.f32.mrf.mxu0
      %5620 = vmatprep.mubr.bf16.mxu0 0
      %5621 = vmatmul.mubr.bf16.gmra.mxu0 %v5459
      %v5622 = vpop.f32.mrf.mxu0
      %v5623 = vadd.f32 0.0, %v5622
      %v5624 = vpop.f32.mrf.mxu0
      %v5625 = vpop.f32.mrf.mxu0
      %v5626 = vadd.f32 0.0, %v5625
      %v5627 = vpop.f32.mrf.mxu0
      %5628 = vmatprep.mubr.bf16.mxu0 0
      %5629 = vmatmul.mubr.bf16.gmra.mxu0 %v5462
      %v5630 = vpop.f32.mrf.mxu0
      %v5631 = vadd.f32 0.0, %v5630
      %v5632 = vpop.f32.mrf.mxu0
      %v5633 = vpop.f32.mrf.mxu0
      %v5634 = vadd.f32 0.0, %v5633
      %v5635 = vpop.f32.mrf.mxu0
      %5636 = vmatprep.mubr.bf16.mxu0 0
      %5637 = vmatmul.mubr.bf16.gmra.mxu0 %v5465
      %v5638 = vpop.f32.mrf.mxu0
      %v5639 = vadd.f32 0.0, %v5638
      %v5640 = vpop.f32.mrf.mxu0
      %v5641 = vpop.f32.mrf.mxu0
      %v5642 = vadd.f32 0.0, %v5641
      %v5643 = vpop.f32.mrf.mxu0
      %5644 = vmatprep.mubr.bf16.mxu0 0
      %5645 = vmatmul.mubr.bf16.gmra.mxu0 %v5468
      %v5646 = vpop.f32.mrf.mxu0
      %v5647 = vadd.f32 0.0, %v5646
      %v5648 = vpop.f32.mrf.mxu0
      %v5649 = vpop.f32.mrf.mxu0
      %v5650 = vadd.f32 0.0, %v5649
      %v5651 = vpop.f32.mrf.mxu0
      %5652 = vmatprep.mubr.bf16.mxu0 0
      %5653 = vmatmul.mubr.bf16.gmra.mxu0 %v5471
      %v5654 = vpop.f32.mrf.mxu0
      %v5655 = vadd.f32 0.0, %v5654
      %v5656 = vpop.f32.mrf.mxu0
      %v5657 = vpop.f32.mrf.mxu0
      %v5658 = vadd.f32 0.0, %v5657
      %v5659 = vpop.f32.mrf.mxu0
      %5660 = vmatprep.mubr.bf16.mxu0 0
      %5661 = vmatmul.mubr.bf16.gmra.mxu0 %v5474
      %v5662 = vpop.f32.mrf.mxu0
      %v5663 = vadd.f32 0.0, %v5662
      %v5664 = vpop.f32.mrf.mxu0
      %v5665 = vpop.f32.mrf.mxu0
      %v5666 = vadd.f32 0.0, %v5665
      %v5667 = vpop.f32.mrf.mxu0
      %5668 = vmatprep.mubr.bf16.mxu0 0
      %5669 = vmatmul.mubr.bf16.gmra.mxu0 %v5477
      %v5670 = vpop.f32.mrf.mxu0
      %v5671 = vadd.f32 0.0, %v5670
      %v5672 = vpop.f32.mrf.mxu0
      %v5673 = vpop.f32.mrf.mxu0
      %v5674 = vadd.f32 0.0, %v5673
      %v5675 = vpop.f32.mrf.mxu0
      %5676 = vmatprep.mubr.bf16.mxu0 0
      %5677 = vmatmul.mubr.bf16.gmra.mxu0 %v5480
      %v5678 = vpop.f32.mrf.mxu0
      %v5679 = vadd.f32 0.0, %v5678
      %v5680 = vpop.f32.mrf.mxu0
      %v5681 = vpop.f32.mrf.mxu0
      %v5682 = vadd.f32 0.0, %v5681
      %v5683 = vpop.f32.mrf.mxu0
      %5684 = vmatprep.mubr.bf16.mxu0 0
      %5685 = vmatmul.mubr.bf16.gmra.mxu0 %v5483
      %v5686 = vpop.f32.mrf.mxu0
      %v5687 = vadd.f32 0.0, %v5686
      %v5688 = vpop.f32.mrf.mxu0
      %v5689 = vpop.f32.mrf.mxu0
      %v5690 = vadd.f32 0.0, %v5689
      %v5691 = vpop.f32.mrf.mxu0
      %5692 = vmatprep.mubr.bf16.mxu0 0
      %5693 = vmatmul.mubr.bf16.gmra.mxu0 %v5486
      %v5694 = vpop.f32.mrf.mxu0
      %v5695 = vadd.f32 0.0, %v5694
      %v5696 = vpop.f32.mrf.mxu0
      %v5697 = vpop.f32.mrf.mxu0
      %v5698 = vadd.f32 0.0, %v5697
      %v5699 = vpop.f32.mrf.mxu0
      %5700 = vmatprep.mubr.bf16.mxu0 0
      %5701 = vmatmul.mubr.bf16.gmra.mxu0 %v5489
      %v5702 = vpop.f32.mrf.mxu0
      %v5703 = vadd.f32 0.0, %v5702
      %v5704 = vpop.f32.mrf.mxu0
      %v5705 = vpop.f32.mrf.mxu0
      %v5706 = vadd.f32 0.0, %v5705
      %v5707 = vpop.f32.mrf.mxu0
      %5708 = vmatprep.mubr.bf16.mxu0 0
      %5709 = vmatmul.mubr.bf16.gmra.mxu0 %v5492
      %v5710 = vpop.f32.mrf.mxu0
      %v5711 = vadd.f32 0.0, %v5710
      %v5712 = vpop.f32.mrf.mxu0
      %v5713 = vpop.f32.mrf.mxu0
      %v5714 = vadd.f32 0.0, %v5713
      %v5715 = vpop.f32.mrf.mxu0
      %5716 = vmatprep.mubr.bf16.mxu0 0
      %5717 = vmatmul.mubr.bf16.gmra.mxu0 %v5495
      %v5718 = vpop.f32.mrf.mxu0
      %v5719 = vadd.f32 0.0, %v5718
      %v5720 = vpop.f32.mrf.mxu0
      %v5721 = vpop.f32.mrf.mxu0
      %v5722 = vadd.f32 0.0, %v5721
      %v5723 = vpop.f32.mrf.mxu0
      %5724 = vdwg.mxu0
      %v5725 = vadd.f32 %v5303, %v5535
      %v5726 = vadd.f32 %v5304, %v5538
      %v5727 = vadd.f32 %v5305, %v5543
      %v5728 = vadd.f32 %v5306, %v5546
      %v5729 = vadd.f32 %v5307, %v5551
      %v5730 = vadd.f32 %v5308, %v5554
      %v5731 = vadd.f32 %v5309, %v5559
      %v5732 = vadd.f32 %v5310, %v5562
      %v5733 = vadd.f32 %v5311, %v5567
      %v5734 = vadd.f32 %v5312, %v5570
      %v5735 = vadd.f32 %v5313, %v5575
      %v5736 = vadd.f32 %v5314, %v5578
      %v5737 = vadd.f32 %v5315, %v5583
      %v5738 = vadd.f32 %v5316, %v5586
      %v5739 = vadd.f32 %v5317, %v5591
      %v5740 = vadd.f32 %v5318, %v5594
      %v5741 = vadd.f32 %v5319, %v5599
      %v5742 = vadd.f32 %v5320, %v5602
      %v5743 = vadd.f32 %v5321, %v5607
      %v5744 = vadd.f32 %v5322, %v5610
      %v5745 = vadd.f32 %v5323, %v5615
      %v5746 = vadd.f32 %v5324, %v5618
      %v5747 = vadd.f32 %v5325, %v5623
      %v5748 = vadd.f32 %v5326, %v5626
      %v5749 = vadd.f32 %v5327, %v5631
      %v5750 = vadd.f32 %v5328, %v5634
      %v5751 = vadd.f32 %v5329, %v5639
      %v5752 = vadd.f32 %v5330, %v5642
      %v5753 = vadd.f32 %v5331, %v5647
      %v5754 = vadd.f32 %v5332, %v5650
      %v5755 = vadd.f32 %v5333, %v5655
      %v5756 = vadd.f32 %v5334, %v5658
      %v5757 = vadd.f32 %v5335, %v5663
      %v5758 = vadd.f32 %v5336, %v5666
      %v5759 = vadd.f32 %v5337, %v5671
      %v5760 = vadd.f32 %v5338, %v5674
      %v5761 = vadd.f32 %v5339, %v5679
      %v5762 = vadd.f32 %v5340, %v5682
      %v5763 = vadd.f32 %v5341, %v5687
      %v5764 = vadd.f32 %v5342, %v5690
      %v5765 = vadd.f32 %v5343, %v5695
      %v5766 = vadd.f32 %v5344, %v5698
      %v5767 = vadd.f32 %v5345, %v5703
      %v5768 = vadd.f32 %v5346, %v5706
      %v5769 = vadd.f32 %v5347, %v5711
      %v5770 = vadd.f32 %v5348, %v5714
      %v5771 = vadd.f32 %v5349, %v5719
      %v5772 = vadd.f32 %v5350, %v5722
      %v5773 = vld [vmem:[#allocation2 + $0x38] sm:$0xff]
      %v5774 = vld [vmem:[#allocation2 + $0x40] sm:$0xff]
      %v5775 = vld [vmem:[#allocation2 + $0x48] sm:$0xff]
      %v5776 = vld [vmem:[#allocation2 + $0x50] sm:$0xff]
      %v5777 = vld [vmem:[#allocation2 + $0x58] sm:$0xff]
      %v5778 = vld [vmem:[#allocation2 + $0x60] sm:$0xff]
      %v5779 = vld [vmem:[#allocation2 + $0x68] sm:$0xff]
      %v5780 = vld [vmem:[#allocation2 + $0x70] sm:$0xff]
      %v5781 = vld [vmem:[#allocation2 + $0x78] sm:$0xff]
      %v5782 = vld [vmem:[#allocation2 + $0x80] sm:$0xff]
      %v5783 = vld [vmem:[#allocation2 + $0x88] sm:$0xff]
      %v5784 = vld [vmem:[#allocation2 + $0x90] sm:$0xff]
      %v5785 = vld [vmem:[#allocation2 + $0x98] sm:$0xff]
      %v5786 = vld [vmem:[#allocation2 + $0xa0] sm:$0xff]
      %v5787 = vld [vmem:[#allocation2 + $0xa8] sm:$0xff]
      %v5788 = vld [vmem:[#allocation2 + $0xb0] sm:$0xff]
      %v5789 = vld [vmem:[#allocation2 + $0xb8] sm:$0xff]
      %v5790 = vld [vmem:[#allocation2 + $0xc0] sm:$0xff]
      %v5791 = vld [vmem:[#allocation2 + $0xc8] sm:$0xff]
      %v5792 = vld [vmem:[#allocation2 + $0xd0] sm:$0xff]
      %v5793 = vld [vmem:[#allocation2 + $0xd8] sm:$0xff]
      %v5794 = vld [vmem:[#allocation2 + $0xe0] sm:$0xff]
      %v5795 = vld [vmem:[#allocation2 + $0xe8] sm:$0xff]
      %v5796 = vld [vmem:[#allocation2 + $0xf0] sm:$0xff]
      %v5797 = vld [vmem:[#allocation2 + $0xf8] sm:$0xff]
      %v5798 = vld [vmem:[#allocation2 + $0x100] sm:$0xff]
      %v5799 = vld [vmem:[#allocation2 + $0x108] sm:$0xff]
      %v5800 = vld [vmem:[#allocation2 + $0x110] sm:$0xff]
      %v5801 = vld [vmem:[#allocation2 + $0x118] sm:$0xff]
      %v5802 = vld [vmem:[#allocation2 + $0x120] sm:$0xff]
      %v5803 = vld [vmem:[#allocation2 + $0x128] sm:$0xff]
      %v5804 = vld [vmem:[#allocation2 + $0x130] sm:$0xff]
      %v5805 = vld [vmem:[#allocation2 + $0x138] sm:$0xff]
      %v5806 = vld [vmem:[#allocation2 + $0x140] sm:$0xff]
      %v5807 = vld [vmem:[#allocation2 + $0x148] sm:$0xff]
      %v5808 = vld [vmem:[#allocation2 + $0x150] sm:$0xff]
      %v5809 = vld [vmem:[#allocation2 + $0x158] sm:$0xff]
      %v5810 = vld [vmem:[#allocation2 + $0x160] sm:$0xff]
      %v5811 = vld [vmem:[#allocation2 + $0x168] sm:$0xff]
      %v5812 = vld [vmem:[#allocation2 + $0x170] sm:$0xff]
      %v5813 = vld [vmem:[#allocation2 + $0x178] sm:$0xff]
      %v5814 = vld [vmem:[#allocation2 + $0x180] sm:$0xff]
      %v5815 = vld [vmem:[#allocation2 + $0x188] sm:$0xff]
      %v5816 = vld [vmem:[#allocation2 + $0x190] sm:$0xff]
      %v5817 = vld [vmem:[#allocation2 + $0x198] sm:$0xff]
      %v5818 = vld [vmem:[#allocation2 + $0x1a0] sm:$0xff]
      %v5819 = vld [vmem:[#allocation2 + $0x1a8] sm:$0xff]
      %v5820 = vld [vmem:[#allocation2 + $0x1b0] sm:$0xff]
      %v5821 = vpack.c.bf16 %v5774, %v5773
      %v5822 = vpack.c.bf16 %v5776, %v5775
      %v5823 = vpack.c.bf16 %v5778, %v5777
      %v5824 = vpack.c.bf16 %v5780, %v5779
      %v5825 = vpack.c.bf16 %v5782, %v5781
      %v5826 = vpack.c.bf16 %v5784, %v5783
      %v5827 = vpack.c.bf16 %v5786, %v5785
      %v5828 = vpack.c.bf16 %v5788, %v5787
      %v5829 = vpack.c.bf16 %v5790, %v5789
      %v5830 = vpack.c.bf16 %v5792, %v5791
      %v5831 = vpack.c.bf16 %v5794, %v5793
      %v5832 = vpack.c.bf16 %v5796, %v5795
      %v5833 = vpack.c.bf16 %v5798, %v5797
      %v5834 = vpack.c.bf16 %v5800, %v5799
      %v5835 = vpack.c.bf16 %v5802, %v5801
      %v5836 = vpack.c.bf16 %v5804, %v5803
      %v5837 = vpack.c.bf16 %v5806, %v5805
      %v5838 = vpack.c.bf16 %v5808, %v5807
      %v5839 = vpack.c.bf16 %v5810, %v5809
      %v5840 = vpack.c.bf16 %v5812, %v5811
      %v5841 = vpack.c.bf16 %v5814, %v5813
      %v5842 = vpack.c.bf16 %v5816, %v5815
      %v5843 = vpack.c.bf16 %v5818, %v5817
      %v5844 = vpack.c.bf16 %v5820, %v5819
      %s5845 = scalar_lea.vmem %s8, 7
      %v5846 = vld [vmem:[%s5845] sm:$0x1]
      %v5848 = vsel %vm1900, %v5821, 0
      %v5851 = vsel %vm1900, %v5822, 0
      %v5854 = vsel %vm1900, %v5823, 0
      %v5857 = vsel %vm1900, %v5824, 0
      %v5860 = vsel %vm1900, %v5825, 0
      %v5863 = vsel %vm1900, %v5826, 0
      %v5866 = vsel %vm1900, %v5827, 0
      %v5869 = vsel %vm1900, %v5828, 0
      %v5872 = vsel %vm1900, %v5829, 0
      %v5875 = vsel %vm1900, %v5830, 0
      %v5878 = vsel %vm1900, %v5831, 0
      %v5881 = vsel %vm1900, %v5832, 0
      %v5884 = vsel %vm1900, %v5833, 0
      %v5887 = vsel %vm1900, %v5834, 0
      %v5890 = vsel %vm1900, %v5835, 0
      %v5893 = vsel %vm1900, %v5836, 0
      %v5896 = vsel %vm1900, %v5837, 0
      %v5899 = vsel %vm1900, %v5838, 0
      %v5902 = vsel %vm1900, %v5839, 0
      %v5905 = vsel %vm1900, %v5840, 0
      %v5908 = vsel %vm1900, %v5841, 0
      %v5911 = vsel %vm1900, %v5842, 0
      %v5914 = vsel %vm1900, %v5843, 0
      %v5917 = vsel %vm1900, %v5844, 0
      %v5920 = vsel %vm2014, %v5846, 0
      %5922 = vmatprep.subr.bf16.mxu0 0
      %5923 = vmatpush1.bf16.msra.mxu0 0
      %5924 = vmatprep.subr.bf16.mxu0 0
      %5925 = vmatpush1.bf16.msra.mxu0 0
      %5926 = vmatprep.subr.bf16.mxu0 0
      %5927 = vmatpush1.bf16.msra.mxu0 0
      %5928 = vmatprep.subr.bf16.mxu0 0
      %5929 = vmatpush1.bf16.msra.mxu0 0
      %5930 = vmatprep.subr.bf16.mxu0 0
      %5931 = vmatpush1.bf16.msra.mxu0 0
      %5932 = vmatprep.subr.bf16.mxu0 0
      %5933 = vmatpush1.bf16.msra.mxu0 0
      %5934 = vmatprep.subr.bf16.mxu0 0
      %5935 = vmatpush1.bf16.msra.mxu0 0
      %5936 = vmatprep.subr.bf16.mxu0 0
      %5937 = vmatpush1.bf16.msra.mxu0 %v5920
      %5938 = vmatprep.subr.bf16.mxu0 0
      %5939 = vmatpush2.bf16.msra.mxu0 0
      %5940 = vmatprep.subr.bf16.mxu0 0
      %5941 = vmatpush2.bf16.msra.mxu0 0
      %5942 = vmatprep.subr.bf16.mxu0 0
      %5943 = vmatpush2.bf16.msra.mxu0 0
      %5944 = vmatprep.subr.bf16.mxu0 0
      %5945 = vmatpush2.bf16.msra.mxu0 0
      %5946 = vmatprep.subr.bf16.mxu0 0
      %5947 = vmatpush2.bf16.msra.mxu0 0
      %5948 = vmatprep.subr.bf16.mxu0 0
      %5949 = vmatpush2.bf16.msra.mxu0 0
      %5950 = vmatprep.subr.bf16.mxu0 0
      %5951 = vmatpush2.bf16.msra.mxu0 0
      %5952 = vmatprep.subr.bf16.mxu0 0
      %5953 = vmatpush2.bf16.msra.mxu0 0
      %5954 = vmatprep.mubr.bf16.mxu0 0
      %5955 = vmatmul.mubr.bf16.gmra.mxu0 %v5848
      %v5956 = vpop.f32.mrf.mxu0
      %v5957 = vadd.f32 0.0, %v5956
      %v5958 = vpop.f32.mrf.mxu0
      %v5959 = vpop.f32.mrf.mxu0
      %v5960 = vadd.f32 0.0, %v5959
      %v5961 = vpop.f32.mrf.mxu0
      %5962 = vmatprep.mubr.bf16.mxu0 0
      %5963 = vmatmul.mubr.bf16.gmra.mxu0 %v5851
      %v5964 = vpop.f32.mrf.mxu0
      %v5965 = vadd.f32 0.0, %v5964
      %v5966 = vpop.f32.mrf.mxu0
      %v5967 = vpop.f32.mrf.mxu0
      %v5968 = vadd.f32 0.0, %v5967
      %v5969 = vpop.f32.mrf.mxu0
      %5970 = vmatprep.mubr.bf16.mxu0 0
      %5971 = vmatmul.mubr.bf16.gmra.mxu0 %v5854
      %v5972 = vpop.f32.mrf.mxu0
      %v5973 = vadd.f32 0.0, %v5972
      %v5974 = vpop.f32.mrf.mxu0
      %v5975 = vpop.f32.mrf.mxu0
      %v5976 = vadd.f32 0.0, %v5975
      %v5977 = vpop.f32.mrf.mxu0
      %5978 = vmatprep.mubr.bf16.mxu0 0
      %5979 = vmatmul.mubr.bf16.gmra.mxu0 %v5857
      %v5980 = vpop.f32.mrf.mxu0
      %v5981 = vadd.f32 0.0, %v5980
      %v5982 = vpop.f32.mrf.mxu0
      %v5983 = vpop.f32.mrf.mxu0
      %v5984 = vadd.f32 0.0, %v5983
      %v5985 = vpop.f32.mrf.mxu0
      %5986 = vmatprep.mubr.bf16.mxu0 0
      %5987 = vmatmul.mubr.bf16.gmra.mxu0 %v5860
      %v5988 = vpop.f32.mrf.mxu0
      %v5989 = vadd.f32 0.0, %v5988
      %v5990 = vpop.f32.mrf.mxu0
      %v5991 = vpop.f32.mrf.mxu0
      %v5992 = vadd.f32 0.0, %v5991
      %v5993 = vpop.f32.mrf.mxu0
      %5994 = vmatprep.mubr.bf16.mxu0 0
      %5995 = vmatmul.mubr.bf16.gmra.mxu0 %v5863
      %v5996 = vpop.f32.mrf.mxu0
      %v5997 = vadd.f32 0.0, %v5996
      %v5998 = vpop.f32.mrf.mxu0
      %v5999 = vpop.f32.mrf.mxu0
      %v6000 = vadd.f32 0.0, %v5999
      %v6001 = vpop.f32.mrf.mxu0
      %6002 = vmatprep.mubr.bf16.mxu0 0
      %6003 = vmatmul.mubr.bf16.gmra.mxu0 %v5866
      %v6004 = vpop.f32.mrf.mxu0
      %v6005 = vadd.f32 0.0, %v6004
      %v6006 = vpop.f32.mrf.mxu0
      %v6007 = vpop.f32.mrf.mxu0
      %v6008 = vadd.f32 0.0, %v6007
      %v6009 = vpop.f32.mrf.mxu0
      %6010 = vmatprep.mubr.bf16.mxu0 0
      %6011 = vmatmul.mubr.bf16.gmra.mxu0 %v5869
      %v6012 = vpop.f32.mrf.mxu0
      %v6013 = vadd.f32 0.0, %v6012
      %v6014 = vpop.f32.mrf.mxu0
      %v6015 = vpop.f32.mrf.mxu0
      %v6016 = vadd.f32 0.0, %v6015
      %v6017 = vpop.f32.mrf.mxu0
      %6018 = vmatprep.mubr.bf16.mxu0 0
      %6019 = vmatmul.mubr.bf16.gmra.mxu0 %v5872
      %v6020 = vpop.f32.mrf.mxu0
      %v6021 = vadd.f32 0.0, %v6020
      %v6022 = vpop.f32.mrf.mxu0
      %v6023 = vpop.f32.mrf.mxu0
      %v6024 = vadd.f32 0.0, %v6023
      %v6025 = vpop.f32.mrf.mxu0
      %6026 = vmatprep.mubr.bf16.mxu0 0
      %6027 = vmatmul.mubr.bf16.gmra.mxu0 %v5875
      %v6028 = vpop.f32.mrf.mxu0
      %v6029 = vadd.f32 0.0, %v6028
      %v6030 = vpop.f32.mrf.mxu0
      %v6031 = vpop.f32.mrf.mxu0
      %v6032 = vadd.f32 0.0, %v6031
      %v6033 = vpop.f32.mrf.mxu0
      %6034 = vmatprep.mubr.bf16.mxu0 0
      %6035 = vmatmul.mubr.bf16.gmra.mxu0 %v5878
      %v6036 = vpop.f32.mrf.mxu0
      %v6037 = vadd.f32 0.0, %v6036
      %v6038 = vpop.f32.mrf.mxu0
      %v6039 = vpop.f32.mrf.mxu0
      %v6040 = vadd.f32 0.0, %v6039
      %v6041 = vpop.f32.mrf.mxu0
      %6042 = vmatprep.mubr.bf16.mxu0 0
      %6043 = vmatmul.mubr.bf16.gmra.mxu0 %v5881
      %v6044 = vpop.f32.mrf.mxu0
      %v6045 = vadd.f32 0.0, %v6044
      %v6046 = vpop.f32.mrf.mxu0
      %v6047 = vpop.f32.mrf.mxu0
      %v6048 = vadd.f32 0.0, %v6047
      %v6049 = vpop.f32.mrf.mxu0
      %6050 = vmatprep.mubr.bf16.mxu0 0
      %6051 = vmatmul.mubr.bf16.gmra.mxu0 %v5884
      %v6052 = vpop.f32.mrf.mxu0
      %v6053 = vadd.f32 0.0, %v6052
      %v6054 = vpop.f32.mrf.mxu0
      %v6055 = vpop.f32.mrf.mxu0
      %v6056 = vadd.f32 0.0, %v6055
      %v6057 = vpop.f32.mrf.mxu0
      %6058 = vmatprep.mubr.bf16.mxu0 0
      %6059 = vmatmul.mubr.bf16.gmra.mxu0 %v5887
      %v6060 = vpop.f32.mrf.mxu0
      %v6061 = vadd.f32 0.0, %v6060
      %v6062 = vpop.f32.mrf.mxu0
      %v6063 = vpop.f32.mrf.mxu0
      %v6064 = vadd.f32 0.0, %v6063
      %v6065 = vpop.f32.mrf.mxu0
      %6066 = vmatprep.mubr.bf16.mxu0 0
      %6067 = vmatmul.mubr.bf16.gmra.mxu0 %v5890
      %v6068 = vpop.f32.mrf.mxu0
      %v6069 = vadd.f32 0.0, %v6068
      %v6070 = vpop.f32.mrf.mxu0
      %v6071 = vpop.f32.mrf.mxu0
      %v6072 = vadd.f32 0.0, %v6071
      %v6073 = vpop.f32.mrf.mxu0
      %6074 = vmatprep.mubr.bf16.mxu0 0
      %6075 = vmatmul.mubr.bf16.gmra.mxu0 %v5893
      %v6076 = vpop.f32.mrf.mxu0
      %v6077 = vadd.f32 0.0, %v6076
      %v6078 = vpop.f32.mrf.mxu0
      %v6079 = vpop.f32.mrf.mxu0
      %v6080 = vadd.f32 0.0, %v6079
      %v6081 = vpop.f32.mrf.mxu0
      %6082 = vmatprep.mubr.bf16.mxu0 0
      %6083 = vmatmul.mubr.bf16.gmra.mxu0 %v5896
      %v6084 = vpop.f32.mrf.mxu0
      %v6085 = vadd.f32 0.0, %v6084
      %v6086 = vpop.f32.mrf.mxu0
      %v6087 = vpop.f32.mrf.mxu0
      %v6088 = vadd.f32 0.0, %v6087
      %v6089 = vpop.f32.mrf.mxu0
      %6090 = vmatprep.mubr.bf16.mxu0 0
      %6091 = vmatmul.mubr.bf16.gmra.mxu0 %v5899
      %v6092 = vpop.f32.mrf.mxu0
      %v6093 = vadd.f32 0.0, %v6092
      %v6094 = vpop.f32.mrf.mxu0
      %v6095 = vpop.f32.mrf.mxu0
      %v6096 = vadd.f32 0.0, %v6095
      %v6097 = vpop.f32.mrf.mxu0
      %6098 = vmatprep.mubr.bf16.mxu0 0
      %6099 = vmatmul.mubr.bf16.gmra.mxu0 %v5902
      %v6100 = vpop.f32.mrf.mxu0
      %v6101 = vadd.f32 0.0, %v6100
      %v6102 = vpop.f32.mrf.mxu0
      %v6103 = vpop.f32.mrf.mxu0
      %v6104 = vadd.f32 0.0, %v6103
      %v6105 = vpop.f32.mrf.mxu0
      %6106 = vmatprep.mubr.bf16.mxu0 0
      %6107 = vmatmul.mubr.bf16.gmra.mxu0 %v5905
      %v6108 = vpop.f32.mrf.mxu0
      %v6109 = vadd.f32 0.0, %v6108
      %v6110 = vpop.f32.mrf.mxu0
      %v6111 = vpop.f32.mrf.mxu0
      %v6112 = vadd.f32 0.0, %v6111
      %v6113 = vpop.f32.mrf.mxu0
      %6114 = vmatprep.mubr.bf16.mxu0 0
      %6115 = vmatmul.mubr.bf16.gmra.mxu0 %v5908
      %v6116 = vpop.f32.mrf.mxu0
      %v6117 = vadd.f32 0.0, %v6116
      %v6118 = vpop.f32.mrf.mxu0
      %v6119 = vpop.f32.mrf.mxu0
      %v6120 = vadd.f32 0.0, %v6119
      %v6121 = vpop.f32.mrf.mxu0
      %6122 = vmatprep.mubr.bf16.mxu0 0
      %6123 = vmatmul.mubr.bf16.gmra.mxu0 %v5911
      %v6124 = vpop.f32.mrf.mxu0
      %v6125 = vadd.f32 0.0, %v6124
      %v6126 = vpop.f32.mrf.mxu0
      %v6127 = vpop.f32.mrf.mxu0
      %v6128 = vadd.f32 0.0, %v6127
      %v6129 = vpop.f32.mrf.mxu0
      %6130 = vmatprep.mubr.bf16.mxu0 0
      %6131 = vmatmul.mubr.bf16.gmra.mxu0 %v5914
      %v6132 = vpop.f32.mrf.mxu0
      %v6133 = vadd.f32 0.0, %v6132
      %v6134 = vpop.f32.mrf.mxu0
      %v6135 = vpop.f32.mrf.mxu0
      %v6136 = vadd.f32 0.0, %v6135
      %v6137 = vpop.f32.mrf.mxu0
      %6138 = vmatprep.mubr.bf16.mxu0 0
      %6139 = vmatmul.mubr.bf16.gmra.mxu0 %v5917
      %v6140 = vpop.f32.mrf.mxu0
      %v6141 = vadd.f32 0.0, %v6140
      %v6142 = vpop.f32.mrf.mxu0
      %v6143 = vpop.f32.mrf.mxu0
      %v6144 = vadd.f32 0.0, %v6143
      %v6145 = vpop.f32.mrf.mxu0
      %6146 = vdwg.mxu0
      %v6147 = vadd.f32 %v5725, %v5957
      %v6148 = vadd.f32 %v5726, %v5960
      %v6149 = vadd.f32 %v5727, %v5965
      %v6150 = vadd.f32 %v5728, %v5968
      %v6151 = vadd.f32 %v5729, %v5973
      %v6152 = vadd.f32 %v5730, %v5976
      %v6153 = vadd.f32 %v5731, %v5981
      %v6154 = vadd.f32 %v5732, %v5984
      %v6155 = vadd.f32 %v5733, %v5989
      %v6156 = vadd.f32 %v5734, %v5992
      %v6157 = vadd.f32 %v5735, %v5997
      %v6158 = vadd.f32 %v5736, %v6000
      %v6159 = vadd.f32 %v5737, %v6005
      %v6160 = vadd.f32 %v5738, %v6008
      %v6161 = vadd.f32 %v5739, %v6013
      %v6162 = vadd.f32 %v5740, %v6016
      %v6163 = vadd.f32 %v5741, %v6021
      %v6164 = vadd.f32 %v5742, %v6024
      %v6165 = vadd.f32 %v5743, %v6029
      %v6166 = vadd.f32 %v5744, %v6032
      %v6167 = vadd.f32 %v5745, %v6037
      %v6168 = vadd.f32 %v5746, %v6040
      %v6169 = vadd.f32 %v5747, %v6045
      %v6170 = vadd.f32 %v5748, %v6048
      %v6171 = vadd.f32 %v5749, %v6053
      %v6172 = vadd.f32 %v5750, %v6056
      %v6173 = vadd.f32 %v5751, %v6061
      %v6174 = vadd.f32 %v5752, %v6064
      %v6175 = vadd.f32 %v5753, %v6069
      %v6176 = vadd.f32 %v5754, %v6072
      %v6177 = vadd.f32 %v5755, %v6077
      %v6178 = vadd.f32 %v5756, %v6080
      %v6179 = vadd.f32 %v5757, %v6085
      %v6180 = vadd.f32 %v5758, %v6088
      %v6181 = vadd.f32 %v5759, %v6093
      %v6182 = vadd.f32 %v5760, %v6096
      %v6183 = vadd.f32 %v5761, %v6101
      %v6184 = vadd.f32 %v5762, %v6104
      %v6185 = vadd.f32 %v5763, %v6109
      %v6186 = vadd.f32 %v5764, %v6112
      %v6187 = vadd.f32 %v5765, %v6117
      %v6188 = vadd.f32 %v5766, %v6120
      %v6189 = vadd.f32 %v5767, %v6125
      %v6190 = vadd.f32 %v5768, %v6128
      %v6191 = vadd.f32 %v5769, %v6133
      %v6192 = vadd.f32 %v5770, %v6136
      %v6193 = vadd.f32 %v5771, %v6141
      %v6194 = vadd.f32 %v5772, %v6144
      %v6195 = vld [vmem:[#allocation2 + $0x39] sm:$0xff]
      %v6196 = vld [vmem:[#allocation2 + $0x41] sm:$0xff]
      %v6197 = vld [vmem:[#allocation2 + $0x49] sm:$0xff]
      %v6198 = vld [vmem:[#allocation2 + $0x51] sm:$0xff]
      %v6199 = vld [vmem:[#allocation2 + $0x59] sm:$0xff]
      %v6200 = vld [vmem:[#allocation2 + $0x61] sm:$0xff]
      %v6201 = vld [vmem:[#allocation2 + $0x69] sm:$0xff]
      %v6202 = vld [vmem:[#allocation2 + $0x71] sm:$0xff]
      %v6203 = vld [vmem:[#allocation2 + $0x79] sm:$0xff]
      %v6204 = vld [vmem:[#allocation2 + $0x81] sm:$0xff]
      %v6205 = vld [vmem:[#allocation2 + $0x89] sm:$0xff]
      %v6206 = vld [vmem:[#allocation2 + $0x91] sm:$0xff]
      %v6207 = vld [vmem:[#allocation2 + $0x99] sm:$0xff]
      %v6208 = vld [vmem:[#allocation2 + $0xa1] sm:$0xff]
      %v6209 = vld [vmem:[#allocation2 + $0xa9] sm:$0xff]
      %v6210 = vld [vmem:[#allocation2 + $0xb1] sm:$0xff]
      %v6211 = vld [vmem:[#allocation2 + $0xb9] sm:$0xff]
      %v6212 = vld [vmem:[#allocation2 + $0xc1] sm:$0xff]
      %v6213 = vld [vmem:[#allocation2 + $0xc9] sm:$0xff]
      %v6214 = vld [vmem:[#allocation2 + $0xd1] sm:$0xff]
      %v6215 = vld [vmem:[#allocation2 + $0xd9] sm:$0xff]
      %v6216 = vld [vmem:[#allocation2 + $0xe1] sm:$0xff]
      %v6217 = vld [vmem:[#allocation2 + $0xe9] sm:$0xff]
      %v6218 = vld [vmem:[#allocation2 + $0xf1] sm:$0xff]
      %v6219 = vld [vmem:[#allocation2 + $0xf9] sm:$0xff]
      %v6220 = vld [vmem:[#allocation2 + $0x101] sm:$0xff]
      %v6221 = vld [vmem:[#allocation2 + $0x109] sm:$0xff]
      %v6222 = vld [vmem:[#allocation2 + $0x111] sm:$0xff]
      %v6223 = vld [vmem:[#allocation2 + $0x119] sm:$0xff]
      %v6224 = vld [vmem:[#allocation2 + $0x121] sm:$0xff]
      %v6225 = vld [vmem:[#allocation2 + $0x129] sm:$0xff]
      %v6226 = vld [vmem:[#allocation2 + $0x131] sm:$0xff]
      %v6227 = vld [vmem:[#allocation2 + $0x139] sm:$0xff]
      %v6228 = vld [vmem:[#allocation2 + $0x141] sm:$0xff]
      %v6229 = vld [vmem:[#allocation2 + $0x149] sm:$0xff]
      %v6230 = vld [vmem:[#allocation2 + $0x151] sm:$0xff]
      %v6231 = vld [vmem:[#allocation2 + $0x159] sm:$0xff]
      %v6232 = vld [vmem:[#allocation2 + $0x161] sm:$0xff]
      %v6233 = vld [vmem:[#allocation2 + $0x169] sm:$0xff]
      %v6234 = vld [vmem:[#allocation2 + $0x171] sm:$0xff]
      %v6235 = vld [vmem:[#allocation2 + $0x179] sm:$0xff]
      %v6236 = vld [vmem:[#allocation2 + $0x181] sm:$0xff]
      %v6237 = vld [vmem:[#allocation2 + $0x189] sm:$0xff]
      %v6238 = vld [vmem:[#allocation2 + $0x191] sm:$0xff]
      %v6239 = vld [vmem:[#allocation2 + $0x199] sm:$0xff]
      %v6240 = vld [vmem:[#allocation2 + $0x1a1] sm:$0xff]
      %v6241 = vld [vmem:[#allocation2 + $0x1a9] sm:$0xff]
      %v6242 = vld [vmem:[#allocation2 + $0x1b1] sm:$0xff]
      %v6243 = vpack.c.bf16 %v6196, %v6195
      %v6244 = vpack.c.bf16 %v6198, %v6197
      %v6245 = vpack.c.bf16 %v6200, %v6199
      %v6246 = vpack.c.bf16 %v6202, %v6201
      %v6247 = vpack.c.bf16 %v6204, %v6203
      %v6248 = vpack.c.bf16 %v6206, %v6205
      %v6249 = vpack.c.bf16 %v6208, %v6207
      %v6250 = vpack.c.bf16 %v6210, %v6209
      %v6251 = vpack.c.bf16 %v6212, %v6211
      %v6252 = vpack.c.bf16 %v6214, %v6213
      %v6253 = vpack.c.bf16 %v6216, %v6215
      %v6254 = vpack.c.bf16 %v6218, %v6217
      %v6255 = vpack.c.bf16 %v6220, %v6219
      %v6256 = vpack.c.bf16 %v6222, %v6221
      %v6257 = vpack.c.bf16 %v6224, %v6223
      %v6258 = vpack.c.bf16 %v6226, %v6225
      %v6259 = vpack.c.bf16 %v6228, %v6227
      %v6260 = vpack.c.bf16 %v6230, %v6229
      %v6261 = vpack.c.bf16 %v6232, %v6231
      %v6262 = vpack.c.bf16 %v6234, %v6233
      %v6263 = vpack.c.bf16 %v6236, %v6235
      %v6264 = vpack.c.bf16 %v6238, %v6237
      %v6265 = vpack.c.bf16 %v6240, %v6239
      %v6266 = vpack.c.bf16 %v6242, %v6241
      %s6267 = scalar_lea.vmem %s8, 8
      %v6268 = vld [vmem:[%s6267] sm:$0x1]
      %v6270 = vsel %vm1900, %v6243, 0
      %v6273 = vsel %vm1900, %v6244, 0
      %v6276 = vsel %vm1900, %v6245, 0
      %v6279 = vsel %vm1900, %v6246, 0
      %v6282 = vsel %vm1900, %v6247, 0
      %v6285 = vsel %vm1900, %v6248, 0
      %v6288 = vsel %vm1900, %v6249, 0
      %v6291 = vsel %vm1900, %v6250, 0
      %v6294 = vsel %vm1900, %v6251, 0
      %v6297 = vsel %vm1900, %v6252, 0
      %v6300 = vsel %vm1900, %v6253, 0
      %v6303 = vsel %vm1900, %v6254, 0
      %v6306 = vsel %vm1900, %v6255, 0
      %v6309 = vsel %vm1900, %v6256, 0
      %v6312 = vsel %vm1900, %v6257, 0
      %v6315 = vsel %vm1900, %v6258, 0
      %v6318 = vsel %vm1900, %v6259, 0
      %v6321 = vsel %vm1900, %v6260, 0
      %v6324 = vsel %vm1900, %v6261, 0
      %v6327 = vsel %vm1900, %v6262, 0
      %v6330 = vsel %vm1900, %v6263, 0
      %v6333 = vsel %vm1900, %v6264, 0
      %v6336 = vsel %vm1900, %v6265, 0
      %v6339 = vsel %vm1900, %v6266, 0
      %v6342 = vsel %vm2014, %v6268, 0
      %6344 = vmatprep.subr.bf16.mxu0 0
      %6345 = vmatpush1.bf16.msra.mxu0 0
      %6346 = vmatprep.subr.bf16.mxu0 0
      %6347 = vmatpush1.bf16.msra.mxu0 0
      %6348 = vmatprep.subr.bf16.mxu0 0
      %6349 = vmatpush1.bf16.msra.mxu0 0
      %6350 = vmatprep.subr.bf16.mxu0 0
      %6351 = vmatpush1.bf16.msra.mxu0 0
      %6352 = vmatprep.subr.bf16.mxu0 0
      %6353 = vmatpush1.bf16.msra.mxu0 0
      %6354 = vmatprep.subr.bf16.mxu0 0
      %6355 = vmatpush1.bf16.msra.mxu0 0
      %6356 = vmatprep.subr.bf16.mxu0 0
      %6357 = vmatpush1.bf16.msra.mxu0 0
      %6358 = vmatprep.subr.bf16.mxu0 0
      %6359 = vmatpush1.bf16.msra.mxu0 %v6342
      %6360 = vmatprep.subr.bf16.mxu0 0
      %6361 = vmatpush2.bf16.msra.mxu0 0
      %6362 = vmatprep.subr.bf16.mxu0 0
      %6363 = vmatpush2.bf16.msra.mxu0 0
      %6364 = vmatprep.subr.bf16.mxu0 0
      %6365 = vmatpush2.bf16.msra.mxu0 0
      %6366 = vmatprep.subr.bf16.mxu0 0
      %6367 = vmatpush2.bf16.msra.mxu0 0
      %6368 = vmatprep.subr.bf16.mxu0 0
      %6369 = vmatpush2.bf16.msra.mxu0 0
      %6370 = vmatprep.subr.bf16.mxu0 0
      %6371 = vmatpush2.bf16.msra.mxu0 0
      %6372 = vmatprep.subr.bf16.mxu0 0
      %6373 = vmatpush2.bf16.msra.mxu0 0
      %6374 = vmatprep.subr.bf16.mxu0 0
      %6375 = vmatpush2.bf16.msra.mxu0 0
      %6376 = vmatprep.mubr.bf16.mxu0 0
      %6377 = vmatmul.mubr.bf16.gmra.mxu0 %v6270
      %v6378 = vpop.f32.mrf.mxu0
      %v6379 = vadd.f32 0.0, %v6378
      %v6380 = vpop.f32.mrf.mxu0
      %v6381 = vpop.f32.mrf.mxu0
      %v6382 = vadd.f32 0.0, %v6381
      %v6383 = vpop.f32.mrf.mxu0
      %6384 = vmatprep.mubr.bf16.mxu0 0
      %6385 = vmatmul.mubr.bf16.gmra.mxu0 %v6273
      %v6386 = vpop.f32.mrf.mxu0
      %v6387 = vadd.f32 0.0, %v6386
      %v6388 = vpop.f32.mrf.mxu0
      %v6389 = vpop.f32.mrf.mxu0
      %v6390 = vadd.f32 0.0, %v6389
      %v6391 = vpop.f32.mrf.mxu0
      %6392 = vmatprep.mubr.bf16.mxu0 0
      %6393 = vmatmul.mubr.bf16.gmra.mxu0 %v6276
      %v6394 = vpop.f32.mrf.mxu0
      %v6395 = vadd.f32 0.0, %v6394
      %v6396 = vpop.f32.mrf.mxu0
      %v6397 = vpop.f32.mrf.mxu0
      %v6398 = vadd.f32 0.0, %v6397
      %v6399 = vpop.f32.mrf.mxu0
      %6400 = vmatprep.mubr.bf16.mxu0 0
      %6401 = vmatmul.mubr.bf16.gmra.mxu0 %v6279
      %v6402 = vpop.f32.mrf.mxu0
      %v6403 = vadd.f32 0.0, %v6402
      %v6404 = vpop.f32.mrf.mxu0
      %v6405 = vpop.f32.mrf.mxu0
      %v6406 = vadd.f32 0.0, %v6405
      %v6407 = vpop.f32.mrf.mxu0
      %6408 = vmatprep.mubr.bf16.mxu0 0
      %6409 = vmatmul.mubr.bf16.gmra.mxu0 %v6282
      %v6410 = vpop.f32.mrf.mxu0
      %v6411 = vadd.f32 0.0, %v6410
      %v6412 = vpop.f32.mrf.mxu0
      %v6413 = vpop.f32.mrf.mxu0
      %v6414 = vadd.f32 0.0, %v6413
      %v6415 = vpop.f32.mrf.mxu0
      %6416 = vmatprep.mubr.bf16.mxu0 0
      %6417 = vmatmul.mubr.bf16.gmra.mxu0 %v6285
      %v6418 = vpop.f32.mrf.mxu0
      %v6419 = vadd.f32 0.0, %v6418
      %v6420 = vpop.f32.mrf.mxu0
      %v6421 = vpop.f32.mrf.mxu0
      %v6422 = vadd.f32 0.0, %v6421
      %v6423 = vpop.f32.mrf.mxu0
      %6424 = vmatprep.mubr.bf16.mxu0 0
      %6425 = vmatmul.mubr.bf16.gmra.mxu0 %v6288
      %v6426 = vpop.f32.mrf.mxu0
      %v6427 = vadd.f32 0.0, %v6426
      %v6428 = vpop.f32.mrf.mxu0
      %v6429 = vpop.f32.mrf.mxu0
      %v6430 = vadd.f32 0.0, %v6429
      %v6431 = vpop.f32.mrf.mxu0
      %6432 = vmatprep.mubr.bf16.mxu0 0
      %6433 = vmatmul.mubr.bf16.gmra.mxu0 %v6291
      %v6434 = vpop.f32.mrf.mxu0
      %v6435 = vadd.f32 0.0, %v6434
      %v6436 = vpop.f32.mrf.mxu0
      %v6437 = vpop.f32.mrf.mxu0
      %v6438 = vadd.f32 0.0, %v6437
      %v6439 = vpop.f32.mrf.mxu0
      %6440 = vmatprep.mubr.bf16.mxu0 0
      %6441 = vmatmul.mubr.bf16.gmra.mxu0 %v6294
      %v6442 = vpop.f32.mrf.mxu0
      %v6443 = vadd.f32 0.0, %v6442
      %v6444 = vpop.f32.mrf.mxu0
      %v6445 = vpop.f32.mrf.mxu0
      %v6446 = vadd.f32 0.0, %v6445
      %v6447 = vpop.f32.mrf.mxu0
      %6448 = vmatprep.mubr.bf16.mxu0 0
      %6449 = vmatmul.mubr.bf16.gmra.mxu0 %v6297
      %v6450 = vpop.f32.mrf.mxu0
      %v6451 = vadd.f32 0.0, %v6450
      %v6452 = vpop.f32.mrf.mxu0
      %v6453 = vpop.f32.mrf.mxu0
      %v6454 = vadd.f32 0.0, %v6453
      %v6455 = vpop.f32.mrf.mxu0
      %6456 = vmatprep.mubr.bf16.mxu0 0
      %6457 = vmatmul.mubr.bf16.gmra.mxu0 %v6300
      %v6458 = vpop.f32.mrf.mxu0
      %v6459 = vadd.f32 0.0, %v6458
      %v6460 = vpop.f32.mrf.mxu0
      %v6461 = vpop.f32.mrf.mxu0
      %v6462 = vadd.f32 0.0, %v6461
      %v6463 = vpop.f32.mrf.mxu0
      %6464 = vmatprep.mubr.bf16.mxu0 0
      %6465 = vmatmul.mubr.bf16.gmra.mxu0 %v6303
      %v6466 = vpop.f32.mrf.mxu0
      %v6467 = vadd.f32 0.0, %v6466
      %v6468 = vpop.f32.mrf.mxu0
      %v6469 = vpop.f32.mrf.mxu0
      %v6470 = vadd.f32 0.0, %v6469
      %v6471 = vpop.f32.mrf.mxu0
      %6472 = vmatprep.mubr.bf16.mxu0 0
      %6473 = vmatmul.mubr.bf16.gmra.mxu0 %v6306
      %v6474 = vpop.f32.mrf.mxu0
      %v6475 = vadd.f32 0.0, %v6474
      %v6476 = vpop.f32.mrf.mxu0
      %v6477 = vpop.f32.mrf.mxu0
      %v6478 = vadd.f32 0.0, %v6477
      %v6479 = vpop.f32.mrf.mxu0
      %6480 = vmatprep.mubr.bf16.mxu0 0
      %6481 = vmatmul.mubr.bf16.gmra.mxu0 %v6309
      %v6482 = vpop.f32.mrf.mxu0
      %v6483 = vadd.f32 0.0, %v6482
      %v6484 = vpop.f32.mrf.mxu0
      %v6485 = vpop.f32.mrf.mxu0
      %v6486 = vadd.f32 0.0, %v6485
      %v6487 = vpop.f32.mrf.mxu0
      %6488 = vmatprep.mubr.bf16.mxu0 0
      %6489 = vmatmul.mubr.bf16.gmra.mxu0 %v6312
      %v6490 = vpop.f32.mrf.mxu0
      %v6491 = vadd.f32 0.0, %v6490
      %v6492 = vpop.f32.mrf.mxu0
      %v6493 = vpop.f32.mrf.mxu0
      %v6494 = vadd.f32 0.0, %v6493
      %v6495 = vpop.f32.mrf.mxu0
      %6496 = vmatprep.mubr.bf16.mxu0 0
      %6497 = vmatmul.mubr.bf16.gmra.mxu0 %v6315
      %v6498 = vpop.f32.mrf.mxu0
      %v6499 = vadd.f32 0.0, %v6498
      %v6500 = vpop.f32.mrf.mxu0
      %v6501 = vpop.f32.mrf.mxu0
      %v6502 = vadd.f32 0.0, %v6501
      %v6503 = vpop.f32.mrf.mxu0
      %6504 = vmatprep.mubr.bf16.mxu0 0
      %6505 = vmatmul.mubr.bf16.gmra.mxu0 %v6318
      %v6506 = vpop.f32.mrf.mxu0
      %v6507 = vadd.f32 0.0, %v6506
      %v6508 = vpop.f32.mrf.mxu0
      %v6509 = vpop.f32.mrf.mxu0
      %v6510 = vadd.f32 0.0, %v6509
      %v6511 = vpop.f32.mrf.mxu0
      %6512 = vmatprep.mubr.bf16.mxu0 0
      %6513 = vmatmul.mubr.bf16.gmra.mxu0 %v6321
      %v6514 = vpop.f32.mrf.mxu0
      %v6515 = vadd.f32 0.0, %v6514
      %v6516 = vpop.f32.mrf.mxu0
      %v6517 = vpop.f32.mrf.mxu0
      %v6518 = vadd.f32 0.0, %v6517
      %v6519 = vpop.f32.mrf.mxu0
      %6520 = vmatprep.mubr.bf16.mxu0 0
      %6521 = vmatmul.mubr.bf16.gmra.mxu0 %v6324
      %v6522 = vpop.f32.mrf.mxu0
      %v6523 = vadd.f32 0.0, %v6522
      %v6524 = vpop.f32.mrf.mxu0
      %v6525 = vpop.f32.mrf.mxu0
      %v6526 = vadd.f32 0.0, %v6525
      %v6527 = vpop.f32.mrf.mxu0
      %6528 = vmatprep.mubr.bf16.mxu0 0
      %6529 = vmatmul.mubr.bf16.gmra.mxu0 %v6327
      %v6530 = vpop.f32.mrf.mxu0
      %v6531 = vadd.f32 0.0, %v6530
      %v6532 = vpop.f32.mrf.mxu0
      %v6533 = vpop.f32.mrf.mxu0
      %v6534 = vadd.f32 0.0, %v6533
      %v6535 = vpop.f32.mrf.mxu0
      %6536 = vmatprep.mubr.bf16.mxu0 0
      %6537 = vmatmul.mubr.bf16.gmra.mxu0 %v6330
      %v6538 = vpop.f32.mrf.mxu0
      %v6539 = vadd.f32 0.0, %v6538
      %v6540 = vpop.f32.mrf.mxu0
      %v6541 = vpop.f32.mrf.mxu0
      %v6542 = vadd.f32 0.0, %v6541
      %v6543 = vpop.f32.mrf.mxu0
      %6544 = vmatprep.mubr.bf16.mxu0 0
      %6545 = vmatmul.mubr.bf16.gmra.mxu0 %v6333
      %v6546 = vpop.f32.mrf.mxu0
      %v6547 = vadd.f32 0.0, %v6546
      %v6548 = vpop.f32.mrf.mxu0
      %v6549 = vpop.f32.mrf.mxu0
      %v6550 = vadd.f32 0.0, %v6549
      %v6551 = vpop.f32.mrf.mxu0
      %6552 = vmatprep.mubr.bf16.mxu0 0
      %6553 = vmatmul.mubr.bf16.gmra.mxu0 %v6336
      %v6554 = vpop.f32.mrf.mxu0
      %v6555 = vadd.f32 0.0, %v6554
      %v6556 = vpop.f32.mrf.mxu0
      %v6557 = vpop.f32.mrf.mxu0
      %v6558 = vadd.f32 0.0, %v6557
      %v6559 = vpop.f32.mrf.mxu0
      %6560 = vmatprep.mubr.bf16.mxu0 0
      %6561 = vmatmul.mubr.bf16.gmra.mxu0 %v6339
      %v6562 = vpop.f32.mrf.mxu0
      %v6563 = vadd.f32 0.0, %v6562
      %v6564 = vpop.f32.mrf.mxu0
      %v6565 = vpop.f32.mrf.mxu0
      %v6566 = vadd.f32 0.0, %v6565
      %v6567 = vpop.f32.mrf.mxu0
      %6568 = vdwg.mxu0
      %v6569 = vadd.f32 %v6147, %v6379
      %v6570 = vadd.f32 %v6148, %v6382
      %v6571 = vadd.f32 %v6149, %v6387
      %v6572 = vadd.f32 %v6150, %v6390
      %v6573 = vadd.f32 %v6151, %v6395
      %v6574 = vadd.f32 %v6152, %v6398
      %v6575 = vadd.f32 %v6153, %v6403
      %v6576 = vadd.f32 %v6154, %v6406
      %v6577 = vadd.f32 %v6155, %v6411
      %v6578 = vadd.f32 %v6156, %v6414
      %v6579 = vadd.f32 %v6157, %v6419
      %v6580 = vadd.f32 %v6158, %v6422
      %v6581 = vadd.f32 %v6159, %v6427
      %v6582 = vadd.f32 %v6160, %v6430
      %v6583 = vadd.f32 %v6161, %v6435
      %v6584 = vadd.f32 %v6162, %v6438
      %v6585 = vadd.f32 %v6163, %v6443
      %v6586 = vadd.f32 %v6164, %v6446
      %v6587 = vadd.f32 %v6165, %v6451
      %v6588 = vadd.f32 %v6166, %v6454
      %v6589 = vadd.f32 %v6167, %v6459
      %v6590 = vadd.f32 %v6168, %v6462
      %v6591 = vadd.f32 %v6169, %v6467
      %v6592 = vadd.f32 %v6170, %v6470
      %v6593 = vadd.f32 %v6171, %v6475
      %v6594 = vadd.f32 %v6172, %v6478
      %v6595 = vadd.f32 %v6173, %v6483
      %v6596 = vadd.f32 %v6174, %v6486
      %v6597 = vadd.f32 %v6175, %v6491
      %v6598 = vadd.f32 %v6176, %v6494
      %v6599 = vadd.f32 %v6177, %v6499
      %v6600 = vadd.f32 %v6178, %v6502
      %v6601 = vadd.f32 %v6179, %v6507
      %v6602 = vadd.f32 %v6180, %v6510
      %v6603 = vadd.f32 %v6181, %v6515
      %v6604 = vadd.f32 %v6182, %v6518
      %v6605 = vadd.f32 %v6183, %v6523
      %v6606 = vadd.f32 %v6184, %v6526
      %v6607 = vadd.f32 %v6185, %v6531
      %v6608 = vadd.f32 %v6186, %v6534
      %v6609 = vadd.f32 %v6187, %v6539
      %v6610 = vadd.f32 %v6188, %v6542
      %v6611 = vadd.f32 %v6189, %v6547
      %v6612 = vadd.f32 %v6190, %v6550
      %v6613 = vadd.f32 %v6191, %v6555
      %v6614 = vadd.f32 %v6192, %v6558
      %v6615 = vadd.f32 %v6193, %v6563
      %v6616 = vadd.f32 %v6194, %v6566
      %v6618 = vlaneseq
      %v6619 = vshrl.u32 %v6618, 7
      %v6620 = vsub.s32 0, %v6619
      %v6621 = vrot.slane %v2915, %v6620
      %v6623 = vadd.f32 %v6569, %v6621
      %v6624 = vadd.f32 %v6570, %v6621
      %v6625 = vadd.f32 %v6571, %v6621
      %v6626 = vadd.f32 %v6572, %v6621
      %v6627 = vadd.f32 %v6573, %v6621
      %v6628 = vadd.f32 %v6574, %v6621
      %v6629 = vadd.f32 %v6575, %v6621
      %v6630 = vadd.f32 %v6576, %v6621
      %v6631 = vadd.f32 %v6577, %v6621
      %v6632 = vadd.f32 %v6578, %v6621
      %v6633 = vadd.f32 %v6579, %v6621
      %v6634 = vadd.f32 %v6580, %v6621
      %v6635 = vadd.f32 %v6581, %v6621
      %v6636 = vadd.f32 %v6582, %v6621
      %v6637 = vadd.f32 %v6583, %v6621
      %v6638 = vadd.f32 %v6584, %v6621
      %v6639 = vadd.f32 %v6585, %v6621
      %v6640 = vadd.f32 %v6586, %v6621
      %v6641 = vadd.f32 %v6587, %v6621
      %v6642 = vadd.f32 %v6588, %v6621
      %v6643 = vadd.f32 %v6589, %v6621
      %v6644 = vadd.f32 %v6590, %v6621
      %v6645 = vadd.f32 %v6591, %v6621
      %v6646 = vadd.f32 %v6592, %v6621
      %v6647 = vadd.f32 %v6593, %v6621
      %v6648 = vadd.f32 %v6594, %v6621
      %v6649 = vadd.f32 %v6595, %v6621
      %v6650 = vadd.f32 %v6596, %v6621
      %v6651 = vadd.f32 %v6597, %v6621
      %v6652 = vadd.f32 %v6598, %v6621
      %v6653 = vadd.f32 %v6599, %v6621
      %v6654 = vadd.f32 %v6600, %v6621
      %v6655 = vadd.f32 %v6601, %v6621
      %v6656 = vadd.f32 %v6602, %v6621
      %v6657 = vadd.f32 %v6603, %v6621
      %v6658 = vadd.f32 %v6604, %v6621
      %v6659 = vadd.f32 %v6605, %v6621
      %v6660 = vadd.f32 %v6606, %v6621
      %v6661 = vadd.f32 %v6607, %v6621
      %v6662 = vadd.f32 %v6608, %v6621
      %v6663 = vadd.f32 %v6609, %v6621
      %v6664 = vadd.f32 %v6610, %v6621
      %v6665 = vadd.f32 %v6611, %v6621
      %v6666 = vadd.f32 %v6612, %v6621
      %v6667 = vadd.f32 %v6613, %v6621
      %v6668 = vadd.f32 %v6614, %v6621
      %v6669 = vadd.f32 %v6615, %v6621
      %v6670 = vadd.f32 %v6616, %v6621
      %v6671 = vxor.u32 %v6623, 2147483648
      %v6672 = vxor.u32 %v6624, 2147483648
      %v6673 = vxor.u32 %v6625, 2147483648
      %v6674 = vxor.u32 %v6626, 2147483648
      %v6675 = vxor.u32 %v6627, 2147483648
      %v6676 = vxor.u32 %v6628, 2147483648
      %v6677 = vxor.u32 %v6629, 2147483648
      %v6678 = vxor.u32 %v6630, 2147483648
      %v6679 = vxor.u32 %v6631, 2147483648
      %v6680 = vxor.u32 %v6632, 2147483648
      %v6681 = vxor.u32 %v6633, 2147483648
      %v6682 = vxor.u32 %v6634, 2147483648
      %v6683 = vxor.u32 %v6635, 2147483648
      %v6684 = vxor.u32 %v6636, 2147483648
      %v6685 = vxor.u32 %v6637, 2147483648
      %v6686 = vxor.u32 %v6638, 2147483648
      %v6687 = vxor.u32 %v6639, 2147483648
      %v6688 = vxor.u32 %v6640, 2147483648
      %v6689 = vxor.u32 %v6641, 2147483648
      %v6690 = vxor.u32 %v6642, 2147483648
      %v6691 = vxor.u32 %v6643, 2147483648
      %v6692 = vxor.u32 %v6644, 2147483648
      %v6693 = vxor.u32 %v6645, 2147483648
      %v6694 = vxor.u32 %v6646, 2147483648
      %v6695 = vxor.u32 %v6647, 2147483648
      %v6696 = vxor.u32 %v6648, 2147483648
      %v6697 = vxor.u32 %v6649, 2147483648
      %v6698 = vxor.u32 %v6650, 2147483648
      %v6699 = vxor.u32 %v6651, 2147483648
      %v6700 = vxor.u32 %v6652, 2147483648
      %v6701 = vxor.u32 %v6653, 2147483648
      %v6702 = vxor.u32 %v6654, 2147483648
      %v6703 = vxor.u32 %v6655, 2147483648
      %v6704 = vxor.u32 %v6656, 2147483648
      %v6705 = vxor.u32 %v6657, 2147483648
      %v6706 = vxor.u32 %v6658, 2147483648
      %v6707 = vxor.u32 %v6659, 2147483648
      %v6708 = vxor.u32 %v6660, 2147483648
      %v6709 = vxor.u32 %v6661, 2147483648
      %v6710 = vxor.u32 %v6662, 2147483648
      %v6711 = vxor.u32 %v6663, 2147483648
      %v6712 = vxor.u32 %v6664, 2147483648
      %v6713 = vxor.u32 %v6665, 2147483648
      %v6714 = vxor.u32 %v6666, 2147483648
      %v6715 = vxor.u32 %v6667, 2147483648
      %v6716 = vxor.u32 %v6668, 2147483648
      %v6717 = vxor.u32 %v6669, 2147483648
      %v6718 = vxor.u32 %v6670, 2147483648
      %v6719 = vmul.f32 %v6671, 1.442695
      %v6720 = vpow.pop %v6719
      %v6721 = vmul.f32 %v6672, 1.442695
      %v6722 = vpow.pop %v6721
      %v6723 = vmul.f32 %v6673, 1.442695
      %v6724 = vpow.pop %v6723
      %v6725 = vmul.f32 %v6674, 1.442695
      %v6726 = vpow.pop %v6725
      %v6727 = vmul.f32 %v6675, 1.442695
      %v6728 = vpow.pop %v6727
      %v6729 = vmul.f32 %v6676, 1.442695
      %v6730 = vpow.pop %v6729
      %v6731 = vmul.f32 %v6677, 1.442695
      %v6732 = vpow.pop %v6731
      %v6733 = vmul.f32 %v6678, 1.442695
      %v6734 = vpow.pop %v6733
      %v6735 = vmul.f32 %v6679, 1.442695
      %v6736 = vpow.pop %v6735
      %v6737 = vmul.f32 %v6680, 1.442695
      %v6738 = vpow.pop %v6737
      %v6739 = vmul.f32 %v6681, 1.442695
      %v6740 = vpow.pop %v6739
      %v6741 = vmul.f32 %v6682, 1.442695
      %v6742 = vpow.pop %v6741
      %v6743 = vmul.f32 %v6683, 1.442695
      %v6744 = vpow.pop %v6743
      %v6745 = vmul.f32 %v6684, 1.442695
      %v6746 = vpow.pop %v6745
      %v6747 = vmul.f32 %v6685, 1.442695
      %v6748 = vpow.pop %v6747
      %v6749 = vmul.f32 %v6686, 1.442695
      %v6750 = vpow.pop %v6749
      %v6751 = vmul.f32 %v6687, 1.442695
      %v6752 = vpow.pop %v6751
      %v6753 = vmul.f32 %v6688, 1.442695
      %v6754 = vpow.pop %v6753
      %v6755 = vmul.f32 %v6689, 1.442695
      %v6756 = vpow.pop %v6755
      %v6757 = vmul.f32 %v6690, 1.442695
      %v6758 = vpow.pop %v6757
      %v6759 = vmul.f32 %v6691, 1.442695
      %v6760 = vpow.pop %v6759
      %v6761 = vmul.f32 %v6692, 1.442695
      %v6762 = vpow.pop %v6761
      %v6763 = vmul.f32 %v6693, 1.442695
      %v6764 = vpow.pop %v6763
      %v6765 = vmul.f32 %v6694, 1.442695
      %v6766 = vpow.pop %v6765
      %v6767 = vmul.f32 %v6695, 1.442695
      %v6768 = vpow.pop %v6767
      %v6769 = vmul.f32 %v6696, 1.442695
      %v6770 = vpow.pop %v6769
      %v6771 = vmul.f32 %v6697, 1.442695
      %v6772 = vpow.pop %v6771
      %v6773 = vmul.f32 %v6698, 1.442695
      %v6774 = vpow.pop %v6773
      %v6775 = vmul.f32 %v6699, 1.442695
      %v6776 = vpow.pop %v6775
      %v6777 = vmul.f32 %v6700, 1.442695
      %v6778 = vpow.pop %v6777
      %v6779 = vmul.f32 %v6701, 1.442695
      %v6780 = vpow.pop %v6779
      %v6781 = vmul.f32 %v6702, 1.442695
      %v6782 = vpow.pop %v6781
      %v6783 = vmul.f32 %v6703, 1.442695
      %v6784 = vpow.pop %v6783
      %v6785 = vmul.f32 %v6704, 1.442695
      %v6786 = vpow.pop %v6785
      %v6787 = vmul.f32 %v6705, 1.442695
      %v6788 = vpow.pop %v6787
      %v6789 = vmul.f32 %v6706, 1.442695
      %v6790 = vpow.pop %v6789
      %v6791 = vmul.f32 %v6707, 1.442695
      %v6792 = vpow.pop %v6791
      %v6793 = vmul.f32 %v6708, 1.442695
      %v6794 = vpow.pop %v6793
      %v6795 = vmul.f32 %v6709, 1.442695
      %v6796 = vpow.pop %v6795
      %v6797 = vmul.f32 %v6710, 1.442695
      %v6798 = vpow.pop %v6797
      %v6799 = vmul.f32 %v6711, 1.442695
      %v6800 = vpow.pop %v6799
      %v6801 = vmul.f32 %v6712, 1.442695
      %v6802 = vpow.pop %v6801
      %v6803 = vmul.f32 %v6713, 1.442695
      %v6804 = vpow.pop %v6803
      %v6805 = vmul.f32 %v6714, 1.442695
      %v6806 = vpow.pop %v6805
      %v6807 = vmul.f32 %v6715, 1.442695
      %v6808 = vpow.pop %v6807
      %v6809 = vmul.f32 %v6716, 1.442695
      %v6810 = vpow.pop %v6809
      %v6811 = vmul.f32 %v6717, 1.442695
      %v6812 = vpow.pop %v6811
      %v6813 = vmul.f32 %v6718, 1.442695
      %v6814 = vpow.pop %v6813
      %v6815 = vadd.f32 %v6720, 1.0
      %v6816 = vadd.f32 %v6722, 1.0
      %v6817 = vadd.f32 %v6724, 1.0
      %v6818 = vadd.f32 %v6726, 1.0
      %v6819 = vadd.f32 %v6728, 1.0
      %v6820 = vadd.f32 %v6730, 1.0
      %v6821 = vadd.f32 %v6732, 1.0
      %v6822 = vadd.f32 %v6734, 1.0
      %v6823 = vadd.f32 %v6736, 1.0
      %v6824 = vadd.f32 %v6738, 1.0
      %v6825 = vadd.f32 %v6740, 1.0
      %v6826 = vadd.f32 %v6742, 1.0
      %v6827 = vadd.f32 %v6744, 1.0
      %v6828 = vadd.f32 %v6746, 1.0
      %v6829 = vadd.f32 %v6748, 1.0
      %v6830 = vadd.f32 %v6750, 1.0
      %v6831 = vadd.f32 %v6752, 1.0
      %v6832 = vadd.f32 %v6754, 1.0
      %v6833 = vadd.f32 %v6756, 1.0
      %v6834 = vadd.f32 %v6758, 1.0
      %v6835 = vadd.f32 %v6760, 1.0
      %v6836 = vadd.f32 %v6762, 1.0
      %v6837 = vadd.f32 %v6764, 1.0
      %v6838 = vadd.f32 %v6766, 1.0
      %v6839 = vadd.f32 %v6768, 1.0
      %v6840 = vadd.f32 %v6770, 1.0
      %v6841 = vadd.f32 %v6772, 1.0
      %v6842 = vadd.f32 %v6774, 1.0
      %v6843 = vadd.f32 %v6776, 1.0
      %v6844 = vadd.f32 %v6778, 1.0
      %v6845 = vadd.f32 %v6780, 1.0
      %v6846 = vadd.f32 %v6782, 1.0
      %v6847 = vadd.f32 %v6784, 1.0
      %v6848 = vadd.f32 %v6786, 1.0
      %v6849 = vadd.f32 %v6788, 1.0
      %v6850 = vadd.f32 %v6790, 1.0
      %v6851 = vadd.f32 %v6792, 1.0
      %v6852 = vadd.f32 %v6794, 1.0
      %v6853 = vadd.f32 %v6796, 1.0
      %v6854 = vadd.f32 %v6798, 1.0
      %v6855 = vadd.f32 %v6800, 1.0
      %v6856 = vadd.f32 %v6802, 1.0
      %v6857 = vadd.f32 %v6804, 1.0
      %v6858 = vadd.f32 %v6806, 1.0
      %v6859 = vadd.f32 %v6808, 1.0
      %v6860 = vadd.f32 %v6810, 1.0
      %v6861 = vadd.f32 %v6812, 1.0
      %v6862 = vadd.f32 %v6814, 1.0
      %v6863 = vrcp.pop %v6815
      %v6864 = vmul.f32 1.0, %v6863
      %v6865 = vrcp.pop %v6816
      %v6866 = vmul.f32 1.0, %v6865
      %v6867 = vrcp.pop %v6817
      %v6868 = vmul.f32 1.0, %v6867
      %v6869 = vrcp.pop %v6818
      %v6870 = vmul.f32 1.0, %v6869
      %v6871 = vrcp.pop %v6819
      %v6872 = vmul.f32 1.0, %v6871
      %v6873 = vrcp.pop %v6820
      %v6874 = vmul.f32 1.0, %v6873
      %v6875 = vrcp.pop %v6821
      %v6876 = vmul.f32 1.0, %v6875
      %v6877 = vrcp.pop %v6822
      %v6878 = vmul.f32 1.0, %v6877
      %v6879 = vrcp.pop %v6823
      %v6880 = vmul.f32 1.0, %v6879
      %v6881 = vrcp.pop %v6824
      %v6882 = vmul.f32 1.0, %v6881
      %v6883 = vrcp.pop %v6825
      %v6884 = vmul.f32 1.0, %v6883
      %v6885 = vrcp.pop %v6826
      %v6886 = vmul.f32 1.0, %v6885
      %v6887 = vrcp.pop %v6827
      %v6888 = vmul.f32 1.0, %v6887
      %v6889 = vrcp.pop %v6828
      %v6890 = vmul.f32 1.0, %v6889
      %v6891 = vrcp.pop %v6829
      %v6892 = vmul.f32 1.0, %v6891
      %v6893 = vrcp.pop %v6830
      %v6894 = vmul.f32 1.0, %v6893
      %v6895 = vrcp.pop %v6831
      %v6896 = vmul.f32 1.0, %v6895
      %v6897 = vrcp.pop %v6832
      %v6898 = vmul.f32 1.0, %v6897
      %v6899 = vrcp.pop %v6833
      %v6900 = vmul.f32 1.0, %v6899
      %v6901 = vrcp.pop %v6834
      %v6902 = vmul.f32 1.0, %v6901
      %v6903 = vrcp.pop %v6835
      %v6904 = vmul.f32 1.0, %v6903
      %v6905 = vrcp.pop %v6836
      %v6906 = vmul.f32 1.0, %v6905
      %v6907 = vrcp.pop %v6837
      %v6908 = vmul.f32 1.0, %v6907
      %v6909 = vrcp.pop %v6838
      %v6910 = vmul.f32 1.0, %v6909
      %v6911 = vrcp.pop %v6839
      %v6912 = vmul.f32 1.0, %v6911
      %v6913 = vrcp.pop %v6840
      %v6914 = vmul.f32 1.0, %v6913
      %v6915 = vrcp.pop %v6841
      %v6916 = vmul.f32 1.0, %v6915
      %v6917 = vrcp.pop %v6842
      %v6918 = vmul.f32 1.0, %v6917
      %v6919 = vrcp.pop %v6843
      %v6920 = vmul.f32 1.0, %v6919
      %v6921 = vrcp.pop %v6844
      %v6922 = vmul.f32 1.0, %v6921
      %v6923 = vrcp.pop %v6845
      %v6924 = vmul.f32 1.0, %v6923
      %v6925 = vrcp.pop %v6846
      %v6926 = vmul.f32 1.0, %v6925
      %v6927 = vrcp.pop %v6847
      %v6928 = vmul.f32 1.0, %v6927
      %v6929 = vrcp.pop %v6848
      %v6930 = vmul.f32 1.0, %v6929
      %v6931 = vrcp.pop %v6849
      %v6932 = vmul.f32 1.0, %v6931
      %v6933 = vrcp.pop %v6850
      %v6934 = vmul.f32 1.0, %v6933
      %v6935 = vrcp.pop %v6851
      %v6936 = vmul.f32 1.0, %v6935
      %v6937 = vrcp.pop %v6852
      %v6938 = vmul.f32 1.0, %v6937
      %v6939 = vrcp.pop %v6853
      %v6940 = vmul.f32 1.0, %v6939
      %v6941 = vrcp.pop %v6854
      %v6942 = vmul.f32 1.0, %v6941
      %v6943 = vrcp.pop %v6855
      %v6944 = vmul.f32 1.0, %v6943
      %v6945 = vrcp.pop %v6856
      %v6946 = vmul.f32 1.0, %v6945
      %v6947 = vrcp.pop %v6857
      %v6948 = vmul.f32 1.0, %v6947
      %v6949 = vrcp.pop %v6858
      %v6950 = vmul.f32 1.0, %v6949
      %v6951 = vrcp.pop %v6859
      %v6952 = vmul.f32 1.0, %v6951
      %v6953 = vrcp.pop %v6860
      %v6954 = vmul.f32 1.0, %v6953
      %v6955 = vrcp.pop %v6861
      %v6956 = vmul.f32 1.0, %v6955
      %v6957 = vrcp.pop %v6862
      %v6958 = vmul.f32 1.0, %v6957
      %v6959 = vmul.f32 %v6623, %v6864
      %v6960 = vmul.f32 %v6624, %v6866
      %v6961 = vmul.f32 %v6625, %v6868
      %v6962 = vmul.f32 %v6626, %v6870
      %v6963 = vmul.f32 %v6627, %v6872
      %v6964 = vmul.f32 %v6628, %v6874
      %v6965 = vmul.f32 %v6629, %v6876
      %v6966 = vmul.f32 %v6630, %v6878
      %v6967 = vmul.f32 %v6631, %v6880
      %v6968 = vmul.f32 %v6632, %v6882
      %v6969 = vmul.f32 %v6633, %v6884
      %v6970 = vmul.f32 %v6634, %v6886
      %v6971 = vmul.f32 %v6635, %v6888
      %v6972 = vmul.f32 %v6636, %v6890
      %v6973 = vmul.f32 %v6637, %v6892
      %v6974 = vmul.f32 %v6638, %v6894
      %v6975 = vmul.f32 %v6639, %v6896
      %v6976 = vmul.f32 %v6640, %v6898
      %v6977 = vmul.f32 %v6641, %v6900
      %v6978 = vmul.f32 %v6642, %v6902
      %v6979 = vmul.f32 %v6643, %v6904
      %v6980 = vmul.f32 %v6644, %v6906
      %v6981 = vmul.f32 %v6645, %v6908
      %v6982 = vmul.f32 %v6646, %v6910
      %v6983 = vmul.f32 %v6647, %v6912
      %v6984 = vmul.f32 %v6648, %v6914
      %v6985 = vmul.f32 %v6649, %v6916
      %v6986 = vmul.f32 %v6650, %v6918
      %v6987 = vmul.f32 %v6651, %v6920
      %v6988 = vmul.f32 %v6652, %v6922
      %v6989 = vmul.f32 %v6653, %v6924
      %v6990 = vmul.f32 %v6654, %v6926
      %v6991 = vmul.f32 %v6655, %v6928
      %v6992 = vmul.f32 %v6656, %v6930
      %v6993 = vmul.f32 %v6657, %v6932
      %v6994 = vmul.f32 %v6658, %v6934
      %v6995 = vmul.f32 %v6659, %v6936
      %v6996 = vmul.f32 %v6660, %v6938
      %v6997 = vmul.f32 %v6661, %v6940
      %v6998 = vmul.f32 %v6662, %v6942
      %v6999 = vmul.f32 %v6663, %v6944
      %v7000 = vmul.f32 %v6664, %v6946
      %v7001 = vmul.f32 %v6665, %v6948
      %v7002 = vmul.f32 %v6666, %v6950
      %v7003 = vmul.f32 %v6667, %v6952
      %v7004 = vmul.f32 %v6668, %v6954
      %v7005 = vmul.f32 %v6669, %v6956
      %v7006 = vmul.f32 %v6670, %v6958
      %v7007 = vadd.f32 %v6959, %v1256
      %v7008 = vadd.f32 %v6960, %v1257
      %v7009 = vadd.f32 %v6961, %v1258
      %v7010 = vadd.f32 %v6962, %v1259
      %v7011 = vadd.f32 %v6963, %v1260
      %v7012 = vadd.f32 %v6964, %v1261
      %v7013 = vadd.f32 %v6965, %v1262
      %v7014 = vadd.f32 %v6966, %v1263
      %v7015 = vadd.f32 %v6967, %v1264
      %v7016 = vadd.f32 %v6968, %v1265
      %v7017 = vadd.f32 %v6969, %v1266
      %v7018 = vadd.f32 %v6970, %v1267
      %v7019 = vadd.f32 %v6971, %v1268
      %v7020 = vadd.f32 %v6972, %v1269
      %v7021 = vadd.f32 %v6973, %v1270
      %v7022 = vadd.f32 %v6974, %v1271
      %v7023 = vadd.f32 %v6975, %v1272
      %v7024 = vadd.f32 %v6976, %v1273
      %v7025 = vadd.f32 %v6977, %v1274
      %v7026 = vadd.f32 %v6978, %v1275
      %v7027 = vadd.f32 %v6979, %v1276
      %v7028 = vadd.f32 %v6980, %v1277
      %v7029 = vadd.f32 %v6981, %v1278
      %v7030 = vadd.f32 %v6982, %v1279
      %v7031 = vadd.f32 %v6983, %v1280
      %v7032 = vadd.f32 %v6984, %v1281
      %v7033 = vadd.f32 %v6985, %v1282
      %v7034 = vadd.f32 %v6986, %v1283
      %v7035 = vadd.f32 %v6987, %v1284
      %v7036 = vadd.f32 %v6988, %v1285
      %v7037 = vadd.f32 %v6989, %v1286
      %v7038 = vadd.f32 %v6990, %v1287
      %v7039 = vadd.f32 %v6991, %v1288
      %v7040 = vadd.f32 %v6992, %v1289
      %v7041 = vadd.f32 %v6993, %v1290
      %v7042 = vadd.f32 %v6994, %v1291
      %v7043 = vadd.f32 %v6995, %v1292
      %v7044 = vadd.f32 %v6996, %v1293
      %v7045 = vadd.f32 %v6997, %v1294
      %v7046 = vadd.f32 %v6998, %v1295
      %v7047 = vadd.f32 %v6999, %v1296
      %v7048 = vadd.f32 %v7000, %v1297
      %v7049 = vadd.f32 %v7001, %v1298
      %v7050 = vadd.f32 %v7002, %v1299
      %v7051 = vadd.f32 %v7003, %v1300
      %v7052 = vadd.f32 %v7004, %v1301
      %v7053 = vadd.f32 %v7005, %v1302
      %v7054 = vadd.f32 %v7006, %v1303
      %v7055 = vpack.c.bf16 %v7008, %v7007
      %v7056 = vpack.c.bf16 %v7010, %v7009
      %v7057 = vpack.c.bf16 %v7012, %v7011
      %v7058 = vpack.c.bf16 %v7014, %v7013
      %v7059 = vpack.c.bf16 %v7016, %v7015
      %v7060 = vpack.c.bf16 %v7018, %v7017
      %v7061 = vpack.c.bf16 %v7020, %v7019
      %v7062 = vpack.c.bf16 %v7022, %v7021
      %v7063 = vpack.c.bf16 %v7024, %v7023
      %v7064 = vpack.c.bf16 %v7026, %v7025
      %v7065 = vpack.c.bf16 %v7028, %v7027
      %v7066 = vpack.c.bf16 %v7030, %v7029
      %v7067 = vpack.c.bf16 %v7032, %v7031
      %v7068 = vpack.c.bf16 %v7034, %v7033
      %v7069 = vpack.c.bf16 %v7036, %v7035
      %v7070 = vpack.c.bf16 %v7038, %v7037
      %v7071 = vpack.c.bf16 %v7040, %v7039
      %v7072 = vpack.c.bf16 %v7042, %v7041
      %v7073 = vpack.c.bf16 %v7044, %v7043
      %v7074 = vpack.c.bf16 %v7046, %v7045
      %v7075 = vpack.c.bf16 %v7048, %v7047
      %v7076 = vpack.c.bf16 %v7050, %v7049
      %v7077 = vpack.c.bf16 %v7052, %v7051
      %v7078 = vpack.c.bf16 %v7054, %v7053
      %v7079 = vld [vmem:[%s10] sm:$0x1]
      %v7080 = vld [vmem:[%s11] sm:$0x1]
      %v7082 = vsel %vm1900, %v1876, 0
      %v7085 = vsel %vm1900, %v1877, 0
      %v7088 = vsel %vm1900, %v1878, 0
      %v7091 = vsel %vm1900, %v1879, 0
      %v7094 = vsel %vm1900, %v1880, 0
      %v7097 = vsel %vm1900, %v1881, 0
      %v7100 = vsel %vm1900, %v1882, 0
      %v7103 = vsel %vm1900, %v1883, 0
      %v7106 = vsel %vm1900, %v1884, 0
      %v7109 = vsel %vm1900, %v1885, 0
      %v7112 = vsel %vm1900, %v1886, 0
      %v7115 = vsel %vm1900, %v1887, 0
      %v7118 = vsel %vm1900, %v1888, 0
      %v7121 = vsel %vm1900, %v1889, 0
      %v7124 = vsel %vm1900, %v1890, 0
      %v7127 = vsel %vm1900, %v1891, 0
      %v7130 = vsel %vm1900, %v1892, 0
      %v7133 = vsel %vm1900, %v1893, 0
      %v7136 = vsel %vm1900, %v1894, 0
      %v7139 = vsel %vm1900, %v1895, 0
      %v7142 = vsel %vm1900, %v1896, 0
      %v7145 = vsel %vm1900, %v1897, 0
      %v7148 = vsel %vm1900, %v1898, 0
      %v7151 = vsel %vm1900, %v1899, 0
      %v7154 = vsel %vm2014, %v7080, 0
      %7156 = vmatprep.subr.bf16.mxu0 0
      %7157 = vmatpush1.bf16.msra.mxu0 0
      %7158 = vmatprep.subr.bf16.mxu0 0
      %7159 = vmatpush1.bf16.msra.mxu0 0
      %7160 = vmatprep.subr.bf16.mxu0 0
      %7161 = vmatpush1.bf16.msra.mxu0 0
      %7162 = vmatprep.subr.bf16.mxu0 0
      %7163 = vmatpush1.bf16.msra.mxu0 0
      %7164 = vmatprep.subr.bf16.mxu0 0
      %7165 = vmatpush1.bf16.msra.mxu0 0
      %7166 = vmatprep.subr.bf16.mxu0 0
      %7167 = vmatpush1.bf16.msra.mxu0 0
      %7168 = vmatprep.subr.bf16.mxu0 0
      %7169 = vmatpush1.bf16.msra.mxu0 0
      %7170 = vmatprep.subr.bf16.mxu0 0
      %7171 = vmatpush1.bf16.msra.mxu0 %v7154
      %7172 = vmatprep.subr.bf16.mxu0 0
      %7173 = vmatpush2.bf16.msra.mxu0 0
      %7174 = vmatprep.subr.bf16.mxu0 0
      %7175 = vmatpush2.bf16.msra.mxu0 0
      %7176 = vmatprep.subr.bf16.mxu0 0
      %7177 = vmatpush2.bf16.msra.mxu0 0
      %7178 = vmatprep.subr.bf16.mxu0 0
      %7179 = vmatpush2.bf16.msra.mxu0 0
      %7180 = vmatprep.subr.bf16.mxu0 0
      %7181 = vmatpush2.bf16.msra.mxu0 0
      %7182 = vmatprep.subr.bf16.mxu0 0
      %7183 = vmatpush2.bf16.msra.mxu0 0
      %7184 = vmatprep.subr.bf16.mxu0 0
      %7185 = vmatpush2.bf16.msra.mxu0 0
      %7186 = vmatprep.subr.bf16.mxu0 0
      %7187 = vmatpush2.bf16.msra.mxu0 0
      %7188 = vmatprep.mubr.bf16.mxu0 0
      %7189 = vmatmul.mubr.bf16.gmra.mxu0 %v7082
      %v7190 = vpop.f32.mrf.mxu0
      %v7191 = vadd.f32 0.0, %v7190
      %v7192 = vpop.f32.mrf.mxu0
      %v7193 = vpop.f32.mrf.mxu0
      %v7194 = vadd.f32 0.0, %v7193
      %v7195 = vpop.f32.mrf.mxu0
      %7196 = vmatprep.mubr.bf16.mxu0 0
      %7197 = vmatmul.mubr.bf16.gmra.mxu0 %v7085
      %v7198 = vpop.f32.mrf.mxu0
      %v7199 = vpop.f32.mrf.mxu0
      %v7200 = vpop.f32.mrf.mxu0
      %v7201 = vadd.f32 0.0, %v7200
      %v7202 = vpop.f32.mrf.mxu0
      %7203 = vmatprep.mubr.bf16.mxu0 0
      %7204 = vmatmul.mubr.bf16.gmra.mxu0 %v7088
      %v7205 = vpop.f32.mrf.mxu0
      %v7206 = vadd.f32 0.0, %v7205
      %v7207 = vpop.f32.mrf.mxu0
      %v7208 = vpop.f32.mrf.mxu0
      %v7209 = vpop.f32.mrf.mxu0
      %7210 = vmatprep.mubr.bf16.mxu0 0
      %7211 = vmatmul.mubr.bf16.gmra.mxu0 %v7091
      %v7212 = vpop.f32.mrf.mxu0
      %v7213 = vadd.f32 0.0, %v7212
      %v7214 = vpop.f32.mrf.mxu0
      %v7215 = vpop.f32.mrf.mxu0
      %v7216 = vadd.f32 0.0, %v7215
      %v7217 = vpop.f32.mrf.mxu0
      %7218 = vmatprep.mubr.bf16.mxu0 0
      %7219 = vmatmul.mubr.bf16.gmra.mxu0 %v7094
      %v7220 = vpop.f32.mrf.mxu0
      %v7221 = vpop.f32.mrf.mxu0
      %v7222 = vpop.f32.mrf.mxu0
      %v7223 = vadd.f32 0.0, %v7222
      %v7224 = vpop.f32.mrf.mxu0
      %7225 = vmatprep.mubr.bf16.mxu0 0
      %7226 = vmatmul.mubr.bf16.gmra.mxu0 %v7097
      %v7227 = vpop.f32.mrf.mxu0
      %v7228 = vadd.f32 0.0, %v7227
      %v7229 = vpop.f32.mrf.mxu0
      %v7230 = vpop.f32.mrf.mxu0
      %v7231 = vpop.f32.mrf.mxu0
      %7232 = vmatprep.mubr.bf16.mxu0 0
      %7233 = vmatmul.mubr.bf16.gmra.mxu0 %v7100
      %v7234 = vpop.f32.mrf.mxu0
      %v7235 = vadd.f32 0.0, %v7234
      %v7236 = vpop.f32.mrf.mxu0
      %v7237 = vpop.f32.mrf.mxu0
      %v7238 = vadd.f32 0.0, %v7237
      %v7239 = vpop.f32.mrf.mxu0
      %7240 = vmatprep.mubr.bf16.mxu0 0
      %7241 = vmatmul.mubr.bf16.gmra.mxu0 %v7103
      %v7242 = vpop.f32.mrf.mxu0
      %v7243 = vpop.f32.mrf.mxu0
      %v7244 = vpop.f32.mrf.mxu0
      %v7245 = vadd.f32 0.0, %v7244
      %v7246 = vpop.f32.mrf.mxu0
      %7247 = vmatprep.mubr.bf16.mxu0 0
      %7248 = vmatmul.mubr.bf16.gmra.mxu0 %v7106
      %v7249 = vpop.f32.mrf.mxu0
      %v7250 = vadd.f32 0.0, %v7249
      %v7251 = vpop.f32.mrf.mxu0
      %v7252 = vpop.f32.mrf.mxu0
      %v7253 = vpop.f32.mrf.mxu0
      %7254 = vmatprep.mubr.bf16.mxu0 0
      %7255 = vmatmul.mubr.bf16.gmra.mxu0 %v7109
      %v7256 = vpop.f32.mrf.mxu0
      %v7257 = vadd.f32 0.0, %v7256
      %v7258 = vpop.f32.mrf.mxu0
      %v7259 = vpop.f32.mrf.mxu0
      %v7260 = vadd.f32 0.0, %v7259
      %v7261 = vpop.f32.mrf.mxu0
      %7262 = vmatprep.mubr.bf16.mxu0 0
      %7263 = vmatmul.mubr.bf16.gmra.mxu0 %v7112
      %v7264 = vpop.f32.mrf.mxu0
      %v7265 = vpop.f32.mrf.mxu0
      %v7266 = vpop.f32.mrf.mxu0
      %v7267 = vadd.f32 0.0, %v7266
      %v7268 = vpop.f32.mrf.mxu0
      %7269 = vmatprep.mubr.bf16.mxu0 0
      %7270 = vmatmul.mubr.bf16.gmra.mxu0 %v7115
      %v7271 = vpop.f32.mrf.mxu0
      %v7272 = vadd.f32 0.0, %v7271
      %v7273 = vpop.f32.mrf.mxu0
      %v7274 = vpop.f32.mrf.mxu0
      %v7275 = vpop.f32.mrf.mxu0
      %7276 = vmatprep.mubr.bf16.mxu0 0
      %7277 = vmatmul.mubr.bf16.gmra.mxu0 %v7118
      %v7278 = vpop.f32.mrf.mxu0
      %v7279 = vadd.f32 0.0, %v7278
      %v7280 = vpop.f32.mrf.mxu0
      %v7281 = vpop.f32.mrf.mxu0
      %v7282 = vadd.f32 0.0, %v7281
      %v7283 = vpop.f32.mrf.mxu0
      %7284 = vmatprep.mubr.bf16.mxu0 0
      %7285 = vmatmul.mubr.bf16.gmra.mxu0 %v7121
      %v7286 = vpop.f32.mrf.mxu0
      %v7287 = vpop.f32.mrf.mxu0
      %v7288 = vpop.f32.mrf.mxu0
      %v7289 = vadd.f32 0.0, %v7288
      %v7290 = vpop.f32.mrf.mxu0
      %7291 = vmatprep.mubr.bf16.mxu0 0
      %7292 = vmatmul.mubr.bf16.gmra.mxu0 %v7124
      %v7293 = vpop.f32.mrf.mxu0
      %v7294 = vadd.f32 0.0, %v7293
      %v7295 = vpop.f32.mrf.mxu0
      %v7296 = vpop.f32.mrf.mxu0
      %v7297 = vpop.f32.mrf.mxu0
      %7298 = vmatprep.mubr.bf16.mxu0 0
      %7299 = vmatmul.mubr.bf16.gmra.mxu0 %v7127
      %v7300 = vpop.f32.mrf.mxu0
      %v7301 = vadd.f32 0.0, %v7300
      %v7302 = vpop.f32.mrf.mxu0
      %v7303 = vpop.f32.mrf.mxu0
      %v7304 = vadd.f32 0.0, %v7303
      %v7305 = vpop.f32.mrf.mxu0
      %7306 = vmatprep.mubr.bf16.mxu0 0
      %7307 = vmatmul.mubr.bf16.gmra.mxu0 %v7130
      %v7308 = vpop.f32.mrf.mxu0
      %v7309 = vpop.f32.mrf.mxu0
      %v7310 = vpop.f32.mrf.mxu0
      %v7311 = vadd.f32 0.0, %v7310
      %v7312 = vpop.f32.mrf.mxu0
      %7313 = vmatprep.mubr.bf16.mxu0 0
      %7314 = vmatmul.mubr.bf16.gmra.mxu0 %v7133
      %v7315 = vpop.f32.mrf.mxu0
      %v7316 = vadd.f32 0.0, %v7315
      %v7317 = vpop.f32.mrf.mxu0
      %v7318 = vpop.f32.mrf.mxu0
      %v7319 = vpop.f32.mrf.mxu0
      %7320 = vmatprep.mubr.bf16.mxu0 0
      %7321 = vmatmul.mubr.bf16.gmra.mxu0 %v7136
      %v7322 = vpop.f32.mrf.mxu0
      %v7323 = vadd.f32 0.0, %v7322
      %v7324 = vpop.f32.mrf.mxu0
      %v7325 = vpop.f32.mrf.mxu0
      %v7326 = vadd.f32 0.0, %v7325
      %v7327 = vpop.f32.mrf.mxu0
      %7328 = vmatprep.mubr.bf16.mxu0 0
      %7329 = vmatmul.mubr.bf16.gmra.mxu0 %v7139
      %v7330 = vpop.f32.mrf.mxu0
      %v7331 = vpop.f32.mrf.mxu0
      %v7332 = vpop.f32.mrf.mxu0
      %v7333 = vadd.f32 0.0, %v7332
      %v7334 = vpop.f32.mrf.mxu0
      %7335 = vmatprep.mubr.bf16.mxu0 0
      %7336 = vmatmul.mubr.bf16.gmra.mxu0 %v7142
      %v7337 = vpop.f32.mrf.mxu0
      %v7338 = vadd.f32 0.0, %v7337
      %v7339 = vpop.f32.mrf.mxu0
      %v7340 = vpop.f32.mrf.mxu0
      %v7341 = vpop.f32.mrf.mxu0
      %7342 = vmatprep.mubr.bf16.mxu0 0
      %7343 = vmatmul.mubr.bf16.gmra.mxu0 %v7145
      %v7344 = vpop.f32.mrf.mxu0
      %v7345 = vadd.f32 0.0, %v7344
      %v7346 = vpop.f32.mrf.mxu0
      %v7347 = vpop.f32.mrf.mxu0
      %v7348 = vadd.f32 0.0, %v7347
      %v7349 = vpop.f32.mrf.mxu0
      %7350 = vmatprep.mubr.bf16.mxu0 0
      %7351 = vmatmul.mubr.bf16.gmra.mxu0 %v7148
      %v7352 = vpop.f32.mrf.mxu0
      %v7353 = vpop.f32.mrf.mxu0
      %v7354 = vpop.f32.mrf.mxu0
      %v7355 = vadd.f32 0.0, %v7354
      %v7356 = vpop.f32.mrf.mxu0
      %7357 = vmatprep.mubr.bf16.mxu0 0
      %7358 = vmatmul.mubr.bf16.gmra.mxu0 %v7151
      %v7359 = vpop.f32.mrf.mxu0
      %v7360 = vadd.f32 0.0, %v7359
      %v7361 = vpop.f32.mrf.mxu0
      %v7362 = vpop.f32.mrf.mxu0
      %v7363 = vpop.f32.mrf.mxu0
      %7364 = vdwg.mxu0
      %v7366 = vsel %vm1900, %v7055, 0
      %v7369 = vsel %vm1900, %v7056, 0
      %v7372 = vsel %vm1900, %v7057, 0
      %v7375 = vsel %vm1900, %v7058, 0
      %v7378 = vsel %vm1900, %v7059, 0
      %v7381 = vsel %vm1900, %v7060, 0
      %v7384 = vsel %vm1900, %v7061, 0
      %v7387 = vsel %vm1900, %v7062, 0
      %v7390 = vsel %vm1900, %v7063, 0
      %v7393 = vsel %vm1900, %v7064, 0
      %v7396 = vsel %vm1900, %v7065, 0
      %v7399 = vsel %vm1900, %v7066, 0
      %v7402 = vsel %vm1900, %v7067, 0
      %v7405 = vsel %vm1900, %v7068, 0
      %v7408 = vsel %vm1900, %v7069, 0
      %v7411 = vsel %vm1900, %v7070, 0
      %v7414 = vsel %vm1900, %v7071, 0
      %v7417 = vsel %vm1900, %v7072, 0
      %v7420 = vsel %vm1900, %v7073, 0
      %v7423 = vsel %vm1900, %v7074, 0
      %v7426 = vsel %vm1900, %v7075, 0
      %v7429 = vsel %vm1900, %v7076, 0
      %v7432 = vsel %vm1900, %v7077, 0
      %v7435 = vsel %vm1900, %v7078, 0
      %v7438 = vsel %vm2014, %v7079, 0
      %7440 = vmatprep.subr.bf16.mxu0 0
      %7441 = vmatpush1.bf16.msra.mxu0 0
      %7442 = vmatprep.subr.bf16.mxu0 0
      %7443 = vmatpush1.bf16.msra.mxu0 0
      %7444 = vmatprep.subr.bf16.mxu0 0
      %7445 = vmatpush1.bf16.msra.mxu0 0
      %7446 = vmatprep.subr.bf16.mxu0 0
      %7447 = vmatpush1.bf16.msra.mxu0 0
      %7448 = vmatprep.subr.bf16.mxu0 0
      %7449 = vmatpush1.bf16.msra.mxu0 0
      %7450 = vmatprep.subr.bf16.mxu0 0
      %7451 = vmatpush1.bf16.msra.mxu0 0
      %7452 = vmatprep.subr.bf16.mxu0 0
      %7453 = vmatpush1.bf16.msra.mxu0 0
      %7454 = vmatprep.subr.bf16.mxu0 0
      %7455 = vmatpush1.bf16.msra.mxu0 %v7438
      %7456 = vmatprep.subr.bf16.mxu0 0
      %7457 = vmatpush2.bf16.msra.mxu0 0
      %7458 = vmatprep.subr.bf16.mxu0 0
      %7459 = vmatpush2.bf16.msra.mxu0 0
      %7460 = vmatprep.subr.bf16.mxu0 0
      %7461 = vmatpush2.bf16.msra.mxu0 0
      %7462 = vmatprep.subr.bf16.mxu0 0
      %7463 = vmatpush2.bf16.msra.mxu0 0
      %7464 = vmatprep.subr.bf16.mxu0 0
      %7465 = vmatpush2.bf16.msra.mxu0 0
      %7466 = vmatprep.subr.bf16.mxu0 0
      %7467 = vmatpush2.bf16.msra.mxu0 0
      %7468 = vmatprep.subr.bf16.mxu0 0
      %7469 = vmatpush2.bf16.msra.mxu0 0
      %7470 = vmatprep.subr.bf16.mxu0 0
      %7471 = vmatpush2.bf16.msra.mxu0 0
      %7472 = vmatprep.mubr.bf16.mxu0 0
      %7473 = vmatmul.mubr.bf16.gmra.mxu0 %v7366
      %v7474 = vpop.f32.mrf.mxu0
      %v7475 = vadd.f32 %v7191, %v7474
      %v7476 = vpop.f32.mrf.mxu0
      %v7477 = vpop.f32.mrf.mxu0
      %v7478 = vadd.f32 %v7194, %v7477
      %v7479 = vpop.f32.mrf.mxu0
      %7480 = vmatprep.mubr.bf16.mxu0 0
      %7481 = vmatmul.mubr.bf16.gmra.mxu0 %v7369
      %v7482 = vpop.f32.mrf.mxu0
      %v7483 = vpop.f32.mrf.mxu0
      %v7484 = vpop.f32.mrf.mxu0
      %v7485 = vadd.f32 %v7201, %v7484
      %v7486 = vpop.f32.mrf.mxu0
      %7487 = vmatprep.mubr.bf16.mxu0 0
      %7488 = vmatmul.mubr.bf16.gmra.mxu0 %v7372
      %v7489 = vpop.f32.mrf.mxu0
      %v7490 = vadd.f32 %v7206, %v7489
      %v7491 = vpop.f32.mrf.mxu0
      %v7492 = vpop.f32.mrf.mxu0
      %v7493 = vpop.f32.mrf.mxu0
      %7494 = vmatprep.mubr.bf16.mxu0 0
      %7495 = vmatmul.mubr.bf16.gmra.mxu0 %v7375
      %v7496 = vpop.f32.mrf.mxu0
      %v7497 = vadd.f32 %v7213, %v7496
      %v7498 = vpop.f32.mrf.mxu0
      %v7499 = vpop.f32.mrf.mxu0
      %v7500 = vadd.f32 %v7216, %v7499
      %v7501 = vpop.f32.mrf.mxu0
      %7502 = vmatprep.mubr.bf16.mxu0 0
      %7503 = vmatmul.mubr.bf16.gmra.mxu0 %v7378
      %v7504 = vpop.f32.mrf.mxu0
      %v7505 = vpop.f32.mrf.mxu0
      %v7506 = vpop.f32.mrf.mxu0
      %v7507 = vadd.f32 %v7223, %v7506
      %v7508 = vpop.f32.mrf.mxu0
      %7509 = vmatprep.mubr.bf16.mxu0 0
      %7510 = vmatmul.mubr.bf16.gmra.mxu0 %v7381
      %v7511 = vpop.f32.mrf.mxu0
      %v7512 = vadd.f32 %v7228, %v7511
      %v7513 = vpop.f32.mrf.mxu0
      %v7514 = vpop.f32.mrf.mxu0
      %v7515 = vpop.f32.mrf.mxu0
      %7516 = vmatprep.mubr.bf16.mxu0 0
      %7517 = vmatmul.mubr.bf16.gmra.mxu0 %v7384
      %v7518 = vpop.f32.mrf.mxu0
      %v7519 = vadd.f32 %v7235, %v7518
      %v7520 = vpop.f32.mrf.mxu0
      %v7521 = vpop.f32.mrf.mxu0
      %v7522 = vadd.f32 %v7238, %v7521
      %v7523 = vpop.f32.mrf.mxu0
      %7524 = vmatprep.mubr.bf16.mxu0 0
      %7525 = vmatmul.mubr.bf16.gmra.mxu0 %v7387
      %v7526 = vpop.f32.mrf.mxu0
      %v7527 = vpop.f32.mrf.mxu0
      %v7528 = vpop.f32.mrf.mxu0
      %v7529 = vadd.f32 %v7245, %v7528
      %v7530 = vpop.f32.mrf.mxu0
      %7531 = vmatprep.mubr.bf16.mxu0 0
      %7532 = vmatmul.mubr.bf16.gmra.mxu0 %v7390
      %v7533 = vpop.f32.mrf.mxu0
      %v7534 = vadd.f32 %v7250, %v7533
      %v7535 = vpop.f32.mrf.mxu0
      %v7536 = vpop.f32.mrf.mxu0
      %v7537 = vpop.f32.mrf.mxu0
      %7538 = vmatprep.mubr.bf16.mxu0 0
      %7539 = vmatmul.mubr.bf16.gmra.mxu0 %v7393
      %v7540 = vpop.f32.mrf.mxu0
      %v7541 = vadd.f32 %v7257, %v7540
      %v7542 = vpop.f32.mrf.mxu0
      %v7543 = vpop.f32.mrf.mxu0
      %v7544 = vadd.f32 %v7260, %v7543
      %v7545 = vpop.f32.mrf.mxu0
      %7546 = vmatprep.mubr.bf16.mxu0 0
      %7547 = vmatmul.mubr.bf16.gmra.mxu0 %v7396
      %v7548 = vpop.f32.mrf.mxu0
      %v7549 = vpop.f32.mrf.mxu0
      %v7550 = vpop.f32.mrf.mxu0
      %v7551 = vadd.f32 %v7267, %v7550
      %v7552 = vpop.f32.mrf.mxu0
      %7553 = vmatprep.mubr.bf16.mxu0 0
      %7554 = vmatmul.mubr.bf16.gmra.mxu0 %v7399
      %v7555 = vpop.f32.mrf.mxu0
      %v7556 = vadd.f32 %v7272, %v7555
      %v7557 = vpop.f32.mrf.mxu0
      %v7558 = vpop.f32.mrf.mxu0
      %v7559 = vpop.f32.mrf.mxu0
      %7560 = vmatprep.mubr.bf16.mxu0 0
      %7561 = vmatmul.mubr.bf16.gmra.mxu0 %v7402
      %v7562 = vpop.f32.mrf.mxu0
      %v7563 = vadd.f32 %v7279, %v7562
      %v7564 = vpop.f32.mrf.mxu0
      %v7565 = vpop.f32.mrf.mxu0
      %v7566 = vadd.f32 %v7282, %v7565
      %v7567 = vpop.f32.mrf.mxu0
      %7568 = vmatprep.mubr.bf16.mxu0 0
      %7569 = vmatmul.mubr.bf16.gmra.mxu0 %v7405
      %v7570 = vpop.f32.mrf.mxu0
      %v7571 = vpop.f32.mrf.mxu0
      %v7572 = vpop.f32.mrf.mxu0
      %v7573 = vadd.f32 %v7289, %v7572
      %v7574 = vpop.f32.mrf.mxu0
      %7575 = vmatprep.mubr.bf16.mxu0 0
      %7576 = vmatmul.mubr.bf16.gmra.mxu0 %v7408
      %v7577 = vpop.f32.mrf.mxu0
      %v7578 = vadd.f32 %v7294, %v7577
      %v7579 = vpop.f32.mrf.mxu0
      %v7580 = vpop.f32.mrf.mxu0
      %v7581 = vpop.f32.mrf.mxu0
      %7582 = vmatprep.mubr.bf16.mxu0 0
      %7583 = vmatmul.mubr.bf16.gmra.mxu0 %v7411
      %v7584 = vpop.f32.mrf.mxu0
      %v7585 = vadd.f32 %v7301, %v7584
      %v7586 = vpop.f32.mrf.mxu0
      %v7587 = vpop.f32.mrf.mxu0
      %v7588 = vadd.f32 %v7304, %v7587
      %v7589 = vpop.f32.mrf.mxu0
      %7590 = vmatprep.mubr.bf16.mxu0 0
      %7591 = vmatmul.mubr.bf16.gmra.mxu0 %v7414
      %v7592 = vpop.f32.mrf.mxu0
      %v7593 = vpop.f32.mrf.mxu0
      %v7594 = vpop.f32.mrf.mxu0
      %v7595 = vadd.f32 %v7311, %v7594
      %v7596 = vpop.f32.mrf.mxu0
      %7597 = vmatprep.mubr.bf16.mxu0 0
      %7598 = vmatmul.mubr.bf16.gmra.mxu0 %v7417
      %v7599 = vpop.f32.mrf.mxu0
      %v7600 = vadd.f32 %v7316, %v7599
      %v7601 = vpop.f32.mrf.mxu0
      %v7602 = vpop.f32.mrf.mxu0
      %v7603 = vpop.f32.mrf.mxu0
      %7604 = vmatprep.mubr.bf16.mxu0 0
      %7605 = vmatmul.mubr.bf16.gmra.mxu0 %v7420
      %v7606 = vpop.f32.mrf.mxu0
      %v7607 = vadd.f32 %v7323, %v7606
      %v7608 = vpop.f32.mrf.mxu0
      %v7609 = vpop.f32.mrf.mxu0
      %v7610 = vadd.f32 %v7326, %v7609
      %v7611 = vpop.f32.mrf.mxu0
      %7612 = vmatprep.mubr.bf16.mxu0 0
      %7613 = vmatmul.mubr.bf16.gmra.mxu0 %v7423
      %v7614 = vpop.f32.mrf.mxu0
      %v7615 = vpop.f32.mrf.mxu0
      %v7616 = vpop.f32.mrf.mxu0
      %v7617 = vadd.f32 %v7333, %v7616
      %v7618 = vpop.f32.mrf.mxu0
      %7619 = vmatprep.mubr.bf16.mxu0 0
      %7620 = vmatmul.mubr.bf16.gmra.mxu0 %v7426
      %v7621 = vpop.f32.mrf.mxu0
      %v7622 = vadd.f32 %v7338, %v7621
      %v7623 = vpop.f32.mrf.mxu0
      %v7624 = vpop.f32.mrf.mxu0
      %v7625 = vpop.f32.mrf.mxu0
      %7626 = vmatprep.mubr.bf16.mxu0 0
      %7627 = vmatmul.mubr.bf16.gmra.mxu0 %v7429
      %v7628 = vpop.f32.mrf.mxu0
      %v7629 = vadd.f32 %v7345, %v7628
      %v7630 = vpop.f32.mrf.mxu0
      %v7631 = vpop.f32.mrf.mxu0
      %v7632 = vadd.f32 %v7348, %v7631
      %v7633 = vpop.f32.mrf.mxu0
      %7634 = vmatprep.mubr.bf16.mxu0 0
      %7635 = vmatmul.mubr.bf16.gmra.mxu0 %v7432
      %v7636 = vpop.f32.mrf.mxu0
      %v7637 = vpop.f32.mrf.mxu0
      %v7638 = vpop.f32.mrf.mxu0
      %v7639 = vadd.f32 %v7355, %v7638
      %v7640 = vpop.f32.mrf.mxu0
      %7641 = vmatprep.mubr.bf16.mxu0 0
      %7642 = vmatmul.mubr.bf16.gmra.mxu0 %v7435
      %v7643 = vpop.f32.mrf.mxu0
      %v7644 = vadd.f32 %v7360, %v7643
      %v7645 = vpop.f32.mrf.mxu0
      %v7646 = vpop.f32.mrf.mxu0
      %v7647 = vpop.f32.mrf.mxu0
      %7648 = vdwg.mxu0
      %v7649 = vld [vmem:[%s12] sm:$0x1]
      %v7651 = vlaneseq
      %v7652 = vshrl.u32 %v7651, 7
      %v7653 = vsub.s32 0, %v7652
      %v7654 = vrot.slane %v7649, %v7653
      %v7656 = vadd.f32 %v7475, %v7654
      %v7657 = vadd.f32 %v7478, %v7654
      %v7658 = vadd.f32 %v7485, %v7654
      %v7659 = vadd.f32 %v7490, %v7654
      %v7660 = vadd.f32 %v7497, %v7654
      %v7661 = vadd.f32 %v7500, %v7654
      %v7662 = vadd.f32 %v7507, %v7654
      %v7663 = vadd.f32 %v7512, %v7654
      %v7664 = vadd.f32 %v7519, %v7654
      %v7665 = vadd.f32 %v7522, %v7654
      %v7666 = vadd.f32 %v7529, %v7654
      %v7667 = vadd.f32 %v7534, %v7654
      %v7668 = vadd.f32 %v7541, %v7654
      %v7669 = vadd.f32 %v7544, %v7654
      %v7670 = vadd.f32 %v7551, %v7654
      %v7671 = vadd.f32 %v7556, %v7654
      %v7672 = vadd.f32 %v7563, %v7654
      %v7673 = vadd.f32 %v7566, %v7654
      %v7674 = vadd.f32 %v7573, %v7654
      %v7675 = vadd.f32 %v7578, %v7654
      %v7676 = vadd.f32 %v7585, %v7654
      %v7677 = vadd.f32 %v7588, %v7654
      %v7678 = vadd.f32 %v7595, %v7654
      %v7679 = vadd.f32 %v7600, %v7654
      %v7680 = vadd.f32 %v7607, %v7654
      %v7681 = vadd.f32 %v7610, %v7654
      %v7682 = vadd.f32 %v7617, %v7654
      %v7683 = vadd.f32 %v7622, %v7654
      %v7684 = vadd.f32 %v7629, %v7654
      %v7685 = vadd.f32 %v7632, %v7654
      %v7686 = vadd.f32 %v7639, %v7654
      %v7687 = vadd.f32 %v7644, %v7654
      %v7688 = vxor.u32 %v7656, 2147483648
      %v7689 = vxor.u32 %v7657, 2147483648
      %v7690 = vxor.u32 %v7658, 2147483648
      %v7691 = vxor.u32 %v7659, 2147483648
      %v7692 = vxor.u32 %v7660, 2147483648
      %v7693 = vxor.u32 %v7661, 2147483648
      %v7694 = vxor.u32 %v7662, 2147483648
      %v7695 = vxor.u32 %v7663, 2147483648
      %v7696 = vxor.u32 %v7664, 2147483648
      %v7697 = vxor.u32 %v7665, 2147483648
      %v7698 = vxor.u32 %v7666, 2147483648
      %v7699 = vxor.u32 %v7667, 2147483648
      %v7700 = vxor.u32 %v7668, 2147483648
      %v7701 = vxor.u32 %v7669, 2147483648
      %v7702 = vxor.u32 %v7670, 2147483648
      %v7703 = vxor.u32 %v7671, 2147483648
      %v7704 = vxor.u32 %v7672, 2147483648
      %v7705 = vxor.u32 %v7673, 2147483648
      %v7706 = vxor.u32 %v7674, 2147483648
      %v7707 = vxor.u32 %v7675, 2147483648
      %v7708 = vxor.u32 %v7676, 2147483648
      %v7709 = vxor.u32 %v7677, 2147483648
      %v7710 = vxor.u32 %v7678, 2147483648
      %v7711 = vxor.u32 %v7679, 2147483648
      %v7712 = vxor.u32 %v7680, 2147483648
      %v7713 = vxor.u32 %v7681, 2147483648
      %v7714 = vxor.u32 %v7682, 2147483648
      %v7715 = vxor.u32 %v7683, 2147483648
      %v7716 = vxor.u32 %v7684, 2147483648
      %v7717 = vxor.u32 %v7685, 2147483648
      %v7718 = vxor.u32 %v7686, 2147483648
      %v7719 = vxor.u32 %v7687, 2147483648
      %v7720 = vmul.f32 %v7688, 1.442695
      %v7721 = vpow.pop %v7720
      %v7722 = vmul.f32 %v7689, 1.442695
      %v7723 = vpow.pop %v7722
      %v7724 = vmul.f32 %v7690, 1.442695
      %v7725 = vpow.pop %v7724
      %v7726 = vmul.f32 %v7691, 1.442695
      %v7727 = vpow.pop %v7726
      %v7728 = vmul.f32 %v7692, 1.442695
      %v7729 = vpow.pop %v7728
      %v7730 = vmul.f32 %v7693, 1.442695
      %v7731 = vpow.pop %v7730
      %v7732 = vmul.f32 %v7694, 1.442695
      %v7733 = vpow.pop %v7732
      %v7734 = vmul.f32 %v7695, 1.442695
      %v7735 = vpow.pop %v7734
      %v7736 = vmul.f32 %v7696, 1.442695
      %v7737 = vpow.pop %v7736
      %v7738 = vmul.f32 %v7697, 1.442695
      %v7739 = vpow.pop %v7738
      %v7740 = vmul.f32 %v7698, 1.442695
      %v7741 = vpow.pop %v7740
      %v7742 = vmul.f32 %v7699, 1.442695
      %v7743 = vpow.pop %v7742
      %v7744 = vmul.f32 %v7700, 1.442695
      %v7745 = vpow.pop %v7744
      %v7746 = vmul.f32 %v7701, 1.442695
      %v7747 = vpow.pop %v7746
      %v7748 = vmul.f32 %v7702, 1.442695
      %v7749 = vpow.pop %v7748
      %v7750 = vmul.f32 %v7703, 1.442695
      %v7751 = vpow.pop %v7750
      %v7752 = vmul.f32 %v7704, 1.442695
      %v7753 = vpow.pop %v7752
      %v7754 = vmul.f32 %v7705, 1.442695
      %v7755 = vpow.pop %v7754
      %v7756 = vmul.f32 %v7706, 1.442695
      %v7757 = vpow.pop %v7756
      %v7758 = vmul.f32 %v7707, 1.442695
      %v7759 = vpow.pop %v7758
      %v7760 = vmul.f32 %v7708, 1.442695
      %v7761 = vpow.pop %v7760
      %v7762 = vmul.f32 %v7709, 1.442695
      %v7763 = vpow.pop %v7762
      %v7764 = vmul.f32 %v7710, 1.442695
      %v7765 = vpow.pop %v7764
      %v7766 = vmul.f32 %v7711, 1.442695
      %v7767 = vpow.pop %v7766
      %v7768 = vmul.f32 %v7712, 1.442695
      %v7769 = vpow.pop %v7768
      %v7770 = vmul.f32 %v7713, 1.442695
      %v7771 = vpow.pop %v7770
      %v7772 = vmul.f32 %v7714, 1.442695
      %v7773 = vpow.pop %v7772
      %v7774 = vmul.f32 %v7715, 1.442695
      %v7775 = vpow.pop %v7774
      %v7776 = vmul.f32 %v7716, 1.442695
      %v7777 = vpow.pop %v7776
      %v7778 = vmul.f32 %v7717, 1.442695
      %v7779 = vpow.pop %v7778
      %v7780 = vmul.f32 %v7718, 1.442695
      %v7781 = vpow.pop %v7780
      %v7782 = vmul.f32 %v7719, 1.442695
      %v7783 = vpow.pop %v7782
      %v7784 = vadd.f32 %v7721, 1.0
      %v7785 = vadd.f32 %v7723, 1.0
      %v7786 = vadd.f32 %v7725, 1.0
      %v7787 = vadd.f32 %v7727, 1.0
      %v7788 = vadd.f32 %v7729, 1.0
      %v7789 = vadd.f32 %v7731, 1.0
      %v7790 = vadd.f32 %v7733, 1.0
      %v7791 = vadd.f32 %v7735, 1.0
      %v7792 = vadd.f32 %v7737, 1.0
      %v7793 = vadd.f32 %v7739, 1.0
      %v7794 = vadd.f32 %v7741, 1.0
      %v7795 = vadd.f32 %v7743, 1.0
      %v7796 = vadd.f32 %v7745, 1.0
      %v7797 = vadd.f32 %v7747, 1.0
      %v7798 = vadd.f32 %v7749, 1.0
      %v7799 = vadd.f32 %v7751, 1.0
      %v7800 = vadd.f32 %v7753, 1.0
      %v7801 = vadd.f32 %v7755, 1.0
      %v7802 = vadd.f32 %v7757, 1.0
      %v7803 = vadd.f32 %v7759, 1.0
      %v7804 = vadd.f32 %v7761, 1.0
      %v7805 = vadd.f32 %v7763, 1.0
      %v7806 = vadd.f32 %v7765, 1.0
      %v7807 = vadd.f32 %v7767, 1.0
      %v7808 = vadd.f32 %v7769, 1.0
      %v7809 = vadd.f32 %v7771, 1.0
      %v7810 = vadd.f32 %v7773, 1.0
      %v7811 = vadd.f32 %v7775, 1.0
      %v7812 = vadd.f32 %v7777, 1.0
      %v7813 = vadd.f32 %v7779, 1.0
      %v7814 = vadd.f32 %v7781, 1.0
      %v7815 = vadd.f32 %v7783, 1.0
      %v7816 = vrcp.pop %v7784
      %v7817 = vmul.f32 1.0, %v7816
      %v7818 = vrcp.pop %v7785
      %v7819 = vmul.f32 1.0, %v7818
      %v7820 = vrcp.pop %v7786
      %v7821 = vmul.f32 1.0, %v7820
      %v7822 = vrcp.pop %v7787
      %v7823 = vmul.f32 1.0, %v7822
      %v7824 = vrcp.pop %v7788
      %v7825 = vmul.f32 1.0, %v7824
      %v7826 = vrcp.pop %v7789
      %v7827 = vmul.f32 1.0, %v7826
      %v7828 = vrcp.pop %v7790
      %v7829 = vmul.f32 1.0, %v7828
      %v7830 = vrcp.pop %v7791
      %v7831 = vmul.f32 1.0, %v7830
      %v7832 = vrcp.pop %v7792
      %v7833 = vmul.f32 1.0, %v7832
      %v7834 = vrcp.pop %v7793
      %v7835 = vmul.f32 1.0, %v7834
      %v7836 = vrcp.pop %v7794
      %v7837 = vmul.f32 1.0, %v7836
      %v7838 = vrcp.pop %v7795
      %v7839 = vmul.f32 1.0, %v7838
      %v7840 = vrcp.pop %v7796
      %v7841 = vmul.f32 1.0, %v7840
      %v7842 = vrcp.pop %v7797
      %v7843 = vmul.f32 1.0, %v7842
      %v7844 = vrcp.pop %v7798
      %v7845 = vmul.f32 1.0, %v7844
      %v7846 = vrcp.pop %v7799
      %v7847 = vmul.f32 1.0, %v7846
      %v7848 = vrcp.pop %v7800
      %v7849 = vmul.f32 1.0, %v7848
      %v7850 = vrcp.pop %v7801
      %v7851 = vmul.f32 1.0, %v7850
      %v7852 = vrcp.pop %v7802
      %v7853 = vmul.f32 1.0, %v7852
      %v7854 = vrcp.pop %v7803
      %v7855 = vmul.f32 1.0, %v7854
      %v7856 = vrcp.pop %v7804
      %v7857 = vmul.f32 1.0, %v7856
      %v7858 = vrcp.pop %v7805
      %v7859 = vmul.f32 1.0, %v7858
      %v7860 = vrcp.pop %v7806
      %v7861 = vmul.f32 1.0, %v7860
      %v7862 = vrcp.pop %v7807
      %v7863 = vmul.f32 1.0, %v7862
      %v7864 = vrcp.pop %v7808
      %v7865 = vmul.f32 1.0, %v7864
      %v7866 = vrcp.pop %v7809
      %v7867 = vmul.f32 1.0, %v7866
      %v7868 = vrcp.pop %v7810
      %v7869 = vmul.f32 1.0, %v7868
      %v7870 = vrcp.pop %v7811
      %v7871 = vmul.f32 1.0, %v7870
      %v7872 = vrcp.pop %v7812
      %v7873 = vmul.f32 1.0, %v7872
      %v7874 = vrcp.pop %v7813
      %v7875 = vmul.f32 1.0, %v7874
      %v7876 = vrcp.pop %v7814
      %v7877 = vmul.f32 1.0, %v7876
      %v7878 = vrcp.pop %v7815
      %v7879 = vmul.f32 1.0, %v7878
      %v7880 = vmul.f32 %v7656, %v7817
      %v7881 = vmul.f32 %v7657, %v7819
      %v7882 = vmul.f32 %v7658, %v7821
      %v7883 = vmul.f32 %v7659, %v7823
      %v7884 = vmul.f32 %v7660, %v7825
      %v7885 = vmul.f32 %v7661, %v7827
      %v7886 = vmul.f32 %v7662, %v7829
      %v7887 = vmul.f32 %v7663, %v7831
      %v7888 = vmul.f32 %v7664, %v7833
      %v7889 = vmul.f32 %v7665, %v7835
      %v7890 = vmul.f32 %v7666, %v7837
      %v7891 = vmul.f32 %v7667, %v7839
      %v7892 = vmul.f32 %v7668, %v7841
      %v7893 = vmul.f32 %v7669, %v7843
      %v7894 = vmul.f32 %v7670, %v7845
      %v7895 = vmul.f32 %v7671, %v7847
      %v7896 = vmul.f32 %v7672, %v7849
      %v7897 = vmul.f32 %v7673, %v7851
      %v7898 = vmul.f32 %v7674, %v7853
      %v7899 = vmul.f32 %v7675, %v7855
      %v7900 = vmul.f32 %v7676, %v7857
      %v7901 = vmul.f32 %v7677, %v7859
      %v7902 = vmul.f32 %v7678, %v7861
      %v7903 = vmul.f32 %v7679, %v7863
      %v7904 = vmul.f32 %v7680, %v7865
      %v7905 = vmul.f32 %v7681, %v7867
      %v7906 = vmul.f32 %v7682, %v7869
      %v7907 = vmul.f32 %v7683, %v7871
      %v7908 = vmul.f32 %v7684, %v7873
      %v7909 = vmul.f32 %v7685, %v7875
      %v7910 = vmul.f32 %v7686, %v7877
      %v7911 = vmul.f32 %v7687, %v7879
      %7912 = vst.msk [vmem:[%s440] sm:$0xff] %vm666, %v7880
      %7913 = vst.msk [vmem:[%s440 + $0x8] sm:$0xff] %vm666, %v7881
      %7914 = vst.msk [vmem:[%s440 + $0x10] sm:$0xff] %vm666, %v7882
      %7915 = vst.msk [vmem:[%s440 + $0x18] sm:$0xff] %vm666, %v7883
      %7916 = vst.msk [vmem:[%s440 + $0x20] sm:$0xff] %vm666, %v7884
      %7917 = vst.msk [vmem:[%s440 + $0x28] sm:$0xff] %vm666, %v7885
      %7918 = vst.msk [vmem:[%s440 + $0x30] sm:$0xff] %vm666, %v7886
      %7919 = vst.msk [vmem:[%s440 + $0x38] sm:$0xff] %vm666, %v7887
      %7920 = vst.msk [vmem:[%s440 + $0x40] sm:$0xff] %vm666, %v7888
      %7921 = vst.msk [vmem:[%s440 + $0x48] sm:$0xff] %vm666, %v7889
      %7922 = vst.msk [vmem:[%s440 + $0x50] sm:$0xff] %vm666, %v7890
      %7923 = vst.msk [vmem:[%s440 + $0x58] sm:$0xff] %vm666, %v7891
      %7924 = vst.msk [vmem:[%s440 + $0x60] sm:$0xff] %vm666, %v7892
      %7925 = vst.msk [vmem:[%s440 + $0x68] sm:$0xff] %vm666, %v7893
      %7926 = vst.msk [vmem:[%s440 + $0x70] sm:$0xff] %vm666, %v7894
      %7927 = vst.msk [vmem:[%s440 + $0x78] sm:$0xff] %vm666, %v7895
      %7928 = vst.msk [vmem:[%s440 + $0x80] sm:$0xff] %vm666, %v7896
      %7929 = vst.msk [vmem:[%s440 + $0x88] sm:$0xff] %vm666, %v7897
      %7930 = vst.msk [vmem:[%s440 + $0x90] sm:$0xff] %vm666, %v7898
      %7931 = vst.msk [vmem:[%s440 + $0x98] sm:$0xff] %vm666, %v7899
      %7932 = vst.msk [vmem:[%s440 + $0xa0] sm:$0xff] %vm666, %v7900
      %7933 = vst.msk [vmem:[%s440 + $0xa8] sm:$0xff] %vm666, %v7901
      %7934 = vst.msk [vmem:[%s440 + $0xb0] sm:$0xff] %vm666, %v7902
      %7935 = vst.msk [vmem:[%s440 + $0xb8] sm:$0xff] %vm666, %v7903
      %7936 = vst.msk [vmem:[%s440 + $0xc0] sm:$0xff] %vm666, %v7904
      %7937 = vst.msk [vmem:[%s440 + $0xc8] sm:$0xff] %vm666, %v7905
      %7938 = vst.msk [vmem:[%s440 + $0xd0] sm:$0xff] %vm666, %v7906
      %7939 = vst.msk [vmem:[%s440 + $0xd8] sm:$0xff] %vm666, %v7907
      %7940 = vst.msk [vmem:[%s440 + $0xe0] sm:$0xff] %vm666, %v7908
      %7941 = vst.msk [vmem:[%s440 + $0xe8] sm:$0xff] %vm666, %v7909
      %7942 = vst.msk [vmem:[%s440 + $0xf0] sm:$0xff] %vm666, %v7910
      %7943 = vst.msk [vmem:[%s440 + $0xf8] sm:$0xff] %vm666, %v7911
      %p7944 = scmp.lt.s32.totalorder %s24, 1
      %s7945 = scalar_select %p7944, %s24, 1
      %s7946 = smul.addr %s7945, 32
      %s7947 = smul.addr %s7946, 8
      %s7948 = scalar_lea.vmem %s13, %s7947
      // Predicated region
      $region73: #{csp_layer_forward.1} parent=71 // pred_check
        %p7949 = pneg %p320
      $region74: #{csp_layer_forward.1} parent=71 // pred_check_branch
        %7951 = sbr.rel (%p7949) target = $region76
      $region75: #{csp_layer_forward.1} parent=71 // pred_region
        _
      $region76: #{csp_layer_forward.1} parent=71 // pred_fallthru
        _
    $region72: #{csp_layer_forward.1} parent=5 // pred_fallthru
      _
    %p7952 = scmp.le.s32.totalorder 2, %s19
    // Predicated region
    $region77: #{csp_layer_forward.1} parent=5 // pred_check
      %p7953 = pneg %p7952
    $region78: #{csp_layer_forward.1} parent=5 // pred_check_branch
      %7955 = sbr.rel (%p7953) target = $region80
    $region79: #{csp_layer_forward.1} parent=5 // pred_region
      %s7956 = ssub.s32 %s19, 2
      // Predicated region
      $region81: #{csp_layer_forward.1} parent=79 // pred_check
        %p7957 = pneg %p326
      $region82: #{csp_layer_forward.1} parent=79 // pred_check_branch
        %7959 = sbr.rel (%p7957) target = $region84
      $region83: #{csp_layer_forward.1} parent=79 // pred_region
        %p7960 = scmp.lt.s32.totalorder %s25, 1
        %s7961 = scalar_select %p7960, %s25, 1
        %s7962 = smul.addr %s7961, 32
        %s7963 = smul.addr %s7962, 8
        %s7964 = scalar_lea.vmem %s13, %s7963
      $region84: #{csp_layer_forward.1} parent=79 // pred_fallthru
        _
    $region80: #{csp_layer_forward.1} parent=5 // pred_fallthru
      _
  $region6: #{csp_layer_forward.1} parent=0 // loop_footer
    %s23 = sadd.s32 1, %s19
  $region7: #{csp_layer_forward.1} parent=0 // loop_footer_branch
    %18 = sbr.rel target = $region3
  $region8: #{csp_layer_forward.1} parent=0 // loop_exit
    _

</llo_original>
